<compile_context>
chip_gen: v7x
topology: tpu7x:2x2x1
jax: 0.10.0
libtpu: 0.0.40
codegen_flags: <defaults>
</compile_context>

<pallas_src>
import functools
import math

import jax
import jax.numpy as jnp
from jax import lax
from jax.experimental import pallas as pl
from jax.experimental.pallas import tpu as pltpu


# ------------------------------ helpers -------------------------------------
def _round_up(x, m):
    return ((x + m - 1) // m) * m


def _reorder_and_pad_gates(w, H, Hp):
    """Last dim has width 4H in torch gate order (i,f,g,o); reorder to (i,f,o,g)
    and zero-pad each gate block from H to Hp -> last dim 4*Hp."""
    i, f, g, o = jnp.split(w, 4, axis=-1)
    w = jnp.concatenate([i, f, o, g], axis=-1)
    lead = w.shape[:-1]
    w = w.reshape(lead + (4, H))
    w = jnp.pad(w, [(0, 0)] * len(lead) + [(0, 0), (0, Hp - H)])
    return w.reshape(lead + (4 * Hp,))


# ---------------- fused multi-layer LSTM + FC head kernel --------------------
def _fused_lstm_fc_kernel(num_layers, seq_len, tt, hp, *refs):
    # refs: x, w_ih0, b0, w_hh0, [w_xh_l, b_l]*(L-1), w_fc, b_fc, out, gx_scr, h_scr, c_scr
    x_ref, w0_ref, b0_ref, whh0_ref = refs[0], refs[1], refs[2], refs[3]
    pos = 4
    deep = []
    for _ in range(num_layers - 1):
        deep.append((refs[pos], refs[pos + 1]))
        pos += 2
    wfc_ref, bfc_ref = refs[pos], refs[pos + 1]
    out_ref = refs[pos + 2]
    gx_ref = refs[pos + 3]
    h_ref, c_ref = refs[pos + 4], refs[pos + 5]

    s = pl.program_id(0)
    bp = h_ref.shape[1]
    four_hp = 4 * hp
    needs_mask = (seq_len % tt) != 0  # static

    @pl.when(s == 0)
    def _init():
        # hidden=None in the PyTorch forward -> zero initial (h, c) for every layer.
        h_ref[...] = jnp.zeros(h_ref.shape, jnp.float32)
        c_ref[...] = jnp.zeros(c_ref.shape, jnp.float32)

    # Layer-0 input projection (bias folded) for the whole TT block: one MXU call,
    # result stays in VMEM (no gates_x HBM round trip).
    gx_ref[...] = (
        jnp.dot(x_ref[...].astype(w0_ref.dtype), w0_ref[...],
                preferred_element_type=jnp.float32)
        + b0_ref[...]
    )

    # Bias broadcasts hoisted out of the unrolled time loop (JAX does not CSE broadcasts).
    # TODO(synk): for L >= 4 fold biases into the fused matmul / stride-0 read to save vregs.
    deep_biases = [jnp.broadcast_to(b_ref[...], (bp, four_hp)) for (_, b_ref) in deep]

    def _cell(gates, c_prev):
        # Gate order (i, f, o, g): one sigmoid over 3 lane-aligned blocks, one tanh.
        sig = jax.nn.sigmoid(gates[:, : 3 * hp])
        g = jnp.tanh(gates[:, 3 * hp:])
        i = sig[:, :hp]
        f = sig[:, hp: 2 * hp]
        o = sig[:, 2 * hp: 3 * hp]
        c_new = f * c_prev + i * g
        h_new = o * jnp.tanh(c_new)
        return h_new, c_new

    # Carry (h, c) as loop values (vregs); scratch is only read/written once per grid step.
    h0s = tuple(h_ref[l] for l in range(num_layers))
    c0s = tuple(c_ref[l] for l in range(num_layers))

    def _step(t, carry):
        hs, cs = carry
        if needs_mask:
            valid = (s * tt + t) < seq_len
        # Layer 0: x-projection precomputed for the block -> only the recurrent matmul here.
        gx_t = gx_ref[pl.ds(t * bp, bp), :]
        gates = gx_t + jnp.dot(hs[0].astype(whh0_ref.dtype), whh0_ref[...],
                               preferred_element_type=jnp.float32)
        h_new, c_new = _cell(gates, cs[0])
        if needs_mask:
            h_new = jnp.where(valid, h_new, hs[0])
            c_new = jnp.where(valid, c_new, cs[0])
        new_hs, new_cs = [h_new], [c_new]
        x_l = h_new
        # Deeper layers: single fused matmul [x_l, h_l] @ [W_ih; W_hh] per layer per timestep.
        for l in range(1, num_layers):
            w_ref, _ = deep[l - 1]
            xh = jnp.concatenate([x_l, hs[l]], axis=-1)
            gates = (
                jnp.dot(xh.astype(w_ref.dtype), w_ref[...],
                        preferred_element_type=jnp.float32)
                + deep_biases[l - 1]
            )
            h_new, c_new = _cell(gates, cs[l])
            if needs_mask:
                h_new = jnp.where(valid, h_new, hs[l])
                c_new = jnp.where(valid, c_new, cs[l])
            new_hs.append(h_new)
            new_cs.append(c_new)
            x_l = h_new
        # TODO(synk): nn.LSTM inter-layer dropout is train-mode only -> identity here.
        return (tuple(new_hs), tuple(new_cs))

    hs, cs = lax.fori_loop(0, tt, _step, (h0s, c0s), unroll=True)

    # Single write-back of the per-layer state for the next grid step.
    for l in range(num_layers):
        h_ref[l] = hs[l]
        c_ref[l] = cs[l]

    # Fused FC head on the last timestep of the last layer (self.dropout is identity in eval).
    @pl.when(s == pl.num_programs(0) - 1)
    def _epilogue():
        out_ref[...] = (
            jnp.dot(hs[num_layers - 1].astype(wfc_ref.dtype), wfc_ref[...],
                    preferred_element_type=jnp.float32)
            + bfc_ref[...]
        ).astype(out_ref.dtype)


# ------------------------------- parameters ----------------------------------
def init_params(key, input_size, hidden_size, num_layers, output_size):
    """PyTorch-layout params with uniform(-1/sqrt(H), 1/sqrt(H)) init."""
    bound = 1.0 / math.sqrt(hidden_size)
    layers = []
    for layer in range(num_layers):
        in_feat = input_size if layer == 0 else hidden_size
        key, k1, k2, k3, k4 = jax.random.split(key, 5)
        layers.append({
            "w_ih": jax.random.uniform(k1, (4 * hidden_size, in_feat), jnp.float32, -bound, bound),
            "w_hh": jax.random.uniform(k2, (4 * hidden_size, hidden_size), jnp.float32, -bound, bound),
            "b_ih": jax.random.uniform(k3, (4 * hidden_size,), jnp.float32, -bound, bound),
            "b_hh": jax.random.uniform(k4, (4 * hidden_size,), jnp.float32, -bound, bound),
        })
    key, k1, k2 = jax.random.split(key, 3)
    w_fc = jax.random.uniform(k1, (output_size, hidden_size), jnp.float32, -bound, bound)
    b_fc = jax.random.uniform(k2, (output_size,), jnp.float32, -bound, bound)
    return {"layers": layers, "w_fc": w_fc, "b_fc": b_fc}


def prepare_params(raw, hidden_size, compute_dtype=jnp.float32):
    """Torch layout -> kernel layout: transpose, gate-reorder to (i,f,o,g), sum biases,
    pad H/O to multiples of 128, and stack deep-layer [W_ih; W_hh] into one (2Hp, 4Hp) weight."""
    H = hidden_size
    Hp = _round_up(H, 128)
    prepped = {"layers": []}
    for l, lp in enumerate(raw["layers"]):
        w_ih = _reorder_and_pad_gates(lp["w_ih"].T, H, Hp)                       # (in, 4Hp)
        w_hh = _reorder_and_pad_gates(lp["w_hh"].T, H, Hp)                       # (H, 4Hp)
        w_hh = jnp.pad(w_hh, ((0, Hp - H), (0, 0)))                              # (Hp, 4Hp)
        bias = _reorder_and_pad_gates((lp["b_ih"] + lp["b_hh"])[None, :], H, Hp)  # (1, 4Hp)
        if l == 0:
            prepped["layers"].append({
                "w_ih": w_ih.astype(compute_dtype),
                "w_hh": w_hh.astype(compute_dtype),
                "b": bias.astype(jnp.float32),
            })
        else:
            w_ih = jnp.pad(w_ih, ((0, Hp - H), (0, 0)))                          # (Hp, 4Hp)
            w_xh = jnp.concatenate([w_ih, w_hh], axis=0)                         # (2Hp, 4Hp)
            prepped["layers"].append({
                "w_xh": w_xh.astype(compute_dtype),
                "b": bias.astype(jnp.float32),
            })
    O = raw["w_fc"].shape[0]
    Op = _round_up(O, 128)
    w_fc = jnp.pad(raw["w_fc"].T, ((0, Hp - H), (0, Op - O)))                    # (Hp, Op)
    b_fc = jnp.pad(raw["b_fc"], ((0, Op - O),))[None, :]                         # (1, Op)
    prepped["w_fc"] = w_fc.astype(compute_dtype)
    prepped["b_fc"] = b_fc.astype(jnp.float32)
    return prepped


# ------------------------------- full network --------------------------------
@functools.partial(jax.jit, static_argnames=("output_size", "single_buffer_weights"))
def lstm_network_forward(params, x_bti, *, output_size, single_buffer_weights=True):
    """x_bti: (B, T, input_size) -> (B, output_size) float32."""
    B, T, in_feat = x_bti.shape
    layers = params["layers"]
    num_layers = len(layers)
    four_hp = layers[0]["w_hh"].shape[1]
    Hp = four_hp // 4
    Op = params["w_fc"].shape[1]
    Bp = _round_up(B, 8)          # fill sublanes

    TT = min(T, 32)               # timesteps per grid step (never degenerates to 1)
    Tp = _round_up(T, TT)         # pad time; tail timesteps are masked in-kernel

    # time-major, pad batch to 8 sublanes and time to a TT multiple, flatten to rows
    x_tbi = jnp.transpose(x_bti, (1, 0, 2)).astype(jnp.float32)
    x_tbi = jnp.pad(x_tbi, ((0, Tp - T), (0, Bp - B), (0, 0)))
    x_rows = x_tbi.reshape(Tp * Bp, in_feat)

    def wspec(shape):
        # Constant-index weight blocks are DMA'd once -> single-buffer them to save VMEM (v7x).
        idx = lambda s: (0,) * len(shape)
        if single_buffer_weights:
            return pl.BlockSpec(shape, idx, pipeline_mode=pl.Buffered(1))
        return pl.BlockSpec(shape, idx)

    inputs = [x_rows, layers[0]["w_ih"], layers[0]["b"], layers[0]["w_hh"]]
    in_specs = [
        pl.BlockSpec((TT * Bp, in_feat), lambda s: (s, 0)),
        wspec((in_feat, four_hp)),
        wspec((1, four_hp)),
        wspec((Hp, four_hp)),
    ]
    for lp in layers[1:]:
        inputs += [lp["w_xh"], lp["b"]]
        in_specs += [wspec((2 * Hp, four_hp)), wspec((1, four_hp))]
    inputs += [params["w_fc"], params["b_fc"]]
    in_specs += [wspec((Hp, Op)), wspec((1, Op))]

    out_padded = pl.pallas_call(
        functools.partial(_fused_lstm_fc_kernel, num_layers, T, TT, Hp),
        out_shape=jax.ShapeDtypeStruct((Bp, Op), jnp.float32),
        grid_spec=pltpu.PrefetchScalarGridSpec(
            num_scalar_prefetch=0,
            grid=(Tp // TT,),
            in_specs=in_specs,
            out_specs=pl.BlockSpec((Bp, Op), lambda s: (0, 0)),
            scratch_shapes=[
                pltpu.VMEM((TT * Bp, four_hp), jnp.float32),    # block layer-0 x-projection
                pltpu.VMEM((num_layers, Bp, Hp), jnp.float32),  # h per layer
                pltpu.VMEM((num_layers, Bp, Hp), jnp.float32),  # c per layer
            ],
        ),
        compiler_params=pltpu.CompilerParams(
            dimension_semantics=("arbitrary",),   # time recurrence carries state -> sequential
            vmem_limit_bytes=48 * 1024 * 1024,    # explicit headroom, below v7x's 64 MiB
        ),
    )(*inputs)

    return out_padded[:B, :output_size]


# ------------------------------ pure-JAX reference ----------------------------
def _reference_forward(raw, x_bti):
    B, T, _ = x_bti.shape
    h_seq = x_bti
    for lp in raw["layers"]:
        H = lp["w_hh"].shape[1]
        w_ih, w_hh = lp["w_ih"].T, lp["w_hh"].T
        b = (lp["b_ih"] + lp["b_hh"])[None, :]
        h = jnp.zeros((B, H), jnp.float32)
        c = jnp.zeros((B, H), jnp.float32)
        outs = []
        for t in range(T):
            gates = h_seq[:, t, :] @ w_ih + h @ w_hh + b
            i = jax.nn.sigmoid(gates[:, :H])
            f = jax.nn.sigmoid(gates[:, H:2 * H])
            g = jnp.tanh(gates[:, 2 * H:3 * H])
            o = jax.nn.sigmoid(gates[:, 3 * H:])
            c = f * c + i * g
            h = o * jnp.tanh(c)
            outs.append(h)
        h_seq = jnp.stack(outs, axis=1)
    return h_seq[:, -1, :] @ raw["w_fc"].T + raw["b_fc"][None, :]


if __name__ == "__main__":
    B, T = 2, 8
    input_size, hidden_size, num_layers, output_size = 4, 32, 2, 3

    key = jax.random.PRNGKey(0)
    pkey, xkey = jax.random.split(key)
    raw = init_params(pkey, input_size, hidden_size, num_layers, output_size)
    x = jax.random.normal(xkey, (B, T, input_size), jnp.float32)
    ref = _reference_forward(raw, x)

    # f32 path (matches PyTorch numerics); prefer single-buffered constant weights.
    params_f32 = prepare_params(raw, hidden_size, jnp.float32)
    try:
        out = lstm_network_forward(params_f32, x, output_size=output_size,
                                   single_buffer_weights=True)
        jax.block_until_ready(out)
        sb = True
    except Exception:
        # TODO(synk): pipeline_mode=pl.Buffered(1) unsupported on this jax build -> default buffering.
        sb = False
        out = lstm_network_forward(params_f32, x, output_size=output_size,
                                   single_buffer_weights=False)
        jax.block_until_ready(out)
    assert out.shape == (B, output_size)
    err = float(jnp.max(jnp.abs(out - ref)))
    assert err < 2e-3, f"f32 kernel/reference mismatch: {err}"

    # bf16 weight/operand path (v6e/v7x MXU rate); state + accumulation stay f32 -> small drift.
    params_bf16 = prepare_params(raw, hidden_size, jnp.bfloat16)
    out_bf16 = lstm_network_forward(params_bf16, x, output_size=output_size,
                                    single_buffer_weights=sb)
    jax.block_until_ready(out_bf16)
    err_bf16 = float(jnp.max(jnp.abs(out_bf16 - ref)))
    assert err_bf16 < 7.5e-2, f"bf16 kernel/reference mismatch: {err_bf16}"

    print("KERNEL_OK")
</pallas_src>

<mosaic_0001>
module attributes {stable_mosaic.version = 11 : i64} {
  func.func @_fused_lstm_fc_kernel(%arg0: i32, %arg1: memref<64x4xf32, #tpu.memory_space<vmem>>, %arg2: memref<4x512xf32, #tpu.memory_space<vmem>>, %arg3: memref<1x512xf32, #tpu.memory_space<vmem>>, %arg4: memref<128x512xf32, #tpu.memory_space<vmem>>, %arg5: memref<256x512xf32, #tpu.memory_space<vmem>>, %arg6: memref<1x512xf32, #tpu.memory_space<vmem>>, %arg7: memref<128x128xf32, #tpu.memory_space<vmem>>, %arg8: memref<1x128xf32, #tpu.memory_space<vmem>>, %arg9: memref<8x128xf32, #tpu.memory_space<vmem>>, %arg10: memref<64x512xf32, #tpu.memory_space<vmem>>, %arg11: memref<2x8x128xf32, #tpu.memory_space<vmem>>, %arg12: memref<2x8x128xf32, #tpu.memory_space<vmem>>) attributes {dimension_semantics = [#tpu.dimension_semantics<arbitrary>], iteration_bounds = array<i64: 1>, scalar_prefetch = 0 : i64, scratch_operands = 3 : i64, tpu.core_type = #tpu.core_type<tc>, window_params = [{transform_indices = @transform_0, window_bounds = array<i64: 64, 4>}, {pipeline_mode = #tpu.pipeline_mode<synchronous>, transform_indices = @transform_1, window_bounds = array<i64: 4, 512>}, {pipeline_mode = #tpu.pipeline_mode<synchronous>, transform_indices = @transform_2, window_bounds = array<i64: 1, 512>}, {pipeline_mode = #tpu.pipeline_mode<synchronous>, transform_indices = @transform_3, window_bounds = array<i64: 128, 512>}, {pipeline_mode = #tpu.pipeline_mode<synchronous>, transform_indices = @transform_4, window_bounds = array<i64: 256, 512>}, {pipeline_mode = #tpu.pipeline_mode<synchronous>, transform_indices = @transform_5, window_bounds = array<i64: 1, 512>}, {pipeline_mode = #tpu.pipeline_mode<synchronous>, transform_indices = @transform_6, window_bounds = array<i64: 128, 128>}, {pipeline_mode = #tpu.pipeline_mode<synchronous>, transform_indices = @transform_7, window_bounds = array<i64: 1, 128>}, {pipeline_mode = #tpu.pipeline_mode<synchronous>, transform_indices = @transform_8, window_bounds = array<i64: 8, 128>}]} {
    %c0_i32 = arith.constant 0 : i32
    %0 = arith.cmpi eq, %arg0, %c0_i32 : i32
    %1 = arith.extui %0 : i1 to i32
    %c0_i32_0 = arith.constant 0 : i32
    %2 = arith.cmpi ne, %1, %c0_i32_0 : i32
    scf.if %2 {
      %cst_116 = arith.constant 0.000000e+00 : f32
      %372 = vector.broadcast %cst_116 : f32 to vector<2x8x128xf32>
      %c0_117 = arith.constant 0 : index
      %c0_118 = arith.constant 0 : index
      %c0_119 = arith.constant 0 : index
      %373 = vector.load %arg11[%c0_117, %c0_118, %c0_119] : memref<2x8x128xf32, #tpu.memory_space<vmem>>, vector<2x8x128xf32>
      tpu.vector_store %arg11[%c0_117, %c0_118, %c0_119], %372 {strides = array<i32>} : memref<2x8x128xf32, #tpu.memory_space<vmem>>, vector<2x8x128xf32>,
      %cst_120 = arith.constant 0.000000e+00 : f32
      %374 = vector.broadcast %cst_120 : f32 to vector<2x8x128xf32>
      %c0_121 = arith.constant 0 : index
      %c0_122 = arith.constant 0 : index
      %c0_123 = arith.constant 0 : index
      %375 = vector.load %arg12[%c0_121, %c0_122, %c0_123] : memref<2x8x128xf32, #tpu.memory_space<vmem>>, vector<2x8x128xf32>
      tpu.vector_store %arg12[%c0_121, %c0_122, %c0_123], %374 {strides = array<i32>} : memref<2x8x128xf32, #tpu.memory_space<vmem>>, vector<2x8x128xf32>,
    } else {
    }
    %c0 = arith.constant 0 : index
    %c0_1 = arith.constant 0 : index
    %3 = vector.load %arg1[%c0, %c0_1] : memref<64x4xf32, #tpu.memory_space<vmem>>, vector<64x4xf32>
    %c0_2 = arith.constant 0 : index
    %c0_3 = arith.constant 0 : index
    %4 = vector.load %arg2[%c0_2, %c0_3] : memref<4x512xf32, #tpu.memory_space<vmem>>, vector<4x512xf32>
    %cst = arith.constant dense<0.000000e+00> : vector<64x512xf32>
    %5 = tpu.matmul %3, %4, %cst {dimension_numbers = #tpu.dot_dimension_numbers<[1], [0], [0], [1], [0, 0, 1, 1], [], []>} : vector<64x4xf32>, vector<4x512xf32>, vector<64x512xf32> -> vector<64x512xf32>
    %c0_4 = arith.constant 0 : index
    %c0_5 = arith.constant 0 : index
    %6 = vector.load %arg3[%c0_4, %c0_5] : memref<1x512xf32, #tpu.memory_space<vmem>>, vector<1x512xf32>
    %7 = vector.broadcast %6 : vector<1x512xf32> to vector<64x512xf32>
    %8 = arith.addf %5, %7 : vector<64x512xf32>
    %c0_6 = arith.constant 0 : index
    %c0_7 = arith.constant 0 : index
    %9 = vector.load %arg10[%c0_6, %c0_7] : memref<64x512xf32, #tpu.memory_space<vmem>>, vector<64x512xf32>
    tpu.vector_store %arg10[%c0_6, %c0_7], %8 {strides = array<i32>} : memref<64x512xf32, #tpu.memory_space<vmem>>, vector<64x512xf32>,
    %c0_8 = arith.constant 0 : index
    %c0_9 = arith.constant 0 : index
    %10 = vector.load %arg6[%c0_8, %c0_9] : memref<1x512xf32, #tpu.memory_space<vmem>>, vector<1x512xf32>
    %11 = vector.shape_cast %10 : vector<1x512xf32> to vector<1x512xf32>
    %12 = vector.broadcast %11 : vector<1x512xf32> to vector<8x512xf32>
    %c0_10 = arith.constant 0 : index
    %c0_11 = arith.constant 0 : index
    %c0_12 = arith.constant 0 : index
    %13 = vector.load %arg11[%c0_10, %c0_11, %c0_12] : memref<2x8x128xf32, #tpu.memory_space<vmem>>, vector<1x8x128xf32>
    %14 = vector.shape_cast %13 : vector<1x8x128xf32> to vector<8x128xf32>
    %c1 = arith.constant 1 : index
    %c0_13 = arith.constant 0 : index
    %c0_14 = arith.constant 0 : index
    %15 = vector.load %arg11[%c1, %c0_13, %c0_14] : memref<2x8x128xf32, #tpu.memory_space<vmem>>, vector<1x8x128xf32>
    %16 = vector.shape_cast %15 : vector<1x8x128xf32> to vector<8x128xf32>
    %c0_15 = arith.constant 0 : index
    %c0_16 = arith.constant 0 : index
    %c0_17 = arith.constant 0 : index
    %17 = vector.load %arg12[%c0_15, %c0_16, %c0_17] : memref<2x8x128xf32, #tpu.memory_space<vmem>>, vector<1x8x128xf32>
    %18 = vector.shape_cast %17 : vector<1x8x128xf32> to vector<8x128xf32>
    %c1_18 = arith.constant 1 : index
    %c0_19 = arith.constant 0 : index
    %c0_20 = arith.constant 0 : index
    %19 = vector.load %arg12[%c1_18, %c0_19, %c0_20] : memref<2x8x128xf32, #tpu.memory_space<vmem>>, vector<1x8x128xf32>
    %20 = vector.shape_cast %19 : vector<1x8x128xf32> to vector<8x128xf32>
    %c0_i32_21 = arith.constant 0 : i32
    %c8_i32 = arith.constant 8 : i32
    %21 = arith.muli %c0_i32_21, %c8_i32 : i32
    %22 = arith.index_cast %21 : i32 to index
    %c0_22 = arith.constant 0 : index
    %23 = vector.load %arg10[%22, %c0_22] : memref<64x512xf32, #tpu.memory_space<vmem>>, vector<8x512xf32>
    %c0_23 = arith.constant 0 : index
    %c0_24 = arith.constant 0 : index
    %24 = vector.load %arg4[%c0_23, %c0_24] : memref<128x512xf32, #tpu.memory_space<vmem>>, vector<128x512xf32>
    %cst_25 = arith.constant dense<0.000000e+00> : vector<8x512xf32>
    %25 = tpu.matmul %14, %24, %cst_25 {dimension_numbers = #tpu.dot_dimension_numbers<[1], [0], [0], [1], [0, 0, 1, 1], [], []>} : vector<8x128xf32>, vector<128x512xf32>, vector<8x512xf32> -> vector<8x512xf32>
    %26 = arith.addf %23, %25 : vector<8x512xf32>
    %27 = vector.extract_strided_slice %26 {offsets = [0, 0], sizes = [8, 384], strides = [1, 1]} : vector<8x512xf32> to vector<8x384xf32>
    %28 = arith.negf %27 : vector<8x384xf32>
    %29 = math.exp %28 : vector<8x384xf32>
    %cst_26 = arith.constant 1.000000e+00 : f32
    %30 = vector.broadcast %cst_26 : f32 to vector<8x384xf32>
    %31 = arith.addf %30, %29 : vector<8x384xf32>
    %32 = arith.divf %30, %31 : vector<8x384xf32>
    %33 = vector.extract_strided_slice %26 {offsets = [0, 384], sizes = [8, 128], strides = [1, 1]} : vector<8x512xf32> to vector<8x128xf32>
    %34 = math.tanh %33 : vector<8x128xf32>
    %35 = vector.extract_strided_slice %32 {offsets = [0, 0], sizes = [8, 128], strides = [1, 1]} : vector<8x384xf32> to vector<8x128xf32>
    %36 = vector.extract_strided_slice %32 {offsets = [0, 128], sizes = [8, 128], strides = [1, 1]} : vector<8x384xf32> to vector<8x128xf32>
    %37 = vector.extract_strided_slice %32 {offsets = [0, 256], sizes = [8, 128], strides = [1, 1]} : vector<8x384xf32> to vector<8x128xf32>
    %38 = arith.mulf %36, %18 : vector<8x128xf32>
    %39 = arith.mulf %35, %34 : vector<8x128xf32>
    %40 = arith.addf %38, %39 : vector<8x128xf32>
    %41 = math.tanh %40 : vector<8x128xf32>
    %42 = arith.mulf %37, %41 : vector<8x128xf32>
    %43 = tpu.concatenate %42, %16 in 1 : vector<8x128xf32>, vector<8x128xf32> -> vector<8x256xf32>
    %c0_27 = arith.constant 0 : index
    %c0_28 = arith.constant 0 : index
    %44 = vector.load %arg5[%c0_27, %c0_28] : memref<256x512xf32, #tpu.memory_space<vmem>>, vector<256x512xf32>
    %cst_29 = arith.constant dense<0.000000e+00> : vector<8x512xf32>
    %45 = tpu.matmul %43, %44, %cst_29 {dimension_numbers = #tpu.dot_dimension_numbers<[1], [0], [0], [1], [0, 0, 1, 1], [], []>} : vector<8x256xf32>, vector<256x512xf32>, vector<8x512xf32> -> vector<8x512xf32>
    %46 = arith.addf %45, %12 : vector<8x512xf32>
    %47 = vector.extract_strided_slice %46 {offsets = [0, 0], sizes = [8, 384], strides = [1, 1]} : vector<8x512xf32> to vector<8x384xf32>
    %48 = arith.negf %47 : vector<8x384xf32>
    %49 = math.exp %48 : vector<8x384xf32>
    %cst_30 = arith.constant 1.000000e+00 : f32
    %50 = vector.broadcast %cst_30 : f32 to vector<8x384xf32>
    %51 = arith.addf %50, %49 : vector<8x384xf32>
    %52 = arith.divf %50, %51 : vector<8x384xf32>
    %53 = vector.extract_strided_slice %46 {offsets = [0, 384], sizes = [8, 128], strides = [1, 1]} : vector<8x512xf32> to vector<8x128xf32>
    %54 = math.tanh %53 : vector<8x128xf32>
    %55 = vector.extract_strided_slice %52 {offsets = [0, 0], sizes = [8, 128], strides = [1, 1]} : vector<8x384xf32> to vector<8x128xf32>
    %56 = vector.extract_strided_slice %52 {offsets = [0, 128], sizes = [8, 128], strides = [1, 1]} : vector<8x384xf32> to vector<8x128xf32>
    %57 = vector.extract_strided_slice %52 {offsets = [0, 256], sizes = [8, 128], strides = [1, 1]} : vector<8x384xf32> to vector<8x128xf32>
    %58 = arith.mulf %56, %20 : vector<8x128xf32>
    %59 = arith.mulf %55, %54 : vector<8x128xf32>
    %60 = arith.addf %58, %59 : vector<8x128xf32>
    %61 = math.tanh %60 : vector<8x128xf32>
    %62 = arith.mulf %57, %61 : vector<8x128xf32>
    %c1_i32 = arith.constant 1 : i32
    %c8_i32_31 = arith.constant 8 : i32
    %63 = arith.muli %c1_i32, %c8_i32_31 : i32
    %64 = arith.index_cast %63 : i32 to index
    %c0_32 = arith.constant 0 : index
    %65 = vector.load %arg10[%64, %c0_32] : memref<64x512xf32, #tpu.memory_space<vmem>>, vector<8x512xf32>
    %c0_33 = arith.constant 0 : index
    %c0_34 = arith.constant 0 : index
    %66 = vector.load %arg4[%c0_33, %c0_34] : memref<128x512xf32, #tpu.memory_space<vmem>>, vector<128x512xf32>
    %cst_35 = arith.constant dense<0.000000e+00> : vector<8x512xf32>
    %67 = tpu.matmul %42, %66, %cst_35 {dimension_numbers = #tpu.dot_dimension_numbers<[1], [0], [0], [1], [0, 0, 1, 1], [], []>} : vector<8x128xf32>, vector<128x512xf32>, vector<8x512xf32> -> vector<8x512xf32>
    %68 = arith.addf %65, %67 : vector<8x512xf32>
    %69 = vector.extract_strided_slice %68 {offsets = [0, 0], sizes = [8, 384], strides = [1, 1]} : vector<8x512xf32> to vector<8x384xf32>
    %70 = arith.negf %69 : vector<8x384xf32>
    %71 = math.exp %70 : vector<8x384xf32>
    %cst_36 = arith.constant 1.000000e+00 : f32
    %72 = vector.broadcast %cst_36 : f32 to vector<8x384xf32>
    %73 = arith.addf %72, %71 : vector<8x384xf32>
    %74 = arith.divf %72, %73 : vector<8x384xf32>
    %75 = vector.extract_strided_slice %68 {offsets = [0, 384], sizes = [8, 128], strides = [1, 1]} : vector<8x512xf32> to vector<8x128xf32>
    %76 = math.tanh %75 : vector<8x128xf32>
    %77 = vector.extract_strided_slice %74 {offsets = [0, 0], sizes = [8, 128], strides = [1, 1]} : vector<8x384xf32> to vector<8x128xf32>
    %78 = vector.extract_strided_slice %74 {offsets = [0, 128], sizes = [8, 128], strides = [1, 1]} : vector<8x384xf32> to vector<8x128xf32>
    %79 = vector.extract_strided_slice %74 {offsets = [0, 256], sizes = [8, 128], strides = [1, 1]} : vector<8x384xf32> to vector<8x128xf32>
    %80 = arith.mulf %78, %40 : vector<8x128xf32>
    %81 = arith.mulf %77, %76 : vector<8x128xf32>
    %82 = arith.addf %80, %81 : vector<8x128xf32>
    %83 = math.tanh %82 : vector<8x128xf32>
    %84 = arith.mulf %79, %83 : vector<8x128xf32>
    %85 = tpu.concatenate %84, %62 in 1 : vector<8x128xf32>, vector<8x128xf32> -> vector<8x256xf32>
    %c0_37 = arith.constant 0 : index
    %c0_38 = arith.constant 0 : index
    %86 = vector.load %arg5[%c0_37, %c0_38] : memref<256x512xf32, #tpu.memory_space<vmem>>, vector<256x512xf32>
    %cst_39 = arith.constant dense<0.000000e+00> : vector<8x512xf32>
    %87 = tpu.matmul %85, %86, %cst_39 {dimension_numbers = #tpu.dot_dimension_numbers<[1], [0], [0], [1], [0, 0, 1, 1], [], []>} : vector<8x256xf32>, vector<256x512xf32>, vector<8x512xf32> -> vector<8x512xf32>
    %88 = arith.addf %87, %12 : vector<8x512xf32>
    %89 = vector.extract_strided_slice %88 {offsets = [0, 0], sizes = [8, 384], strides = [1, 1]} : vector<8x512xf32> to vector<8x384xf32>
    %90 = arith.negf %89 : vector<8x384xf32>
    %91 = math.exp %90 : vector<8x384xf32>
    %cst_40 = arith.constant 1.000000e+00 : f32
    %92 = vector.broadcast %cst_40 : f32 to vector<8x384xf32>
    %93 = arith.addf %92, %91 : vector<8x384xf32>
    %94 = arith.divf %92, %93 : vector<8x384xf32>
    %95 = vector.extract_strided_slice %88 {offsets = [0, 384], sizes = [8, 128], strides = [1, 1]} : vector<8x512xf32> to vector<8x128xf32>
    %96 = math.tanh %95 : vector<8x128xf32>
    %97 = vector.extract_strided_slice %94 {offsets = [0, 0], sizes = [8, 128], strides = [1, 1]} : vector<8x384xf32> to vector<8x128xf32>
    %98 = vector.extract_strided_slice %94 {offsets = [0, 128], sizes = [8, 128], strides = [1, 1]} : vector<8x384xf32> to vector<8x128xf32>
    %99 = vector.extract_strided_slice %94 {offsets = [0, 256], sizes = [8, 128], strides = [1, 1]} : vector<8x384xf32> to vector<8x128xf32>
    %100 = arith.mulf %98, %60 : vector<8x128xf32>
    %101 = arith.mulf %97, %96 : vector<8x128xf32>
    %102 = arith.addf %100, %101 : vector<8x128xf32>
    %103 = math.tanh %102 : vector<8x128xf32>
    %104 = arith.mulf %99, %103 : vector<8x128xf32>
    %c2_i32 = arith.constant 2 : i32
    %c8_i32_41 = arith.constant 8 : i32
    %105 = arith.muli %c2_i32, %c8_i32_41 : i32
    %106 = arith.index_cast %105 : i32 to index
    %c0_42 = arith.constant 0 : index
    %107 = vector.load %arg10[%106, %c0_42] : memref<64x512xf32, #tpu.memory_space<vmem>>, vector<8x512xf32>
    %c0_43 = arith.constant 0 : index
    %c0_44 = arith.constant 0 : index
    %108 = vector.load %arg4[%c0_43, %c0_44] : memref<128x512xf32, #tpu.memory_space<vmem>>, vector<128x512xf32>
    %cst_45 = arith.constant dense<0.000000e+00> : vector<8x512xf32>
    %109 = tpu.matmul %84, %108, %cst_45 {dimension_numbers = #tpu.dot_dimension_numbers<[1], [0], [0], [1], [0, 0, 1, 1], [], []>} : vector<8x128xf32>, vector<128x512xf32>, vector<8x512xf32> -> vector<8x512xf32>
    %110 = arith.addf %107, %109 : vector<8x512xf32>
    %111 = vector.extract_strided_slice %110 {offsets = [0, 0], sizes = [8, 384], strides = [1, 1]} : vector<8x512xf32> to vector<8x384xf32>
    %112 = arith.negf %111 : vector<8x384xf32>
    %113 = math.exp %112 : vector<8x384xf32>
    %cst_46 = arith.constant 1.000000e+00 : f32
    %114 = vector.broadcast %cst_46 : f32 to vector<8x384xf32>
    %115 = arith.addf %114, %113 : vector<8x384xf32>
    %116 = arith.divf %114, %115 : vector<8x384xf32>
    %117 = vector.extract_strided_slice %110 {offsets = [0, 384], sizes = [8, 128], strides = [1, 1]} : vector<8x512xf32> to vector<8x128xf32>
    %118 = math.tanh %117 : vector<8x128xf32>
    %119 = vector.extract_strided_slice %116 {offsets = [0, 0], sizes = [8, 128], strides = [1, 1]} : vector<8x384xf32> to vector<8x128xf32>
    %120 = vector.extract_strided_slice %116 {offsets = [0, 128], sizes = [8, 128], strides = [1, 1]} : vector<8x384xf32> to vector<8x128xf32>
    %121 = vector.extract_strided_slice %116 {offsets = [0, 256], sizes = [8, 128], strides = [1, 1]} : vector<8x384xf32> to vector<8x128xf32>
    %122 = arith.mulf %120, %82 : vector<8x128xf32>
    %123 = arith.mulf %119, %118 : vector<8x128xf32>
    %124 = arith.addf %122, %123 : vector<8x128xf32>
    %125 = math.tanh %124 : vector<8x128xf32>
    %126 = arith.mulf %121, %125 : vector<8x128xf32>
    %127 = tpu.concatenate %126, %104 in 1 : vector<8x128xf32>, vector<8x128xf32> -> vector<8x256xf32>
    %c0_47 = arith.constant 0 : index
    %c0_48 = arith.constant 0 : index
    %128 = vector.load %arg5[%c0_47, %c0_48] : memref<256x512xf32, #tpu.memory_space<vmem>>, vector<256x512xf32>
    %cst_49 = arith.constant dense<0.000000e+00> : vector<8x512xf32>
    %129 = tpu.matmul %127, %128, %cst_49 {dimension_numbers = #tpu.dot_dimension_numbers<[1], [0], [0], [1], [0, 0, 1, 1], [], []>} : vector<8x256xf32>, vector<256x512xf32>, vector<8x512xf32> -> vector<8x512xf32>
    %130 = arith.addf %129, %12 : vector<8x512xf32>
    %131 = vector.extract_strided_slice %130 {offsets = [0, 0], sizes = [8, 384], strides = [1, 1]} : vector<8x512xf32> to vector<8x384xf32>
    %132 = arith.negf %131 : vector<8x384xf32>
    %133 = math.exp %132 : vector<8x384xf32>
    %cst_50 = arith.constant 1.000000e+00 : f32
    %134 = vector.broadcast %cst_50 : f32 to vector<8x384xf32>
    %135 = arith.addf %134, %133 : vector<8x384xf32>
    %136 = arith.divf %134, %135 : vector<8x384xf32>
    %137 = vector.extract_strided_slice %130 {offsets = [0, 384], sizes = [8, 128], strides = [1, 1]} : vector<8x512xf32> to vector<8x128xf32>
    %138 = math.tanh %137 : vector<8x128xf32>
    %139 = vector.extract_strided_slice %136 {offsets = [0, 0], sizes = [8, 128], strides = [1, 1]} : vector<8x384xf32> to vector<8x128xf32>
    %140 = vector.extract_strided_slice %136 {offsets = [0, 128], sizes = [8, 128], strides = [1, 1]} : vector<8x384xf32> to vector<8x128xf32>
    %141 = vector.extract_strided_slice %136 {offsets = [0, 256], sizes = [8, 128], strides = [1, 1]} : vector<8x384xf32> to vector<8x128xf32>
    %142 = arith.mulf %140, %102 : vector<8x128xf32>
    %143 = arith.mulf %139, %138 : vector<8x128xf32>
    %144 = arith.addf %142, %143 : vector<8x128xf32>
    %145 = math.tanh %144 : vector<8x128xf32>
    %146 = arith.mulf %141, %145 : vector<8x128xf32>
    %c3_i32 = arith.constant 3 : i32
    %c8_i32_51 = arith.constant 8 : i32
    %147 = arith.muli %c3_i32, %c8_i32_51 : i32
    %148 = arith.index_cast %147 : i32 to index
    %c0_52 = arith.constant 0 : index
    %149 = vector.load %arg10[%148, %c0_52] : memref<64x512xf32, #tpu.memory_space<vmem>>, vector<8x512xf32>
    %c0_53 = arith.constant 0 : index
    %c0_54 = arith.constant 0 : index
    %150 = vector.load %arg4[%c0_53, %c0_54] : memref<128x512xf32, #tpu.memory_space<vmem>>, vector<128x512xf32>
    %cst_55 = arith.constant dense<0.000000e+00> : vector<8x512xf32>
    %151 = tpu.matmul %126, %150, %cst_55 {dimension_numbers = #tpu.dot_dimension_numbers<[1], [0], [0], [1], [0, 0, 1, 1], [], []>} : vector<8x128xf32>, vector<128x512xf32>, vector<8x512xf32> -> vector<8x512xf32>
    %152 = arith.addf %149, %151 : vector<8x512xf32>
    %153 = vector.extract_strided_slice %152 {offsets = [0, 0], sizes = [8, 384], strides = [1, 1]} : vector<8x512xf32> to vector<8x384xf32>
    %154 = arith.negf %153 : vector<8x384xf32>
    %155 = math.exp %154 : vector<8x384xf32>
    %cst_56 = arith.constant 1.000000e+00 : f32
    %156 = vector.broadcast %cst_56 : f32 to vector<8x384xf32>
    %157 = arith.addf %156, %155 : vector<8x384xf32>
    %158 = arith.divf %156, %157 : vector<8x384xf32>
    %159 = vector.extract_strided_slice %152 {offsets = [0, 384], sizes = [8, 128], strides = [1, 1]} : vector<8x512xf32> to vector<8x128xf32>
    %160 = math.tanh %159 : vector<8x128xf32>
    %161 = vector.extract_strided_slice %158 {offsets = [0, 0], sizes = [8, 128], strides = [1, 1]} : vector<8x384xf32> to vector<8x128xf32>
    %162 = vector.extract_strided_slice %158 {offsets = [0, 128], sizes = [8, 128], strides = [1, 1]} : vector<8x384xf32> to vector<8x128xf32>
    %163 = vector.extract_strided_slice %158 {offsets = [0, 256], sizes = [8, 128], strides = [1, 1]} : vector<8x384xf32> to vector<8x128xf32>
    %164 = arith.mulf %162, %124 : vector<8x128xf32>
    %165 = arith.mulf %161, %160 : vector<8x128xf32>
    %166 = arith.addf %164, %165 : vector<8x128xf32>
    %167 = math.tanh %166 : vector<8x128xf32>
    %168 = arith.mulf %163, %167 : vector<8x128xf32>
    %169 = tpu.concatenate %168, %146 in 1 : vector<8x128xf32>, vector<8x128xf32> -> vector<8x256xf32>
    %c0_57 = arith.constant 0 : index
    %c0_58 = arith.constant 0 : index
    %170 = vector.load %arg5[%c0_57, %c0_58] : memref<256x512xf32, #tpu.memory_space<vmem>>, vector<256x512xf32>
    %cst_59 = arith.constant dense<0.000000e+00> : vector<8x512xf32>
    %171 = tpu.matmul %169, %170, %cst_59 {dimension_numbers = #tpu.dot_dimension_numbers<[1], [0], [0], [1], [0, 0, 1, 1], [], []>} : vector<8x256xf32>, vector<256x512xf32>, vector<8x512xf32> -> vector<8x512xf32>
    %172 = arith.addf %171, %12 : vector<8x512xf32>
    %173 = vector.extract_strided_slice %172 {offsets = [0, 0], sizes = [8, 384], strides = [1, 1]} : vector<8x512xf32> to vector<8x384xf32>
    %174 = arith.negf %173 : vector<8x384xf32>
    %175 = math.exp %174 : vector<8x384xf32>
    %cst_60 = arith.constant 1.000000e+00 : f32
    %176 = vector.broadcast %cst_60 : f32 to vector<8x384xf32>
    %177 = arith.addf %176, %175 : vector<8x384xf32>
    %178 = arith.divf %176, %177 : vector<8x384xf32>
    %179 = vector.extract_strided_slice %172 {offsets = [0, 384], sizes = [8, 128], strides = [1, 1]} : vector<8x512xf32> to vector<8x128xf32>
    %180 = math.tanh %179 : vector<8x128xf32>
    %181 = vector.extract_strided_slice %178 {offsets = [0, 0], sizes = [8, 128], strides = [1, 1]} : vector<8x384xf32> to vector<8x128xf32>
    %182 = vector.extract_strided_slice %178 {offsets = [0, 128], sizes = [8, 128], strides = [1, 1]} : vector<8x384xf32> to vector<8x128xf32>
    %183 = vector.extract_strided_slice %178 {offsets = [0, 256], sizes = [8, 128], strides = [1, 1]} : vector<8x384xf32> to vector<8x128xf32>
    %184 = arith.mulf %182, %144 : vector<8x128xf32>
    %185 = arith.mulf %181, %180 : vector<8x128xf32>
    %186 = arith.addf %184, %185 : vector<8x128xf32>
    %187 = math.tanh %186 : vector<8x128xf32>
    %188 = arith.mulf %183, %187 : vector<8x128xf32>
    %c4_i32 = arith.constant 4 : i32
    %c8_i32_61 = arith.constant 8 : i32
    %189 = arith.muli %c4_i32, %c8_i32_61 : i32
    %190 = arith.index_cast %189 : i32 to index
    %c0_62 = arith.constant 0 : index
    %191 = vector.load %arg10[%190, %c0_62] : memref<64x512xf32, #tpu.memory_space<vmem>>, vector<8x512xf32>
    %c0_63 = arith.constant 0 : index
    %c0_64 = arith.constant 0 : index
    %192 = vector.load %arg4[%c0_63, %c0_64] : memref<128x512xf32, #tpu.memory_space<vmem>>, vector<128x512xf32>
    %cst_65 = arith.constant dense<0.000000e+00> : vector<8x512xf32>
    %193 = tpu.matmul %168, %192, %cst_65 {dimension_numbers = #tpu.dot_dimension_numbers<[1], [0], [0], [1], [0, 0, 1, 1], [], []>} : vector<8x128xf32>, vector<128x512xf32>, vector<8x512xf32> -> vector<8x512xf32>
    %194 = arith.addf %191, %193 : vector<8x512xf32>
    %195 = vector.extract_strided_slice %194 {offsets = [0, 0], sizes = [8, 384], strides = [1, 1]} : vector<8x512xf32> to vector<8x384xf32>
    %196 = arith.negf %195 : vector<8x384xf32>
    %197 = math.exp %196 : vector<8x384xf32>
    %cst_66 = arith.constant 1.000000e+00 : f32
    %198 = vector.broadcast %cst_66 : f32 to vector<8x384xf32>
    %199 = arith.addf %198, %197 : vector<8x384xf32>
    %200 = arith.divf %198, %199 : vector<8x384xf32>
    %201 = vector.extract_strided_slice %194 {offsets = [0, 384], sizes = [8, 128], strides = [1, 1]} : vector<8x512xf32> to vector<8x128xf32>
    %202 = math.tanh %201 : vector<8x128xf32>
    %203 = vector.extract_strided_slice %200 {offsets = [0, 0], sizes = [8, 128], strides = [1, 1]} : vector<8x384xf32> to vector<8x128xf32>
    %204 = vector.extract_strided_slice %200 {offsets = [0, 128], sizes = [8, 128], strides = [1, 1]} : vector<8x384xf32> to vector<8x128xf32>
    %205 = vector.extract_strided_slice %200 {offsets = [0, 256], sizes = [8, 128], strides = [1, 1]} : vector<8x384xf32> to vector<8x128xf32>
    %206 = arith.mulf %204, %166 : vector<8x128xf32>
    %207 = arith.mulf %203, %202 : vector<8x128xf32>
    %208 = arith.addf %206, %207 : vector<8x128xf32>
    %209 = math.tanh %208 : vector<8x128xf32>
    %210 = arith.mulf %205, %209 : vector<8x128xf32>
    %211 = tpu.concatenate %210, %188 in 1 : vector<8x128xf32>, vector<8x128xf32> -> vector<8x256xf32>
    %c0_67 = arith.constant 0 : index
    %c0_68 = arith.constant 0 : index
    %212 = vector.load %arg5[%c0_67, %c0_68] : memref<256x512xf32, #tpu.memory_space<vmem>>, vector<256x512xf32>
    %cst_69 = arith.constant dense<0.000000e+00> : vector<8x512xf32>
    %213 = tpu.matmul %211, %212, %cst_69 {dimension_numbers = #tpu.dot_dimension_numbers<[1], [0], [0], [1], [0, 0, 1, 1], [], []>} : vector<8x256xf32>, vector<256x512xf32>, vector<8x512xf32> -> vector<8x512xf32>
    %214 = arith.addf %213, %12 : vector<8x512xf32>
    %215 = vector.extract_strided_slice %214 {offsets = [0, 0], sizes = [8, 384], strides = [1, 1]} : vector<8x512xf32> to vector<8x384xf32>
    %216 = arith.negf %215 : vector<8x384xf32>
    %217 = math.exp %216 : vector<8x384xf32>
    %cst_70 = arith.constant 1.000000e+00 : f32
    %218 = vector.broadcast %cst_70 : f32 to vector<8x384xf32>
    %219 = arith.addf %218, %217 : vector<8x384xf32>
    %220 = arith.divf %218, %219 : vector<8x384xf32>
    %221 = vector.extract_strided_slice %214 {offsets = [0, 384], sizes = [8, 128], strides = [1, 1]} : vector<8x512xf32> to vector<8x128xf32>
    %222 = math.tanh %221 : vector<8x128xf32>
    %223 = vector.extract_strided_slice %220 {offsets = [0, 0], sizes = [8, 128], strides = [1, 1]} : vector<8x384xf32> to vector<8x128xf32>
    %224 = vector.extract_strided_slice %220 {offsets = [0, 128], sizes = [8, 128], strides = [1, 1]} : vector<8x384xf32> to vector<8x128xf32>
    %225 = vector.extract_strided_slice %220 {offsets = [0, 256], sizes = [8, 128], strides = [1, 1]} : vector<8x384xf32> to vector<8x128xf32>
    %226 = arith.mulf %224, %186 : vector<8x128xf32>
    %227 = arith.mulf %223, %222 : vector<8x128xf32>
    %228 = arith.addf %226, %227 : vector<8x128xf32>
    %229 = math.tanh %228 : vector<8x128xf32>
    %230 = arith.mulf %225, %229 : vector<8x128xf32>
    %c5_i32 = arith.constant 5 : i32
    %c8_i32_71 = arith.constant 8 : i32
    %231 = arith.muli %c5_i32, %c8_i32_71 : i32
    %232 = arith.index_cast %231 : i32 to index
    %c0_72 = arith.constant 0 : index
    %233 = vector.load %arg10[%232, %c0_72] : memref<64x512xf32, #tpu.memory_space<vmem>>, vector<8x512xf32>
    %c0_73 = arith.constant 0 : index
    %c0_74 = arith.constant 0 : index
    %234 = vector.load %arg4[%c0_73, %c0_74] : memref<128x512xf32, #tpu.memory_space<vmem>>, vector<128x512xf32>
    %cst_75 = arith.constant dense<0.000000e+00> : vector<8x512xf32>
    %235 = tpu.matmul %210, %234, %cst_75 {dimension_numbers = #tpu.dot_dimension_numbers<[1], [0], [0], [1], [0, 0, 1, 1], [], []>} : vector<8x128xf32>, vector<128x512xf32>, vector<8x512xf32> -> vector<8x512xf32>
    %236 = arith.addf %233, %235 : vector<8x512xf32>
    %237 = vector.extract_strided_slice %236 {offsets = [0, 0], sizes = [8, 384], strides = [1, 1]} : vector<8x512xf32> to vector<8x384xf32>
    %238 = arith.negf %237 : vector<8x384xf32>
    %239 = math.exp %238 : vector<8x384xf32>
    %cst_76 = arith.constant 1.000000e+00 : f32
    %240 = vector.broadcast %cst_76 : f32 to vector<8x384xf32>
    %241 = arith.addf %240, %239 : vector<8x384xf32>
    %242 = arith.divf %240, %241 : vector<8x384xf32>
    %243 = vector.extract_strided_slice %236 {offsets = [0, 384], sizes = [8, 128], strides = [1, 1]} : vector<8x512xf32> to vector<8x128xf32>
    %244 = math.tanh %243 : vector<8x128xf32>
    %245 = vector.extract_strided_slice %242 {offsets = [0, 0], sizes = [8, 128], strides = [1, 1]} : vector<8x384xf32> to vector<8x128xf32>
    %246 = vector.extract_strided_slice %242 {offsets = [0, 128], sizes = [8, 128], strides = [1, 1]} : vector<8x384xf32> to vector<8x128xf32>
    %247 = vector.extract_strided_slice %242 {offsets = [0, 256], sizes = [8, 128], strides = [1, 1]} : vector<8x384xf32> to vector<8x128xf32>
    %248 = arith.mulf %246, %208 : vector<8x128xf32>
    %249 = arith.mulf %245, %244 : vector<8x128xf32>
    %250 = arith.addf %248, %249 : vector<8x128xf32>
    %251 = math.tanh %250 : vector<8x128xf32>
    %252 = arith.mulf %247, %251 : vector<8x128xf32>
    %253 = tpu.concatenate %252, %230 in 1 : vector<8x128xf32>, vector<8x128xf32> -> vector<8x256xf32>
    %c0_77 = arith.constant 0 : index
    %c0_78 = arith.constant 0 : index
    %254 = vector.load %arg5[%c0_77, %c0_78] : memref<256x512xf32, #tpu.memory_space<vmem>>, vector<256x512xf32>
    %cst_79 = arith.constant dense<0.000000e+00> : vector<8x512xf32>
    %255 = tpu.matmul %253, %254, %cst_79 {dimension_numbers = #tpu.dot_dimension_numbers<[1], [0], [0], [1], [0, 0, 1, 1], [], []>} : vector<8x256xf32>, vector<256x512xf32>, vector<8x512xf32> -> vector<8x512xf32>
    %256 = arith.addf %255, %12 : vector<8x512xf32>
    %257 = vector.extract_strided_slice %256 {offsets = [0, 0], sizes = [8, 384], strides = [1, 1]} : vector<8x512xf32> to vector<8x384xf32>
    %258 = arith.negf %257 : vector<8x384xf32>
    %259 = math.exp %258 : vector<8x384xf32>
    %cst_80 = arith.constant 1.000000e+00 : f32
    %260 = vector.broadcast %cst_80 : f32 to vector<8x384xf32>
    %261 = arith.addf %260, %259 : vector<8x384xf32>
    %262 = arith.divf %260, %261 : vector<8x384xf32>
    %263 = vector.extract_strided_slice %256 {offsets = [0, 384], sizes = [8, 128], strides = [1, 1]} : vector<8x512xf32> to vector<8x128xf32>
    %264 = math.tanh %263 : vector<8x128xf32>
    %265 = vector.extract_strided_slice %262 {offsets = [0, 0], sizes = [8, 128], strides = [1, 1]} : vector<8x384xf32> to vector<8x128xf32>
    %266 = vector.extract_strided_slice %262 {offsets = [0, 128], sizes = [8, 128], strides = [1, 1]} : vector<8x384xf32> to vector<8x128xf32>
    %267 = vector.extract_strided_slice %262 {offsets = [0, 256], sizes = [8, 128], strides = [1, 1]} : vector<8x384xf32> to vector<8x128xf32>
    %268 = arith.mulf %266, %228 : vector<8x128xf32>
    %269 = arith.mulf %265, %264 : vector<8x128xf32>
    %270 = arith.addf %268, %269 : vector<8x128xf32>
    %271 = math.tanh %270 : vector<8x128xf32>
    %272 = arith.mulf %267, %271 : vector<8x128xf32>
    %c6_i32 = arith.constant 6 : i32
    %c8_i32_81 = arith.constant 8 : i32
    %273 = arith.muli %c6_i32, %c8_i32_81 : i32
    %274 = arith.index_cast %273 : i32 to index
    %c0_82 = arith.constant 0 : index
    %275 = vector.load %arg10[%274, %c0_82] : memref<64x512xf32, #tpu.memory_space<vmem>>, vector<8x512xf32>
    %c0_83 = arith.constant 0 : index
    %c0_84 = arith.constant 0 : index
    %276 = vector.load %arg4[%c0_83, %c0_84] : memref<128x512xf32, #tpu.memory_space<vmem>>, vector<128x512xf32>
    %cst_85 = arith.constant dense<0.000000e+00> : vector<8x512xf32>
    %277 = tpu.matmul %252, %276, %cst_85 {dimension_numbers = #tpu.dot_dimension_numbers<[1], [0], [0], [1], [0, 0, 1, 1], [], []>} : vector<8x128xf32>, vector<128x512xf32>, vector<8x512xf32> -> vector<8x512xf32>
    %278 = arith.addf %275, %277 : vector<8x512xf32>
    %279 = vector.extract_strided_slice %278 {offsets = [0, 0], sizes = [8, 384], strides = [1, 1]} : vector<8x512xf32> to vector<8x384xf32>
    %280 = arith.negf %279 : vector<8x384xf32>
    %281 = math.exp %280 : vector<8x384xf32>
    %cst_86 = arith.constant 1.000000e+00 : f32
    %282 = vector.broadcast %cst_86 : f32 to vector<8x384xf32>
    %283 = arith.addf %282, %281 : vector<8x384xf32>
    %284 = arith.divf %282, %283 : vector<8x384xf32>
    %285 = vector.extract_strided_slice %278 {offsets = [0, 384], sizes = [8, 128], strides = [1, 1]} : vector<8x512xf32> to vector<8x128xf32>
    %286 = math.tanh %285 : vector<8x128xf32>
    %287 = vector.extract_strided_slice %284 {offsets = [0, 0], sizes = [8, 128], strides = [1, 1]} : vector<8x384xf32> to vector<8x128xf32>
    %288 = vector.extract_strided_slice %284 {offsets = [0, 128], sizes = [8, 128], strides = [1, 1]} : vector<8x384xf32> to vector<8x128xf32>
    %289 = vector.extract_strided_slice %284 {offsets = [0, 256], sizes = [8, 128], strides = [1, 1]} : vector<8x384xf32> to vector<8x128xf32>
    %290 = arith.mulf %288, %250 : vector<8x128xf32>
    %291 = arith.mulf %287, %286 : vector<8x128xf32>
    %292 = arith.addf %290, %291 : vector<8x128xf32>
    %293 = math.tanh %292 : vector<8x128xf32>
    %294 = arith.mulf %289, %293 : vector<8x128xf32>
    %295 = tpu.concatenate %294, %272 in 1 : vector<8x128xf32>, vector<8x128xf32> -> vector<8x256xf32>
    %c0_87 = arith.constant 0 : index
    %c0_88 = arith.constant 0 : index
    %296 = vector.load %arg5[%c0_87, %c0_88] : memref<256x512xf32, #tpu.memory_space<vmem>>, vector<256x512xf32>
    %cst_89 = arith.constant dense<0.000000e+00> : vector<8x512xf32>
    %297 = tpu.matmul %295, %296, %cst_89 {dimension_numbers = #tpu.dot_dimension_numbers<[1], [0], [0], [1], [0, 0, 1, 1], [], []>} : vector<8x256xf32>, vector<256x512xf32>, vector<8x512xf32> -> vector<8x512xf32>
    %298 = arith.addf %297, %12 : vector<8x512xf32>
    %299 = vector.extract_strided_slice %298 {offsets = [0, 0], sizes = [8, 384], strides = [1, 1]} : vector<8x512xf32> to vector<8x384xf32>
    %300 = arith.negf %299 : vector<8x384xf32>
    %301 = math.exp %300 : vector<8x384xf32>
    %cst_90 = arith.constant 1.000000e+00 : f32
    %302 = vector.broadcast %cst_90 : f32 to vector<8x384xf32>
    %303 = arith.addf %302, %301 : vector<8x384xf32>
    %304 = arith.divf %302, %303 : vector<8x384xf32>
    %305 = vector.extract_strided_slice %298 {offsets = [0, 384], sizes = [8, 128], strides = [1, 1]} : vector<8x512xf32> to vector<8x128xf32>
    %306 = math.tanh %305 : vector<8x128xf32>
    %307 = vector.extract_strided_slice %304 {offsets = [0, 0], sizes = [8, 128], strides = [1, 1]} : vector<8x384xf32> to vector<8x128xf32>
    %308 = vector.extract_strided_slice %304 {offsets = [0, 128], sizes = [8, 128], strides = [1, 1]} : vector<8x384xf32> to vector<8x128xf32>
    %309 = vector.extract_strided_slice %304 {offsets = [0, 256], sizes = [8, 128], strides = [1, 1]} : vector<8x384xf32> to vector<8x128xf32>
    %310 = arith.mulf %308, %270 : vector<8x128xf32>
    %311 = arith.mulf %307, %306 : vector<8x128xf32>
    %312 = arith.addf %310, %311 : vector<8x128xf32>
    %313 = math.tanh %312 : vector<8x128xf32>
    %314 = arith.mulf %309, %313 : vector<8x128xf32>
    %c7_i32 = arith.constant 7 : i32
    %c8_i32_91 = arith.constant 8 : i32
    %315 = arith.muli %c7_i32, %c8_i32_91 : i32
    %316 = arith.index_cast %315 : i32 to index
    %c0_92 = arith.constant 0 : index
    %317 = vector.load %arg10[%316, %c0_92] : memref<64x512xf32, #tpu.memory_space<vmem>>, vector<8x512xf32>
    %c0_93 = arith.constant 0 : index
    %c0_94 = arith.constant 0 : index
    %318 = vector.load %arg4[%c0_93, %c0_94] : memref<128x512xf32, #tpu.memory_space<vmem>>, vector<128x512xf32>
    %cst_95 = arith.constant dense<0.000000e+00> : vector<8x512xf32>
    %319 = tpu.matmul %294, %318, %cst_95 {dimension_numbers = #tpu.dot_dimension_numbers<[1], [0], [0], [1], [0, 0, 1, 1], [], []>} : vector<8x128xf32>, vector<128x512xf32>, vector<8x512xf32> -> vector<8x512xf32>
    %320 = arith.addf %317, %319 : vector<8x512xf32>
    %321 = vector.extract_strided_slice %320 {offsets = [0, 0], sizes = [8, 384], strides = [1, 1]} : vector<8x512xf32> to vector<8x384xf32>
    %322 = arith.negf %321 : vector<8x384xf32>
    %323 = math.exp %322 : vector<8x384xf32>
    %cst_96 = arith.constant 1.000000e+00 : f32
    %324 = vector.broadcast %cst_96 : f32 to vector<8x384xf32>
    %325 = arith.addf %324, %323 : vector<8x384xf32>
    %326 = arith.divf %324, %325 : vector<8x384xf32>
    %327 = vector.extract_strided_slice %320 {offsets = [0, 384], sizes = [8, 128], strides = [1, 1]} : vector<8x512xf32> to vector<8x128xf32>
    %328 = math.tanh %327 : vector<8x128xf32>
    %329 = vector.extract_strided_slice %326 {offsets = [0, 0], sizes = [8, 128], strides = [1, 1]} : vector<8x384xf32> to vector<8x128xf32>
    %330 = vector.extract_strided_slice %326 {offsets = [0, 128], sizes = [8, 128], strides = [1, 1]} : vector<8x384xf32> to vector<8x128xf32>
    %331 = vector.extract_strided_slice %326 {offsets = [0, 256], sizes = [8, 128], strides = [1, 1]} : vector<8x384xf32> to vector<8x128xf32>
    %332 = arith.mulf %330, %292 : vector<8x128xf32>
    %333 = arith.mulf %329, %328 : vector<8x128xf32>
    %334 = arith.addf %332, %333 : vector<8x128xf32>
    %335 = math.tanh %334 : vector<8x128xf32>
    %336 = arith.mulf %331, %335 : vector<8x128xf32>
    %337 = tpu.concatenate %336, %314 in 1 : vector<8x128xf32>, vector<8x128xf32> -> vector<8x256xf32>
    %c0_97 = arith.constant 0 : index
    %c0_98 = arith.constant 0 : index
    %338 = vector.load %arg5[%c0_97, %c0_98] : memref<256x512xf32, #tpu.memory_space<vmem>>, vector<256x512xf32>
    %cst_99 = arith.constant dense<0.000000e+00> : vector<8x512xf32>
    %339 = tpu.matmul %337, %338, %cst_99 {dimension_numbers = #tpu.dot_dimension_numbers<[1], [0], [0], [1], [0, 0, 1, 1], [], []>} : vector<8x256xf32>, vector<256x512xf32>, vector<8x512xf32> -> vector<8x512xf32>
    %340 = arith.addf %339, %12 : vector<8x512xf32>
    %341 = vector.extract_strided_slice %340 {offsets = [0, 0], sizes = [8, 384], strides = [1, 1]} : vector<8x512xf32> to vector<8x384xf32>
    %342 = arith.negf %341 : vector<8x384xf32>
    %343 = math.exp %342 : vector<8x384xf32>
    %cst_100 = arith.constant 1.000000e+00 : f32
    %344 = vector.broadcast %cst_100 : f32 to vector<8x384xf32>
    %345 = arith.addf %344, %343 : vector<8x384xf32>
    %346 = arith.divf %344, %345 : vector<8x384xf32>
    %347 = vector.extract_strided_slice %340 {offsets = [0, 384], sizes = [8, 128], strides = [1, 1]} : vector<8x512xf32> to vector<8x128xf32>
    %348 = math.tanh %347 : vector<8x128xf32>
    %349 = vector.extract_strided_slice %346 {offsets = [0, 0], sizes = [8, 128], strides = [1, 1]} : vector<8x384xf32> to vector<8x128xf32>
    %350 = vector.extract_strided_slice %346 {offsets = [0, 128], sizes = [8, 128], strides = [1, 1]} : vector<8x384xf32> to vector<8x128xf32>
    %351 = vector.extract_strided_slice %346 {offsets = [0, 256], sizes = [8, 128], strides = [1, 1]} : vector<8x384xf32> to vector<8x128xf32>
    %352 = arith.mulf %350, %312 : vector<8x128xf32>
    %353 = arith.mulf %349, %348 : vector<8x128xf32>
    %354 = arith.addf %352, %353 : vector<8x128xf32>
    %355 = math.tanh %354 : vector<8x128xf32>
    %356 = arith.mulf %351, %355 : vector<8x128xf32>
    %c8_i32_101 = arith.constant 8 : i32
    %c0_102 = arith.constant 0 : index
    %c0_103 = arith.constant 0 : index
    %c0_104 = arith.constant 0 : index
    %357 = vector.load %arg11[%c0_102, %c0_103, %c0_104] : memref<2x8x128xf32, #tpu.memory_space<vmem>>, vector<1x8x128xf32>
    %358 = vector.shape_cast %357 : vector<1x8x128xf32> to vector<8x128xf32>
    %359 = vector.shape_cast %336 : vector<8x128xf32> to vector<1x8x128xf32>
    tpu.vector_store %arg11[%c0_102, %c0_103, %c0_104], %359 {strides = array<i32>} : memref<2x8x128xf32, #tpu.memory_space<vmem>>, vector<1x8x128xf32>,
    %c0_105 = arith.constant 0 : index
    %c0_106 = arith.constant 0 : index
    %c0_107 = arith.constant 0 : index
    %360 = vector.load %arg12[%c0_105, %c0_106, %c0_107] : memref<2x8x128xf32, #tpu.memory_space<vmem>>, vector<1x8x128xf32>
    %361 = vector.shape_cast %360 : vector<1x8x128xf32> to vector<8x128xf32>
    %362 = vector.shape_cast %334 : vector<8x128xf32> to vector<1x8x128xf32>
    tpu.vector_store %arg12[%c0_105, %c0_106, %c0_107], %362 {strides = array<i32>} : memref<2x8x128xf32, #tpu.memory_space<vmem>>, vector<1x8x128xf32>,
    %c1_108 = arith.constant 1 : index
    %c0_109 = arith.constant 0 : index
    %c0_110 = arith.constant 0 : index
    %363 = vector.load %arg11[%c1_108, %c0_109, %c0_110] : memref<2x8x128xf32, #tpu.memory_space<vmem>>, vector<1x8x128xf32>
    %364 = vector.shape_cast %363 : vector<1x8x128xf32> to vector<8x128xf32>
    %365 = vector.shape_cast %356 : vector<8x128xf32> to vector<1x8x128xf32>
    tpu.vector_store %arg11[%c1_108, %c0_109, %c0_110], %365 {strides = array<i32>} : memref<2x8x128xf32, #tpu.memory_space<vmem>>, vector<1x8x128xf32>,
    %c1_111 = arith.constant 1 : index
    %c0_112 = arith.constant 0 : index
    %c0_113 = arith.constant 0 : index
    %366 = vector.load %arg12[%c1_111, %c0_112, %c0_113] : memref<2x8x128xf32, #tpu.memory_space<vmem>>, vector<1x8x128xf32>
    %367 = vector.shape_cast %366 : vector<1x8x128xf32> to vector<8x128xf32>
    %368 = vector.shape_cast %354 : vector<8x128xf32> to vector<1x8x128xf32>
    tpu.vector_store %arg12[%c1_111, %c0_112, %c0_113], %368 {strides = array<i32>} : memref<2x8x128xf32, #tpu.memory_space<vmem>>, vector<1x8x128xf32>,
    %c0_i32_114 = arith.constant 0 : i32
    %369 = arith.cmpi eq, %arg0, %c0_i32_114 : i32
    %370 = arith.extui %369 : i1 to i32
    %c0_i32_115 = arith.constant 0 : i32
    %371 = arith.cmpi ne, %370, %c0_i32_115 : i32
    scf.if %371 {
      %c0_116 = arith.constant 0 : index
      %c0_117 = arith.constant 0 : index
      %372 = vector.load %arg7[%c0_116, %c0_117] : memref<128x128xf32, #tpu.memory_space<vmem>>, vector<128x128xf32>
      %cst_118 = arith.constant dense<0.000000e+00> : vector<8x128xf32>
      %373 = tpu.matmul %356, %372, %cst_118 {dimension_numbers = #tpu.dot_dimension_numbers<[1], [0], [0], [1], [0, 0, 1, 1], [], []>} : vector<8x128xf32>, vector<128x128xf32>, vector<8x128xf32> -> vector<8x128xf32>
      %c0_119 = arith.constant 0 : index
      %c0_120 = arith.constant 0 : index
      %374 = vector.load %arg8[%c0_119, %c0_120] : memref<1x128xf32, #tpu.memory_space<vmem>>, vector<1x128xf32>
      %375 = vector.broadcast %374 : vector<1x128xf32> to vector<8x128xf32>
      %376 = arith.addf %373, %375 : vector<8x128xf32>
      %c0_121 = arith.constant 0 : index
      %c0_122 = arith.constant 0 : index
      %377 = vector.load %arg9[%c0_121, %c0_122] : memref<8x128xf32, #tpu.memory_space<vmem>>, vector<8x128xf32>
      tpu.vector_store %arg9[%c0_121, %c0_122], %376 {strides = array<i32>} : memref<8x128xf32, #tpu.memory_space<vmem>>, vector<8x128xf32>,
    } else {
    }
    return
  }
  func.func @transform_0(%arg0: i32) -> (i32, i32) {
    %c0_i32 = arith.constant 0 : i32
    %c0_i32_0 = arith.constant 0 : i32
    return %arg0, %c0_i32 : i32, i32
  }
  func.func @transform_1(%arg0: i32) -> (i32, i32) {
    %c0_i32 = arith.constant 0 : i32
    %c0_i32_0 = arith.constant 0 : i32
    %c0_i32_1 = arith.constant 0 : i32
    return %c0_i32, %c0_i32_0 : i32, i32
  }
  func.func @transform_2(%arg0: i32) -> (i32, i32) {
    %c0_i32 = arith.constant 0 : i32
    %c0_i32_0 = arith.constant 0 : i32
    %c0_i32_1 = arith.constant 0 : i32
    return %c0_i32, %c0_i32_0 : i32, i32
  }
  func.func @transform_3(%arg0: i32) -> (i32, i32) {
    %c0_i32 = arith.constant 0 : i32
    %c0_i32_0 = arith.constant 0 : i32
    %c0_i32_1 = arith.constant 0 : i32
    return %c0_i32, %c0_i32_0 : i32, i32
  }
  func.func @transform_4(%arg0: i32) -> (i32, i32) {
    %c0_i32 = arith.constant 0 : i32
    %c0_i32_0 = arith.constant 0 : i32
    %c0_i32_1 = arith.constant 0 : i32
    return %c0_i32, %c0_i32_0 : i32, i32
  }
  func.func @transform_5(%arg0: i32) -> (i32, i32) {
    %c0_i32 = arith.constant 0 : i32
    %c0_i32_0 = arith.constant 0 : i32
    %c0_i32_1 = arith.constant 0 : i32
    return %c0_i32, %c0_i32_0 : i32, i32
  }
  func.func @transform_6(%arg0: i32) -> (i32, i32) {
    %c0_i32 = arith.constant 0 : i32
    %c0_i32_0 = arith.constant 0 : i32
    %c0_i32_1 = arith.constant 0 : i32
    return %c0_i32, %c0_i32_0 : i32, i32
  }
  func.func @transform_7(%arg0: i32) -> (i32, i32) {
    %c0_i32 = arith.constant 0 : i32
    %c0_i32_0 = arith.constant 0 : i32
    %c0_i32_1 = arith.constant 0 : i32
    return %c0_i32, %c0_i32_0 : i32, i32
  }
  func.func @transform_8(%arg0: i32) -> (i32, i32) {
    %c0_i32 = arith.constant 0 : i32
    %c0_i32_0 = arith.constant 0 : i32
    %c0_i32_1 = arith.constant 0 : i32
    return %c0_i32, %c0_i32_0 : i32, i32
  }
}

module attributes {stable_mosaic.version = 11 : i64} {
  func.func @_fused_lstm_fc_kernel(%arg0: i32, %arg1: memref<64x4xf32, #tpu.memory_space<vmem>>, %arg2: memref<4x512xf32, #tpu.memory_space<vmem>>, %arg3: memref<1x512xf32, #tpu.memory_space<vmem>>, %arg4: memref<128x512xf32, #tpu.memory_space<vmem>>, %arg5: memref<256x512xf32, #tpu.memory_space<vmem>>, %arg6: memref<1x512xf32, #tpu.memory_space<vmem>>, %arg7: memref<128x128xf32, #tpu.memory_space<vmem>>, %arg8: memref<1x128xf32, #tpu.memory_space<vmem>>, %arg9: memref<8x128xf32, #tpu.memory_space<vmem>>, %arg10: memref<64x512xf32, #tpu.memory_space<vmem>>, %arg11: memref<2x8x128xf32, #tpu.memory_space<vmem>>, %arg12: memref<2x8x128xf32, #tpu.memory_space<vmem>>) attributes {dimension_semantics = [#tpu.dimension_semantics<arbitrary>], iteration_bounds = array<i64: 1>, scalar_prefetch = 0 : i64, scratch_operands = 3 : i64, tpu.core_type = #tpu.core_type<tc>, window_params = [{transform_indices = @transform_0, window_bounds = array<i64: 64, 4>}, {pipeline_mode = #tpu.pipeline_mode<synchronous>, transform_indices = @transform_1, window_bounds = array<i64: 4, 512>}, {pipeline_mode = #tpu.pipeline_mode<synchronous>, transform_indices = @transform_2, window_bounds = array<i64: 1, 512>}, {pipeline_mode = #tpu.pipeline_mode<synchronous>, transform_indices = @transform_3, window_bounds = array<i64: 128, 512>}, {pipeline_mode = #tpu.pipeline_mode<synchronous>, transform_indices = @transform_4, window_bounds = array<i64: 256, 512>}, {pipeline_mode = #tpu.pipeline_mode<synchronous>, transform_indices = @transform_5, window_bounds = array<i64: 1, 512>}, {pipeline_mode = #tpu.pipeline_mode<synchronous>, transform_indices = @transform_6, window_bounds = array<i64: 128, 128>}, {pipeline_mode = #tpu.pipeline_mode<synchronous>, transform_indices = @transform_7, window_bounds = array<i64: 1, 128>}, {pipeline_mode = #tpu.pipeline_mode<synchronous>, transform_indices = @transform_8, window_bounds = array<i64: 8, 128>}]} {
    %c0_i32 = arith.constant 0 : i32
    %0 = arith.cmpi eq, %arg0, %c0_i32 : i32
    %1 = arith.extui %0 : i1 to i32
    %c0_i32_0 = arith.constant 0 : i32
    %2 = arith.cmpi ne, %1, %c0_i32_0 : i32
    scf.if %2 {
      %cst_116 = arith.constant 0.000000e+00 : f32
      %372 = vector.broadcast %cst_116 : f32 to vector<2x8x128xf32>
      %c0_117 = arith.constant 0 : index
      %c0_118 = arith.constant 0 : index
      %c0_119 = arith.constant 0 : index
      %373 = vector.load %arg11[%c0_117, %c0_118, %c0_119] : memref<2x8x128xf32, #tpu.memory_space<vmem>>, vector<2x8x128xf32>
      tpu.vector_store %arg11[%c0_117, %c0_118, %c0_119], %372 {strides = array<i32>} : memref<2x8x128xf32, #tpu.memory_space<vmem>>, vector<2x8x128xf32>,
      %cst_120 = arith.constant 0.000000e+00 : f32
      %374 = vector.broadcast %cst_120 : f32 to vector<2x8x128xf32>
      %c0_121 = arith.constant 0 : index
      %c0_122 = arith.constant 0 : index
      %c0_123 = arith.constant 0 : index
      %375 = vector.load %arg12[%c0_121, %c0_122, %c0_123] : memref<2x8x128xf32, #tpu.memory_space<vmem>>, vector<2x8x128xf32>
      tpu.vector_store %arg12[%c0_121, %c0_122, %c0_123], %374 {strides = array<i32>} : memref<2x8x128xf32, #tpu.memory_space<vmem>>, vector<2x8x128xf32>,
    } else {
    }
    %c0 = arith.constant 0 : index
    %c0_1 = arith.constant 0 : index
    %3 = vector.load %arg1[%c0, %c0_1] : memref<64x4xf32, #tpu.memory_space<vmem>>, vector<64x4xf32>
    %c0_2 = arith.constant 0 : index
    %c0_3 = arith.constant 0 : index
    %4 = vector.load %arg2[%c0_2, %c0_3] : memref<4x512xf32, #tpu.memory_space<vmem>>, vector<4x512xf32>
    %cst = arith.constant dense<0.000000e+00> : vector<64x512xf32>
    %5 = tpu.matmul %3, %4, %cst {dimension_numbers = #tpu.dot_dimension_numbers<[1], [0], [0], [1], [0, 0, 1, 1], [], []>} : vector<64x4xf32>, vector<4x512xf32>, vector<64x512xf32> -> vector<64x512xf32>
    %c0_4 = arith.constant 0 : index
    %c0_5 = arith.constant 0 : index
    %6 = vector.load %arg3[%c0_4, %c0_5] : memref<1x512xf32, #tpu.memory_space<vmem>>, vector<1x512xf32>
    %7 = vector.broadcast %6 : vector<1x512xf32> to vector<64x512xf32>
    %8 = arith.addf %5, %7 : vector<64x512xf32>
    %c0_6 = arith.constant 0 : index
    %c0_7 = arith.constant 0 : index
    %9 = vector.load %arg10[%c0_6, %c0_7] : memref<64x512xf32, #tpu.memory_space<vmem>>, vector<64x512xf32>
    tpu.vector_store %arg10[%c0_6, %c0_7], %8 {strides = array<i32>} : memref<64x512xf32, #tpu.memory_space<vmem>>, vector<64x512xf32>,
    %c0_8 = arith.constant 0 : index
    %c0_9 = arith.constant 0 : index
    %10 = vector.load %arg6[%c0_8, %c0_9] : memref<1x512xf32, #tpu.memory_space<vmem>>, vector<1x512xf32>
    %11 = vector.shape_cast %10 : vector<1x512xf32> to vector<1x512xf32>
    %12 = vector.broadcast %11 : vector<1x512xf32> to vector<8x512xf32>
    %c0_10 = arith.constant 0 : index
    %c0_11 = arith.constant 0 : index
    %c0_12 = arith.constant 0 : index
    %13 = vector.load %arg11[%c0_10, %c0_11, %c0_12] : memref<2x8x128xf32, #tpu.memory_space<vmem>>, vector<1x8x128xf32>
    %14 = vector.shape_cast %13 : vector<1x8x128xf32> to vector<8x128xf32>
    %c1 = arith.constant 1 : index
    %c0_13 = arith.constant 0 : index
    %c0_14 = arith.constant 0 : index
    %15 = vector.load %arg11[%c1, %c0_13, %c0_14] : memref<2x8x128xf32, #tpu.memory_space<vmem>>, vector<1x8x128xf32>
    %16 = vector.shape_cast %15 : vector<1x8x128xf32> to vector<8x128xf32>
    %c0_15 = arith.constant 0 : index
    %c0_16 = arith.constant 0 : index
    %c0_17 = arith.constant 0 : index
    %17 = vector.load %arg12[%c0_15, %c0_16, %c0_17] : memref<2x8x128xf32, #tpu.memory_space<vmem>>, vector<1x8x128xf32>
    %18 = vector.shape_cast %17 : vector<1x8x128xf32> to vector<8x128xf32>
    %c1_18 = arith.constant 1 : index
    %c0_19 = arith.constant 0 : index
    %c0_20 = arith.constant 0 : index
    %19 = vector.load %arg12[%c1_18, %c0_19, %c0_20] : memref<2x8x128xf32, #tpu.memory_space<vmem>>, vector<1x8x128xf32>
    %20 = vector.shape_cast %19 : vector<1x8x128xf32> to vector<8x128xf32>
    %c0_i32_21 = arith.constant 0 : i32
    %c8_i32 = arith.constant 8 : i32
    %21 = arith.muli %c0_i32_21, %c8_i32 : i32
    %22 = arith.index_cast %21 : i32 to index
    %c0_22 = arith.constant 0 : index
    %23 = vector.load %arg10[%22, %c0_22] : memref<64x512xf32, #tpu.memory_space<vmem>>, vector<8x512xf32>
    %c0_23 = arith.constant 0 : index
    %c0_24 = arith.constant 0 : index
    %24 = vector.load %arg4[%c0_23, %c0_24] : memref<128x512xf32, #tpu.memory_space<vmem>>, vector<128x512xf32>
    %cst_25 = arith.constant dense<0.000000e+00> : vector<8x512xf32>
    %25 = tpu.matmul %14, %24, %cst_25 {dimension_numbers = #tpu.dot_dimension_numbers<[1], [0], [0], [1], [0, 0, 1, 1], [], []>} : vector<8x128xf32>, vector<128x512xf32>, vector<8x512xf32> -> vector<8x512xf32>
    %26 = arith.addf %23, %25 : vector<8x512xf32>
    %27 = vector.extract_strided_slice %26 {offsets = [0, 0], sizes = [8, 384], strides = [1, 1]} : vector<8x512xf32> to vector<8x384xf32>
    %28 = arith.negf %27 : vector<8x384xf32>
    %29 = math.exp %28 : vector<8x384xf32>
    %cst_26 = arith.constant 1.000000e+00 : f32
    %30 = vector.broadcast %cst_26 : f32 to vector<8x384xf32>
    %31 = arith.addf %30, %29 : vector<8x384xf32>
    %32 = arith.divf %30, %31 : vector<8x384xf32>
    %33 = vector.extract_strided_slice %26 {offsets = [0, 384], sizes = [8, 128], strides = [1, 1]} : vector<8x512xf32> to vector<8x128xf32>
    %34 = math.tanh %33 : vector<8x128xf32>
    %35 = vector.extract_strided_slice %32 {offsets = [0, 0], sizes = [8, 128], strides = [1, 1]} : vector<8x384xf32> to vector<8x128xf32>
    %36 = vector.extract_strided_slice %32 {offsets = [0, 128], sizes = [8, 128], strides = [1, 1]} : vector<8x384xf32> to vector<8x128xf32>
    %37 = vector.extract_strided_slice %32 {offsets = [0, 256], sizes = [8, 128], strides = [1, 1]} : vector<8x384xf32> to vector<8x128xf32>
    %38 = arith.mulf %36, %18 : vector<8x128xf32>
    %39 = arith.mulf %35, %34 : vector<8x128xf32>
    %40 = arith.addf %38, %39 : vector<8x128xf32>
    %41 = math.tanh %40 : vector<8x128xf32>
    %42 = arith.mulf %37, %41 : vector<8x128xf32>
    %43 = tpu.concatenate %42, %16 in 1 : vector<8x128xf32>, vector<8x128xf32> -> vector<8x256xf32>
    %c0_27 = arith.constant 0 : index
    %c0_28 = arith.constant 0 : index
    %44 = vector.load %arg5[%c0_27, %c0_28] : memref<256x512xf32, #tpu.memory_space<vmem>>, vector<256x512xf32>
    %cst_29 = arith.constant dense<0.000000e+00> : vector<8x512xf32>
    %45 = tpu.matmul %43, %44, %cst_29 {dimension_numbers = #tpu.dot_dimension_numbers<[1], [0], [0], [1], [0, 0, 1, 1], [], []>} : vector<8x256xf32>, vector<256x512xf32>, vector<8x512xf32> -> vector<8x512xf32>
    %46 = arith.addf %45, %12 : vector<8x512xf32>
    %47 = vector.extract_strided_slice %46 {offsets = [0, 0], sizes = [8, 384], strides = [1, 1]} : vector<8x512xf32> to vector<8x384xf32>
    %48 = arith.negf %47 : vector<8x384xf32>
    %49 = math.exp %48 : vector<8x384xf32>
    %cst_30 = arith.constant 1.000000e+00 : f32
    %50 = vector.broadcast %cst_30 : f32 to vector<8x384xf32>
    %51 = arith.addf %50, %49 : vector<8x384xf32>
    %52 = arith.divf %50, %51 : vector<8x384xf32>
    %53 = vector.extract_strided_slice %46 {offsets = [0, 384], sizes = [8, 128], strides = [1, 1]} : vector<8x512xf32> to vector<8x128xf32>
    %54 = math.tanh %53 : vector<8x128xf32>
    %55 = vector.extract_strided_slice %52 {offsets = [0, 0], sizes = [8, 128], strides = [1, 1]} : vector<8x384xf32> to vector<8x128xf32>
    %56 = vector.extract_strided_slice %52 {offsets = [0, 128], sizes = [8, 128], strides = [1, 1]} : vector<8x384xf32> to vector<8x128xf32>
    %57 = vector.extract_strided_slice %52 {offsets = [0, 256], sizes = [8, 128], strides = [1, 1]} : vector<8x384xf32> to vector<8x128xf32>
    %58 = arith.mulf %56, %20 : vector<8x128xf32>
    %59 = arith.mulf %55, %54 : vector<8x128xf32>
    %60 = arith.addf %58, %59 : vector<8x128xf32>
    %61 = math.tanh %60 : vector<8x128xf32>
    %62 = arith.mulf %57, %61 : vector<8x128xf32>
    %c1_i32 = arith.constant 1 : i32
    %c8_i32_31 = arith.constant 8 : i32
    %63 = arith.muli %c1_i32, %c8_i32_31 : i32
    %64 = arith.index_cast %63 : i32 to index
    %c0_32 = arith.constant 0 : index
    %65 = vector.load %arg10[%64, %c0_32] : memref<64x512xf32, #tpu.memory_space<vmem>>, vector<8x512xf32>
    %c0_33 = arith.constant 0 : index
    %c0_34 = arith.constant 0 : index
    %66 = vector.load %arg4[%c0_33, %c0_34] : memref<128x512xf32, #tpu.memory_space<vmem>>, vector<128x512xf32>
    %cst_35 = arith.constant dense<0.000000e+00> : vector<8x512xf32>
    %67 = tpu.matmul %42, %66, %cst_35 {dimension_numbers = #tpu.dot_dimension_numbers<[1], [0], [0], [1], [0, 0, 1, 1], [], []>} : vector<8x128xf32>, vector<128x512xf32>, vector<8x512xf32> -> vector<8x512xf32>
    %68 = arith.addf %65, %67 : vector<8x512xf32>
    %69 = vector.extract_strided_slice %68 {offsets = [0, 0], sizes = [8, 384], strides = [1, 1]} : vector<8x512xf32> to vector<8x384xf32>
    %70 = arith.negf %69 : vector<8x384xf32>
    %71 = math.exp %70 : vector<8x384xf32>
    %cst_36 = arith.constant 1.000000e+00 : f32
    %72 = vector.broadcast %cst_36 : f32 to vector<8x384xf32>
    %73 = arith.addf %72, %71 : vector<8x384xf32>
    %74 = arith.divf %72, %73 : vector<8x384xf32>
    %75 = vector.extract_strided_slice %68 {offsets = [0, 384], sizes = [8, 128], strides = [1, 1]} : vector<8x512xf32> to vector<8x128xf32>
    %76 = math.tanh %75 : vector<8x128xf32>
    %77 = vector.extract_strided_slice %74 {offsets = [0, 0], sizes = [8, 128], strides = [1, 1]} : vector<8x384xf32> to vector<8x128xf32>
    %78 = vector.extract_strided_slice %74 {offsets = [0, 128], sizes = [8, 128], strides = [1, 1]} : vector<8x384xf32> to vector<8x128xf32>
    %79 = vector.extract_strided_slice %74 {offsets = [0, 256], sizes = [8, 128], strides = [1, 1]} : vector<8x384xf32> to vector<8x128xf32>
    %80 = arith.mulf %78, %40 : vector<8x128xf32>
    %81 = arith.mulf %77, %76 : vector<8x128xf32>
    %82 = arith.addf %80, %81 : vector<8x128xf32>
    %83 = math.tanh %82 : vector<8x128xf32>
    %84 = arith.mulf %79, %83 : vector<8x128xf32>
    %85 = tpu.concatenate %84, %62 in 1 : vector<8x128xf32>, vector<8x128xf32> -> vector<8x256xf32>
    %c0_37 = arith.constant 0 : index
    %c0_38 = arith.constant 0 : index
    %86 = vector.load %arg5[%c0_37, %c0_38] : memref<256x512xf32, #tpu.memory_space<vmem>>, vector<256x512xf32>
    %cst_39 = arith.constant dense<0.000000e+00> : vector<8x512xf32>
    %87 = tpu.matmul %85, %86, %cst_39 {dimension_numbers = #tpu.dot_dimension_numbers<[1], [0], [0], [1], [0, 0, 1, 1], [], []>} : vector<8x256xf32>, vector<256x512xf32>, vector<8x512xf32> -> vector<8x512xf32>
    %88 = arith.addf %87, %12 : vector<8x512xf32>
    %89 = vector.extract_strided_slice %88 {offsets = [0, 0], sizes = [8, 384], strides = [1, 1]} : vector<8x512xf32> to vector<8x384xf32>
    %90 = arith.negf %89 : vector<8x384xf32>
    %91 = math.exp %90 : vector<8x384xf32>
    %cst_40 = arith.constant 1.000000e+00 : f32
    %92 = vector.broadcast %cst_40 : f32 to vector<8x384xf32>
    %93 = arith.addf %92, %91 : vector<8x384xf32>
    %94 = arith.divf %92, %93 : vector<8x384xf32>
    %95 = vector.extract_strided_slice %88 {offsets = [0, 384], sizes = [8, 128], strides = [1, 1]} : vector<8x512xf32> to vector<8x128xf32>
    %96 = math.tanh %95 : vector<8x128xf32>
    %97 = vector.extract_strided_slice %94 {offsets = [0, 0], sizes = [8, 128], strides = [1, 1]} : vector<8x384xf32> to vector<8x128xf32>
    %98 = vector.extract_strided_slice %94 {offsets = [0, 128], sizes = [8, 128], strides = [1, 1]} : vector<8x384xf32> to vector<8x128xf32>
    %99 = vector.extract_strided_slice %94 {offsets = [0, 256], sizes = [8, 128], strides = [1, 1]} : vector<8x384xf32> to vector<8x128xf32>
    %100 = arith.mulf %98, %60 : vector<8x128xf32>
    %101 = arith.mulf %97, %96 : vector<8x128xf32>
    %102 = arith.addf %100, %101 : vector<8x128xf32>
    %103 = math.tanh %102 : vector<8x128xf32>
    %104 = arith.mulf %99, %103 : vector<8x128xf32>
    %c2_i32 = arith.constant 2 : i32
    %c8_i32_41 = arith.constant 8 : i32
    %105 = arith.muli %c2_i32, %c8_i32_41 : i32
    %106 = arith.index_cast %105 : i32 to index
    %c0_42 = arith.constant 0 : index
    %107 = vector.load %arg10[%106, %c0_42] : memref<64x512xf32, #tpu.memory_space<vmem>>, vector<8x512xf32>
    %c0_43 = arith.constant 0 : index
    %c0_44 = arith.constant 0 : index
    %108 = vector.load %arg4[%c0_43, %c0_44] : memref<128x512xf32, #tpu.memory_space<vmem>>, vector<128x512xf32>
    %cst_45 = arith.constant dense<0.000000e+00> : vector<8x512xf32>
    %109 = tpu.matmul %84, %108, %cst_45 {dimension_numbers = #tpu.dot_dimension_numbers<[1], [0], [0], [1], [0, 0, 1, 1], [], []>} : vector<8x128xf32>, vector<128x512xf32>, vector<8x512xf32> -> vector<8x512xf32>
    %110 = arith.addf %107, %109 : vector<8x512xf32>
    %111 = vector.extract_strided_slice %110 {offsets = [0, 0], sizes = [8, 384], strides = [1, 1]} : vector<8x512xf32> to vector<8x384xf32>
    %112 = arith.negf %111 : vector<8x384xf32>
    %113 = math.exp %112 : vector<8x384xf32>
    %cst_46 = arith.constant 1.000000e+00 : f32
    %114 = vector.broadcast %cst_46 : f32 to vector<8x384xf32>
    %115 = arith.addf %114, %113 : vector<8x384xf32>
    %116 = arith.divf %114, %115 : vector<8x384xf32>
    %117 = vector.extract_strided_slice %110 {offsets = [0, 384], sizes = [8, 128], strides = [1, 1]} : vector<8x512xf32> to vector<8x128xf32>
    %118 = math.tanh %117 : vector<8x128xf32>
    %119 = vector.extract_strided_slice %116 {offsets = [0, 0], sizes = [8, 128], strides = [1, 1]} : vector<8x384xf32> to vector<8x128xf32>
    %120 = vector.extract_strided_slice %116 {offsets = [0, 128], sizes = [8, 128], strides = [1, 1]} : vector<8x384xf32> to vector<8x128xf32>
    %121 = vector.extract_strided_slice %116 {offsets = [0, 256], sizes = [8, 128], strides = [1, 1]} : vector<8x384xf32> to vector<8x128xf32>
    %122 = arith.mulf %120, %82 : vector<8x128xf32>
    %123 = arith.mulf %119, %118 : vector<8x128xf32>
    %124 = arith.addf %122, %123 : vector<8x128xf32>
    %125 = math.tanh %124 : vector<8x128xf32>
    %126 = arith.mulf %121, %125 : vector<8x128xf32>
    %127 = tpu.concatenate %126, %104 in 1 : vector<8x128xf32>, vector<8x128xf32> -> vector<8x256xf32>
    %c0_47 = arith.constant 0 : index
    %c0_48 = arith.constant 0 : index
    %128 = vector.load %arg5[%c0_47, %c0_48] : memref<256x512xf32, #tpu.memory_space<vmem>>, vector<256x512xf32>
    %cst_49 = arith.constant dense<0.000000e+00> : vector<8x512xf32>
    %129 = tpu.matmul %127, %128, %cst_49 {dimension_numbers = #tpu.dot_dimension_numbers<[1], [0], [0], [1], [0, 0, 1, 1], [], []>} : vector<8x256xf32>, vector<256x512xf32>, vector<8x512xf32> -> vector<8x512xf32>
    %130 = arith.addf %129, %12 : vector<8x512xf32>
    %131 = vector.extract_strided_slice %130 {offsets = [0, 0], sizes = [8, 384], strides = [1, 1]} : vector<8x512xf32> to vector<8x384xf32>
    %132 = arith.negf %131 : vector<8x384xf32>
    %133 = math.exp %132 : vector<8x384xf32>
    %cst_50 = arith.constant 1.000000e+00 : f32
    %134 = vector.broadcast %cst_50 : f32 to vector<8x384xf32>
    %135 = arith.addf %134, %133 : vector<8x384xf32>
    %136 = arith.divf %134, %135 : vector<8x384xf32>
    %137 = vector.extract_strided_slice %130 {offsets = [0, 384], sizes = [8, 128], strides = [1, 1]} : vector<8x512xf32> to vector<8x128xf32>
    %138 = math.tanh %137 : vector<8x128xf32>
    %139 = vector.extract_strided_slice %136 {offsets = [0, 0], sizes = [8, 128], strides = [1, 1]} : vector<8x384xf32> to vector<8x128xf32>
    %140 = vector.extract_strided_slice %136 {offsets = [0, 128], sizes = [8, 128], strides = [1, 1]} : vector<8x384xf32> to vector<8x128xf32>
    %141 = vector.extract_strided_slice %136 {offsets = [0, 256], sizes = [8, 128], strides = [1, 1]} : vector<8x384xf32> to vector<8x128xf32>
    %142 = arith.mulf %140, %102 : vector<8x128xf32>
    %143 = arith.mulf %139, %138 : vector<8x128xf32>
    %144 = arith.addf %142, %143 : vector<8x128xf32>
    %145 = math.tanh %144 : vector<8x128xf32>
    %146 = arith.mulf %141, %145 : vector<8x128xf32>
    %c3_i32 = arith.constant 3 : i32
    %c8_i32_51 = arith.constant 8 : i32
    %147 = arith.muli %c3_i32, %c8_i32_51 : i32
    %148 = arith.index_cast %147 : i32 to index
    %c0_52 = arith.constant 0 : index
    %149 = vector.load %arg10[%148, %c0_52] : memref<64x512xf32, #tpu.memory_space<vmem>>, vector<8x512xf32>
    %c0_53 = arith.constant 0 : index
    %c0_54 = arith.constant 0 : index
    %150 = vector.load %arg4[%c0_53, %c0_54] : memref<128x512xf32, #tpu.memory_space<vmem>>, vector<128x512xf32>
    %cst_55 = arith.constant dense<0.000000e+00> : vector<8x512xf32>
    %151 = tpu.matmul %126, %150, %cst_55 {dimension_numbers = #tpu.dot_dimension_numbers<[1], [0], [0], [1], [0, 0, 1, 1], [], []>} : vector<8x128xf32>, vector<128x512xf32>, vector<8x512xf32> -> vector<8x512xf32>
    %152 = arith.addf %149, %151 : vector<8x512xf32>
    %153 = vector.extract_strided_slice %152 {offsets = [0, 0], sizes = [8, 384], strides = [1, 1]} : vector<8x512xf32> to vector<8x384xf32>
    %154 = arith.negf %153 : vector<8x384xf32>
    %155 = math.exp %154 : vector<8x384xf32>
    %cst_56 = arith.constant 1.000000e+00 : f32
    %156 = vector.broadcast %cst_56 : f32 to vector<8x384xf32>
    %157 = arith.addf %156, %155 : vector<8x384xf32>
    %158 = arith.divf %156, %157 : vector<8x384xf32>
    %159 = vector.extract_strided_slice %152 {offsets = [0, 384], sizes = [8, 128], strides = [1, 1]} : vector<8x512xf32> to vector<8x128xf32>
    %160 = math.tanh %159 : vector<8x128xf32>
    %161 = vector.extract_strided_slice %158 {offsets = [0, 0], sizes = [8, 128], strides = [1, 1]} : vector<8x384xf32> to vector<8x128xf32>
    %162 = vector.extract_strided_slice %158 {offsets = [0, 128], sizes = [8, 128], strides = [1, 1]} : vector<8x384xf32> to vector<8x128xf32>
    %163 = vector.extract_strided_slice %158 {offsets = [0, 256], sizes = [8, 128], strides = [1, 1]} : vector<8x384xf32> to vector<8x128xf32>
    %164 = arith.mulf %162, %124 : vector<8x128xf32>
    %165 = arith.mulf %161, %160 : vector<8x128xf32>
    %166 = arith.addf %164, %165 : vector<8x128xf32>
    %167 = math.tanh %166 : vector<8x128xf32>
    %168 = arith.mulf %163, %167 : vector<8x128xf32>
    %169 = tpu.concatenate %168, %146 in 1 : vector<8x128xf32>, vector<8x128xf32> -> vector<8x256xf32>
    %c0_57 = arith.constant 0 : index
    %c0_58 = arith.constant 0 : index
    %170 = vector.load %arg5[%c0_57, %c0_58] : memref<256x512xf32, #tpu.memory_space<vmem>>, vector<256x512xf32>
    %cst_59 = arith.constant dense<0.000000e+00> : vector<8x512xf32>
    %171 = tpu.matmul %169, %170, %cst_59 {dimension_numbers = #tpu.dot_dimension_numbers<[1], [0], [0], [1], [0, 0, 1, 1], [], []>} : vector<8x256xf32>, vector<256x512xf32>, vector<8x512xf32> -> vector<8x512xf32>
    %172 = arith.addf %171, %12 : vector<8x512xf32>
    %173 = vector.extract_strided_slice %172 {offsets = [0, 0], sizes = [8, 384], strides = [1, 1]} : vector<8x512xf32> to vector<8x384xf32>
    %174 = arith.negf %173 : vector<8x384xf32>
    %175 = math.exp %174 : vector<8x384xf32>
    %cst_60 = arith.constant 1.000000e+00 : f32
    %176 = vector.broadcast %cst_60 : f32 to vector<8x384xf32>
    %177 = arith.addf %176, %175 : vector<8x384xf32>
    %178 = arith.divf %176, %177 : vector<8x384xf32>
    %179 = vector.extract_strided_slice %172 {offsets = [0, 384], sizes = [8, 128], strides = [1, 1]} : vector<8x512xf32> to vector<8x128xf32>
    %180 = math.tanh %179 : vector<8x128xf32>
    %181 = vector.extract_strided_slice %178 {offsets = [0, 0], sizes = [8, 128], strides = [1, 1]} : vector<8x384xf32> to vector<8x128xf32>
    %182 = vector.extract_strided_slice %178 {offsets = [0, 128], sizes = [8, 128], strides = [1, 1]} : vector<8x384xf32> to vector<8x128xf32>
    %183 = vector.extract_strided_slice %178 {offsets = [0, 256], sizes = [8, 128], strides = [1, 1]} : vector<8x384xf32> to vector<8x128xf32>
    %184 = arith.mulf %182, %144 : vector<8x128xf32>
    %185 = arith.mulf %181, %180 : vector<8x128xf32>
    %186 = arith.addf %184, %185 : vector<8x128xf32>
    %187 = math.tanh %186 : vector<8x128xf32>
    %188 = arith.mulf %183, %187 : vector<8x128xf32>
    %c4_i32 = arith.constant 4 : i32
    %c8_i32_61 = arith.constant 8 : i32
    %189 = arith.muli %c4_i32, %c8_i32_61 : i32
    %190 = arith.index_cast %189 : i32 to index
    %c0_62 = arith.constant 0 : index
    %191 = vector.load %arg10[%190, %c0_62] : memref<64x512xf32, #tpu.memory_space<vmem>>, vector<8x512xf32>
    %c0_63 = arith.constant 0 : index
    %c0_64 = arith.constant 0 : index
    %192 = vector.load %arg4[%c0_63, %c0_64] : memref<128x512xf32, #tpu.memory_space<vmem>>, vector<128x512xf32>
    %cst_65 = arith.constant dense<0.000000e+00> : vector<8x512xf32>
    %193 = tpu.matmul %168, %192, %cst_65 {dimension_numbers = #tpu.dot_dimension_numbers<[1], [0], [0], [1], [0, 0, 1, 1], [], []>} : vector<8x128xf32>, vector<128x512xf32>, vector<8x512xf32> -> vector<8x512xf32>
    %194 = arith.addf %191, %193 : vector<8x512xf32>
    %195 = vector.extract_strided_slice %194 {offsets = [0, 0], sizes = [8, 384], strides = [1, 1]} : vector<8x512xf32> to vector<8x384xf32>
    %196 = arith.negf %195 : vector<8x384xf32>
    %197 = math.exp %196 : vector<8x384xf32>
    %cst_66 = arith.constant 1.000000e+00 : f32
    %198 = vector.broadcast %cst_66 : f32 to vector<8x384xf32>
    %199 = arith.addf %198, %197 : vector<8x384xf32>
    %200 = arith.divf %198, %199 : vector<8x384xf32>
    %201 = vector.extract_strided_slice %194 {offsets = [0, 384], sizes = [8, 128], strides = [1, 1]} : vector<8x512xf32> to vector<8x128xf32>
    %202 = math.tanh %201 : vector<8x128xf32>
    %203 = vector.extract_strided_slice %200 {offsets = [0, 0], sizes = [8, 128], strides = [1, 1]} : vector<8x384xf32> to vector<8x128xf32>
    %204 = vector.extract_strided_slice %200 {offsets = [0, 128], sizes = [8, 128], strides = [1, 1]} : vector<8x384xf32> to vector<8x128xf32>
    %205 = vector.extract_strided_slice %200 {offsets = [0, 256], sizes = [8, 128], strides = [1, 1]} : vector<8x384xf32> to vector<8x128xf32>
    %206 = arith.mulf %204, %166 : vector<8x128xf32>
    %207 = arith.mulf %203, %202 : vector<8x128xf32>
    %208 = arith.addf %206, %207 : vector<8x128xf32>
    %209 = math.tanh %208 : vector<8x128xf32>
    %210 = arith.mulf %205, %209 : vector<8x128xf32>
    %211 = tpu.concatenate %210, %188 in 1 : vector<8x128xf32>, vector<8x128xf32> -> vector<8x256xf32>
    %c0_67 = arith.constant 0 : index
    %c0_68 = arith.constant 0 : index
    %212 = vector.load %arg5[%c0_67, %c0_68] : memref<256x512xf32, #tpu.memory_space<vmem>>, vector<256x512xf32>
    %cst_69 = arith.constant dense<0.000000e+00> : vector<8x512xf32>
    %213 = tpu.matmul %211, %212, %cst_69 {dimension_numbers = #tpu.dot_dimension_numbers<[1], [0], [0], [1], [0, 0, 1, 1], [], []>} : vector<8x256xf32>, vector<256x512xf32>, vector<8x512xf32> -> vector<8x512xf32>
    %214 = arith.addf %213, %12 : vector<8x512xf32>
    %215 = vector.extract_strided_slice %214 {offsets = [0, 0], sizes = [8, 384], strides = [1, 1]} : vector<8x512xf32> to vector<8x384xf32>
    %216 = arith.negf %215 : vector<8x384xf32>
    %217 = math.exp %216 : vector<8x384xf32>
    %cst_70 = arith.constant 1.000000e+00 : f32
    %218 = vector.broadcast %cst_70 : f32 to vector<8x384xf32>
    %219 = arith.addf %218, %217 : vector<8x384xf32>
    %220 = arith.divf %218, %219 : vector<8x384xf32>
    %221 = vector.extract_strided_slice %214 {offsets = [0, 384], sizes = [8, 128], strides = [1, 1]} : vector<8x512xf32> to vector<8x128xf32>
    %222 = math.tanh %221 : vector<8x128xf32>
    %223 = vector.extract_strided_slice %220 {offsets = [0, 0], sizes = [8, 128], strides = [1, 1]} : vector<8x384xf32> to vector<8x128xf32>
    %224 = vector.extract_strided_slice %220 {offsets = [0, 128], sizes = [8, 128], strides = [1, 1]} : vector<8x384xf32> to vector<8x128xf32>
    %225 = vector.extract_strided_slice %220 {offsets = [0, 256], sizes = [8, 128], strides = [1, 1]} : vector<8x384xf32> to vector<8x128xf32>
    %226 = arith.mulf %224, %186 : vector<8x128xf32>
    %227 = arith.mulf %223, %222 : vector<8x128xf32>
    %228 = arith.addf %226, %227 : vector<8x128xf32>
    %229 = math.tanh %228 : vector<8x128xf32>
    %230 = arith.mulf %225, %229 : vector<8x128xf32>
    %c5_i32 = arith.constant 5 : i32
    %c8_i32_71 = arith.constant 8 : i32
    %231 = arith.muli %c5_i32, %c8_i32_71 : i32
    %232 = arith.index_cast %231 : i32 to index
    %c0_72 = arith.constant 0 : index
    %233 = vector.load %arg10[%232, %c0_72] : memref<64x512xf32, #tpu.memory_space<vmem>>, vector<8x512xf32>
    %c0_73 = arith.constant 0 : index
    %c0_74 = arith.constant 0 : index
    %234 = vector.load %arg4[%c0_73, %c0_74] : memref<128x512xf32, #tpu.memory_space<vmem>>, vector<128x512xf32>
    %cst_75 = arith.constant dense<0.000000e+00> : vector<8x512xf32>
    %235 = tpu.matmul %210, %234, %cst_75 {dimension_numbers = #tpu.dot_dimension_numbers<[1], [0], [0], [1], [0, 0, 1, 1], [], []>} : vector<8x128xf32>, vector<128x512xf32>, vector<8x512xf32> -> vector<8x512xf32>
    %236 = arith.addf %233, %235 : vector<8x512xf32>
    %237 = vector.extract_strided_slice %236 {offsets = [0, 0], sizes = [8, 384], strides = [1, 1]} : vector<8x512xf32> to vector<8x384xf32>
    %238 = arith.negf %237 : vector<8x384xf32>
    %239 = math.exp %238 : vector<8x384xf32>
    %cst_76 = arith.constant 1.000000e+00 : f32
    %240 = vector.broadcast %cst_76 : f32 to vector<8x384xf32>
    %241 = arith.addf %240, %239 : vector<8x384xf32>
    %242 = arith.divf %240, %241 : vector<8x384xf32>
    %243 = vector.extract_strided_slice %236 {offsets = [0, 384], sizes = [8, 128], strides = [1, 1]} : vector<8x512xf32> to vector<8x128xf32>
    %244 = math.tanh %243 : vector<8x128xf32>
    %245 = vector.extract_strided_slice %242 {offsets = [0, 0], sizes = [8, 128], strides = [1, 1]} : vector<8x384xf32> to vector<8x128xf32>
    %246 = vector.extract_strided_slice %242 {offsets = [0, 128], sizes = [8, 128], strides = [1, 1]} : vector<8x384xf32> to vector<8x128xf32>
    %247 = vector.extract_strided_slice %242 {offsets = [0, 256], sizes = [8, 128], strides = [1, 1]} : vector<8x384xf32> to vector<8x128xf32>
    %248 = arith.mulf %246, %208 : vector<8x128xf32>
    %249 = arith.mulf %245, %244 : vector<8x128xf32>
    %250 = arith.addf %248, %249 : vector<8x128xf32>
    %251 = math.tanh %250 : vector<8x128xf32>
    %252 = arith.mulf %247, %251 : vector<8x128xf32>
    %253 = tpu.concatenate %252, %230 in 1 : vector<8x128xf32>, vector<8x128xf32> -> vector<8x256xf32>
    %c0_77 = arith.constant 0 : index
    %c0_78 = arith.constant 0 : index
    %254 = vector.load %arg5[%c0_77, %c0_78] : memref<256x512xf32, #tpu.memory_space<vmem>>, vector<256x512xf32>
    %cst_79 = arith.constant dense<0.000000e+00> : vector<8x512xf32>
    %255 = tpu.matmul %253, %254, %cst_79 {dimension_numbers = #tpu.dot_dimension_numbers<[1], [0], [0], [1], [0, 0, 1, 1], [], []>} : vector<8x256xf32>, vector<256x512xf32>, vector<8x512xf32> -> vector<8x512xf32>
    %256 = arith.addf %255, %12 : vector<8x512xf32>
    %257 = vector.extract_strided_slice %256 {offsets = [0, 0], sizes = [8, 384], strides = [1, 1]} : vector<8x512xf32> to vector<8x384xf32>
    %258 = arith.negf %257 : vector<8x384xf32>
    %259 = math.exp %258 : vector<8x384xf32>
    %cst_80 = arith.constant 1.000000e+00 : f32
    %260 = vector.broadcast %cst_80 : f32 to vector<8x384xf32>
    %261 = arith.addf %260, %259 : vector<8x384xf32>
    %262 = arith.divf %260, %261 : vector<8x384xf32>
    %263 = vector.extract_strided_slice %256 {offsets = [0, 384], sizes = [8, 128], strides = [1, 1]} : vector<8x512xf32> to vector<8x128xf32>
    %264 = math.tanh %263 : vector<8x128xf32>
    %265 = vector.extract_strided_slice %262 {offsets = [0, 0], sizes = [8, 128], strides = [1, 1]} : vector<8x384xf32> to vector<8x128xf32>
    %266 = vector.extract_strided_slice %262 {offsets = [0, 128], sizes = [8, 128], strides = [1, 1]} : vector<8x384xf32> to vector<8x128xf32>
    %267 = vector.extract_strided_slice %262 {offsets = [0, 256], sizes = [8, 128], strides = [1, 1]} : vector<8x384xf32> to vector<8x128xf32>
    %268 = arith.mulf %266, %228 : vector<8x128xf32>
    %269 = arith.mulf %265, %264 : vector<8x128xf32>
    %270 = arith.addf %268, %269 : vector<8x128xf32>
    %271 = math.tanh %270 : vector<8x128xf32>
    %272 = arith.mulf %267, %271 : vector<8x128xf32>
    %c6_i32 = arith.constant 6 : i32
    %c8_i32_81 = arith.constant 8 : i32
    %273 = arith.muli %c6_i32, %c8_i32_81 : i32
    %274 = arith.index_cast %273 : i32 to index
    %c0_82 = arith.constant 0 : index
    %275 = vector.load %arg10[%274, %c0_82] : memref<64x512xf32, #tpu.memory_space<vmem>>, vector<8x512xf32>
    %c0_83 = arith.constant 0 : index
    %c0_84 = arith.constant 0 : index
    %276 = vector.load %arg4[%c0_83, %c0_84] : memref<128x512xf32, #tpu.memory_space<vmem>>, vector<128x512xf32>
    %cst_85 = arith.constant dense<0.000000e+00> : vector<8x512xf32>
    %277 = tpu.matmul %252, %276, %cst_85 {dimension_numbers = #tpu.dot_dimension_numbers<[1], [0], [0], [1], [0, 0, 1, 1], [], []>} : vector<8x128xf32>, vector<128x512xf32>, vector<8x512xf32> -> vector<8x512xf32>
    %278 = arith.addf %275, %277 : vector<8x512xf32>
    %279 = vector.extract_strided_slice %278 {offsets = [0, 0], sizes = [8, 384], strides = [1, 1]} : vector<8x512xf32> to vector<8x384xf32>
    %280 = arith.negf %279 : vector<8x384xf32>
    %281 = math.exp %280 : vector<8x384xf32>
    %cst_86 = arith.constant 1.000000e+00 : f32
    %282 = vector.broadcast %cst_86 : f32 to vector<8x384xf32>
    %283 = arith.addf %282, %281 : vector<8x384xf32>
    %284 = arith.divf %282, %283 : vector<8x384xf32>
    %285 = vector.extract_strided_slice %278 {offsets = [0, 384], sizes = [8, 128], strides = [1, 1]} : vector<8x512xf32> to vector<8x128xf32>
    %286 = math.tanh %285 : vector<8x128xf32>
    %287 = vector.extract_strided_slice %284 {offsets = [0, 0], sizes = [8, 128], strides = [1, 1]} : vector<8x384xf32> to vector<8x128xf32>
    %288 = vector.extract_strided_slice %284 {offsets = [0, 128], sizes = [8, 128], strides = [1, 1]} : vector<8x384xf32> to vector<8x128xf32>
    %289 = vector.extract_strided_slice %284 {offsets = [0, 256], sizes = [8, 128], strides = [1, 1]} : vector<8x384xf32> to vector<8x128xf32>
    %290 = arith.mulf %288, %250 : vector<8x128xf32>
    %291 = arith.mulf %287, %286 : vector<8x128xf32>
    %292 = arith.addf %290, %291 : vector<8x128xf32>
    %293 = math.tanh %292 : vector<8x128xf32>
    %294 = arith.mulf %289, %293 : vector<8x128xf32>
    %295 = tpu.concatenate %294, %272 in 1 : vector<8x128xf32>, vector<8x128xf32> -> vector<8x256xf32>
    %c0_87 = arith.constant 0 : index
    %c0_88 = arith.constant 0 : index
    %296 = vector.load %arg5[%c0_87, %c0_88] : memref<256x512xf32, #tpu.memory_space<vmem>>, vector<256x512xf32>
    %cst_89 = arith.constant dense<0.000000e+00> : vector<8x512xf32>
    %297 = tpu.matmul %295, %296, %cst_89 {dimension_numbers = #tpu.dot_dimension_numbers<[1], [0], [0], [1], [0, 0, 1, 1], [], []>} : vector<8x256xf32>, vector<256x512xf32>, vector<8x512xf32> -> vector<8x512xf32>
    %298 = arith.addf %297, %12 : vector<8x512xf32>
    %299 = vector.extract_strided_slice %298 {offsets = [0, 0], sizes = [8, 384], strides = [1, 1]} : vector<8x512xf32> to vector<8x384xf32>
    %300 = arith.negf %299 : vector<8x384xf32>
    %301 = math.exp %300 : vector<8x384xf32>
    %cst_90 = arith.constant 1.000000e+00 : f32
    %302 = vector.broadcast %cst_90 : f32 to vector<8x384xf32>
    %303 = arith.addf %302, %301 : vector<8x384xf32>
    %304 = arith.divf %302, %303 : vector<8x384xf32>
    %305 = vector.extract_strided_slice %298 {offsets = [0, 384], sizes = [8, 128], strides = [1, 1]} : vector<8x512xf32> to vector<8x128xf32>
    %306 = math.tanh %305 : vector<8x128xf32>
    %307 = vector.extract_strided_slice %304 {offsets = [0, 0], sizes = [8, 128], strides = [1, 1]} : vector<8x384xf32> to vector<8x128xf32>
    %308 = vector.extract_strided_slice %304 {offsets = [0, 128], sizes = [8, 128], strides = [1, 1]} : vector<8x384xf32> to vector<8x128xf32>
    %309 = vector.extract_strided_slice %304 {offsets = [0, 256], sizes = [8, 128], strides = [1, 1]} : vector<8x384xf32> to vector<8x128xf32>
    %310 = arith.mulf %308, %270 : vector<8x128xf32>
    %311 = arith.mulf %307, %306 : vector<8x128xf32>
    %312 = arith.addf %310, %311 : vector<8x128xf32>
    %313 = math.tanh %312 : vector<8x128xf32>
    %314 = arith.mulf %309, %313 : vector<8x128xf32>
    %c7_i32 = arith.constant 7 : i32
    %c8_i32_91 = arith.constant 8 : i32
    %315 = arith.muli %c7_i32, %c8_i32_91 : i32
    %316 = arith.index_cast %315 : i32 to index
    %c0_92 = arith.constant 0 : index
    %317 = vector.load %arg10[%316, %c0_92] : memref<64x512xf32, #tpu.memory_space<vmem>>, vector<8x512xf32>
    %c0_93 = arith.constant 0 : index
    %c0_94 = arith.constant 0 : index
    %318 = vector.load %arg4[%c0_93, %c0_94] : memref<128x512xf32, #tpu.memory_space<vmem>>, vector<128x512xf32>
    %cst_95 = arith.constant dense<0.000000e+00> : vector<8x512xf32>
    %319 = tpu.matmul %294, %318, %cst_95 {dimension_numbers = #tpu.dot_dimension_numbers<[1], [0], [0], [1], [0, 0, 1, 1], [], []>} : vector<8x128xf32>, vector<128x512xf32>, vector<8x512xf32> -> vector<8x512xf32>
    %320 = arith.addf %317, %319 : vector<8x512xf32>
    %321 = vector.extract_strided_slice %320 {offsets = [0, 0], sizes = [8, 384], strides = [1, 1]} : vector<8x512xf32> to vector<8x384xf32>
    %322 = arith.negf %321 : vector<8x384xf32>
    %323 = math.exp %322 : vector<8x384xf32>
    %cst_96 = arith.constant 1.000000e+00 : f32
    %324 = vector.broadcast %cst_96 : f32 to vector<8x384xf32>
    %325 = arith.addf %324, %323 : vector<8x384xf32>
    %326 = arith.divf %324, %325 : vector<8x384xf32>
    %327 = vector.extract_strided_slice %320 {offsets = [0, 384], sizes = [8, 128], strides = [1, 1]} : vector<8x512xf32> to vector<8x128xf32>
    %328 = math.tanh %327 : vector<8x128xf32>
    %329 = vector.extract_strided_slice %326 {offsets = [0, 0], sizes = [8, 128], strides = [1, 1]} : vector<8x384xf32> to vector<8x128xf32>
    %330 = vector.extract_strided_slice %326 {offsets = [0, 128], sizes = [8, 128], strides = [1, 1]} : vector<8x384xf32> to vector<8x128xf32>
    %331 = vector.extract_strided_slice %326 {offsets = [0, 256], sizes = [8, 128], strides = [1, 1]} : vector<8x384xf32> to vector<8x128xf32>
    %332 = arith.mulf %330, %292 : vector<8x128xf32>
    %333 = arith.mulf %329, %328 : vector<8x128xf32>
    %334 = arith.addf %332, %333 : vector<8x128xf32>
    %335 = math.tanh %334 : vector<8x128xf32>
    %336 = arith.mulf %331, %335 : vector<8x128xf32>
    %337 = tpu.concatenate %336, %314 in 1 : vector<8x128xf32>, vector<8x128xf32> -> vector<8x256xf32>
    %c0_97 = arith.constant 0 : index
    %c0_98 = arith.constant 0 : index
    %338 = vector.load %arg5[%c0_97, %c0_98] : memref<256x512xf32, #tpu.memory_space<vmem>>, vector<256x512xf32>
    %cst_99 = arith.constant dense<0.000000e+00> : vector<8x512xf32>
    %339 = tpu.matmul %337, %338, %cst_99 {dimension_numbers = #tpu.dot_dimension_numbers<[1], [0], [0], [1], [0, 0, 1, 1], [], []>} : vector<8x256xf32>, vector<256x512xf32>, vector<8x512xf32> -> vector<8x512xf32>
    %340 = arith.addf %339, %12 : vector<8x512xf32>
    %341 = vector.extract_strided_slice %340 {offsets = [0, 0], sizes = [8, 384], strides = [1, 1]} : vector<8x512xf32> to vector<8x384xf32>
    %342 = arith.negf %341 : vector<8x384xf32>
    %343 = math.exp %342 : vector<8x384xf32>
    %cst_100 = arith.constant 1.000000e+00 : f32
    %344 = vector.broadcast %cst_100 : f32 to vector<8x384xf32>
    %345 = arith.addf %344, %343 : vector<8x384xf32>
    %346 = arith.divf %344, %345 : vector<8x384xf32>
    %347 = vector.extract_strided_slice %340 {offsets = [0, 384], sizes = [8, 128], strides = [1, 1]} : vector<8x512xf32> to vector<8x128xf32>
    %348 = math.tanh %347 : vector<8x128xf32>
    %349 = vector.extract_strided_slice %346 {offsets = [0, 0], sizes = [8, 128], strides = [1, 1]} : vector<8x384xf32> to vector<8x128xf32>
    %350 = vector.extract_strided_slice %346 {offsets = [0, 128], sizes = [8, 128], strides = [1, 1]} : vector<8x384xf32> to vector<8x128xf32>
    %351 = vector.extract_strided_slice %346 {offsets = [0, 256], sizes = [8, 128], strides = [1, 1]} : vector<8x384xf32> to vector<8x128xf32>
    %352 = arith.mulf %350, %312 : vector<8x128xf32>
    %353 = arith.mulf %349, %348 : vector<8x128xf32>
    %354 = arith.addf %352, %353 : vector<8x128xf32>
    %355 = math.tanh %354 : vector<8x128xf32>
    %356 = arith.mulf %351, %355 : vector<8x128xf32>
    %c8_i32_101 = arith.constant 8 : i32
    %c0_102 = arith.constant 0 : index
    %c0_103 = arith.constant 0 : index
    %c0_104 = arith.constant 0 : index
    %357 = vector.load %arg11[%c0_102, %c0_103, %c0_104] : memref<2x8x128xf32, #tpu.memory_space<vmem>>, vector<1x8x128xf32>
    %358 = vector.shape_cast %357 : vector<1x8x128xf32> to vector<8x128xf32>
    %359 = vector.shape_cast %336 : vector<8x128xf32> to vector<1x8x128xf32>
    tpu.vector_store %arg11[%c0_102, %c0_103, %c0_104], %359 {strides = array<i32>} : memref<2x8x128xf32, #tpu.memory_space<vmem>>, vector<1x8x128xf32>,
    %c0_105 = arith.constant 0 : index
    %c0_106 = arith.constant 0 : index
    %c0_107 = arith.constant 0 : index
    %360 = vector.load %arg12[%c0_105, %c0_106, %c0_107] : memref<2x8x128xf32, #tpu.memory_space<vmem>>, vector<1x8x128xf32>
    %361 = vector.shape_cast %360 : vector<1x8x128xf32> to vector<8x128xf32>
    %362 = vector.shape_cast %334 : vector<8x128xf32> to vector<1x8x128xf32>
    tpu.vector_store %arg12[%c0_105, %c0_106, %c0_107], %362 {strides = array<i32>} : memref<2x8x128xf32, #tpu.memory_space<vmem>>, vector<1x8x128xf32>,
    %c1_108 = arith.constant 1 : index
    %c0_109 = arith.constant 0 : index
    %c0_110 = arith.constant 0 : index
    %363 = vector.load %arg11[%c1_108, %c0_109, %c0_110] : memref<2x8x128xf32, #tpu.memory_space<vmem>>, vector<1x8x128xf32>
    %364 = vector.shape_cast %363 : vector<1x8x128xf32> to vector<8x128xf32>
    %365 = vector.shape_cast %356 : vector<8x128xf32> to vector<1x8x128xf32>
    tpu.vector_store %arg11[%c1_108, %c0_109, %c0_110], %365 {strides = array<i32>} : memref<2x8x128xf32, #tpu.memory_space<vmem>>, vector<1x8x128xf32>,
    %c1_111 = arith.constant 1 : index
    %c0_112 = arith.constant 0 : index
    %c0_113 = arith.constant 0 : index
    %366 = vector.load %arg12[%c1_111, %c0_112, %c0_113] : memref<2x8x128xf32, #tpu.memory_space<vmem>>, vector<1x8x128xf32>
    %367 = vector.shape_cast %366 : vector<1x8x128xf32> to vector<8x128xf32>
    %368 = vector.shape_cast %354 : vector<8x128xf32> to vector<1x8x128xf32>
    tpu.vector_store %arg12[%c1_111, %c0_112, %c0_113], %368 {strides = array<i32>} : memref<2x8x128xf32, #tpu.memory_space<vmem>>, vector<1x8x128xf32>,
    %c0_i32_114 = arith.constant 0 : i32
    %369 = arith.cmpi eq, %arg0, %c0_i32_114 : i32
    %370 = arith.extui %369 : i1 to i32
    %c0_i32_115 = arith.constant 0 : i32
    %371 = arith.cmpi ne, %370, %c0_i32_115 : i32
    scf.if %371 {
      %c0_116 = arith.constant 0 : index
      %c0_117 = arith.constant 0 : index
      %372 = vector.load %arg7[%c0_116, %c0_117] : memref<128x128xf32, #tpu.memory_space<vmem>>, vector<128x128xf32>
      %cst_118 = arith.constant dense<0.000000e+00> : vector<8x128xf32>
      %373 = tpu.matmul %356, %372, %cst_118 {dimension_numbers = #tpu.dot_dimension_numbers<[1], [0], [0], [1], [0, 0, 1, 1], [], []>} : vector<8x128xf32>, vector<128x128xf32>, vector<8x128xf32> -> vector<8x128xf32>
      %c0_119 = arith.constant 0 : index
      %c0_120 = arith.constant 0 : index
      %374 = vector.load %arg8[%c0_119, %c0_120] : memref<1x128xf32, #tpu.memory_space<vmem>>, vector<1x128xf32>
      %375 = vector.broadcast %374 : vector<1x128xf32> to vector<8x128xf32>
      %376 = arith.addf %373, %375 : vector<8x128xf32>
      %c0_121 = arith.constant 0 : index
      %c0_122 = arith.constant 0 : index
      %377 = vector.load %arg9[%c0_121, %c0_122] : memref<8x128xf32, #tpu.memory_space<vmem>>, vector<8x128xf32>
      tpu.vector_store %arg9[%c0_121, %c0_122], %376 {strides = array<i32>} : memref<8x128xf32, #tpu.memory_space<vmem>>, vector<8x128xf32>,
    } else {
    }
    return
  }
  func.func @transform_0(%arg0: i32) -> (i32, i32) {
    %c0_i32 = arith.constant 0 : i32
    %c0_i32_0 = arith.constant 0 : i32
    return %arg0, %c0_i32 : i32, i32
  }
  func.func @transform_1(%arg0: i32) -> (i32, i32) {
    %c0_i32 = arith.constant 0 : i32
    %c0_i32_0 = arith.constant 0 : i32
    %c0_i32_1 = arith.constant 0 : i32
    return %c0_i32, %c0_i32_0 : i32, i32
  }
  func.func @transform_2(%arg0: i32) -> (i32, i32) {
    %c0_i32 = arith.constant 0 : i32
    %c0_i32_0 = arith.constant 0 : i32
    %c0_i32_1 = arith.constant 0 : i32
    return %c0_i32, %c0_i32_0 : i32, i32
  }
  func.func @transform_3(%arg0: i32) -> (i32, i32) {
    %c0_i32 = arith.constant 0 : i32
    %c0_i32_0 = arith.constant 0 : i32
    %c0_i32_1 = arith.constant 0 : i32
    return %c0_i32, %c0_i32_0 : i32, i32
  }
  func.func @transform_4(%arg0: i32) -> (i32, i32) {
    %c0_i32 = arith.constant 0 : i32
    %c0_i32_0 = arith.constant 0 : i32
    %c0_i32_1 = arith.constant 0 : i32
    return %c0_i32, %c0_i32_0 : i32, i32
  }
  func.func @transform_5(%arg0: i32) -> (i32, i32) {
    %c0_i32 = arith.constant 0 : i32
    %c0_i32_0 = arith.constant 0 : i32
    %c0_i32_1 = arith.constant 0 : i32
    return %c0_i32, %c0_i32_0 : i32, i32
  }
  func.func @transform_6(%arg0: i32) -> (i32, i32) {
    %c0_i32 = arith.constant 0 : i32
    %c0_i32_0 = arith.constant 0 : i32
    %c0_i32_1 = arith.constant 0 : i32
    return %c0_i32, %c0_i32_0 : i32, i32
  }
  func.func @transform_7(%arg0: i32) -> (i32, i32) {
    %c0_i32 = arith.constant 0 : i32
    %c0_i32_0 = arith.constant 0 : i32
    %c0_i32_1 = arith.constant 0 : i32
    return %c0_i32, %c0_i32_0 : i32, i32
  }
  func.func @transform_8(%arg0: i32) -> (i32, i32) {
    %c0_i32 = arith.constant 0 : i32
    %c0_i32_0 = arith.constant 0 : i32
    %c0_i32_1 = arith.constant 0 : i32
    return %c0_i32, %c0_i32_0 : i32, i32
  }
}

</mosaic_0001>

<llo_original>
// kernel: lstm_network_forward.1
$region0: #{lstm_network_forward.1}
  #allocation0 [shape = 'u32[]', space=smem, size = 0x4, offset = 0x4, fixed_abs, tag = 'smem constant byte address 0x4 - core index']
  #allocation1 [shape = 'u32[144,128]{1,0:T(1,128)}', space=vmem, size = 0x12000, scoped, tag = 'internal scratch']
  #allocation2 [shape = 'f32[64,512]{1,0:T(8,128)}', space=vmem, size = 0x20000, scoped, tag = 'scratch operand']
  #allocation3 [shape = 'f32[2,8,128]{2,1,0:T(8,128)}', space=vmem, size = 0x2000, scoped, tag = 'scratch operand']
  #allocation4 [shape = 'f32[2,8,128]{2,1,0:T(8,128)}', space=vmem, size = 0x2000, scoped, tag = 'scratch operand']
  %s0 = inlined_call_operand.vmem [shape: f32[64,4], index: 0, kind: input, shape index: {}]
  %s1 = inlined_call_operand.hbm [shape: f32[4,512], index: 1, kind: input, shape index: {}]
  %s2 = inlined_call_operand.hbm [shape: f32[1,512], index: 2, kind: input, shape index: {}]
  %s3 = inlined_call_operand.hbm [shape: f32[128,512], index: 3, kind: input, shape index: {}]
  %s4 = inlined_call_operand.hbm [shape: f32[256,512], index: 4, kind: input, shape index: {}]
  %s5 = inlined_call_operand.hbm [shape: f32[1,512], index: 5, kind: input, shape index: {}]
  %s6 = inlined_call_operand.vmem [shape: f32[128,128], index: 6, kind: input, shape index: {}]
  %s7 = inlined_call_operand.vmem [shape: f32[1,128], index: 7, kind: input, shape index: {}]
  %s8 = inlined_call_operand.vmem [shape: f32[8,128], index: 8, kind: output, shape index: {}]
  %s9 = sld [smem:[#allocation0]]
  $region70: #{lstm_network_forward.1} parent=0
    _
  %s11 = ssub.s32 1, %s9
  %s12 = scalar_select 0, %s11, %s9
  $region1: #{lstm_network_forward.1} parent=0
    #allocation5 [shape = 'u8[8192]{0}', space=vmem, size = 0x2000, scoped, tag = 'input window, operand 1, single buffered']
    #allocation6 [shape = 's32[1]{0}', space=sflag, size = 0x4, scoped, tag = 'scoped memory for lstm_network_forward.1']
    #allocation7 [shape = 'u8[2048]{0}', space=vmem, size = 0x800, scoped, tag = 'input window, operand 2, single buffered']
    #allocation8 [shape = 's32[1]{0}', space=sflag, size = 0x4, scoped, tag = 'scoped memory for lstm_network_forward.1']
    #allocation9 [shape = 'u8[262144]{0}', space=vmem, size = 0x40000, scoped, tag = 'input window, operand 3, single buffered']
    #allocation10 [shape = 'u8[524288]{0}', space=vmem, size = 0x80000, scoped, tag = 'input window, operand 4, single buffered']
    #allocation11 [shape = 's32[1]{0}', space=sflag, size = 0x4, scoped, tag = 'scoped memory for lstm_network_forward.1']
    #allocation12 [shape = 'u8[2048]{0}', space=vmem, size = 0x800, scoped, tag = 'input window, operand 5, single buffered']
    %13 = vsyncpa [#allocation6], 0
    %14 = vsyncpa [#allocation8], 0
    %15 = vsyncpa [#allocation11], 0
    // Predicated region
    $region2: #{lstm_network_forward.1} parent=1 // pred_check
      _
    $region3: #{lstm_network_forward.1} parent=1 // pred_check_branch
      %17 = sbr.rel (0) target = $region5
    $region4: #{lstm_network_forward.1} parent=1 // pred_region
      _
    $region5: #{lstm_network_forward.1} parent=1 // pred_fallthru
      _
    // Predicated region
    $region6: #{lstm_network_forward.1} parent=1 // pred_check
      _
    $region7: #{lstm_network_forward.1} parent=1 // pred_check_branch
      %19 = sbr.rel (0) target = $region9
    $region8: #{lstm_network_forward.1} parent=1 // pred_region
      %s21 = ssub.s32 256, 256
      %22 = vsyncadd [#allocation6], %s21
      %s24 = sshll.u32 [#allocation5], 4
      %s25 = int_to_ptr.vmem [resolvable:$true] %s24
      %27 = dma.hbm_to_vmem [thread:$0]  %s1, 256, %s25, [#allocation6]
    $region9: #{lstm_network_forward.1} parent=1 // pred_fallthru
      _
    // Predicated region
    $region10: #{lstm_network_forward.1} parent=1 // pred_check
      _
    $region11: #{lstm_network_forward.1} parent=1 // pred_check_branch
      %29 = sbr.rel (0) target = $region13
    $region12: #{lstm_network_forward.1} parent=1 // pred_region
      %s31 = ssub.s32 64, 64
      %32 = vsyncadd [#allocation8], %s31
      %s34 = sshll.u32 [#allocation7], 4
      %s35 = int_to_ptr.vmem [resolvable:$true] %s34
      %37 = dma.hbm_to_vmem [thread:$0]  %s2, 64, %s35, [#allocation8]
    $region13: #{lstm_network_forward.1} parent=1 // pred_fallthru
      _
    // Predicated region
    $region14: #{lstm_network_forward.1} parent=1 // pred_check
      _
    $region15: #{lstm_network_forward.1} parent=1 // pred_check_branch
      %39 = sbr.rel (0) target = $region17
    $region16: #{lstm_network_forward.1} parent=1 // pred_region
      %s41 = ssub.s32 8192, 8192
      %42 = vsyncadd [#allocation8], %s41
      %s43 = sshll.u32 [#allocation9], 4
      %s44 = int_to_ptr.vmem [resolvable:$true] %s43
      %49 = dma.hbm_to_vmem [thread:$0]  %s3, 8192, %s44, [#allocation8], 512, 512, 32
    $region17: #{lstm_network_forward.1} parent=1 // pred_fallthru
      _
    // Predicated region
    $region18: #{lstm_network_forward.1} parent=1 // pred_check
      _
    $region19: #{lstm_network_forward.1} parent=1 // pred_check_branch
      %51 = sbr.rel (0) target = $region21
    $region20: #{lstm_network_forward.1} parent=1 // pred_region
      %s53 = ssub.s32 16384, 16384
      %54 = vsyncadd [#allocation11], %s53
      %s55 = sshll.u32 [#allocation10], 4
      %s56 = int_to_ptr.vmem [resolvable:$true] %s55
      %61 = dma.hbm_to_vmem [thread:$0]  %s4, 16384, %s56, [#allocation11], 512, 512, 32
    $region21: #{lstm_network_forward.1} parent=1 // pred_fallthru
      _
    // Predicated region
    $region22: #{lstm_network_forward.1} parent=1 // pred_check
      _
    $region23: #{lstm_network_forward.1} parent=1 // pred_check_branch
      %63 = sbr.rel (0) target = $region25
    $region24: #{lstm_network_forward.1} parent=1 // pred_region
      %s65 = ssub.s32 64, 64
      %66 = vsyncadd [#allocation11], %s65
      %s68 = sshll.u32 [#allocation12], 4
      %s69 = int_to_ptr.vmem [resolvable:$true] %s68
      %71 = dma.hbm_to_vmem [thread:$0]  %s5, 64, %s69, [#allocation11]
    $region25: #{lstm_network_forward.1} parent=1 // pred_fallthru
      _
    // Predicated region
    $region26: #{lstm_network_forward.1} parent=1 // pred_check
      _
    $region27: #{lstm_network_forward.1} parent=1 // pred_check_branch
      %73 = sbr.rel (0) target = $region29
    $region28: #{lstm_network_forward.1} parent=1 // pred_region
      _
    $region29: #{lstm_network_forward.1} parent=1 // pred_fallthru
      _
    // Predicated region
    $region30: #{lstm_network_forward.1} parent=1 // pred_check
      _
    $region31: #{lstm_network_forward.1} parent=1 // pred_check_branch
      %75 = sbr.rel (0) target = $region33
    $region32: #{lstm_network_forward.1} parent=1 // pred_region
      _
    $region33: #{lstm_network_forward.1} parent=1 // pred_fallthru
      _
    // Predicated region
    $region34: #{lstm_network_forward.1} parent=1 // pred_check
      _
    $region35: #{lstm_network_forward.1} parent=1 // pred_check_branch
      %77 = sbr.rel (0) target = $region37
    $region36: #{lstm_network_forward.1} parent=1 // pred_region
      %78 = dma.done [#allocation6], 256
    $region37: #{lstm_network_forward.1} parent=1 // pred_fallthru
      _
    // Predicated region
    $region38: #{lstm_network_forward.1} parent=1 // pred_check
      _
    $region39: #{lstm_network_forward.1} parent=1 // pred_check_branch
      %80 = sbr.rel (0) target = $region41
    $region40: #{lstm_network_forward.1} parent=1 // pred_region
      %81 = dma.done [#allocation8], 64
    $region41: #{lstm_network_forward.1} parent=1 // pred_fallthru
      _
    // Predicated region
    $region42: #{lstm_network_forward.1} parent=1 // pred_check
      _
    $region43: #{lstm_network_forward.1} parent=1 // pred_check_branch
      %83 = sbr.rel (0) target = $region45
    $region44: #{lstm_network_forward.1} parent=1 // pred_region
      %84 = dma.done [#allocation8], 8192
    $region45: #{lstm_network_forward.1} parent=1 // pred_fallthru
      _
    // Predicated region
    $region46: #{lstm_network_forward.1} parent=1 // pred_check
      _
    $region47: #{lstm_network_forward.1} parent=1 // pred_check_branch
      %86 = sbr.rel (0) target = $region49
    $region48: #{lstm_network_forward.1} parent=1 // pred_region
      %87 = dma.done [#allocation11], 16384
    $region49: #{lstm_network_forward.1} parent=1 // pred_fallthru
      _
    // Predicated region
    $region50: #{lstm_network_forward.1} parent=1 // pred_check
      _
    $region51: #{lstm_network_forward.1} parent=1 // pred_check_branch
      %89 = sbr.rel (0) target = $region53
    $region52: #{lstm_network_forward.1} parent=1 // pred_region
      %90 = dma.done [#allocation11], 64
    $region53: #{lstm_network_forward.1} parent=1 // pred_fallthru
      _
    %p91 = scmp.eq.s32.totalorder 0, 0
    // Predicated region
    $region54: #{lstm_network_forward.1} parent=1 // pred_check
      %p92 = pneg %p91
    $region55: #{lstm_network_forward.1} parent=1 // pred_check_branch
      %94 = sbr.rel (%p92) target = $region57
    $region56: #{lstm_network_forward.1} parent=1 // pred_region
      %95 = vst [vmem:[#allocation3] sm:$0xff] 0.0
      %96 = vst [vmem:[#allocation3 + $0x8] sm:$0xff] 0.0
      %97 = vst [vmem:[#allocation4] sm:$0xff] 0.0
      %98 = vst [vmem:[#allocation4 + $0x8] sm:$0xff] 0.0
    $region57: #{lstm_network_forward.1} parent=1 // pred_fallthru
      _
    %v99 = vld [vmem:[%s0] sm:$0xff]
    %v100 = vld [vmem:[%s0 + $0x8] sm:$0xff]
    %v101 = vld [vmem:[%s0 + $0x10] sm:$0xff]
    %v102 = vld [vmem:[%s0 + $0x18] sm:$0xff]
    %v103 = vld [vmem:[%s0 + $0x20] sm:$0xff]
    %v104 = vld [vmem:[%s0 + $0x28] sm:$0xff]
    %v105 = vld [vmem:[%s0 + $0x30] sm:$0xff]
    %v106 = vld [vmem:[%s0 + $0x38] sm:$0xff]
    %v107 = vld [vmem:[#allocation5] sm:$0xff]
    %v108 = vld [vmem:[#allocation5 + $0x8] sm:$0xff]
    %v109 = vld [vmem:[#allocation7] sm:$0xf]
    %v111 = vlaneseq
    %v112 = vshrl.u32 %v111, 7
    %v113 = vsub.s32 0, %v112
    %v114 = vrot.slane %v109, %v113
    %v115 = vlaneseq
    %v116 = vshrl.u32 %v115, 7
    %v117 = vsub.s32 1, %v116
    %v118 = vrot.slane %v109, %v117
    %v119 = vlaneseq
    %v120 = vshrl.u32 %v119, 7
    %v121 = vsub.s32 2, %v120
    %v122 = vrot.slane %v109, %v121
    %v123 = vlaneseq
    %v124 = vshrl.u32 %v123, 7
    %v125 = vsub.s32 3, %v124
    %v126 = vrot.slane %v109, %v125
    %v133 = vcombine.high %v107, %v107
    %v134 = vcombine.high %v108, %v108
    %vm135 = vcmask 31744
    %v137 = vsel %vm135, %v99, 0
    %v140 = vsel %vm135, %v100, 0
    %v143 = vsel %vm135, %v101, 0
    %v146 = vsel %vm135, %v102, 0
    %v149 = vsel %vm135, %v103, 0
    %v152 = vsel %vm135, %v104, 0
    %v155 = vsel %vm135, %v105, 0
    %v158 = vsel %vm135, %v106, 0
    %vm160 = vcmask 1043456
    %v161 = vsel %vm160, %v107, 0
    %v163 = vsel %vm160, %v133, 0
    %v165 = vsel %vm160, %v108, 0
    %v167 = vsel %vm160, %v134, 0
    %169 = vmatprep.subr.mxu0 %v163
    %170 = vmatpush1.msra.mxu0 %v161
    %171 = vmatprep.subr.mxu0 0.0
    %172 = vmatpush1.msra.mxu0 0.0
    %173 = vmatprep.subr.mxu0 0.0
    %174 = vmatpush1.msra.mxu0 0.0
    %175 = vmatprep.subr.mxu0 0.0
    %176 = vmatpush1.msra.mxu0 0.0
    %177 = vmatprep.subr.mxu0 0.0
    %178 = vmatpush1.msra.mxu0 0.0
    %179 = vmatprep.subr.mxu0 0.0
    %180 = vmatpush1.msra.mxu0 0.0
    %181 = vmatprep.subr.mxu0 0.0
    %182 = vmatpush1.msra.mxu0 0.0
    %183 = vmatprep.subr.mxu0 0.0
    %184 = vmatpush1.msra.mxu0 0.0
    %185 = vmatprep.subr.mxu0 0.0
    %186 = vmatpush1.msra.mxu0 0.0
    %187 = vmatprep.subr.mxu0 0.0
    %188 = vmatpush1.msra.mxu0 0.0
    %189 = vmatprep.subr.mxu0 0.0
    %190 = vmatpush1.msra.mxu0 0.0
    %191 = vmatprep.subr.mxu0 0.0
    %192 = vmatpush1.msra.mxu0 0.0
    %193 = vmatprep.subr.mxu0 0.0
    %194 = vmatpush1.msra.mxu0 0.0
    %195 = vmatprep.subr.mxu0 0.0
    %196 = vmatpush1.msra.mxu0 0.0
    %197 = vmatprep.subr.mxu0 0.0
    %198 = vmatpush1.msra.mxu0 0.0
    %199 = vmatprep.subr.mxu0 0.0
    %200 = vmatpush1.msra.mxu0 0.0
    %201 = vmatprep.subr.mxu0 0.0
    %202 = vmatpush1.msra.mxu0 0.0
    %203 = vmatprep.subr.mxu0 0.0
    %204 = vmatpush1.msra.mxu0 0.0
    %205 = vmatprep.subr.mxu0 0.0
    %206 = vmatpush1.msra.mxu0 0.0
    %207 = vmatprep.subr.mxu0 0.0
    %208 = vmatpush1.msra.mxu0 0.0
    %209 = vmatprep.subr.mxu0 0.0
    %210 = vmatpush1.msra.mxu0 0.0
    %211 = vmatprep.subr.mxu0 0.0
    %212 = vmatpush1.msra.mxu0 0.0
    %213 = vmatprep.subr.mxu0 0.0
    %214 = vmatpush1.msra.mxu0 0.0
    %215 = vmatprep.subr.mxu0 0.0
    %216 = vmatpush1.msra.mxu0 0.0
    %217 = vmatprep.subr.mxu0 0.0
    %218 = vmatpush1.msra.mxu0 0.0
    %219 = vmatprep.subr.mxu0 0.0
    %220 = vmatpush1.msra.mxu0 0.0
    %221 = vmatprep.subr.mxu0 0.0
    %222 = vmatpush1.msra.mxu0 0.0
    %223 = vmatprep.subr.mxu0 0.0
    %224 = vmatpush1.msra.mxu0 0.0
    %225 = vmatprep.subr.mxu0 0.0
    %226 = vmatpush1.msra.mxu0 0.0
    %227 = vmatprep.subr.mxu0 0.0
    %228 = vmatpush1.msra.mxu0 0.0
    %229 = vmatprep.subr.mxu0 0.0
    %230 = vmatpush1.msra.mxu0 0.0
    %231 = vmatprep.subr.mxu0 0.0
    %232 = vmatpush1.msra.mxu0 0.0
    %233 = vmatprep.mubr.f32.mxu0 0.0
    %234 = vmatmul.mubr.f32.gmra.mrb[0].mxu0 %v137
    %v235 = vpop.f32.mrb[0].mxu0
    %v236 = vadd.f32 %v114, %v235
    %v237 = vpop.f32.mrb[0].mxu0
    %v238 = vadd.f32 %v118, %v237
    %239 = vmatprep.mubr.f32.mxu0 0.0
    %240 = vmatmul.mubr.f32.gmra.mrb[0].mxu0 %v140
    %v241 = vpop.f32.mrb[0].mxu0
    %v242 = vadd.f32 %v114, %v241
    %v243 = vpop.f32.mrb[0].mxu0
    %v244 = vadd.f32 %v118, %v243
    %245 = vmatprep.mubr.f32.mxu0 0.0
    %246 = vmatmul.mubr.f32.gmra.mrb[0].mxu0 %v143
    %v247 = vpop.f32.mrb[0].mxu0
    %v248 = vadd.f32 %v114, %v247
    %v249 = vpop.f32.mrb[0].mxu0
    %v250 = vadd.f32 %v118, %v249
    %251 = vmatprep.mubr.f32.mxu0 0.0
    %252 = vmatmul.mubr.f32.gmra.mrb[0].mxu0 %v146
    %v253 = vpop.f32.mrb[0].mxu0
    %v254 = vadd.f32 %v114, %v253
    %v255 = vpop.f32.mrb[0].mxu0
    %v256 = vadd.f32 %v118, %v255
    %257 = vmatprep.mubr.f32.mxu0 0.0
    %258 = vmatmul.mubr.f32.gmra.mrb[0].mxu0 %v149
    %v259 = vpop.f32.mrb[0].mxu0
    %v260 = vadd.f32 %v114, %v259
    %v261 = vpop.f32.mrb[0].mxu0
    %v262 = vadd.f32 %v118, %v261
    %263 = vmatprep.mubr.f32.mxu0 0.0
    %264 = vmatmul.mubr.f32.gmra.mrb[0].mxu0 %v152
    %v265 = vpop.f32.mrb[0].mxu0
    %v266 = vadd.f32 %v114, %v265
    %v267 = vpop.f32.mrb[0].mxu0
    %v268 = vadd.f32 %v118, %v267
    %269 = vmatprep.mubr.f32.mxu0 0.0
    %270 = vmatmul.mubr.f32.gmra.mrb[0].mxu0 %v155
    %v271 = vpop.f32.mrb[0].mxu0
    %v272 = vadd.f32 %v114, %v271
    %v273 = vpop.f32.mrb[0].mxu0
    %v274 = vadd.f32 %v118, %v273
    %275 = vmatprep.mubr.f32.mxu0 0.0
    %276 = vmatmul.mubr.f32.gmra.mrb[0].mxu0 %v158
    %v277 = vpop.f32.mrb[0].mxu0
    %v278 = vadd.f32 %v114, %v277
    %v279 = vpop.f32.mrb[0].mxu0
    %v280 = vadd.f32 %v118, %v279
    %281 = vdwg.mxu0
    %282 = vmatprep.subr.mxu0 %v167
    %283 = vmatpush1.msra.mxu0 %v165
    %284 = vmatprep.subr.mxu0 0.0
    %285 = vmatpush1.msra.mxu0 0.0
    %286 = vmatprep.subr.mxu0 0.0
    %287 = vmatpush1.msra.mxu0 0.0
    %288 = vmatprep.subr.mxu0 0.0
    %289 = vmatpush1.msra.mxu0 0.0
    %290 = vmatprep.subr.mxu0 0.0
    %291 = vmatpush1.msra.mxu0 0.0
    %292 = vmatprep.subr.mxu0 0.0
    %293 = vmatpush1.msra.mxu0 0.0
    %294 = vmatprep.subr.mxu0 0.0
    %295 = vmatpush1.msra.mxu0 0.0
    %296 = vmatprep.subr.mxu0 0.0
    %297 = vmatpush1.msra.mxu0 0.0
    %298 = vmatprep.subr.mxu0 0.0
    %299 = vmatpush1.msra.mxu0 0.0
    %300 = vmatprep.subr.mxu0 0.0
    %301 = vmatpush1.msra.mxu0 0.0
    %302 = vmatprep.subr.mxu0 0.0
    %303 = vmatpush1.msra.mxu0 0.0
    %304 = vmatprep.subr.mxu0 0.0
    %305 = vmatpush1.msra.mxu0 0.0
    %306 = vmatprep.subr.mxu0 0.0
    %307 = vmatpush1.msra.mxu0 0.0
    %308 = vmatprep.subr.mxu0 0.0
    %309 = vmatpush1.msra.mxu0 0.0
    %310 = vmatprep.subr.mxu0 0.0
    %311 = vmatpush1.msra.mxu0 0.0
    %312 = vmatprep.subr.mxu0 0.0
    %313 = vmatpush1.msra.mxu0 0.0
    %314 = vmatprep.subr.mxu0 0.0
    %315 = vmatpush1.msra.mxu0 0.0
    %316 = vmatprep.subr.mxu0 0.0
    %317 = vmatpush1.msra.mxu0 0.0
    %318 = vmatprep.subr.mxu0 0.0
    %319 = vmatpush1.msra.mxu0 0.0
    %320 = vmatprep.subr.mxu0 0.0
    %321 = vmatpush1.msra.mxu0 0.0
    %322 = vmatprep.subr.mxu0 0.0
    %323 = vmatpush1.msra.mxu0 0.0
    %324 = vmatprep.subr.mxu0 0.0
    %325 = vmatpush1.msra.mxu0 0.0
    %326 = vmatprep.subr.mxu0 0.0
    %327 = vmatpush1.msra.mxu0 0.0
    %328 = vmatprep.subr.mxu0 0.0
    %329 = vmatpush1.msra.mxu0 0.0
    %330 = vmatprep.subr.mxu0 0.0
    %331 = vmatpush1.msra.mxu0 0.0
    %332 = vmatprep.subr.mxu0 0.0
    %333 = vmatpush1.msra.mxu0 0.0
    %334 = vmatprep.subr.mxu0 0.0
    %335 = vmatpush1.msra.mxu0 0.0
    %336 = vmatprep.subr.mxu0 0.0
    %337 = vmatpush1.msra.mxu0 0.0
    %338 = vmatprep.subr.mxu0 0.0
    %339 = vmatpush1.msra.mxu0 0.0
    %340 = vmatprep.subr.mxu0 0.0
    %341 = vmatpush1.msra.mxu0 0.0
    %342 = vmatprep.subr.mxu0 0.0
    %343 = vmatpush1.msra.mxu0 0.0
    %344 = vmatprep.subr.mxu0 0.0
    %345 = vmatpush1.msra.mxu0 0.0
    %346 = vmatprep.mubr.f32.mxu0 0.0
    %347 = vmatmul.mubr.f32.gmra.mrb[0].mxu0 %v137
    %v348 = vpop.f32.mrb[0].mxu0
    %v349 = vadd.f32 %v122, %v348
    %v350 = vpop.f32.mrb[0].mxu0
    %v351 = vadd.f32 %v126, %v350
    %352 = vmatprep.mubr.f32.mxu0 0.0
    %353 = vmatmul.mubr.f32.gmra.mrb[0].mxu0 %v140
    %v354 = vpop.f32.mrb[0].mxu0
    %v355 = vadd.f32 %v122, %v354
    %v356 = vpop.f32.mrb[0].mxu0
    %v357 = vadd.f32 %v126, %v356
    %358 = vmatprep.mubr.f32.mxu0 0.0
    %359 = vmatmul.mubr.f32.gmra.mrb[0].mxu0 %v143
    %v360 = vpop.f32.mrb[0].mxu0
    %v361 = vadd.f32 %v122, %v360
    %v362 = vpop.f32.mrb[0].mxu0
    %v363 = vadd.f32 %v126, %v362
    %364 = vmatprep.mubr.f32.mxu0 0.0
    %365 = vmatmul.mubr.f32.gmra.mrb[0].mxu0 %v146
    %v366 = vpop.f32.mrb[0].mxu0
    %v367 = vadd.f32 %v122, %v366
    %v368 = vpop.f32.mrb[0].mxu0
    %v369 = vadd.f32 %v126, %v368
    %370 = vmatprep.mubr.f32.mxu0 0.0
    %371 = vmatmul.mubr.f32.gmra.mrb[0].mxu0 %v149
    %v372 = vpop.f32.mrb[0].mxu0
    %v373 = vadd.f32 %v122, %v372
    %v374 = vpop.f32.mrb[0].mxu0
    %v375 = vadd.f32 %v126, %v374
    %376 = vmatprep.mubr.f32.mxu0 0.0
    %377 = vmatmul.mubr.f32.gmra.mrb[0].mxu0 %v152
    %v378 = vpop.f32.mrb[0].mxu0
    %v379 = vadd.f32 %v122, %v378
    %v380 = vpop.f32.mrb[0].mxu0
    %v381 = vadd.f32 %v126, %v380
    %382 = vmatprep.mubr.f32.mxu0 0.0
    %383 = vmatmul.mubr.f32.gmra.mrb[0].mxu0 %v155
    %v384 = vpop.f32.mrb[0].mxu0
    %v385 = vadd.f32 %v122, %v384
    %v386 = vpop.f32.mrb[0].mxu0
    %v387 = vadd.f32 %v126, %v386
    %388 = vmatprep.mubr.f32.mxu0 0.0
    %389 = vmatmul.mubr.f32.gmra.mrb[0].mxu0 %v158
    %v390 = vpop.f32.mrb[0].mxu0
    %v391 = vadd.f32 %v122, %v390
    %v392 = vpop.f32.mrb[0].mxu0
    %v393 = vadd.f32 %v126, %v392
    %394 = vdwg.mxu0
    %395 = vst [vmem:[#allocation2] sm:$0xff] %v236
    %396 = vst [vmem:[#allocation2 + $0x8] sm:$0xff] %v238
    %397 = vst [vmem:[#allocation2 + $0x10] sm:$0xff] %v349
    %398 = vst [vmem:[#allocation2 + $0x18] sm:$0xff] %v351
    %399 = vst [vmem:[#allocation2 + $0x20] sm:$0xff] %v242
    %400 = vst [vmem:[#allocation2 + $0x28] sm:$0xff] %v244
    %401 = vst [vmem:[#allocation2 + $0x30] sm:$0xff] %v355
    %402 = vst [vmem:[#allocation2 + $0x38] sm:$0xff] %v357
    %403 = vst [vmem:[#allocation2 + $0x40] sm:$0xff] %v248
    %404 = vst [vmem:[#allocation2 + $0x48] sm:$0xff] %v250
    %405 = vst [vmem:[#allocation2 + $0x50] sm:$0xff] %v361
    %406 = vst [vmem:[#allocation2 + $0x58] sm:$0xff] %v363
    %407 = vst [vmem:[#allocation2 + $0x60] sm:$0xff] %v254
    %408 = vst [vmem:[#allocation2 + $0x68] sm:$0xff] %v256
    %409 = vst [vmem:[#allocation2 + $0x70] sm:$0xff] %v367
    %410 = vst [vmem:[#allocation2 + $0x78] sm:$0xff] %v369
    %411 = vst [vmem:[#allocation2 + $0x80] sm:$0xff] %v260
    %412 = vst [vmem:[#allocation2 + $0x88] sm:$0xff] %v262
    %413 = vst [vmem:[#allocation2 + $0x90] sm:$0xff] %v373
    %414 = vst [vmem:[#allocation2 + $0x98] sm:$0xff] %v375
    %415 = vst [vmem:[#allocation2 + $0xa0] sm:$0xff] %v266
    %416 = vst [vmem:[#allocation2 + $0xa8] sm:$0xff] %v268
    %417 = vst [vmem:[#allocation2 + $0xb0] sm:$0xff] %v379
    %418 = vst [vmem:[#allocation2 + $0xb8] sm:$0xff] %v381
    %419 = vst [vmem:[#allocation2 + $0xc0] sm:$0xff] %v272
    %420 = vst [vmem:[#allocation2 + $0xc8] sm:$0xff] %v274
    %421 = vst [vmem:[#allocation2 + $0xd0] sm:$0xff] %v385
    %422 = vst [vmem:[#allocation2 + $0xd8] sm:$0xff] %v387
    %423 = vst [vmem:[#allocation2 + $0xe0] sm:$0xff] %v278
    %424 = vst [vmem:[#allocation2 + $0xe8] sm:$0xff] %v280
    %425 = vst [vmem:[#allocation2 + $0xf0] sm:$0xff] %v391
    %426 = vst [vmem:[#allocation2 + $0xf8] sm:$0xff] %v393
    %v427 = vld [vmem:[#allocation12] sm:$0xf]
    %v429 = vlaneseq
    %v430 = vshrl.u32 %v429, 7
    %v431 = vsub.s32 0, %v430
    %v432 = vrot.slane %v427, %v431
    %v433 = vlaneseq
    %v434 = vshrl.u32 %v433, 7
    %v435 = vsub.s32 1, %v434
    %v436 = vrot.slane %v427, %v435
    %v437 = vlaneseq
    %v438 = vshrl.u32 %v437, 7
    %v439 = vsub.s32 2, %v438
    %v440 = vrot.slane %v427, %v439
    %v441 = vlaneseq
    %v442 = vshrl.u32 %v441, 7
    %v443 = vsub.s32 3, %v442
    %v444 = vrot.slane %v427, %v443
    %v449 = vld [vmem:[#allocation3] sm:$0xff]
    %s450 = scalar_lea.vmem [#allocation3], 8
    %v451 = vld [vmem:[%s450] sm:$0xff]
    %v452 = vld [vmem:[#allocation4] sm:$0xff]
    %s453 = scalar_lea.vmem [#allocation4], 8
    %v454 = vld [vmem:[%s453] sm:$0xff]
    %v455 = vld [vmem:[#allocation2] sm:$0xff]
    %v456 = vld [vmem:[#allocation2 + $0x8] sm:$0xff]
    %v457 = vld [vmem:[#allocation2 + $0x10] sm:$0xff]
    %v458 = vld [vmem:[#allocation2 + $0x18] sm:$0xff]
    %v459 = vld [vmem:[#allocation9] sm:$0xff]
    %v460 = vld [vmem:[#allocation9 + $0x8] sm:$0xff]
    %v461 = vld [vmem:[#allocation9 + $0x10] sm:$0xff]
    %v462 = vld [vmem:[#allocation9 + $0x18] sm:$0xff]
    %v463 = vld [vmem:[#allocation9 + $0x20] sm:$0xff]
    %v464 = vld [vmem:[#allocation9 + $0x28] sm:$0xff]
    %v465 = vld [vmem:[#allocation9 + $0x30] sm:$0xff]
    %v466 = vld [vmem:[#allocation9 + $0x38] sm:$0xff]
    %v467 = vld [vmem:[#allocation9 + $0x40] sm:$0xff]
    %v468 = vld [vmem:[#allocation9 + $0x48] sm:$0xff]
    %v469 = vld [vmem:[#allocation9 + $0x50] sm:$0xff]
    %v470 = vld [vmem:[#allocation9 + $0x58] sm:$0xff]
    %v471 = vld [vmem:[#allocation9 + $0x60] sm:$0xff]
    %v472 = vld [vmem:[#allocation9 + $0x68] sm:$0xff]
    %v473 = vld [vmem:[#allocation9 + $0x70] sm:$0xff]
    %v474 = vld [vmem:[#allocation9 + $0x78] sm:$0xff]
    %v475 = vld [vmem:[#allocation9 + $0x80] sm:$0xff]
    %v476 = vld [vmem:[#allocation9 + $0x88] sm:$0xff]
    %v477 = vld [vmem:[#allocation9 + $0x90] sm:$0xff]
    %v478 = vld [vmem:[#allocation9 + $0x98] sm:$0xff]
    %v479 = vld [vmem:[#allocation9 + $0xa0] sm:$0xff]
    %v480 = vld [vmem:[#allocation9 + $0xa8] sm:$0xff]
    %v481 = vld [vmem:[#allocation9 + $0xb0] sm:$0xff]
    %v482 = vld [vmem:[#allocation9 + $0xb8] sm:$0xff]
    %v483 = vld [vmem:[#allocation9 + $0xc0] sm:$0xff]
    %v484 = vld [vmem:[#allocation9 + $0xc8] sm:$0xff]
    %v485 = vld [vmem:[#allocation9 + $0xd0] sm:$0xff]
    %v486 = vld [vmem:[#allocation9 + $0xd8] sm:$0xff]
    %v487 = vld [vmem:[#allocation9 + $0xe0] sm:$0xff]
    %v488 = vld [vmem:[#allocation9 + $0xe8] sm:$0xff]
    %v489 = vld [vmem:[#allocation9 + $0xf0] sm:$0xff]
    %v490 = vld [vmem:[#allocation9 + $0xf8] sm:$0xff]
    %v491 = vld [vmem:[#allocation9 + $0x100] sm:$0xff]
    %v492 = vld [vmem:[#allocation9 + $0x108] sm:$0xff]
    %v493 = vld [vmem:[#allocation9 + $0x110] sm:$0xff]
    %v494 = vld [vmem:[#allocation9 + $0x118] sm:$0xff]
    %v495 = vld [vmem:[#allocation9 + $0x120] sm:$0xff]
    %v496 = vld [vmem:[#allocation9 + $0x128] sm:$0xff]
    %v497 = vld [vmem:[#allocation9 + $0x130] sm:$0xff]
    %v498 = vld [vmem:[#allocation9 + $0x138] sm:$0xff]
    %v499 = vld [vmem:[#allocation9 + $0x140] sm:$0xff]
    %v500 = vld [vmem:[#allocation9 + $0x148] sm:$0xff]
    %v501 = vld [vmem:[#allocation9 + $0x150] sm:$0xff]
    %v502 = vld [vmem:[#allocation9 + $0x158] sm:$0xff]
    %v503 = vld [vmem:[#allocation9 + $0x160] sm:$0xff]
    %v504 = vld [vmem:[#allocation9 + $0x168] sm:$0xff]
    %v505 = vld [vmem:[#allocation9 + $0x170] sm:$0xff]
    %v506 = vld [vmem:[#allocation9 + $0x178] sm:$0xff]
    %v507 = vld [vmem:[#allocation9 + $0x180] sm:$0xff]
    %v508 = vld [vmem:[#allocation9 + $0x188] sm:$0xff]
    %v509 = vld [vmem:[#allocation9 + $0x190] sm:$0xff]
    %v510 = vld [vmem:[#allocation9 + $0x198] sm:$0xff]
    %v511 = vld [vmem:[#allocation9 + $0x1a0] sm:$0xff]
    %v512 = vld [vmem:[#allocation9 + $0x1a8] sm:$0xff]
    %v513 = vld [vmem:[#allocation9 + $0x1b0] sm:$0xff]
    %v514 = vld [vmem:[#allocation9 + $0x1b8] sm:$0xff]
    %v515 = vld [vmem:[#allocation9 + $0x1c0] sm:$0xff]
    %v516 = vld [vmem:[#allocation9 + $0x1c8] sm:$0xff]
    %v517 = vld [vmem:[#allocation9 + $0x1d0] sm:$0xff]
    %v518 = vld [vmem:[#allocation9 + $0x1d8] sm:$0xff]
    %v519 = vld [vmem:[#allocation9 + $0x1e0] sm:$0xff]
    %v520 = vld [vmem:[#allocation9 + $0x1e8] sm:$0xff]
    %v521 = vld [vmem:[#allocation9 + $0x1f0] sm:$0xff]
    %v522 = vld [vmem:[#allocation9 + $0x1f8] sm:$0xff]
    %523 = vmatprep.subr.mxu0 %v460
    %524 = vmatpush1.msra.mxu0 %v459
    %525 = vmatprep.subr.mxu0 %v464
    %526 = vmatpush1.msra.mxu0 %v463
    %527 = vmatprep.subr.mxu0 %v468
    %528 = vmatpush1.msra.mxu0 %v467
    %529 = vmatprep.subr.mxu0 %v472
    %530 = vmatpush1.msra.mxu0 %v471
    %531 = vmatprep.subr.mxu0 %v476
    %532 = vmatpush1.msra.mxu0 %v475
    %533 = vmatprep.subr.mxu0 %v480
    %534 = vmatpush1.msra.mxu0 %v479
    %535 = vmatprep.subr.mxu0 %v484
    %536 = vmatpush1.msra.mxu0 %v483
    %537 = vmatprep.subr.mxu0 %v488
    %538 = vmatpush1.msra.mxu0 %v487
    %539 = vmatprep.subr.mxu0 %v492
    %540 = vmatpush1.msra.mxu0 %v491
    %541 = vmatprep.subr.mxu0 %v496
    %542 = vmatpush1.msra.mxu0 %v495
    %543 = vmatprep.subr.mxu0 %v500
    %544 = vmatpush1.msra.mxu0 %v499
    %545 = vmatprep.subr.mxu0 %v504
    %546 = vmatpush1.msra.mxu0 %v503
    %547 = vmatprep.subr.mxu0 %v508
    %548 = vmatpush1.msra.mxu0 %v507
    %549 = vmatprep.subr.mxu0 %v512
    %550 = vmatpush1.msra.mxu0 %v511
    %551 = vmatprep.subr.mxu0 %v516
    %552 = vmatpush1.msra.mxu0 %v515
    %553 = vmatprep.subr.mxu0 %v520
    %554 = vmatpush1.msra.mxu0 %v519
    %555 = vmatprep.subr.mxu0 0.0
    %556 = vmatpush1.msra.mxu0 0.0
    %557 = vmatprep.subr.mxu0 0.0
    %558 = vmatpush1.msra.mxu0 0.0
    %559 = vmatprep.subr.mxu0 0.0
    %560 = vmatpush1.msra.mxu0 0.0
    %561 = vmatprep.subr.mxu0 0.0
    %562 = vmatpush1.msra.mxu0 0.0
    %563 = vmatprep.subr.mxu0 0.0
    %564 = vmatpush1.msra.mxu0 0.0
    %565 = vmatprep.subr.mxu0 0.0
    %566 = vmatpush1.msra.mxu0 0.0
    %567 = vmatprep.subr.mxu0 0.0
    %568 = vmatpush1.msra.mxu0 0.0
    %569 = vmatprep.subr.mxu0 0.0
    %570 = vmatpush1.msra.mxu0 0.0
    %571 = vmatprep.subr.mxu0 0.0
    %572 = vmatpush1.msra.mxu0 0.0
    %573 = vmatprep.subr.mxu0 0.0
    %574 = vmatpush1.msra.mxu0 0.0
    %575 = vmatprep.subr.mxu0 0.0
    %576 = vmatpush1.msra.mxu0 0.0
    %577 = vmatprep.subr.mxu0 0.0
    %578 = vmatpush1.msra.mxu0 0.0
    %579 = vmatprep.subr.mxu0 0.0
    %580 = vmatpush1.msra.mxu0 0.0
    %581 = vmatprep.subr.mxu0 0.0
    %582 = vmatpush1.msra.mxu0 0.0
    %583 = vmatprep.subr.mxu0 0.0
    %584 = vmatpush1.msra.mxu0 0.0
    %585 = vmatprep.subr.mxu0 0.0
    %586 = vmatpush1.msra.mxu0 0.0
    %587 = vmatprep.mubr.f32.mxu0 0.0
    %588 = vmatmul.mubr.f32.gmra.mrb[0].mxu0 %v449
    %v589 = vpop.f32.mrb[0].mxu0
    %v590 = vadd.f32 0.0, %v589
    %v591 = vpop.f32.mrb[0].mxu0
    %v592 = vadd.f32 0.0, %v591
    %593 = vdwg.mxu0
    %594 = vmatprep.subr.mxu0 %v462
    %595 = vmatpush1.msra.mxu0 %v461
    %596 = vmatprep.subr.mxu0 %v466
    %597 = vmatpush1.msra.mxu0 %v465
    %598 = vmatprep.subr.mxu0 %v470
    %599 = vmatpush1.msra.mxu0 %v469
    %600 = vmatprep.subr.mxu0 %v474
    %601 = vmatpush1.msra.mxu0 %v473
    %602 = vmatprep.subr.mxu0 %v478
    %603 = vmatpush1.msra.mxu0 %v477
    %604 = vmatprep.subr.mxu0 %v482
    %605 = vmatpush1.msra.mxu0 %v481
    %606 = vmatprep.subr.mxu0 %v486
    %607 = vmatpush1.msra.mxu0 %v485
    %608 = vmatprep.subr.mxu0 %v490
    %609 = vmatpush1.msra.mxu0 %v489
    %610 = vmatprep.subr.mxu0 %v494
    %611 = vmatpush1.msra.mxu0 %v493
    %612 = vmatprep.subr.mxu0 %v498
    %613 = vmatpush1.msra.mxu0 %v497
    %614 = vmatprep.subr.mxu0 %v502
    %615 = vmatpush1.msra.mxu0 %v501
    %616 = vmatprep.subr.mxu0 %v506
    %617 = vmatpush1.msra.mxu0 %v505
    %618 = vmatprep.subr.mxu0 %v510
    %619 = vmatpush1.msra.mxu0 %v509
    %620 = vmatprep.subr.mxu0 %v514
    %621 = vmatpush1.msra.mxu0 %v513
    %622 = vmatprep.subr.mxu0 %v518
    %623 = vmatpush1.msra.mxu0 %v517
    %624 = vmatprep.subr.mxu0 %v522
    %625 = vmatpush1.msra.mxu0 %v521
    %626 = vmatprep.subr.mxu0 0.0
    %627 = vmatpush1.msra.mxu0 0.0
    %628 = vmatprep.subr.mxu0 0.0
    %629 = vmatpush1.msra.mxu0 0.0
    %630 = vmatprep.subr.mxu0 0.0
    %631 = vmatpush1.msra.mxu0 0.0
    %632 = vmatprep.subr.mxu0 0.0
    %633 = vmatpush1.msra.mxu0 0.0
    %634 = vmatprep.subr.mxu0 0.0
    %635 = vmatpush1.msra.mxu0 0.0
    %636 = vmatprep.subr.mxu0 0.0
    %637 = vmatpush1.msra.mxu0 0.0
    %638 = vmatprep.subr.mxu0 0.0
    %639 = vmatpush1.msra.mxu0 0.0
    %640 = vmatprep.subr.mxu0 0.0
    %641 = vmatpush1.msra.mxu0 0.0
    %642 = vmatprep.subr.mxu0 0.0
    %643 = vmatpush1.msra.mxu0 0.0
    %644 = vmatprep.subr.mxu0 0.0
    %645 = vmatpush1.msra.mxu0 0.0
    %646 = vmatprep.subr.mxu0 0.0
    %647 = vmatpush1.msra.mxu0 0.0
    %648 = vmatprep.subr.mxu0 0.0
    %649 = vmatpush1.msra.mxu0 0.0
    %650 = vmatprep.subr.mxu0 0.0
    %651 = vmatpush1.msra.mxu0 0.0
    %652 = vmatprep.subr.mxu0 0.0
    %653 = vmatpush1.msra.mxu0 0.0
    %654 = vmatprep.subr.mxu0 0.0
    %655 = vmatpush1.msra.mxu0 0.0
    %656 = vmatprep.subr.mxu0 0.0
    %657 = vmatpush1.msra.mxu0 0.0
    %658 = vmatprep.mubr.f32.mxu0 0.0
    %659 = vmatmul.mubr.f32.gmra.mrb[0].mxu0 %v449
    %v660 = vpop.f32.mrb[0].mxu0
    %v661 = vadd.f32 0.0, %v660
    %v662 = vpop.f32.mrb[0].mxu0
    %v663 = vadd.f32 0.0, %v662
    %664 = vdwg.mxu0
    %v665 = vadd.f32 %v455, %v590
    %v666 = vadd.f32 %v456, %v592
    %v667 = vadd.f32 %v457, %v661
    %v668 = vadd.f32 %v458, %v663
    %v669 = vxor.u32 %v665, 2147483648
    %v670 = vxor.u32 %v666, 2147483648
    %v671 = vxor.u32 %v667, 2147483648
    %v672 = vmul.f32 %v669, 1.442695
    %v673 = vpow.pop %v672
    %v674 = vmul.f32 %v670, 1.442695
    %v675 = vpow.pop %v674
    %v676 = vmul.f32 %v671, 1.442695
    %v677 = vpow.pop %v676
    %v678 = vadd.f32 %v673, 1.0
    %v679 = vadd.f32 %v675, 1.0
    %v680 = vadd.f32 %v677, 1.0
    %v681 = vrcp.pop %v678
    %v682 = vmul.f32 1.0, %v681
    %v683 = vrcp.pop %v679
    %v684 = vmul.f32 1.0, %v683
    %v685 = vrcp.pop %v680
    %v686 = vmul.f32 1.0, %v685
    %v687 = vtanh.pop %v668
    %v688 = vmul.f32 %v684, %v452
    %v689 = vmul.f32 %v682, %v687
    %v690 = vadd.f32 %v688, %v689
    %v691 = vtanh.pop %v690
    %v692 = vmul.f32 %v686, %v691
    %v693 = vld [vmem:[#allocation10] sm:$0xff]
    %v694 = vld [vmem:[#allocation10 + $0x8] sm:$0xff]
    %v695 = vld [vmem:[#allocation10 + $0x10] sm:$0xff]
    %v696 = vld [vmem:[#allocation10 + $0x18] sm:$0xff]
    %v697 = vld [vmem:[#allocation10 + $0x20] sm:$0xff]
    %v698 = vld [vmem:[#allocation10 + $0x28] sm:$0xff]
    %v699 = vld [vmem:[#allocation10 + $0x30] sm:$0xff]
    %v700 = vld [vmem:[#allocation10 + $0x38] sm:$0xff]
    %v701 = vld [vmem:[#allocation10 + $0x40] sm:$0xff]
    %v702 = vld [vmem:[#allocation10 + $0x48] sm:$0xff]
    %v703 = vld [vmem:[#allocation10 + $0x50] sm:$0xff]
    %v704 = vld [vmem:[#allocation10 + $0x58] sm:$0xff]
    %v705 = vld [vmem:[#allocation10 + $0x60] sm:$0xff]
    %v706 = vld [vmem:[#allocation10 + $0x68] sm:$0xff]
    %v707 = vld [vmem:[#allocation10 + $0x70] sm:$0xff]
    %v708 = vld [vmem:[#allocation10 + $0x78] sm:$0xff]
    %v709 = vld [vmem:[#allocation10 + $0x80] sm:$0xff]
    %v710 = vld [vmem:[#allocation10 + $0x88] sm:$0xff]
    %v711 = vld [vmem:[#allocation10 + $0x90] sm:$0xff]
    %v712 = vld [vmem:[#allocation10 + $0x98] sm:$0xff]
    %v713 = vld [vmem:[#allocation10 + $0xa0] sm:$0xff]
    %v714 = vld [vmem:[#allocation10 + $0xa8] sm:$0xff]
    %v715 = vld [vmem:[#allocation10 + $0xb0] sm:$0xff]
    %v716 = vld [vmem:[#allocation10 + $0xb8] sm:$0xff]
    %v717 = vld [vmem:[#allocation10 + $0xc0] sm:$0xff]
    %v718 = vld [vmem:[#allocation10 + $0xc8] sm:$0xff]
    %v719 = vld [vmem:[#allocation10 + $0xd0] sm:$0xff]
    %v720 = vld [vmem:[#allocation10 + $0xd8] sm:$0xff]
    %v721 = vld [vmem:[#allocation10 + $0xe0] sm:$0xff]
    %v722 = vld [vmem:[#allocation10 + $0xe8] sm:$0xff]
    %v723 = vld [vmem:[#allocation10 + $0xf0] sm:$0xff]
    %v724 = vld [vmem:[#allocation10 + $0xf8] sm:$0xff]
    %v725 = vld [vmem:[#allocation10 + $0x100] sm:$0xff]
    %v726 = vld [vmem:[#allocation10 + $0x108] sm:$0xff]
    %v727 = vld [vmem:[#allocation10 + $0x110] sm:$0xff]
    %v728 = vld [vmem:[#allocation10 + $0x118] sm:$0xff]
    %v729 = vld [vmem:[#allocation10 + $0x120] sm:$0xff]
    %v730 = vld [vmem:[#allocation10 + $0x128] sm:$0xff]
    %v731 = vld [vmem:[#allocation10 + $0x130] sm:$0xff]
    %v732 = vld [vmem:[#allocation10 + $0x138] sm:$0xff]
    %v733 = vld [vmem:[#allocation10 + $0x140] sm:$0xff]
    %v734 = vld [vmem:[#allocation10 + $0x148] sm:$0xff]
    %v735 = vld [vmem:[#allocation10 + $0x150] sm:$0xff]
    %v736 = vld [vmem:[#allocation10 + $0x158] sm:$0xff]
    %v737 = vld [vmem:[#allocation10 + $0x160] sm:$0xff]
    %v738 = vld [vmem:[#allocation10 + $0x168] sm:$0xff]
    %v739 = vld [vmem:[#allocation10 + $0x170] sm:$0xff]
    %v740 = vld [vmem:[#allocation10 + $0x178] sm:$0xff]
    %v741 = vld [vmem:[#allocation10 + $0x180] sm:$0xff]
    %v742 = vld [vmem:[#allocation10 + $0x188] sm:$0xff]
    %v743 = vld [vmem:[#allocation10 + $0x190] sm:$0xff]
    %v744 = vld [vmem:[#allocation10 + $0x198] sm:$0xff]
    %v745 = vld [vmem:[#allocation10 + $0x1a0] sm:$0xff]
    %v746 = vld [vmem:[#allocation10 + $0x1a8] sm:$0xff]
    %v747 = vld [vmem:[#allocation10 + $0x1b0] sm:$0xff]
    %v748 = vld [vmem:[#allocation10 + $0x1b8] sm:$0xff]
    %v749 = vld [vmem:[#allocation10 + $0x1c0] sm:$0xff]
    %v750 = vld [vmem:[#allocation10 + $0x1c8] sm:$0xff]
    %v751 = vld [vmem:[#allocation10 + $0x1d0] sm:$0xff]
    %v752 = vld [vmem:[#allocation10 + $0x1d8] sm:$0xff]
    %v753 = vld [vmem:[#allocation10 + $0x1e0] sm:$0xff]
    %v754 = vld [vmem:[#allocation10 + $0x1e8] sm:$0xff]
    %v755 = vld [vmem:[#allocation10 + $0x1f0] sm:$0xff]
    %v756 = vld [vmem:[#allocation10 + $0x1f8] sm:$0xff]
    %v757 = vld [vmem:[#allocation10 + $0x200] sm:$0xff]
    %v758 = vld [vmem:[#allocation10 + $0x208] sm:$0xff]
    %v759 = vld [vmem:[#allocation10 + $0x210] sm:$0xff]
    %v760 = vld [vmem:[#allocation10 + $0x218] sm:$0xff]
    %v761 = vld [vmem:[#allocation10 + $0x220] sm:$0xff]
    %v762 = vld [vmem:[#allocation10 + $0x228] sm:$0xff]
    %v763 = vld [vmem:[#allocation10 + $0x230] sm:$0xff]
    %v764 = vld [vmem:[#allocation10 + $0x238] sm:$0xff]
    %v765 = vld [vmem:[#allocation10 + $0x240] sm:$0xff]
    %v766 = vld [vmem:[#allocation10 + $0x248] sm:$0xff]
    %v767 = vld [vmem:[#allocation10 + $0x250] sm:$0xff]
    %v768 = vld [vmem:[#allocation10 + $0x258] sm:$0xff]
    %v769 = vld [vmem:[#allocation10 + $0x260] sm:$0xff]
    %v770 = vld [vmem:[#allocation10 + $0x268] sm:$0xff]
    %v771 = vld [vmem:[#allocation10 + $0x270] sm:$0xff]
    %v772 = vld [vmem:[#allocation10 + $0x278] sm:$0xff]
    %v773 = vld [vmem:[#allocation10 + $0x280] sm:$0xff]
    %v774 = vld [vmem:[#allocation10 + $0x288] sm:$0xff]
    %v775 = vld [vmem:[#allocation10 + $0x290] sm:$0xff]
    %v776 = vld [vmem:[#allocation10 + $0x298] sm:$0xff]
    %v777 = vld [vmem:[#allocation10 + $0x2a0] sm:$0xff]
    %v778 = vld [vmem:[#allocation10 + $0x2a8] sm:$0xff]
    %v779 = vld [vmem:[#allocation10 + $0x2b0] sm:$0xff]
    %v780 = vld [vmem:[#allocation10 + $0x2b8] sm:$0xff]
    %v781 = vld [vmem:[#allocation10 + $0x2c0] sm:$0xff]
    %v782 = vld [vmem:[#allocation10 + $0x2c8] sm:$0xff]
    %v783 = vld [vmem:[#allocation10 + $0x2d0] sm:$0xff]
    %v784 = vld [vmem:[#allocation10 + $0x2d8] sm:$0xff]
    %v785 = vld [vmem:[#allocation10 + $0x2e0] sm:$0xff]
    %v786 = vld [vmem:[#allocation10 + $0x2e8] sm:$0xff]
    %v787 = vld [vmem:[#allocation10 + $0x2f0] sm:$0xff]
    %v788 = vld [vmem:[#allocation10 + $0x2f8] sm:$0xff]
    %v789 = vld [vmem:[#allocation10 + $0x300] sm:$0xff]
    %v790 = vld [vmem:[#allocation10 + $0x308] sm:$0xff]
    %v791 = vld [vmem:[#allocation10 + $0x310] sm:$0xff]
    %v792 = vld [vmem:[#allocation10 + $0x318] sm:$0xff]
    %v793 = vld [vmem:[#allocation10 + $0x320] sm:$0xff]
    %v794 = vld [vmem:[#allocation10 + $0x328] sm:$0xff]
    %v795 = vld [vmem:[#allocation10 + $0x330] sm:$0xff]
    %v796 = vld [vmem:[#allocation10 + $0x338] sm:$0xff]
    %v797 = vld [vmem:[#allocation10 + $0x340] sm:$0xff]
    %v798 = vld [vmem:[#allocation10 + $0x348] sm:$0xff]
    %v799 = vld [vmem:[#allocation10 + $0x350] sm:$0xff]
    %v800 = vld [vmem:[#allocation10 + $0x358] sm:$0xff]
    %v801 = vld [vmem:[#allocation10 + $0x360] sm:$0xff]
    %v802 = vld [vmem:[#allocation10 + $0x368] sm:$0xff]
    %v803 = vld [vmem:[#allocation10 + $0x370] sm:$0xff]
    %v804 = vld [vmem:[#allocation10 + $0x378] sm:$0xff]
    %v805 = vld [vmem:[#allocation10 + $0x380] sm:$0xff]
    %v806 = vld [vmem:[#allocation10 + $0x388] sm:$0xff]
    %v807 = vld [vmem:[#allocation10 + $0x390] sm:$0xff]
    %v808 = vld [vmem:[#allocation10 + $0x398] sm:$0xff]
    %v809 = vld [vmem:[#allocation10 + $0x3a0] sm:$0xff]
    %v810 = vld [vmem:[#allocation10 + $0x3a8] sm:$0xff]
    %v811 = vld [vmem:[#allocation10 + $0x3b0] sm:$0xff]
    %v812 = vld [vmem:[#allocation10 + $0x3b8] sm:$0xff]
    %v813 = vld [vmem:[#allocation10 + $0x3c0] sm:$0xff]
    %v814 = vld [vmem:[#allocation10 + $0x3c8] sm:$0xff]
    %v815 = vld [vmem:[#allocation10 + $0x3d0] sm:$0xff]
    %v816 = vld [vmem:[#allocation10 + $0x3d8] sm:$0xff]
    %v817 = vld [vmem:[#allocation10 + $0x3e0] sm:$0xff]
    %v818 = vld [vmem:[#allocation10 + $0x3e8] sm:$0xff]
    %v819 = vld [vmem:[#allocation10 + $0x3f0] sm:$0xff]
    %v820 = vld [vmem:[#allocation10 + $0x3f8] sm:$0xff]
    %821 = vmatprep.subr.mxu0 %v694
    %822 = vmatpush1.msra.mxu0 %v693
    %823 = vmatprep.subr.mxu0 %v698
    %824 = vmatpush1.msra.mxu0 %v697
    %825 = vmatprep.subr.mxu0 %v702
    %826 = vmatpush1.msra.mxu0 %v701
    %827 = vmatprep.subr.mxu0 %v706
    %828 = vmatpush1.msra.mxu0 %v705
    %829 = vmatprep.subr.mxu0 %v710
    %830 = vmatpush1.msra.mxu0 %v709
    %831 = vmatprep.subr.mxu0 %v714
    %832 = vmatpush1.msra.mxu0 %v713
    %833 = vmatprep.subr.mxu0 %v718
    %834 = vmatpush1.msra.mxu0 %v717
    %835 = vmatprep.subr.mxu0 %v722
    %836 = vmatpush1.msra.mxu0 %v721
    %837 = vmatprep.subr.mxu0 %v726
    %838 = vmatpush1.msra.mxu0 %v725
    %839 = vmatprep.subr.mxu0 %v730
    %840 = vmatpush1.msra.mxu0 %v729
    %841 = vmatprep.subr.mxu0 %v734
    %842 = vmatpush1.msra.mxu0 %v733
    %843 = vmatprep.subr.mxu0 %v738
    %844 = vmatpush1.msra.mxu0 %v737
    %845 = vmatprep.subr.mxu0 %v742
    %846 = vmatpush1.msra.mxu0 %v741
    %847 = vmatprep.subr.mxu0 %v746
    %848 = vmatpush1.msra.mxu0 %v745
    %849 = vmatprep.subr.mxu0 %v750
    %850 = vmatpush1.msra.mxu0 %v749
    %851 = vmatprep.subr.mxu0 %v754
    %852 = vmatpush1.msra.mxu0 %v753
    %853 = vmatprep.subr.mxu0 %v758
    %854 = vmatpush1.msra.mxu0 %v757
    %855 = vmatprep.subr.mxu0 %v762
    %856 = vmatpush1.msra.mxu0 %v761
    %857 = vmatprep.subr.mxu0 %v766
    %858 = vmatpush1.msra.mxu0 %v765
    %859 = vmatprep.subr.mxu0 %v770
    %860 = vmatpush1.msra.mxu0 %v769
    %861 = vmatprep.subr.mxu0 %v774
    %862 = vmatpush1.msra.mxu0 %v773
    %863 = vmatprep.subr.mxu0 %v778
    %864 = vmatpush1.msra.mxu0 %v777
    %865 = vmatprep.subr.mxu0 %v782
    %866 = vmatpush1.msra.mxu0 %v781
    %867 = vmatprep.subr.mxu0 %v786
    %868 = vmatpush1.msra.mxu0 %v785
    %869 = vmatprep.subr.mxu0 %v790
    %870 = vmatpush1.msra.mxu0 %v789
    %871 = vmatprep.subr.mxu0 %v794
    %872 = vmatpush1.msra.mxu0 %v793
    %873 = vmatprep.subr.mxu0 %v798
    %874 = vmatpush1.msra.mxu0 %v797
    %875 = vmatprep.subr.mxu0 %v802
    %876 = vmatpush1.msra.mxu0 %v801
    %877 = vmatprep.subr.mxu0 %v806
    %878 = vmatpush1.msra.mxu0 %v805
    %879 = vmatprep.subr.mxu0 %v810
    %880 = vmatpush1.msra.mxu0 %v809
    %881 = vmatprep.subr.mxu0 %v814
    %882 = vmatpush1.msra.mxu0 %v813
    %883 = vmatprep.subr.mxu0 %v818
    %884 = vmatpush1.msra.mxu0 %v817
    %885 = vmatprep.mubr.f32.mxu0 %v451
    %886 = vmatmul.mubr.f32.gmra.mrb[0].mxu0 %v692
    %v887 = vpop.f32.mrb[0].mxu0
    %v888 = vadd.f32 %v432, %v887
    %v889 = vpop.f32.mrb[0].mxu0
    %v890 = vadd.f32 %v436, %v889
    %891 = vdwg.mxu0
    %892 = vmatprep.subr.mxu0 %v696
    %893 = vmatpush1.msra.mxu0 %v695
    %894 = vmatprep.subr.mxu0 %v700
    %895 = vmatpush1.msra.mxu0 %v699
    %896 = vmatprep.subr.mxu0 %v704
    %897 = vmatpush1.msra.mxu0 %v703
    %898 = vmatprep.subr.mxu0 %v708
    %899 = vmatpush1.msra.mxu0 %v707
    %900 = vmatprep.subr.mxu0 %v712
    %901 = vmatpush1.msra.mxu0 %v711
    %902 = vmatprep.subr.mxu0 %v716
    %903 = vmatpush1.msra.mxu0 %v715
    %904 = vmatprep.subr.mxu0 %v720
    %905 = vmatpush1.msra.mxu0 %v719
    %906 = vmatprep.subr.mxu0 %v724
    %907 = vmatpush1.msra.mxu0 %v723
    %908 = vmatprep.subr.mxu0 %v728
    %909 = vmatpush1.msra.mxu0 %v727
    %910 = vmatprep.subr.mxu0 %v732
    %911 = vmatpush1.msra.mxu0 %v731
    %912 = vmatprep.subr.mxu0 %v736
    %913 = vmatpush1.msra.mxu0 %v735
    %914 = vmatprep.subr.mxu0 %v740
    %915 = vmatpush1.msra.mxu0 %v739
    %916 = vmatprep.subr.mxu0 %v744
    %917 = vmatpush1.msra.mxu0 %v743
    %918 = vmatprep.subr.mxu0 %v748
    %919 = vmatpush1.msra.mxu0 %v747
    %920 = vmatprep.subr.mxu0 %v752
    %921 = vmatpush1.msra.mxu0 %v751
    %922 = vmatprep.subr.mxu0 %v756
    %923 = vmatpush1.msra.mxu0 %v755
    %924 = vmatprep.subr.mxu0 %v760
    %925 = vmatpush1.msra.mxu0 %v759
    %926 = vmatprep.subr.mxu0 %v764
    %927 = vmatpush1.msra.mxu0 %v763
    %928 = vmatprep.subr.mxu0 %v768
    %929 = vmatpush1.msra.mxu0 %v767
    %930 = vmatprep.subr.mxu0 %v772
    %931 = vmatpush1.msra.mxu0 %v771
    %932 = vmatprep.subr.mxu0 %v776
    %933 = vmatpush1.msra.mxu0 %v775
    %934 = vmatprep.subr.mxu0 %v780
    %935 = vmatpush1.msra.mxu0 %v779
    %936 = vmatprep.subr.mxu0 %v784
    %937 = vmatpush1.msra.mxu0 %v783
    %938 = vmatprep.subr.mxu0 %v788
    %939 = vmatpush1.msra.mxu0 %v787
    %940 = vmatprep.subr.mxu0 %v792
    %941 = vmatpush1.msra.mxu0 %v791
    %942 = vmatprep.subr.mxu0 %v796
    %943 = vmatpush1.msra.mxu0 %v795
    %944 = vmatprep.subr.mxu0 %v800
    %945 = vmatpush1.msra.mxu0 %v799
    %946 = vmatprep.subr.mxu0 %v804
    %947 = vmatpush1.msra.mxu0 %v803
    %948 = vmatprep.subr.mxu0 %v808
    %949 = vmatpush1.msra.mxu0 %v807
    %950 = vmatprep.subr.mxu0 %v812
    %951 = vmatpush1.msra.mxu0 %v811
    %952 = vmatprep.subr.mxu0 %v816
    %953 = vmatpush1.msra.mxu0 %v815
    %954 = vmatprep.subr.mxu0 %v820
    %955 = vmatpush1.msra.mxu0 %v819
    %956 = vmatprep.mubr.f32.mxu0 %v451
    %957 = vmatmul.mubr.f32.gmra.mrb[0].mxu0 %v692
    %v958 = vpop.f32.mrb[0].mxu0
    %v959 = vadd.f32 %v440, %v958
    %v960 = vpop.f32.mrb[0].mxu0
    %v961 = vadd.f32 %v444, %v960
    %962 = vdwg.mxu0
    %v963 = vxor.u32 %v888, 2147483648
    %v964 = vxor.u32 %v890, 2147483648
    %v965 = vxor.u32 %v959, 2147483648
    %v966 = vmul.f32 %v963, 1.442695
    %v967 = vpow.pop %v966
    %v968 = vmul.f32 %v964, 1.442695
    %v969 = vpow.pop %v968
    %v970 = vmul.f32 %v965, 1.442695
    %v971 = vpow.pop %v970
    %v972 = vadd.f32 %v967, 1.0
    %v973 = vadd.f32 %v969, 1.0
    %v974 = vadd.f32 %v971, 1.0
    %v975 = vrcp.pop %v972
    %v976 = vmul.f32 1.0, %v975
    %v977 = vrcp.pop %v973
    %v978 = vmul.f32 1.0, %v977
    %v979 = vrcp.pop %v974
    %v980 = vmul.f32 1.0, %v979
    %v981 = vtanh.pop %v961
    %v982 = vmul.f32 %v978, %v454
    %v983 = vmul.f32 %v976, %v981
    %v984 = vadd.f32 %v982, %v983
    %v985 = vtanh.pop %v984
    %v986 = vmul.f32 %v980, %v985
    %v987 = vld [vmem:[#allocation2 + $0x20] sm:$0xff]
    %v988 = vld [vmem:[#allocation2 + $0x28] sm:$0xff]
    %v989 = vld [vmem:[#allocation2 + $0x30] sm:$0xff]
    %v990 = vld [vmem:[#allocation2 + $0x38] sm:$0xff]
    %991 = vmatprep.subr.mxu0 %v460
    %992 = vmatpush1.msra.mxu0 %v459
    %993 = vmatprep.subr.mxu0 %v464
    %994 = vmatpush1.msra.mxu0 %v463
    %995 = vmatprep.subr.mxu0 %v468
    %996 = vmatpush1.msra.mxu0 %v467
    %997 = vmatprep.subr.mxu0 %v472
    %998 = vmatpush1.msra.mxu0 %v471
    %999 = vmatprep.subr.mxu0 %v476
    %1000 = vmatpush1.msra.mxu0 %v475
    %1001 = vmatprep.subr.mxu0 %v480
    %1002 = vmatpush1.msra.mxu0 %v479
    %1003 = vmatprep.subr.mxu0 %v484
    %1004 = vmatpush1.msra.mxu0 %v483
    %1005 = vmatprep.subr.mxu0 %v488
    %1006 = vmatpush1.msra.mxu0 %v487
    %1007 = vmatprep.subr.mxu0 %v492
    %1008 = vmatpush1.msra.mxu0 %v491
    %1009 = vmatprep.subr.mxu0 %v496
    %1010 = vmatpush1.msra.mxu0 %v495
    %1011 = vmatprep.subr.mxu0 %v500
    %1012 = vmatpush1.msra.mxu0 %v499
    %1013 = vmatprep.subr.mxu0 %v504
    %1014 = vmatpush1.msra.mxu0 %v503
    %1015 = vmatprep.subr.mxu0 %v508
    %1016 = vmatpush1.msra.mxu0 %v507
    %1017 = vmatprep.subr.mxu0 %v512
    %1018 = vmatpush1.msra.mxu0 %v511
    %1019 = vmatprep.subr.mxu0 %v516
    %1020 = vmatpush1.msra.mxu0 %v515
    %1021 = vmatprep.subr.mxu0 %v520
    %1022 = vmatpush1.msra.mxu0 %v519
    %1023 = vmatprep.subr.mxu0 0.0
    %1024 = vmatpush1.msra.mxu0 0.0
    %1025 = vmatprep.subr.mxu0 0.0
    %1026 = vmatpush1.msra.mxu0 0.0
    %1027 = vmatprep.subr.mxu0 0.0
    %1028 = vmatpush1.msra.mxu0 0.0
    %1029 = vmatprep.subr.mxu0 0.0
    %1030 = vmatpush1.msra.mxu0 0.0
    %1031 = vmatprep.subr.mxu0 0.0
    %1032 = vmatpush1.msra.mxu0 0.0
    %1033 = vmatprep.subr.mxu0 0.0
    %1034 = vmatpush1.msra.mxu0 0.0
    %1035 = vmatprep.subr.mxu0 0.0
    %1036 = vmatpush1.msra.mxu0 0.0
    %1037 = vmatprep.subr.mxu0 0.0
    %1038 = vmatpush1.msra.mxu0 0.0
    %1039 = vmatprep.subr.mxu0 0.0
    %1040 = vmatpush1.msra.mxu0 0.0
    %1041 = vmatprep.subr.mxu0 0.0
    %1042 = vmatpush1.msra.mxu0 0.0
    %1043 = vmatprep.subr.mxu0 0.0
    %1044 = vmatpush1.msra.mxu0 0.0
    %1045 = vmatprep.subr.mxu0 0.0
    %1046 = vmatpush1.msra.mxu0 0.0
    %1047 = vmatprep.subr.mxu0 0.0
    %1048 = vmatpush1.msra.mxu0 0.0
    %1049 = vmatprep.subr.mxu0 0.0
    %1050 = vmatpush1.msra.mxu0 0.0
    %1051 = vmatprep.subr.mxu0 0.0
    %1052 = vmatpush1.msra.mxu0 0.0
    %1053 = vmatprep.subr.mxu0 0.0
    %1054 = vmatpush1.msra.mxu0 0.0
    %1055 = vmatprep.mubr.f32.mxu0 0.0
    %1056 = vmatmul.mubr.f32.gmra.mrb[0].mxu0 %v692
    %v1057 = vpop.f32.mrb[0].mxu0
    %v1058 = vadd.f32 0.0, %v1057
    %v1059 = vpop.f32.mrb[0].mxu0
    %v1060 = vadd.f32 0.0, %v1059
    %1061 = vdwg.mxu0
    %1062 = vmatprep.subr.mxu0 %v462
    %1063 = vmatpush1.msra.mxu0 %v461
    %1064 = vmatprep.subr.mxu0 %v466
    %1065 = vmatpush1.msra.mxu0 %v465
    %1066 = vmatprep.subr.mxu0 %v470
    %1067 = vmatpush1.msra.mxu0 %v469
    %1068 = vmatprep.subr.mxu0 %v474
    %1069 = vmatpush1.msra.mxu0 %v473
    %1070 = vmatprep.subr.mxu0 %v478
    %1071 = vmatpush1.msra.mxu0 %v477
    %1072 = vmatprep.subr.mxu0 %v482
    %1073 = vmatpush1.msra.mxu0 %v481
    %1074 = vmatprep.subr.mxu0 %v486
    %1075 = vmatpush1.msra.mxu0 %v485
    %1076 = vmatprep.subr.mxu0 %v490
    %1077 = vmatpush1.msra.mxu0 %v489
    %1078 = vmatprep.subr.mxu0 %v494
    %1079 = vmatpush1.msra.mxu0 %v493
    %1080 = vmatprep.subr.mxu0 %v498
    %1081 = vmatpush1.msra.mxu0 %v497
    %1082 = vmatprep.subr.mxu0 %v502
    %1083 = vmatpush1.msra.mxu0 %v501
    %1084 = vmatprep.subr.mxu0 %v506
    %1085 = vmatpush1.msra.mxu0 %v505
    %1086 = vmatprep.subr.mxu0 %v510
    %1087 = vmatpush1.msra.mxu0 %v509
    %1088 = vmatprep.subr.mxu0 %v514
    %1089 = vmatpush1.msra.mxu0 %v513
    %1090 = vmatprep.subr.mxu0 %v518
    %1091 = vmatpush1.msra.mxu0 %v517
    %1092 = vmatprep.subr.mxu0 %v522
    %1093 = vmatpush1.msra.mxu0 %v521
    %1094 = vmatprep.subr.mxu0 0.0
    %1095 = vmatpush1.msra.mxu0 0.0
    %1096 = vmatprep.subr.mxu0 0.0
    %1097 = vmatpush1.msra.mxu0 0.0
    %1098 = vmatprep.subr.mxu0 0.0
    %1099 = vmatpush1.msra.mxu0 0.0
    %1100 = vmatprep.subr.mxu0 0.0
    %1101 = vmatpush1.msra.mxu0 0.0
    %1102 = vmatprep.subr.mxu0 0.0
    %1103 = vmatpush1.msra.mxu0 0.0
    %1104 = vmatprep.subr.mxu0 0.0
    %1105 = vmatpush1.msra.mxu0 0.0
    %1106 = vmatprep.subr.mxu0 0.0
    %1107 = vmatpush1.msra.mxu0 0.0
    %1108 = vmatprep.subr.mxu0 0.0
    %1109 = vmatpush1.msra.mxu0 0.0
    %1110 = vmatprep.subr.mxu0 0.0
    %1111 = vmatpush1.msra.mxu0 0.0
    %1112 = vmatprep.subr.mxu0 0.0
    %1113 = vmatpush1.msra.mxu0 0.0
    %1114 = vmatprep.subr.mxu0 0.0
    %1115 = vmatpush1.msra.mxu0 0.0
    %1116 = vmatprep.subr.mxu0 0.0
    %1117 = vmatpush1.msra.mxu0 0.0
    %1118 = vmatprep.subr.mxu0 0.0
    %1119 = vmatpush1.msra.mxu0 0.0
    %1120 = vmatprep.subr.mxu0 0.0
    %1121 = vmatpush1.msra.mxu0 0.0
    %1122 = vmatprep.subr.mxu0 0.0
    %1123 = vmatpush1.msra.mxu0 0.0
    %1124 = vmatprep.subr.mxu0 0.0
    %1125 = vmatpush1.msra.mxu0 0.0
    %1126 = vmatprep.mubr.f32.mxu0 0.0
    %1127 = vmatmul.mubr.f32.gmra.mrb[0].mxu0 %v692
    %v1128 = vpop.f32.mrb[0].mxu0
    %v1129 = vadd.f32 0.0, %v1128
    %v1130 = vpop.f32.mrb[0].mxu0
    %v1131 = vadd.f32 0.0, %v1130
    %1132 = vdwg.mxu0
    %v1133 = vadd.f32 %v987, %v1058
    %v1134 = vadd.f32 %v988, %v1060
    %v1135 = vadd.f32 %v989, %v1129
    %v1136 = vadd.f32 %v990, %v1131
    %v1137 = vxor.u32 %v1133, 2147483648
    %v1138 = vxor.u32 %v1134, 2147483648
    %v1139 = vxor.u32 %v1135, 2147483648
    %v1140 = vmul.f32 %v1137, 1.442695
    %v1141 = vpow.pop %v1140
    %v1142 = vmul.f32 %v1138, 1.442695
    %v1143 = vpow.pop %v1142
    %v1144 = vmul.f32 %v1139, 1.442695
    %v1145 = vpow.pop %v1144
    %v1146 = vadd.f32 %v1141, 1.0
    %v1147 = vadd.f32 %v1143, 1.0
    %v1148 = vadd.f32 %v1145, 1.0
    %v1149 = vrcp.pop %v1146
    %v1150 = vmul.f32 1.0, %v1149
    %v1151 = vrcp.pop %v1147
    %v1152 = vmul.f32 1.0, %v1151
    %v1153 = vrcp.pop %v1148
    %v1154 = vmul.f32 1.0, %v1153
    %v1155 = vtanh.pop %v1136
    %v1156 = vmul.f32 %v1152, %v690
    %v1157 = vmul.f32 %v1150, %v1155
    %v1158 = vadd.f32 %v1156, %v1157
    %v1159 = vtanh.pop %v1158
    %v1160 = vmul.f32 %v1154, %v1159
    %1161 = vmatprep.subr.mxu0 %v694
    %1162 = vmatpush1.msra.mxu0 %v693
    %1163 = vmatprep.subr.mxu0 %v698
    %1164 = vmatpush1.msra.mxu0 %v697
    %1165 = vmatprep.subr.mxu0 %v702
    %1166 = vmatpush1.msra.mxu0 %v701
    %1167 = vmatprep.subr.mxu0 %v706
    %1168 = vmatpush1.msra.mxu0 %v705
    %1169 = vmatprep.subr.mxu0 %v710
    %1170 = vmatpush1.msra.mxu0 %v709
    %1171 = vmatprep.subr.mxu0 %v714
    %1172 = vmatpush1.msra.mxu0 %v713
    %1173 = vmatprep.subr.mxu0 %v718
    %1174 = vmatpush1.msra.mxu0 %v717
    %1175 = vmatprep.subr.mxu0 %v722
    %1176 = vmatpush1.msra.mxu0 %v721
    %1177 = vmatprep.subr.mxu0 %v726
    %1178 = vmatpush1.msra.mxu0 %v725
    %1179 = vmatprep.subr.mxu0 %v730
    %1180 = vmatpush1.msra.mxu0 %v729
    %1181 = vmatprep.subr.mxu0 %v734
    %1182 = vmatpush1.msra.mxu0 %v733
    %1183 = vmatprep.subr.mxu0 %v738
    %1184 = vmatpush1.msra.mxu0 %v737
    %1185 = vmatprep.subr.mxu0 %v742
    %1186 = vmatpush1.msra.mxu0 %v741
    %1187 = vmatprep.subr.mxu0 %v746
    %1188 = vmatpush1.msra.mxu0 %v745
    %1189 = vmatprep.subr.mxu0 %v750
    %1190 = vmatpush1.msra.mxu0 %v749
    %1191 = vmatprep.subr.mxu0 %v754
    %1192 = vmatpush1.msra.mxu0 %v753
    %1193 = vmatprep.subr.mxu0 %v758
    %1194 = vmatpush1.msra.mxu0 %v757
    %1195 = vmatprep.subr.mxu0 %v762
    %1196 = vmatpush1.msra.mxu0 %v761
    %1197 = vmatprep.subr.mxu0 %v766
    %1198 = vmatpush1.msra.mxu0 %v765
    %1199 = vmatprep.subr.mxu0 %v770
    %1200 = vmatpush1.msra.mxu0 %v769
    %1201 = vmatprep.subr.mxu0 %v774
    %1202 = vmatpush1.msra.mxu0 %v773
    %1203 = vmatprep.subr.mxu0 %v778
    %1204 = vmatpush1.msra.mxu0 %v777
    %1205 = vmatprep.subr.mxu0 %v782
    %1206 = vmatpush1.msra.mxu0 %v781
    %1207 = vmatprep.subr.mxu0 %v786
    %1208 = vmatpush1.msra.mxu0 %v785
    %1209 = vmatprep.subr.mxu0 %v790
    %1210 = vmatpush1.msra.mxu0 %v789
    %1211 = vmatprep.subr.mxu0 %v794
    %1212 = vmatpush1.msra.mxu0 %v793
    %1213 = vmatprep.subr.mxu0 %v798
    %1214 = vmatpush1.msra.mxu0 %v797
    %1215 = vmatprep.subr.mxu0 %v802
    %1216 = vmatpush1.msra.mxu0 %v801
    %1217 = vmatprep.subr.mxu0 %v806
    %1218 = vmatpush1.msra.mxu0 %v805
    %1219 = vmatprep.subr.mxu0 %v810
    %1220 = vmatpush1.msra.mxu0 %v809
    %1221 = vmatprep.subr.mxu0 %v814
    %1222 = vmatpush1.msra.mxu0 %v813
    %1223 = vmatprep.subr.mxu0 %v818
    %1224 = vmatpush1.msra.mxu0 %v817
    %1225 = vmatprep.mubr.f32.mxu0 %v986
    %1226 = vmatmul.mubr.f32.gmra.mrb[0].mxu0 %v1160
    %v1227 = vpop.f32.mrb[0].mxu0
    %v1228 = vadd.f32 %v432, %v1227
    %v1229 = vpop.f32.mrb[0].mxu0
    %v1230 = vadd.f32 %v436, %v1229
    %1231 = vdwg.mxu0
    %1232 = vmatprep.subr.mxu0 %v696
    %1233 = vmatpush1.msra.mxu0 %v695
    %1234 = vmatprep.subr.mxu0 %v700
    %1235 = vmatpush1.msra.mxu0 %v699
    %1236 = vmatprep.subr.mxu0 %v704
    %1237 = vmatpush1.msra.mxu0 %v703
    %1238 = vmatprep.subr.mxu0 %v708
    %1239 = vmatpush1.msra.mxu0 %v707
    %1240 = vmatprep.subr.mxu0 %v712
    %1241 = vmatpush1.msra.mxu0 %v711
    %1242 = vmatprep.subr.mxu0 %v716
    %1243 = vmatpush1.msra.mxu0 %v715
    %1244 = vmatprep.subr.mxu0 %v720
    %1245 = vmatpush1.msra.mxu0 %v719
    %1246 = vmatprep.subr.mxu0 %v724
    %1247 = vmatpush1.msra.mxu0 %v723
    %1248 = vmatprep.subr.mxu0 %v728
    %1249 = vmatpush1.msra.mxu0 %v727
    %1250 = vmatprep.subr.mxu0 %v732
    %1251 = vmatpush1.msra.mxu0 %v731
    %1252 = vmatprep.subr.mxu0 %v736
    %1253 = vmatpush1.msra.mxu0 %v735
    %1254 = vmatprep.subr.mxu0 %v740
    %1255 = vmatpush1.msra.mxu0 %v739
    %1256 = vmatprep.subr.mxu0 %v744
    %1257 = vmatpush1.msra.mxu0 %v743
    %1258 = vmatprep.subr.mxu0 %v748
    %1259 = vmatpush1.msra.mxu0 %v747
    %1260 = vmatprep.subr.mxu0 %v752
    %1261 = vmatpush1.msra.mxu0 %v751
    %1262 = vmatprep.subr.mxu0 %v756
    %1263 = vmatpush1.msra.mxu0 %v755
    %1264 = vmatprep.subr.mxu0 %v760
    %1265 = vmatpush1.msra.mxu0 %v759
    %1266 = vmatprep.subr.mxu0 %v764
    %1267 = vmatpush1.msra.mxu0 %v763
    %1268 = vmatprep.subr.mxu0 %v768
    %1269 = vmatpush1.msra.mxu0 %v767
    %1270 = vmatprep.subr.mxu0 %v772
    %1271 = vmatpush1.msra.mxu0 %v771
    %1272 = vmatprep.subr.mxu0 %v776
    %1273 = vmatpush1.msra.mxu0 %v775
    %1274 = vmatprep.subr.mxu0 %v780
    %1275 = vmatpush1.msra.mxu0 %v779
    %1276 = vmatprep.subr.mxu0 %v784
    %1277 = vmatpush1.msra.mxu0 %v783
    %1278 = vmatprep.subr.mxu0 %v788
    %1279 = vmatpush1.msra.mxu0 %v787
    %1280 = vmatprep.subr.mxu0 %v792
    %1281 = vmatpush1.msra.mxu0 %v791
    %1282 = vmatprep.subr.mxu0 %v796
    %1283 = vmatpush1.msra.mxu0 %v795
    %1284 = vmatprep.subr.mxu0 %v800
    %1285 = vmatpush1.msra.mxu0 %v799
    %1286 = vmatprep.subr.mxu0 %v804
    %1287 = vmatpush1.msra.mxu0 %v803
    %1288 = vmatprep.subr.mxu0 %v808
    %1289 = vmatpush1.msra.mxu0 %v807
    %1290 = vmatprep.subr.mxu0 %v812
    %1291 = vmatpush1.msra.mxu0 %v811
    %1292 = vmatprep.subr.mxu0 %v816
    %1293 = vmatpush1.msra.mxu0 %v815
    %1294 = vmatprep.subr.mxu0 %v820
    %1295 = vmatpush1.msra.mxu0 %v819
    %1296 = vmatprep.mubr.f32.mxu0 %v986
    %1297 = vmatmul.mubr.f32.gmra.mrb[0].mxu0 %v1160
    %v1298 = vpop.f32.mrb[0].mxu0
    %v1299 = vadd.f32 %v440, %v1298
    %v1300 = vpop.f32.mrb[0].mxu0
    %v1301 = vadd.f32 %v444, %v1300
    %1302 = vdwg.mxu0
    %v1303 = vxor.u32 %v1228, 2147483648
    %v1304 = vxor.u32 %v1230, 2147483648
    %v1305 = vxor.u32 %v1299, 2147483648
    %v1306 = vmul.f32 %v1303, 1.442695
    %v1307 = vpow.pop %v1306
    %v1308 = vmul.f32 %v1304, 1.442695
    %v1309 = vpow.pop %v1308
    %v1310 = vmul.f32 %v1305, 1.442695
    %v1311 = vpow.pop %v1310
    %v1312 = vadd.f32 %v1307, 1.0
    %v1313 = vadd.f32 %v1309, 1.0
    %v1314 = vadd.f32 %v1311, 1.0
    %v1315 = vrcp.pop %v1312
    %v1316 = vmul.f32 1.0, %v1315
    %v1317 = vrcp.pop %v1313
    %v1318 = vmul.f32 1.0, %v1317
    %v1319 = vrcp.pop %v1314
    %v1320 = vmul.f32 1.0, %v1319
    %v1321 = vtanh.pop %v1301
    %v1322 = vmul.f32 %v1318, %v984
    %v1323 = vmul.f32 %v1316, %v1321
    %v1324 = vadd.f32 %v1322, %v1323
    %v1325 = vtanh.pop %v1324
    %v1326 = vmul.f32 %v1320, %v1325
    %v1327 = vld [vmem:[#allocation2 + $0x40] sm:$0xff]
    %v1328 = vld [vmem:[#allocation2 + $0x48] sm:$0xff]
    %v1329 = vld [vmem:[#allocation2 + $0x50] sm:$0xff]
    %v1330 = vld [vmem:[#allocation2 + $0x58] sm:$0xff]
    %1331 = vmatprep.subr.mxu0 %v460
    %1332 = vmatpush1.msra.mxu0 %v459
    %1333 = vmatprep.subr.mxu0 %v464
    %1334 = vmatpush1.msra.mxu0 %v463
    %1335 = vmatprep.subr.mxu0 %v468
    %1336 = vmatpush1.msra.mxu0 %v467
    %1337 = vmatprep.subr.mxu0 %v472
    %1338 = vmatpush1.msra.mxu0 %v471
    %1339 = vmatprep.subr.mxu0 %v476
    %1340 = vmatpush1.msra.mxu0 %v475
    %1341 = vmatprep.subr.mxu0 %v480
    %1342 = vmatpush1.msra.mxu0 %v479
    %1343 = vmatprep.subr.mxu0 %v484
    %1344 = vmatpush1.msra.mxu0 %v483
    %1345 = vmatprep.subr.mxu0 %v488
    %1346 = vmatpush1.msra.mxu0 %v487
    %1347 = vmatprep.subr.mxu0 %v492
    %1348 = vmatpush1.msra.mxu0 %v491
    %1349 = vmatprep.subr.mxu0 %v496
    %1350 = vmatpush1.msra.mxu0 %v495
    %1351 = vmatprep.subr.mxu0 %v500
    %1352 = vmatpush1.msra.mxu0 %v499
    %1353 = vmatprep.subr.mxu0 %v504
    %1354 = vmatpush1.msra.mxu0 %v503
    %1355 = vmatprep.subr.mxu0 %v508
    %1356 = vmatpush1.msra.mxu0 %v507
    %1357 = vmatprep.subr.mxu0 %v512
    %1358 = vmatpush1.msra.mxu0 %v511
    %1359 = vmatprep.subr.mxu0 %v516
    %1360 = vmatpush1.msra.mxu0 %v515
    %1361 = vmatprep.subr.mxu0 %v520
    %1362 = vmatpush1.msra.mxu0 %v519
    %1363 = vmatprep.subr.mxu0 0.0
    %1364 = vmatpush1.msra.mxu0 0.0
    %1365 = vmatprep.subr.mxu0 0.0
    %1366 = vmatpush1.msra.mxu0 0.0
    %1367 = vmatprep.subr.mxu0 0.0
    %1368 = vmatpush1.msra.mxu0 0.0
    %1369 = vmatprep.subr.mxu0 0.0
    %1370 = vmatpush1.msra.mxu0 0.0
    %1371 = vmatprep.subr.mxu0 0.0
    %1372 = vmatpush1.msra.mxu0 0.0
    %1373 = vmatprep.subr.mxu0 0.0
    %1374 = vmatpush1.msra.mxu0 0.0
    %1375 = vmatprep.subr.mxu0 0.0
    %1376 = vmatpush1.msra.mxu0 0.0
    %1377 = vmatprep.subr.mxu0 0.0
    %1378 = vmatpush1.msra.mxu0 0.0
    %1379 = vmatprep.subr.mxu0 0.0
    %1380 = vmatpush1.msra.mxu0 0.0
    %1381 = vmatprep.subr.mxu0 0.0
    %1382 = vmatpush1.msra.mxu0 0.0
    %1383 = vmatprep.subr.mxu0 0.0
    %1384 = vmatpush1.msra.mxu0 0.0
    %1385 = vmatprep.subr.mxu0 0.0
    %1386 = vmatpush1.msra.mxu0 0.0
    %1387 = vmatprep.subr.mxu0 0.0
    %1388 = vmatpush1.msra.mxu0 0.0
    %1389 = vmatprep.subr.mxu0 0.0
    %1390 = vmatpush1.msra.mxu0 0.0
    %1391 = vmatprep.subr.mxu0 0.0
    %1392 = vmatpush1.msra.mxu0 0.0
    %1393 = vmatprep.subr.mxu0 0.0
    %1394 = vmatpush1.msra.mxu0 0.0
    %1395 = vmatprep.mubr.f32.mxu0 0.0
    %1396 = vmatmul.mubr.f32.gmra.mrb[0].mxu0 %v1160
    %v1397 = vpop.f32.mrb[0].mxu0
    %v1398 = vadd.f32 0.0, %v1397
    %v1399 = vpop.f32.mrb[0].mxu0
    %v1400 = vadd.f32 0.0, %v1399
    %1401 = vdwg.mxu0
    %1402 = vmatprep.subr.mxu0 %v462
    %1403 = vmatpush1.msra.mxu0 %v461
    %1404 = vmatprep.subr.mxu0 %v466
    %1405 = vmatpush1.msra.mxu0 %v465
    %1406 = vmatprep.subr.mxu0 %v470
    %1407 = vmatpush1.msra.mxu0 %v469
    %1408 = vmatprep.subr.mxu0 %v474
    %1409 = vmatpush1.msra.mxu0 %v473
    %1410 = vmatprep.subr.mxu0 %v478
    %1411 = vmatpush1.msra.mxu0 %v477
    %1412 = vmatprep.subr.mxu0 %v482
    %1413 = vmatpush1.msra.mxu0 %v481
    %1414 = vmatprep.subr.mxu0 %v486
    %1415 = vmatpush1.msra.mxu0 %v485
    %1416 = vmatprep.subr.mxu0 %v490
    %1417 = vmatpush1.msra.mxu0 %v489
    %1418 = vmatprep.subr.mxu0 %v494
    %1419 = vmatpush1.msra.mxu0 %v493
    %1420 = vmatprep.subr.mxu0 %v498
    %1421 = vmatpush1.msra.mxu0 %v497
    %1422 = vmatprep.subr.mxu0 %v502
    %1423 = vmatpush1.msra.mxu0 %v501
    %1424 = vmatprep.subr.mxu0 %v506
    %1425 = vmatpush1.msra.mxu0 %v505
    %1426 = vmatprep.subr.mxu0 %v510
    %1427 = vmatpush1.msra.mxu0 %v509
    %1428 = vmatprep.subr.mxu0 %v514
    %1429 = vmatpush1.msra.mxu0 %v513
    %1430 = vmatprep.subr.mxu0 %v518
    %1431 = vmatpush1.msra.mxu0 %v517
    %1432 = vmatprep.subr.mxu0 %v522
    %1433 = vmatpush1.msra.mxu0 %v521
    %1434 = vmatprep.subr.mxu0 0.0
    %1435 = vmatpush1.msra.mxu0 0.0
    %1436 = vmatprep.subr.mxu0 0.0
    %1437 = vmatpush1.msra.mxu0 0.0
    %1438 = vmatprep.subr.mxu0 0.0
    %1439 = vmatpush1.msra.mxu0 0.0
    %1440 = vmatprep.subr.mxu0 0.0
    %1441 = vmatpush1.msra.mxu0 0.0
    %1442 = vmatprep.subr.mxu0 0.0
    %1443 = vmatpush1.msra.mxu0 0.0
    %1444 = vmatprep.subr.mxu0 0.0
    %1445 = vmatpush1.msra.mxu0 0.0
    %1446 = vmatprep.subr.mxu0 0.0
    %1447 = vmatpush1.msra.mxu0 0.0
    %1448 = vmatprep.subr.mxu0 0.0
    %1449 = vmatpush1.msra.mxu0 0.0
    %1450 = vmatprep.subr.mxu0 0.0
    %1451 = vmatpush1.msra.mxu0 0.0
    %1452 = vmatprep.subr.mxu0 0.0
    %1453 = vmatpush1.msra.mxu0 0.0
    %1454 = vmatprep.subr.mxu0 0.0
    %1455 = vmatpush1.msra.mxu0 0.0
    %1456 = vmatprep.subr.mxu0 0.0
    %1457 = vmatpush1.msra.mxu0 0.0
    %1458 = vmatprep.subr.mxu0 0.0
    %1459 = vmatpush1.msra.mxu0 0.0
    %1460 = vmatprep.subr.mxu0 0.0
    %1461 = vmatpush1.msra.mxu0 0.0
    %1462 = vmatprep.subr.mxu0 0.0
    %1463 = vmatpush1.msra.mxu0 0.0
    %1464 = vmatprep.subr.mxu0 0.0
    %1465 = vmatpush1.msra.mxu0 0.0
    %1466 = vmatprep.mubr.f32.mxu0 0.0
    %1467 = vmatmul.mubr.f32.gmra.mrb[0].mxu0 %v1160
    %v1468 = vpop.f32.mrb[0].mxu0
    %v1469 = vadd.f32 0.0, %v1468
    %v1470 = vpop.f32.mrb[0].mxu0
    %v1471 = vadd.f32 0.0, %v1470
    %1472 = vdwg.mxu0
    %v1473 = vadd.f32 %v1327, %v1398
    %v1474 = vadd.f32 %v1328, %v1400
    %v1475 = vadd.f32 %v1329, %v1469
    %v1476 = vadd.f32 %v1330, %v1471
    %v1477 = vxor.u32 %v1473, 2147483648
    %v1478 = vxor.u32 %v1474, 2147483648
    %v1479 = vxor.u32 %v1475, 2147483648
    %v1480 = vmul.f32 %v1477, 1.442695
    %v1481 = vpow.pop %v1480
    %v1482 = vmul.f32 %v1478, 1.442695
    %v1483 = vpow.pop %v1482
    %v1484 = vmul.f32 %v1479, 1.442695
    %v1485 = vpow.pop %v1484
    %v1486 = vadd.f32 %v1481, 1.0
    %v1487 = vadd.f32 %v1483, 1.0
    %v1488 = vadd.f32 %v1485, 1.0
    %v1489 = vrcp.pop %v1486
    %v1490 = vmul.f32 1.0, %v1489
    %v1491 = vrcp.pop %v1487
    %v1492 = vmul.f32 1.0, %v1491
    %v1493 = vrcp.pop %v1488
    %v1494 = vmul.f32 1.0, %v1493
    %v1495 = vtanh.pop %v1476
    %v1496 = vmul.f32 %v1492, %v1158
    %v1497 = vmul.f32 %v1490, %v1495
    %v1498 = vadd.f32 %v1496, %v1497
    %v1499 = vtanh.pop %v1498
    %v1500 = vmul.f32 %v1494, %v1499
    %1501 = vmatprep.subr.mxu0 %v694
    %1502 = vmatpush1.msra.mxu0 %v693
    %1503 = vmatprep.subr.mxu0 %v698
    %1504 = vmatpush1.msra.mxu0 %v697
    %1505 = vmatprep.subr.mxu0 %v702
    %1506 = vmatpush1.msra.mxu0 %v701
    %1507 = vmatprep.subr.mxu0 %v706
    %1508 = vmatpush1.msra.mxu0 %v705
    %1509 = vmatprep.subr.mxu0 %v710
    %1510 = vmatpush1.msra.mxu0 %v709
    %1511 = vmatprep.subr.mxu0 %v714
    %1512 = vmatpush1.msra.mxu0 %v713
    %1513 = vmatprep.subr.mxu0 %v718
    %1514 = vmatpush1.msra.mxu0 %v717
    %1515 = vmatprep.subr.mxu0 %v722
    %1516 = vmatpush1.msra.mxu0 %v721
    %1517 = vmatprep.subr.mxu0 %v726
    %1518 = vmatpush1.msra.mxu0 %v725
    %1519 = vmatprep.subr.mxu0 %v730
    %1520 = vmatpush1.msra.mxu0 %v729
    %1521 = vmatprep.subr.mxu0 %v734
    %1522 = vmatpush1.msra.mxu0 %v733
    %1523 = vmatprep.subr.mxu0 %v738
    %1524 = vmatpush1.msra.mxu0 %v737
    %1525 = vmatprep.subr.mxu0 %v742
    %1526 = vmatpush1.msra.mxu0 %v741
    %1527 = vmatprep.subr.mxu0 %v746
    %1528 = vmatpush1.msra.mxu0 %v745
    %1529 = vmatprep.subr.mxu0 %v750
    %1530 = vmatpush1.msra.mxu0 %v749
    %1531 = vmatprep.subr.mxu0 %v754
    %1532 = vmatpush1.msra.mxu0 %v753
    %1533 = vmatprep.subr.mxu0 %v758
    %1534 = vmatpush1.msra.mxu0 %v757
    %1535 = vmatprep.subr.mxu0 %v762
    %1536 = vmatpush1.msra.mxu0 %v761
    %1537 = vmatprep.subr.mxu0 %v766
    %1538 = vmatpush1.msra.mxu0 %v765
    %1539 = vmatprep.subr.mxu0 %v770
    %1540 = vmatpush1.msra.mxu0 %v769
    %1541 = vmatprep.subr.mxu0 %v774
    %1542 = vmatpush1.msra.mxu0 %v773
    %1543 = vmatprep.subr.mxu0 %v778
    %1544 = vmatpush1.msra.mxu0 %v777
    %1545 = vmatprep.subr.mxu0 %v782
    %1546 = vmatpush1.msra.mxu0 %v781
    %1547 = vmatprep.subr.mxu0 %v786
    %1548 = vmatpush1.msra.mxu0 %v785
    %1549 = vmatprep.subr.mxu0 %v790
    %1550 = vmatpush1.msra.mxu0 %v789
    %1551 = vmatprep.subr.mxu0 %v794
    %1552 = vmatpush1.msra.mxu0 %v793
    %1553 = vmatprep.subr.mxu0 %v798
    %1554 = vmatpush1.msra.mxu0 %v797
    %1555 = vmatprep.subr.mxu0 %v802
    %1556 = vmatpush1.msra.mxu0 %v801
    %1557 = vmatprep.subr.mxu0 %v806
    %1558 = vmatpush1.msra.mxu0 %v805
    %1559 = vmatprep.subr.mxu0 %v810
    %1560 = vmatpush1.msra.mxu0 %v809
    %1561 = vmatprep.subr.mxu0 %v814
    %1562 = vmatpush1.msra.mxu0 %v813
    %1563 = vmatprep.subr.mxu0 %v818
    %1564 = vmatpush1.msra.mxu0 %v817
    %1565 = vmatprep.mubr.f32.mxu0 %v1326
    %1566 = vmatmul.mubr.f32.gmra.mrb[0].mxu0 %v1500
    %v1567 = vpop.f32.mrb[0].mxu0
    %v1568 = vadd.f32 %v432, %v1567
    %v1569 = vpop.f32.mrb[0].mxu0
    %v1570 = vadd.f32 %v436, %v1569
    %1571 = vdwg.mxu0
    %1572 = vmatprep.subr.mxu0 %v696
    %1573 = vmatpush1.msra.mxu0 %v695
    %1574 = vmatprep.subr.mxu0 %v700
    %1575 = vmatpush1.msra.mxu0 %v699
    %1576 = vmatprep.subr.mxu0 %v704
    %1577 = vmatpush1.msra.mxu0 %v703
    %1578 = vmatprep.subr.mxu0 %v708
    %1579 = vmatpush1.msra.mxu0 %v707
    %1580 = vmatprep.subr.mxu0 %v712
    %1581 = vmatpush1.msra.mxu0 %v711
    %1582 = vmatprep.subr.mxu0 %v716
    %1583 = vmatpush1.msra.mxu0 %v715
    %1584 = vmatprep.subr.mxu0 %v720
    %1585 = vmatpush1.msra.mxu0 %v719
    %1586 = vmatprep.subr.mxu0 %v724
    %1587 = vmatpush1.msra.mxu0 %v723
    %1588 = vmatprep.subr.mxu0 %v728
    %1589 = vmatpush1.msra.mxu0 %v727
    %1590 = vmatprep.subr.mxu0 %v732
    %1591 = vmatpush1.msra.mxu0 %v731
    %1592 = vmatprep.subr.mxu0 %v736
    %1593 = vmatpush1.msra.mxu0 %v735
    %1594 = vmatprep.subr.mxu0 %v740
    %1595 = vmatpush1.msra.mxu0 %v739
    %1596 = vmatprep.subr.mxu0 %v744
    %1597 = vmatpush1.msra.mxu0 %v743
    %1598 = vmatprep.subr.mxu0 %v748
    %1599 = vmatpush1.msra.mxu0 %v747
    %1600 = vmatprep.subr.mxu0 %v752
    %1601 = vmatpush1.msra.mxu0 %v751
    %1602 = vmatprep.subr.mxu0 %v756
    %1603 = vmatpush1.msra.mxu0 %v755
    %1604 = vmatprep.subr.mxu0 %v760
    %1605 = vmatpush1.msra.mxu0 %v759
    %1606 = vmatprep.subr.mxu0 %v764
    %1607 = vmatpush1.msra.mxu0 %v763
    %1608 = vmatprep.subr.mxu0 %v768
    %1609 = vmatpush1.msra.mxu0 %v767
    %1610 = vmatprep.subr.mxu0 %v772
    %1611 = vmatpush1.msra.mxu0 %v771
    %1612 = vmatprep.subr.mxu0 %v776
    %1613 = vmatpush1.msra.mxu0 %v775
    %1614 = vmatprep.subr.mxu0 %v780
    %1615 = vmatpush1.msra.mxu0 %v779
    %1616 = vmatprep.subr.mxu0 %v784
    %1617 = vmatpush1.msra.mxu0 %v783
    %1618 = vmatprep.subr.mxu0 %v788
    %1619 = vmatpush1.msra.mxu0 %v787
    %1620 = vmatprep.subr.mxu0 %v792
    %1621 = vmatpush1.msra.mxu0 %v791
    %1622 = vmatprep.subr.mxu0 %v796
    %1623 = vmatpush1.msra.mxu0 %v795
    %1624 = vmatprep.subr.mxu0 %v800
    %1625 = vmatpush1.msra.mxu0 %v799
    %1626 = vmatprep.subr.mxu0 %v804
    %1627 = vmatpush1.msra.mxu0 %v803
    %1628 = vmatprep.subr.mxu0 %v808
    %1629 = vmatpush1.msra.mxu0 %v807
    %1630 = vmatprep.subr.mxu0 %v812
    %1631 = vmatpush1.msra.mxu0 %v811
    %1632 = vmatprep.subr.mxu0 %v816
    %1633 = vmatpush1.msra.mxu0 %v815
    %1634 = vmatprep.subr.mxu0 %v820
    %1635 = vmatpush1.msra.mxu0 %v819
    %1636 = vmatprep.mubr.f32.mxu0 %v1326
    %1637 = vmatmul.mubr.f32.gmra.mrb[0].mxu0 %v1500
    %v1638 = vpop.f32.mrb[0].mxu0
    %v1639 = vadd.f32 %v440, %v1638
    %v1640 = vpop.f32.mrb[0].mxu0
    %v1641 = vadd.f32 %v444, %v1640
    %1642 = vdwg.mxu0
    %v1643 = vxor.u32 %v1568, 2147483648
    %v1644 = vxor.u32 %v1570, 2147483648
    %v1645 = vxor.u32 %v1639, 2147483648
    %v1646 = vmul.f32 %v1643, 1.442695
    %v1647 = vpow.pop %v1646
    %v1648 = vmul.f32 %v1644, 1.442695
    %v1649 = vpow.pop %v1648
    %v1650 = vmul.f32 %v1645, 1.442695
    %v1651 = vpow.pop %v1650
    %v1652 = vadd.f32 %v1647, 1.0
    %v1653 = vadd.f32 %v1649, 1.0
    %v1654 = vadd.f32 %v1651, 1.0
    %v1655 = vrcp.pop %v1652
    %v1656 = vmul.f32 1.0, %v1655
    %v1657 = vrcp.pop %v1653
    %v1658 = vmul.f32 1.0, %v1657
    %v1659 = vrcp.pop %v1654
    %v1660 = vmul.f32 1.0, %v1659
    %v1661 = vtanh.pop %v1641
    %v1662 = vmul.f32 %v1658, %v1324
    %v1663 = vmul.f32 %v1656, %v1661
    %v1664 = vadd.f32 %v1662, %v1663
    %v1665 = vtanh.pop %v1664
    %v1666 = vmul.f32 %v1660, %v1665
    %v1667 = vld [vmem:[#allocation2 + $0x60] sm:$0xff]
    %v1668 = vld [vmem:[#allocation2 + $0x68] sm:$0xff]
    %v1669 = vld [vmem:[#allocation2 + $0x70] sm:$0xff]
    %v1670 = vld [vmem:[#allocation2 + $0x78] sm:$0xff]
    %1671 = vmatprep.subr.mxu0 %v460
    %1672 = vmatpush1.msra.mxu0 %v459
    %1673 = vmatprep.subr.mxu0 %v464
    %1674 = vmatpush1.msra.mxu0 %v463
    %1675 = vmatprep.subr.mxu0 %v468
    %1676 = vmatpush1.msra.mxu0 %v467
    %1677 = vmatprep.subr.mxu0 %v472
    %1678 = vmatpush1.msra.mxu0 %v471
    %1679 = vmatprep.subr.mxu0 %v476
    %1680 = vmatpush1.msra.mxu0 %v475
    %1681 = vmatprep.subr.mxu0 %v480
    %1682 = vmatpush1.msra.mxu0 %v479
    %1683 = vmatprep.subr.mxu0 %v484
    %1684 = vmatpush1.msra.mxu0 %v483
    %1685 = vmatprep.subr.mxu0 %v488
    %1686 = vmatpush1.msra.mxu0 %v487
    %1687 = vmatprep.subr.mxu0 %v492
    %1688 = vmatpush1.msra.mxu0 %v491
    %1689 = vmatprep.subr.mxu0 %v496
    %1690 = vmatpush1.msra.mxu0 %v495
    %1691 = vmatprep.subr.mxu0 %v500
    %1692 = vmatpush1.msra.mxu0 %v499
    %1693 = vmatprep.subr.mxu0 %v504
    %1694 = vmatpush1.msra.mxu0 %v503
    %1695 = vmatprep.subr.mxu0 %v508
    %1696 = vmatpush1.msra.mxu0 %v507
    %1697 = vmatprep.subr.mxu0 %v512
    %1698 = vmatpush1.msra.mxu0 %v511
    %1699 = vmatprep.subr.mxu0 %v516
    %1700 = vmatpush1.msra.mxu0 %v515
    %1701 = vmatprep.subr.mxu0 %v520
    %1702 = vmatpush1.msra.mxu0 %v519
    %1703 = vmatprep.subr.mxu0 0.0
    %1704 = vmatpush1.msra.mxu0 0.0
    %1705 = vmatprep.subr.mxu0 0.0
    %1706 = vmatpush1.msra.mxu0 0.0
    %1707 = vmatprep.subr.mxu0 0.0
    %1708 = vmatpush1.msra.mxu0 0.0
    %1709 = vmatprep.subr.mxu0 0.0
    %1710 = vmatpush1.msra.mxu0 0.0
    %1711 = vmatprep.subr.mxu0 0.0
    %1712 = vmatpush1.msra.mxu0 0.0
    %1713 = vmatprep.subr.mxu0 0.0
    %1714 = vmatpush1.msra.mxu0 0.0
    %1715 = vmatprep.subr.mxu0 0.0
    %1716 = vmatpush1.msra.mxu0 0.0
    %1717 = vmatprep.subr.mxu0 0.0
    %1718 = vmatpush1.msra.mxu0 0.0
    %1719 = vmatprep.subr.mxu0 0.0
    %1720 = vmatpush1.msra.mxu0 0.0
    %1721 = vmatprep.subr.mxu0 0.0
    %1722 = vmatpush1.msra.mxu0 0.0
    %1723 = vmatprep.subr.mxu0 0.0
    %1724 = vmatpush1.msra.mxu0 0.0
    %1725 = vmatprep.subr.mxu0 0.0
    %1726 = vmatpush1.msra.mxu0 0.0
    %1727 = vmatprep.subr.mxu0 0.0
    %1728 = vmatpush1.msra.mxu0 0.0
    %1729 = vmatprep.subr.mxu0 0.0
    %1730 = vmatpush1.msra.mxu0 0.0
    %1731 = vmatprep.subr.mxu0 0.0
    %1732 = vmatpush1.msra.mxu0 0.0
    %1733 = vmatprep.subr.mxu0 0.0
    %1734 = vmatpush1.msra.mxu0 0.0
    %1735 = vmatprep.mubr.f32.mxu0 0.0
    %1736 = vmatmul.mubr.f32.gmra.mrb[0].mxu0 %v1500
    %v1737 = vpop.f32.mrb[0].mxu0
    %v1738 = vadd.f32 0.0, %v1737
    %v1739 = vpop.f32.mrb[0].mxu0
    %v1740 = vadd.f32 0.0, %v1739
    %1741 = vdwg.mxu0
    %1742 = vmatprep.subr.mxu0 %v462
    %1743 = vmatpush1.msra.mxu0 %v461
    %1744 = vmatprep.subr.mxu0 %v466
    %1745 = vmatpush1.msra.mxu0 %v465
    %1746 = vmatprep.subr.mxu0 %v470
    %1747 = vmatpush1.msra.mxu0 %v469
    %1748 = vmatprep.subr.mxu0 %v474
    %1749 = vmatpush1.msra.mxu0 %v473
    %1750 = vmatprep.subr.mxu0 %v478
    %1751 = vmatpush1.msra.mxu0 %v477
    %1752 = vmatprep.subr.mxu0 %v482
    %1753 = vmatpush1.msra.mxu0 %v481
    %1754 = vmatprep.subr.mxu0 %v486
    %1755 = vmatpush1.msra.mxu0 %v485
    %1756 = vmatprep.subr.mxu0 %v490
    %1757 = vmatpush1.msra.mxu0 %v489
    %1758 = vmatprep.subr.mxu0 %v494
    %1759 = vmatpush1.msra.mxu0 %v493
    %1760 = vmatprep.subr.mxu0 %v498
    %1761 = vmatpush1.msra.mxu0 %v497
    %1762 = vmatprep.subr.mxu0 %v502
    %1763 = vmatpush1.msra.mxu0 %v501
    %1764 = vmatprep.subr.mxu0 %v506
    %1765 = vmatpush1.msra.mxu0 %v505
    %1766 = vmatprep.subr.mxu0 %v510
    %1767 = vmatpush1.msra.mxu0 %v509
    %1768 = vmatprep.subr.mxu0 %v514
    %1769 = vmatpush1.msra.mxu0 %v513
    %1770 = vmatprep.subr.mxu0 %v518
    %1771 = vmatpush1.msra.mxu0 %v517
    %1772 = vmatprep.subr.mxu0 %v522
    %1773 = vmatpush1.msra.mxu0 %v521
    %1774 = vmatprep.subr.mxu0 0.0
    %1775 = vmatpush1.msra.mxu0 0.0
    %1776 = vmatprep.subr.mxu0 0.0
    %1777 = vmatpush1.msra.mxu0 0.0
    %1778 = vmatprep.subr.mxu0 0.0
    %1779 = vmatpush1.msra.mxu0 0.0
    %1780 = vmatprep.subr.mxu0 0.0
    %1781 = vmatpush1.msra.mxu0 0.0
    %1782 = vmatprep.subr.mxu0 0.0
    %1783 = vmatpush1.msra.mxu0 0.0
    %1784 = vmatprep.subr.mxu0 0.0
    %1785 = vmatpush1.msra.mxu0 0.0
    %1786 = vmatprep.subr.mxu0 0.0
    %1787 = vmatpush1.msra.mxu0 0.0
    %1788 = vmatprep.subr.mxu0 0.0
    %1789 = vmatpush1.msra.mxu0 0.0
    %1790 = vmatprep.subr.mxu0 0.0
    %1791 = vmatpush1.msra.mxu0 0.0
    %1792 = vmatprep.subr.mxu0 0.0
    %1793 = vmatpush1.msra.mxu0 0.0
    %1794 = vmatprep.subr.mxu0 0.0
    %1795 = vmatpush1.msra.mxu0 0.0
    %1796 = vmatprep.subr.mxu0 0.0
    %1797 = vmatpush1.msra.mxu0 0.0
    %1798 = vmatprep.subr.mxu0 0.0
    %1799 = vmatpush1.msra.mxu0 0.0
    %1800 = vmatprep.subr.mxu0 0.0
    %1801 = vmatpush1.msra.mxu0 0.0
    %1802 = vmatprep.subr.mxu0 0.0
    %1803 = vmatpush1.msra.mxu0 0.0
    %1804 = vmatprep.subr.mxu0 0.0
    %1805 = vmatpush1.msra.mxu0 0.0
    %1806 = vmatprep.mubr.f32.mxu0 0.0
    %1807 = vmatmul.mubr.f32.gmra.mrb[0].mxu0 %v1500
    %v1808 = vpop.f32.mrb[0].mxu0
    %v1809 = vadd.f32 0.0, %v1808
    %v1810 = vpop.f32.mrb[0].mxu0
    %v1811 = vadd.f32 0.0, %v1810
    %1812 = vdwg.mxu0
    %v1813 = vadd.f32 %v1667, %v1738
    %v1814 = vadd.f32 %v1668, %v1740
    %v1815 = vadd.f32 %v1669, %v1809
    %v1816 = vadd.f32 %v1670, %v1811
    %v1817 = vxor.u32 %v1813, 2147483648
    %v1818 = vxor.u32 %v1814, 2147483648
    %v1819 = vxor.u32 %v1815, 2147483648
    %v1820 = vmul.f32 %v1817, 1.442695
    %v1821 = vpow.pop %v1820
    %v1822 = vmul.f32 %v1818, 1.442695
    %v1823 = vpow.pop %v1822
    %v1824 = vmul.f32 %v1819, 1.442695
    %v1825 = vpow.pop %v1824
    %v1826 = vadd.f32 %v1821, 1.0
    %v1827 = vadd.f32 %v1823, 1.0
    %v1828 = vadd.f32 %v1825, 1.0
    %v1829 = vrcp.pop %v1826
    %v1830 = vmul.f32 1.0, %v1829
    %v1831 = vrcp.pop %v1827
    %v1832 = vmul.f32 1.0, %v1831
    %v1833 = vrcp.pop %v1828
    %v1834 = vmul.f32 1.0, %v1833
    %v1835 = vtanh.pop %v1816
    %v1836 = vmul.f32 %v1832, %v1498
    %v1837 = vmul.f32 %v1830, %v1835
    %v1838 = vadd.f32 %v1836, %v1837
    %v1839 = vtanh.pop %v1838
    %v1840 = vmul.f32 %v1834, %v1839
    %1841 = vmatprep.subr.mxu0 %v694
    %1842 = vmatpush1.msra.mxu0 %v693
    %1843 = vmatprep.subr.mxu0 %v698
    %1844 = vmatpush1.msra.mxu0 %v697
    %1845 = vmatprep.subr.mxu0 %v702
    %1846 = vmatpush1.msra.mxu0 %v701
    %1847 = vmatprep.subr.mxu0 %v706
    %1848 = vmatpush1.msra.mxu0 %v705
    %1849 = vmatprep.subr.mxu0 %v710
    %1850 = vmatpush1.msra.mxu0 %v709
    %1851 = vmatprep.subr.mxu0 %v714
    %1852 = vmatpush1.msra.mxu0 %v713
    %1853 = vmatprep.subr.mxu0 %v718
    %1854 = vmatpush1.msra.mxu0 %v717
    %1855 = vmatprep.subr.mxu0 %v722
    %1856 = vmatpush1.msra.mxu0 %v721
    %1857 = vmatprep.subr.mxu0 %v726
    %1858 = vmatpush1.msra.mxu0 %v725
    %1859 = vmatprep.subr.mxu0 %v730
    %1860 = vmatpush1.msra.mxu0 %v729
    %1861 = vmatprep.subr.mxu0 %v734
    %1862 = vmatpush1.msra.mxu0 %v733
    %1863 = vmatprep.subr.mxu0 %v738
    %1864 = vmatpush1.msra.mxu0 %v737
    %1865 = vmatprep.subr.mxu0 %v742
    %1866 = vmatpush1.msra.mxu0 %v741
    %1867 = vmatprep.subr.mxu0 %v746
    %1868 = vmatpush1.msra.mxu0 %v745
    %1869 = vmatprep.subr.mxu0 %v750
    %1870 = vmatpush1.msra.mxu0 %v749
    %1871 = vmatprep.subr.mxu0 %v754
    %1872 = vmatpush1.msra.mxu0 %v753
    %1873 = vmatprep.subr.mxu0 %v758
    %1874 = vmatpush1.msra.mxu0 %v757
    %1875 = vmatprep.subr.mxu0 %v762
    %1876 = vmatpush1.msra.mxu0 %v761
    %1877 = vmatprep.subr.mxu0 %v766
    %1878 = vmatpush1.msra.mxu0 %v765
    %1879 = vmatprep.subr.mxu0 %v770
    %1880 = vmatpush1.msra.mxu0 %v769
    %1881 = vmatprep.subr.mxu0 %v774
    %1882 = vmatpush1.msra.mxu0 %v773
    %1883 = vmatprep.subr.mxu0 %v778
    %1884 = vmatpush1.msra.mxu0 %v777
    %1885 = vmatprep.subr.mxu0 %v782
    %1886 = vmatpush1.msra.mxu0 %v781
    %1887 = vmatprep.subr.mxu0 %v786
    %1888 = vmatpush1.msra.mxu0 %v785
    %1889 = vmatprep.subr.mxu0 %v790
    %1890 = vmatpush1.msra.mxu0 %v789
    %1891 = vmatprep.subr.mxu0 %v794
    %1892 = vmatpush1.msra.mxu0 %v793
    %1893 = vmatprep.subr.mxu0 %v798
    %1894 = vmatpush1.msra.mxu0 %v797
    %1895 = vmatprep.subr.mxu0 %v802
    %1896 = vmatpush1.msra.mxu0 %v801
    %1897 = vmatprep.subr.mxu0 %v806
    %1898 = vmatpush1.msra.mxu0 %v805
    %1899 = vmatprep.subr.mxu0 %v810
    %1900 = vmatpush1.msra.mxu0 %v809
    %1901 = vmatprep.subr.mxu0 %v814
    %1902 = vmatpush1.msra.mxu0 %v813
    %1903 = vmatprep.subr.mxu0 %v818
    %1904 = vmatpush1.msra.mxu0 %v817
    %1905 = vmatprep.mubr.f32.mxu0 %v1666
    %1906 = vmatmul.mubr.f32.gmra.mrb[0].mxu0 %v1840
    %v1907 = vpop.f32.mrb[0].mxu0
    %v1908 = vadd.f32 %v432, %v1907
    %v1909 = vpop.f32.mrb[0].mxu0
    %v1910 = vadd.f32 %v436, %v1909
    %1911 = vdwg.mxu0
    %1912 = vmatprep.subr.mxu0 %v696
    %1913 = vmatpush1.msra.mxu0 %v695
    %1914 = vmatprep.subr.mxu0 %v700
    %1915 = vmatpush1.msra.mxu0 %v699
    %1916 = vmatprep.subr.mxu0 %v704
    %1917 = vmatpush1.msra.mxu0 %v703
    %1918 = vmatprep.subr.mxu0 %v708
    %1919 = vmatpush1.msra.mxu0 %v707
    %1920 = vmatprep.subr.mxu0 %v712
    %1921 = vmatpush1.msra.mxu0 %v711
    %1922 = vmatprep.subr.mxu0 %v716
    %1923 = vmatpush1.msra.mxu0 %v715
    %1924 = vmatprep.subr.mxu0 %v720
    %1925 = vmatpush1.msra.mxu0 %v719
    %1926 = vmatprep.subr.mxu0 %v724
    %1927 = vmatpush1.msra.mxu0 %v723
    %1928 = vmatprep.subr.mxu0 %v728
    %1929 = vmatpush1.msra.mxu0 %v727
    %1930 = vmatprep.subr.mxu0 %v732
    %1931 = vmatpush1.msra.mxu0 %v731
    %1932 = vmatprep.subr.mxu0 %v736
    %1933 = vmatpush1.msra.mxu0 %v735
    %1934 = vmatprep.subr.mxu0 %v740
    %1935 = vmatpush1.msra.mxu0 %v739
    %1936 = vmatprep.subr.mxu0 %v744
    %1937 = vmatpush1.msra.mxu0 %v743
    %1938 = vmatprep.subr.mxu0 %v748
    %1939 = vmatpush1.msra.mxu0 %v747
    %1940 = vmatprep.subr.mxu0 %v752
    %1941 = vmatpush1.msra.mxu0 %v751
    %1942 = vmatprep.subr.mxu0 %v756
    %1943 = vmatpush1.msra.mxu0 %v755
    %1944 = vmatprep.subr.mxu0 %v760
    %1945 = vmatpush1.msra.mxu0 %v759
    %1946 = vmatprep.subr.mxu0 %v764
    %1947 = vmatpush1.msra.mxu0 %v763
    %1948 = vmatprep.subr.mxu0 %v768
    %1949 = vmatpush1.msra.mxu0 %v767
    %1950 = vmatprep.subr.mxu0 %v772
    %1951 = vmatpush1.msra.mxu0 %v771
    %1952 = vmatprep.subr.mxu0 %v776
    %1953 = vmatpush1.msra.mxu0 %v775
    %1954 = vmatprep.subr.mxu0 %v780
    %1955 = vmatpush1.msra.mxu0 %v779
    %1956 = vmatprep.subr.mxu0 %v784
    %1957 = vmatpush1.msra.mxu0 %v783
    %1958 = vmatprep.subr.mxu0 %v788
    %1959 = vmatpush1.msra.mxu0 %v787
    %1960 = vmatprep.subr.mxu0 %v792
    %1961 = vmatpush1.msra.mxu0 %v791
    %1962 = vmatprep.subr.mxu0 %v796
    %1963 = vmatpush1.msra.mxu0 %v795
    %1964 = vmatprep.subr.mxu0 %v800
    %1965 = vmatpush1.msra.mxu0 %v799
    %1966 = vmatprep.subr.mxu0 %v804
    %1967 = vmatpush1.msra.mxu0 %v803
    %1968 = vmatprep.subr.mxu0 %v808
    %1969 = vmatpush1.msra.mxu0 %v807
    %1970 = vmatprep.subr.mxu0 %v812
    %1971 = vmatpush1.msra.mxu0 %v811
    %1972 = vmatprep.subr.mxu0 %v816
    %1973 = vmatpush1.msra.mxu0 %v815
    %1974 = vmatprep.subr.mxu0 %v820
    %1975 = vmatpush1.msra.mxu0 %v819
    %1976 = vmatprep.mubr.f32.mxu0 %v1666
    %1977 = vmatmul.mubr.f32.gmra.mrb[0].mxu0 %v1840
    %v1978 = vpop.f32.mrb[0].mxu0
    %v1979 = vadd.f32 %v440, %v1978
    %v1980 = vpop.f32.mrb[0].mxu0
    %v1981 = vadd.f32 %v444, %v1980
    %1982 = vdwg.mxu0
    %v1983 = vxor.u32 %v1908, 2147483648
    %v1984 = vxor.u32 %v1910, 2147483648
    %v1985 = vxor.u32 %v1979, 2147483648
    %v1986 = vmul.f32 %v1983, 1.442695
    %v1987 = vpow.pop %v1986
    %v1988 = vmul.f32 %v1984, 1.442695
    %v1989 = vpow.pop %v1988
    %v1990 = vmul.f32 %v1985, 1.442695
    %v1991 = vpow.pop %v1990
    %v1992 = vadd.f32 %v1987, 1.0
    %v1993 = vadd.f32 %v1989, 1.0
    %v1994 = vadd.f32 %v1991, 1.0
    %v1995 = vrcp.pop %v1992
    %v1996 = vmul.f32 1.0, %v1995
    %v1997 = vrcp.pop %v1993
    %v1998 = vmul.f32 1.0, %v1997
    %v1999 = vrcp.pop %v1994
    %v2000 = vmul.f32 1.0, %v1999
    %v2001 = vtanh.pop %v1981
    %v2002 = vmul.f32 %v1998, %v1664
    %v2003 = vmul.f32 %v1996, %v2001
    %v2004 = vadd.f32 %v2002, %v2003
    %v2005 = vtanh.pop %v2004
    %v2006 = vmul.f32 %v2000, %v2005
    %v2007 = vld [vmem:[#allocation2 + $0x80] sm:$0xff]
    %v2008 = vld [vmem:[#allocation2 + $0x88] sm:$0xff]
    %v2009 = vld [vmem:[#allocation2 + $0x90] sm:$0xff]
    %v2010 = vld [vmem:[#allocation2 + $0x98] sm:$0xff]
    %2011 = vmatprep.subr.mxu0 %v460
    %2012 = vmatpush1.msra.mxu0 %v459
    %2013 = vmatprep.subr.mxu0 %v464
    %2014 = vmatpush1.msra.mxu0 %v463
    %2015 = vmatprep.subr.mxu0 %v468
    %2016 = vmatpush1.msra.mxu0 %v467
    %2017 = vmatprep.subr.mxu0 %v472
    %2018 = vmatpush1.msra.mxu0 %v471
    %2019 = vmatprep.subr.mxu0 %v476
    %2020 = vmatpush1.msra.mxu0 %v475
    %2021 = vmatprep.subr.mxu0 %v480
    %2022 = vmatpush1.msra.mxu0 %v479
    %2023 = vmatprep.subr.mxu0 %v484
    %2024 = vmatpush1.msra.mxu0 %v483
    %2025 = vmatprep.subr.mxu0 %v488
    %2026 = vmatpush1.msra.mxu0 %v487
    %2027 = vmatprep.subr.mxu0 %v492
    %2028 = vmatpush1.msra.mxu0 %v491
    %2029 = vmatprep.subr.mxu0 %v496
    %2030 = vmatpush1.msra.mxu0 %v495
    %2031 = vmatprep.subr.mxu0 %v500
    %2032 = vmatpush1.msra.mxu0 %v499
    %2033 = vmatprep.subr.mxu0 %v504
    %2034 = vmatpush1.msra.mxu0 %v503
    %2035 = vmatprep.subr.mxu0 %v508
    %2036 = vmatpush1.msra.mxu0 %v507
    %2037 = vmatprep.subr.mxu0 %v512
    %2038 = vmatpush1.msra.mxu0 %v511
    %2039 = vmatprep.subr.mxu0 %v516
    %2040 = vmatpush1.msra.mxu0 %v515
    %2041 = vmatprep.subr.mxu0 %v520
    %2042 = vmatpush1.msra.mxu0 %v519
    %2043 = vmatprep.subr.mxu0 0.0
    %2044 = vmatpush1.msra.mxu0 0.0
    %2045 = vmatprep.subr.mxu0 0.0
    %2046 = vmatpush1.msra.mxu0 0.0
    %2047 = vmatprep.subr.mxu0 0.0
    %2048 = vmatpush1.msra.mxu0 0.0
    %2049 = vmatprep.subr.mxu0 0.0
    %2050 = vmatpush1.msra.mxu0 0.0
    %2051 = vmatprep.subr.mxu0 0.0
    %2052 = vmatpush1.msra.mxu0 0.0
    %2053 = vmatprep.subr.mxu0 0.0
    %2054 = vmatpush1.msra.mxu0 0.0
    %2055 = vmatprep.subr.mxu0 0.0
    %2056 = vmatpush1.msra.mxu0 0.0
    %2057 = vmatprep.subr.mxu0 0.0
    %2058 = vmatpush1.msra.mxu0 0.0
    %2059 = vmatprep.subr.mxu0 0.0
    %2060 = vmatpush1.msra.mxu0 0.0
    %2061 = vmatprep.subr.mxu0 0.0
    %2062 = vmatpush1.msra.mxu0 0.0
    %2063 = vmatprep.subr.mxu0 0.0
    %2064 = vmatpush1.msra.mxu0 0.0
    %2065 = vmatprep.subr.mxu0 0.0
    %2066 = vmatpush1.msra.mxu0 0.0
    %2067 = vmatprep.subr.mxu0 0.0
    %2068 = vmatpush1.msra.mxu0 0.0
    %2069 = vmatprep.subr.mxu0 0.0
    %2070 = vmatpush1.msra.mxu0 0.0
    %2071 = vmatprep.subr.mxu0 0.0
    %2072 = vmatpush1.msra.mxu0 0.0
    %2073 = vmatprep.subr.mxu0 0.0
    %2074 = vmatpush1.msra.mxu0 0.0
    %2075 = vmatprep.mubr.f32.mxu0 0.0
    %2076 = vmatmul.mubr.f32.gmra.mrb[0].mxu0 %v1840
    %v2077 = vpop.f32.mrb[0].mxu0
    %v2078 = vadd.f32 0.0, %v2077
    %v2079 = vpop.f32.mrb[0].mxu0
    %v2080 = vadd.f32 0.0, %v2079
    %2081 = vdwg.mxu0
    %2082 = vmatprep.subr.mxu0 %v462
    %2083 = vmatpush1.msra.mxu0 %v461
    %2084 = vmatprep.subr.mxu0 %v466
    %2085 = vmatpush1.msra.mxu0 %v465
    %2086 = vmatprep.subr.mxu0 %v470
    %2087 = vmatpush1.msra.mxu0 %v469
    %2088 = vmatprep.subr.mxu0 %v474
    %2089 = vmatpush1.msra.mxu0 %v473
    %2090 = vmatprep.subr.mxu0 %v478
    %2091 = vmatpush1.msra.mxu0 %v477
    %2092 = vmatprep.subr.mxu0 %v482
    %2093 = vmatpush1.msra.mxu0 %v481
    %2094 = vmatprep.subr.mxu0 %v486
    %2095 = vmatpush1.msra.mxu0 %v485
    %2096 = vmatprep.subr.mxu0 %v490
    %2097 = vmatpush1.msra.mxu0 %v489
    %2098 = vmatprep.subr.mxu0 %v494
    %2099 = vmatpush1.msra.mxu0 %v493
    %2100 = vmatprep.subr.mxu0 %v498
    %2101 = vmatpush1.msra.mxu0 %v497
    %2102 = vmatprep.subr.mxu0 %v502
    %2103 = vmatpush1.msra.mxu0 %v501
    %2104 = vmatprep.subr.mxu0 %v506
    %2105 = vmatpush1.msra.mxu0 %v505
    %2106 = vmatprep.subr.mxu0 %v510
    %2107 = vmatpush1.msra.mxu0 %v509
    %2108 = vmatprep.subr.mxu0 %v514
    %2109 = vmatpush1.msra.mxu0 %v513
    %2110 = vmatprep.subr.mxu0 %v518
    %2111 = vmatpush1.msra.mxu0 %v517
    %2112 = vmatprep.subr.mxu0 %v522
    %2113 = vmatpush1.msra.mxu0 %v521
    %2114 = vmatprep.subr.mxu0 0.0
    %2115 = vmatpush1.msra.mxu0 0.0
    %2116 = vmatprep.subr.mxu0 0.0
    %2117 = vmatpush1.msra.mxu0 0.0
    %2118 = vmatprep.subr.mxu0 0.0
    %2119 = vmatpush1.msra.mxu0 0.0
    %2120 = vmatprep.subr.mxu0 0.0
    %2121 = vmatpush1.msra.mxu0 0.0
    %2122 = vmatprep.subr.mxu0 0.0
    %2123 = vmatpush1.msra.mxu0 0.0
    %2124 = vmatprep.subr.mxu0 0.0
    %2125 = vmatpush1.msra.mxu0 0.0
    %2126 = vmatprep.subr.mxu0 0.0
    %2127 = vmatpush1.msra.mxu0 0.0
    %2128 = vmatprep.subr.mxu0 0.0
    %2129 = vmatpush1.msra.mxu0 0.0
    %2130 = vmatprep.subr.mxu0 0.0
    %2131 = vmatpush1.msra.mxu0 0.0
    %2132 = vmatprep.subr.mxu0 0.0
    %2133 = vmatpush1.msra.mxu0 0.0
    %2134 = vmatprep.subr.mxu0 0.0
    %2135 = vmatpush1.msra.mxu0 0.0
    %2136 = vmatprep.subr.mxu0 0.0
    %2137 = vmatpush1.msra.mxu0 0.0
    %2138 = vmatprep.subr.mxu0 0.0
    %2139 = vmatpush1.msra.mxu0 0.0
    %2140 = vmatprep.subr.mxu0 0.0
    %2141 = vmatpush1.msra.mxu0 0.0
    %2142 = vmatprep.subr.mxu0 0.0
    %2143 = vmatpush1.msra.mxu0 0.0
    %2144 = vmatprep.subr.mxu0 0.0
    %2145 = vmatpush1.msra.mxu0 0.0
    %2146 = vmatprep.mubr.f32.mxu0 0.0
    %2147 = vmatmul.mubr.f32.gmra.mrb[0].mxu0 %v1840
    %v2148 = vpop.f32.mrb[0].mxu0
    %v2149 = vadd.f32 0.0, %v2148
    %v2150 = vpop.f32.mrb[0].mxu0
    %v2151 = vadd.f32 0.0, %v2150
    %2152 = vdwg.mxu0
    %v2153 = vadd.f32 %v2007, %v2078
    %v2154 = vadd.f32 %v2008, %v2080
    %v2155 = vadd.f32 %v2009, %v2149
    %v2156 = vadd.f32 %v2010, %v2151
    %v2157 = vxor.u32 %v2153, 2147483648
    %v2158 = vxor.u32 %v2154, 2147483648
    %v2159 = vxor.u32 %v2155, 2147483648
    %v2160 = vmul.f32 %v2157, 1.442695
    %v2161 = vpow.pop %v2160
    %v2162 = vmul.f32 %v2158, 1.442695
    %v2163 = vpow.pop %v2162
    %v2164 = vmul.f32 %v2159, 1.442695
    %v2165 = vpow.pop %v2164
    %v2166 = vadd.f32 %v2161, 1.0
    %v2167 = vadd.f32 %v2163, 1.0
    %v2168 = vadd.f32 %v2165, 1.0
    %v2169 = vrcp.pop %v2166
    %v2170 = vmul.f32 1.0, %v2169
    %v2171 = vrcp.pop %v2167
    %v2172 = vmul.f32 1.0, %v2171
    %v2173 = vrcp.pop %v2168
    %v2174 = vmul.f32 1.0, %v2173
    %v2175 = vtanh.pop %v2156
    %v2176 = vmul.f32 %v2172, %v1838
    %v2177 = vmul.f32 %v2170, %v2175
    %v2178 = vadd.f32 %v2176, %v2177
    %v2179 = vtanh.pop %v2178
    %v2180 = vmul.f32 %v2174, %v2179
    %2181 = vmatprep.subr.mxu0 %v694
    %2182 = vmatpush1.msra.mxu0 %v693
    %2183 = vmatprep.subr.mxu0 %v698
    %2184 = vmatpush1.msra.mxu0 %v697
    %2185 = vmatprep.subr.mxu0 %v702
    %2186 = vmatpush1.msra.mxu0 %v701
    %2187 = vmatprep.subr.mxu0 %v706
    %2188 = vmatpush1.msra.mxu0 %v705
    %2189 = vmatprep.subr.mxu0 %v710
    %2190 = vmatpush1.msra.mxu0 %v709
    %2191 = vmatprep.subr.mxu0 %v714
    %2192 = vmatpush1.msra.mxu0 %v713
    %2193 = vmatprep.subr.mxu0 %v718
    %2194 = vmatpush1.msra.mxu0 %v717
    %2195 = vmatprep.subr.mxu0 %v722
    %2196 = vmatpush1.msra.mxu0 %v721
    %2197 = vmatprep.subr.mxu0 %v726
    %2198 = vmatpush1.msra.mxu0 %v725
    %2199 = vmatprep.subr.mxu0 %v730
    %2200 = vmatpush1.msra.mxu0 %v729
    %2201 = vmatprep.subr.mxu0 %v734
    %2202 = vmatpush1.msra.mxu0 %v733
    %2203 = vmatprep.subr.mxu0 %v738
    %2204 = vmatpush1.msra.mxu0 %v737
    %2205 = vmatprep.subr.mxu0 %v742
    %2206 = vmatpush1.msra.mxu0 %v741
    %2207 = vmatprep.subr.mxu0 %v746
    %2208 = vmatpush1.msra.mxu0 %v745
    %2209 = vmatprep.subr.mxu0 %v750
    %2210 = vmatpush1.msra.mxu0 %v749
    %2211 = vmatprep.subr.mxu0 %v754
    %2212 = vmatpush1.msra.mxu0 %v753
    %2213 = vmatprep.subr.mxu0 %v758
    %2214 = vmatpush1.msra.mxu0 %v757
    %2215 = vmatprep.subr.mxu0 %v762
    %2216 = vmatpush1.msra.mxu0 %v761
    %2217 = vmatprep.subr.mxu0 %v766
    %2218 = vmatpush1.msra.mxu0 %v765
    %2219 = vmatprep.subr.mxu0 %v770
    %2220 = vmatpush1.msra.mxu0 %v769
    %2221 = vmatprep.subr.mxu0 %v774
    %2222 = vmatpush1.msra.mxu0 %v773
    %2223 = vmatprep.subr.mxu0 %v778
    %2224 = vmatpush1.msra.mxu0 %v777
    %2225 = vmatprep.subr.mxu0 %v782
    %2226 = vmatpush1.msra.mxu0 %v781
    %2227 = vmatprep.subr.mxu0 %v786
    %2228 = vmatpush1.msra.mxu0 %v785
    %2229 = vmatprep.subr.mxu0 %v790
    %2230 = vmatpush1.msra.mxu0 %v789
    %2231 = vmatprep.subr.mxu0 %v794
    %2232 = vmatpush1.msra.mxu0 %v793
    %2233 = vmatprep.subr.mxu0 %v798
    %2234 = vmatpush1.msra.mxu0 %v797
    %2235 = vmatprep.subr.mxu0 %v802
    %2236 = vmatpush1.msra.mxu0 %v801
    %2237 = vmatprep.subr.mxu0 %v806
    %2238 = vmatpush1.msra.mxu0 %v805
    %2239 = vmatprep.subr.mxu0 %v810
    %2240 = vmatpush1.msra.mxu0 %v809
    %2241 = vmatprep.subr.mxu0 %v814
    %2242 = vmatpush1.msra.mxu0 %v813
    %2243 = vmatprep.subr.mxu0 %v818
    %2244 = vmatpush1.msra.mxu0 %v817
    %2245 = vmatprep.mubr.f32.mxu0 %v2006
    %2246 = vmatmul.mubr.f32.gmra.mrb[0].mxu0 %v2180
    %v2247 = vpop.f32.mrb[0].mxu0
    %v2248 = vadd.f32 %v432, %v2247
    %v2249 = vpop.f32.mrb[0].mxu0
    %v2250 = vadd.f32 %v436, %v2249
    %2251 = vdwg.mxu0
    %2252 = vmatprep.subr.mxu0 %v696
    %2253 = vmatpush1.msra.mxu0 %v695
    %2254 = vmatprep.subr.mxu0 %v700
    %2255 = vmatpush1.msra.mxu0 %v699
    %2256 = vmatprep.subr.mxu0 %v704
    %2257 = vmatpush1.msra.mxu0 %v703
    %2258 = vmatprep.subr.mxu0 %v708
    %2259 = vmatpush1.msra.mxu0 %v707
    %2260 = vmatprep.subr.mxu0 %v712
    %2261 = vmatpush1.msra.mxu0 %v711
    %2262 = vmatprep.subr.mxu0 %v716
    %2263 = vmatpush1.msra.mxu0 %v715
    %2264 = vmatprep.subr.mxu0 %v720
    %2265 = vmatpush1.msra.mxu0 %v719
    %2266 = vmatprep.subr.mxu0 %v724
    %2267 = vmatpush1.msra.mxu0 %v723
    %2268 = vmatprep.subr.mxu0 %v728
    %2269 = vmatpush1.msra.mxu0 %v727
    %2270 = vmatprep.subr.mxu0 %v732
    %2271 = vmatpush1.msra.mxu0 %v731
    %2272 = vmatprep.subr.mxu0 %v736
    %2273 = vmatpush1.msra.mxu0 %v735
    %2274 = vmatprep.subr.mxu0 %v740
    %2275 = vmatpush1.msra.mxu0 %v739
    %2276 = vmatprep.subr.mxu0 %v744
    %2277 = vmatpush1.msra.mxu0 %v743
    %2278 = vmatprep.subr.mxu0 %v748
    %2279 = vmatpush1.msra.mxu0 %v747
    %2280 = vmatprep.subr.mxu0 %v752
    %2281 = vmatpush1.msra.mxu0 %v751
    %2282 = vmatprep.subr.mxu0 %v756
    %2283 = vmatpush1.msra.mxu0 %v755
    %2284 = vmatprep.subr.mxu0 %v760
    %2285 = vmatpush1.msra.mxu0 %v759
    %2286 = vmatprep.subr.mxu0 %v764
    %2287 = vmatpush1.msra.mxu0 %v763
    %2288 = vmatprep.subr.mxu0 %v768
    %2289 = vmatpush1.msra.mxu0 %v767
    %2290 = vmatprep.subr.mxu0 %v772
    %2291 = vmatpush1.msra.mxu0 %v771
    %2292 = vmatprep.subr.mxu0 %v776
    %2293 = vmatpush1.msra.mxu0 %v775
    %2294 = vmatprep.subr.mxu0 %v780
    %2295 = vmatpush1.msra.mxu0 %v779
    %2296 = vmatprep.subr.mxu0 %v784
    %2297 = vmatpush1.msra.mxu0 %v783
    %2298 = vmatprep.subr.mxu0 %v788
    %2299 = vmatpush1.msra.mxu0 %v787
    %2300 = vmatprep.subr.mxu0 %v792
    %2301 = vmatpush1.msra.mxu0 %v791
    %2302 = vmatprep.subr.mxu0 %v796
    %2303 = vmatpush1.msra.mxu0 %v795
    %2304 = vmatprep.subr.mxu0 %v800
    %2305 = vmatpush1.msra.mxu0 %v799
    %2306 = vmatprep.subr.mxu0 %v804
    %2307 = vmatpush1.msra.mxu0 %v803
    %2308 = vmatprep.subr.mxu0 %v808
    %2309 = vmatpush1.msra.mxu0 %v807
    %2310 = vmatprep.subr.mxu0 %v812
    %2311 = vmatpush1.msra.mxu0 %v811
    %2312 = vmatprep.subr.mxu0 %v816
    %2313 = vmatpush1.msra.mxu0 %v815
    %2314 = vmatprep.subr.mxu0 %v820
    %2315 = vmatpush1.msra.mxu0 %v819
    %2316 = vmatprep.mubr.f32.mxu0 %v2006
    %2317 = vmatmul.mubr.f32.gmra.mrb[0].mxu0 %v2180
    %v2318 = vpop.f32.mrb[0].mxu0
    %v2319 = vadd.f32 %v440, %v2318
    %v2320 = vpop.f32.mrb[0].mxu0
    %v2321 = vadd.f32 %v444, %v2320
    %2322 = vdwg.mxu0
    %v2323 = vxor.u32 %v2248, 2147483648
    %v2324 = vxor.u32 %v2250, 2147483648
    %v2325 = vxor.u32 %v2319, 2147483648
    %v2326 = vmul.f32 %v2323, 1.442695
    %v2327 = vpow.pop %v2326
    %v2328 = vmul.f32 %v2324, 1.442695
    %v2329 = vpow.pop %v2328
    %v2330 = vmul.f32 %v2325, 1.442695
    %v2331 = vpow.pop %v2330
    %v2332 = vadd.f32 %v2327, 1.0
    %v2333 = vadd.f32 %v2329, 1.0
    %v2334 = vadd.f32 %v2331, 1.0
    %v2335 = vrcp.pop %v2332
    %v2336 = vmul.f32 1.0, %v2335
    %v2337 = vrcp.pop %v2333
    %v2338 = vmul.f32 1.0, %v2337
    %v2339 = vrcp.pop %v2334
    %v2340 = vmul.f32 1.0, %v2339
    %v2341 = vtanh.pop %v2321
    %v2342 = vmul.f32 %v2338, %v2004
    %v2343 = vmul.f32 %v2336, %v2341
    %v2344 = vadd.f32 %v2342, %v2343
    %v2345 = vtanh.pop %v2344
    %v2346 = vmul.f32 %v2340, %v2345
    %v2347 = vld [vmem:[#allocation2 + $0xa0] sm:$0xff]
    %v2348 = vld [vmem:[#allocation2 + $0xa8] sm:$0xff]
    %v2349 = vld [vmem:[#allocation2 + $0xb0] sm:$0xff]
    %v2350 = vld [vmem:[#allocation2 + $0xb8] sm:$0xff]
    %2351 = vmatprep.subr.mxu0 %v460
    %2352 = vmatpush1.msra.mxu0 %v459
    %2353 = vmatprep.subr.mxu0 %v464
    %2354 = vmatpush1.msra.mxu0 %v463
    %2355 = vmatprep.subr.mxu0 %v468
    %2356 = vmatpush1.msra.mxu0 %v467
    %2357 = vmatprep.subr.mxu0 %v472
    %2358 = vmatpush1.msra.mxu0 %v471
    %2359 = vmatprep.subr.mxu0 %v476
    %2360 = vmatpush1.msra.mxu0 %v475
    %2361 = vmatprep.subr.mxu0 %v480
    %2362 = vmatpush1.msra.mxu0 %v479
    %2363 = vmatprep.subr.mxu0 %v484
    %2364 = vmatpush1.msra.mxu0 %v483
    %2365 = vmatprep.subr.mxu0 %v488
    %2366 = vmatpush1.msra.mxu0 %v487
    %2367 = vmatprep.subr.mxu0 %v492
    %2368 = vmatpush1.msra.mxu0 %v491
    %2369 = vmatprep.subr.mxu0 %v496
    %2370 = vmatpush1.msra.mxu0 %v495
    %2371 = vmatprep.subr.mxu0 %v500
    %2372 = vmatpush1.msra.mxu0 %v499
    %2373 = vmatprep.subr.mxu0 %v504
    %2374 = vmatpush1.msra.mxu0 %v503
    %2375 = vmatprep.subr.mxu0 %v508
    %2376 = vmatpush1.msra.mxu0 %v507
    %2377 = vmatprep.subr.mxu0 %v512
    %2378 = vmatpush1.msra.mxu0 %v511
    %2379 = vmatprep.subr.mxu0 %v516
    %2380 = vmatpush1.msra.mxu0 %v515
    %2381 = vmatprep.subr.mxu0 %v520
    %2382 = vmatpush1.msra.mxu0 %v519
    %2383 = vmatprep.subr.mxu0 0.0
    %2384 = vmatpush1.msra.mxu0 0.0
    %2385 = vmatprep.subr.mxu0 0.0
    %2386 = vmatpush1.msra.mxu0 0.0
    %2387 = vmatprep.subr.mxu0 0.0
    %2388 = vmatpush1.msra.mxu0 0.0
    %2389 = vmatprep.subr.mxu0 0.0
    %2390 = vmatpush1.msra.mxu0 0.0
    %2391 = vmatprep.subr.mxu0 0.0
    %2392 = vmatpush1.msra.mxu0 0.0
    %2393 = vmatprep.subr.mxu0 0.0
    %2394 = vmatpush1.msra.mxu0 0.0
    %2395 = vmatprep.subr.mxu0 0.0
    %2396 = vmatpush1.msra.mxu0 0.0
    %2397 = vmatprep.subr.mxu0 0.0
    %2398 = vmatpush1.msra.mxu0 0.0
    %2399 = vmatprep.subr.mxu0 0.0
    %2400 = vmatpush1.msra.mxu0 0.0
    %2401 = vmatprep.subr.mxu0 0.0
    %2402 = vmatpush1.msra.mxu0 0.0
    %2403 = vmatprep.subr.mxu0 0.0
    %2404 = vmatpush1.msra.mxu0 0.0
    %2405 = vmatprep.subr.mxu0 0.0
    %2406 = vmatpush1.msra.mxu0 0.0
    %2407 = vmatprep.subr.mxu0 0.0
    %2408 = vmatpush1.msra.mxu0 0.0
    %2409 = vmatprep.subr.mxu0 0.0
    %2410 = vmatpush1.msra.mxu0 0.0
    %2411 = vmatprep.subr.mxu0 0.0
    %2412 = vmatpush1.msra.mxu0 0.0
    %2413 = vmatprep.subr.mxu0 0.0
    %2414 = vmatpush1.msra.mxu0 0.0
    %2415 = vmatprep.mubr.f32.mxu0 0.0
    %2416 = vmatmul.mubr.f32.gmra.mrb[0].mxu0 %v2180
    %v2417 = vpop.f32.mrb[0].mxu0
    %v2418 = vadd.f32 0.0, %v2417
    %v2419 = vpop.f32.mrb[0].mxu0
    %v2420 = vadd.f32 0.0, %v2419
    %2421 = vdwg.mxu0
    %2422 = vmatprep.subr.mxu0 %v462
    %2423 = vmatpush1.msra.mxu0 %v461
    %2424 = vmatprep.subr.mxu0 %v466
    %2425 = vmatpush1.msra.mxu0 %v465
    %2426 = vmatprep.subr.mxu0 %v470
    %2427 = vmatpush1.msra.mxu0 %v469
    %2428 = vmatprep.subr.mxu0 %v474
    %2429 = vmatpush1.msra.mxu0 %v473
    %2430 = vmatprep.subr.mxu0 %v478
    %2431 = vmatpush1.msra.mxu0 %v477
    %2432 = vmatprep.subr.mxu0 %v482
    %2433 = vmatpush1.msra.mxu0 %v481
    %2434 = vmatprep.subr.mxu0 %v486
    %2435 = vmatpush1.msra.mxu0 %v485
    %2436 = vmatprep.subr.mxu0 %v490
    %2437 = vmatpush1.msra.mxu0 %v489
    %2438 = vmatprep.subr.mxu0 %v494
    %2439 = vmatpush1.msra.mxu0 %v493
    %2440 = vmatprep.subr.mxu0 %v498
    %2441 = vmatpush1.msra.mxu0 %v497
    %2442 = vmatprep.subr.mxu0 %v502
    %2443 = vmatpush1.msra.mxu0 %v501
    %2444 = vmatprep.subr.mxu0 %v506
    %2445 = vmatpush1.msra.mxu0 %v505
    %2446 = vmatprep.subr.mxu0 %v510
    %2447 = vmatpush1.msra.mxu0 %v509
    %2448 = vmatprep.subr.mxu0 %v514
    %2449 = vmatpush1.msra.mxu0 %v513
    %2450 = vmatprep.subr.mxu0 %v518
    %2451 = vmatpush1.msra.mxu0 %v517
    %2452 = vmatprep.subr.mxu0 %v522
    %2453 = vmatpush1.msra.mxu0 %v521
    %2454 = vmatprep.subr.mxu0 0.0
    %2455 = vmatpush1.msra.mxu0 0.0
    %2456 = vmatprep.subr.mxu0 0.0
    %2457 = vmatpush1.msra.mxu0 0.0
    %2458 = vmatprep.subr.mxu0 0.0
    %2459 = vmatpush1.msra.mxu0 0.0
    %2460 = vmatprep.subr.mxu0 0.0
    %2461 = vmatpush1.msra.mxu0 0.0
    %2462 = vmatprep.subr.mxu0 0.0
    %2463 = vmatpush1.msra.mxu0 0.0
    %2464 = vmatprep.subr.mxu0 0.0
    %2465 = vmatpush1.msra.mxu0 0.0
    %2466 = vmatprep.subr.mxu0 0.0
    %2467 = vmatpush1.msra.mxu0 0.0
    %2468 = vmatprep.subr.mxu0 0.0
    %2469 = vmatpush1.msra.mxu0 0.0
    %2470 = vmatprep.subr.mxu0 0.0
    %2471 = vmatpush1.msra.mxu0 0.0
    %2472 = vmatprep.subr.mxu0 0.0
    %2473 = vmatpush1.msra.mxu0 0.0
    %2474 = vmatprep.subr.mxu0 0.0
    %2475 = vmatpush1.msra.mxu0 0.0
    %2476 = vmatprep.subr.mxu0 0.0
    %2477 = vmatpush1.msra.mxu0 0.0
    %2478 = vmatprep.subr.mxu0 0.0
    %2479 = vmatpush1.msra.mxu0 0.0
    %2480 = vmatprep.subr.mxu0 0.0
    %2481 = vmatpush1.msra.mxu0 0.0
    %2482 = vmatprep.subr.mxu0 0.0
    %2483 = vmatpush1.msra.mxu0 0.0
    %2484 = vmatprep.subr.mxu0 0.0
    %2485 = vmatpush1.msra.mxu0 0.0
    %2486 = vmatprep.mubr.f32.mxu0 0.0
    %2487 = vmatmul.mubr.f32.gmra.mrb[0].mxu0 %v2180
    %v2488 = vpop.f32.mrb[0].mxu0
    %v2489 = vadd.f32 0.0, %v2488
    %v2490 = vpop.f32.mrb[0].mxu0
    %v2491 = vadd.f32 0.0, %v2490
    %2492 = vdwg.mxu0
    %v2493 = vadd.f32 %v2347, %v2418
    %v2494 = vadd.f32 %v2348, %v2420
    %v2495 = vadd.f32 %v2349, %v2489
    %v2496 = vadd.f32 %v2350, %v2491
    %v2497 = vxor.u32 %v2493, 2147483648
    %v2498 = vxor.u32 %v2494, 2147483648
    %v2499 = vxor.u32 %v2495, 2147483648
    %v2500 = vmul.f32 %v2497, 1.442695
    %v2501 = vpow.pop %v2500
    %v2502 = vmul.f32 %v2498, 1.442695
    %v2503 = vpow.pop %v2502
    %v2504 = vmul.f32 %v2499, 1.442695
    %v2505 = vpow.pop %v2504
    %v2506 = vadd.f32 %v2501, 1.0
    %v2507 = vadd.f32 %v2503, 1.0
    %v2508 = vadd.f32 %v2505, 1.0
    %v2509 = vrcp.pop %v2506
    %v2510 = vmul.f32 1.0, %v2509
    %v2511 = vrcp.pop %v2507
    %v2512 = vmul.f32 1.0, %v2511
    %v2513 = vrcp.pop %v2508
    %v2514 = vmul.f32 1.0, %v2513
    %v2515 = vtanh.pop %v2496
    %v2516 = vmul.f32 %v2512, %v2178
    %v2517 = vmul.f32 %v2510, %v2515
    %v2518 = vadd.f32 %v2516, %v2517
    %v2519 = vtanh.pop %v2518
    %v2520 = vmul.f32 %v2514, %v2519
    %2521 = vmatprep.subr.mxu0 %v694
    %2522 = vmatpush1.msra.mxu0 %v693
    %2523 = vmatprep.subr.mxu0 %v698
    %2524 = vmatpush1.msra.mxu0 %v697
    %2525 = vmatprep.subr.mxu0 %v702
    %2526 = vmatpush1.msra.mxu0 %v701
    %2527 = vmatprep.subr.mxu0 %v706
    %2528 = vmatpush1.msra.mxu0 %v705
    %2529 = vmatprep.subr.mxu0 %v710
    %2530 = vmatpush1.msra.mxu0 %v709
    %2531 = vmatprep.subr.mxu0 %v714
    %2532 = vmatpush1.msra.mxu0 %v713
    %2533 = vmatprep.subr.mxu0 %v718
    %2534 = vmatpush1.msra.mxu0 %v717
    %2535 = vmatprep.subr.mxu0 %v722
    %2536 = vmatpush1.msra.mxu0 %v721
    %2537 = vmatprep.subr.mxu0 %v726
    %2538 = vmatpush1.msra.mxu0 %v725
    %2539 = vmatprep.subr.mxu0 %v730
    %2540 = vmatpush1.msra.mxu0 %v729
    %2541 = vmatprep.subr.mxu0 %v734
    %2542 = vmatpush1.msra.mxu0 %v733
    %2543 = vmatprep.subr.mxu0 %v738
    %2544 = vmatpush1.msra.mxu0 %v737
    %2545 = vmatprep.subr.mxu0 %v742
    %2546 = vmatpush1.msra.mxu0 %v741
    %2547 = vmatprep.subr.mxu0 %v746
    %2548 = vmatpush1.msra.mxu0 %v745
    %2549 = vmatprep.subr.mxu0 %v750
    %2550 = vmatpush1.msra.mxu0 %v749
    %2551 = vmatprep.subr.mxu0 %v754
    %2552 = vmatpush1.msra.mxu0 %v753
    %2553 = vmatprep.subr.mxu0 %v758
    %2554 = vmatpush1.msra.mxu0 %v757
    %2555 = vmatprep.subr.mxu0 %v762
    %2556 = vmatpush1.msra.mxu0 %v761
    %2557 = vmatprep.subr.mxu0 %v766
    %2558 = vmatpush1.msra.mxu0 %v765
    %2559 = vmatprep.subr.mxu0 %v770
    %2560 = vmatpush1.msra.mxu0 %v769
    %2561 = vmatprep.subr.mxu0 %v774
    %2562 = vmatpush1.msra.mxu0 %v773
    %2563 = vmatprep.subr.mxu0 %v778
    %2564 = vmatpush1.msra.mxu0 %v777
    %2565 = vmatprep.subr.mxu0 %v782
    %2566 = vmatpush1.msra.mxu0 %v781
    %2567 = vmatprep.subr.mxu0 %v786
    %2568 = vmatpush1.msra.mxu0 %v785
    %2569 = vmatprep.subr.mxu0 %v790
    %2570 = vmatpush1.msra.mxu0 %v789
    %2571 = vmatprep.subr.mxu0 %v794
    %2572 = vmatpush1.msra.mxu0 %v793
    %2573 = vmatprep.subr.mxu0 %v798
    %2574 = vmatpush1.msra.mxu0 %v797
    %2575 = vmatprep.subr.mxu0 %v802
    %2576 = vmatpush1.msra.mxu0 %v801
    %2577 = vmatprep.subr.mxu0 %v806
    %2578 = vmatpush1.msra.mxu0 %v805
    %2579 = vmatprep.subr.mxu0 %v810
    %2580 = vmatpush1.msra.mxu0 %v809
    %2581 = vmatprep.subr.mxu0 %v814
    %2582 = vmatpush1.msra.mxu0 %v813
    %2583 = vmatprep.subr.mxu0 %v818
    %2584 = vmatpush1.msra.mxu0 %v817
    %2585 = vmatprep.mubr.f32.mxu0 %v2346
    %2586 = vmatmul.mubr.f32.gmra.mrb[0].mxu0 %v2520
    %v2587 = vpop.f32.mrb[0].mxu0
    %v2588 = vadd.f32 %v432, %v2587
    %v2589 = vpop.f32.mrb[0].mxu0
    %v2590 = vadd.f32 %v436, %v2589
    %2591 = vdwg.mxu0
    %2592 = vmatprep.subr.mxu0 %v696
    %2593 = vmatpush1.msra.mxu0 %v695
    %2594 = vmatprep.subr.mxu0 %v700
    %2595 = vmatpush1.msra.mxu0 %v699
    %2596 = vmatprep.subr.mxu0 %v704
    %2597 = vmatpush1.msra.mxu0 %v703
    %2598 = vmatprep.subr.mxu0 %v708
    %2599 = vmatpush1.msra.mxu0 %v707
    %2600 = vmatprep.subr.mxu0 %v712
    %2601 = vmatpush1.msra.mxu0 %v711
    %2602 = vmatprep.subr.mxu0 %v716
    %2603 = vmatpush1.msra.mxu0 %v715
    %2604 = vmatprep.subr.mxu0 %v720
    %2605 = vmatpush1.msra.mxu0 %v719
    %2606 = vmatprep.subr.mxu0 %v724
    %2607 = vmatpush1.msra.mxu0 %v723
    %2608 = vmatprep.subr.mxu0 %v728
    %2609 = vmatpush1.msra.mxu0 %v727
    %2610 = vmatprep.subr.mxu0 %v732
    %2611 = vmatpush1.msra.mxu0 %v731
    %2612 = vmatprep.subr.mxu0 %v736
    %2613 = vmatpush1.msra.mxu0 %v735
    %2614 = vmatprep.subr.mxu0 %v740
    %2615 = vmatpush1.msra.mxu0 %v739
    %2616 = vmatprep.subr.mxu0 %v744
    %2617 = vmatpush1.msra.mxu0 %v743
    %2618 = vmatprep.subr.mxu0 %v748
    %2619 = vmatpush1.msra.mxu0 %v747
    %2620 = vmatprep.subr.mxu0 %v752
    %2621 = vmatpush1.msra.mxu0 %v751
    %2622 = vmatprep.subr.mxu0 %v756
    %2623 = vmatpush1.msra.mxu0 %v755
    %2624 = vmatprep.subr.mxu0 %v760
    %2625 = vmatpush1.msra.mxu0 %v759
    %2626 = vmatprep.subr.mxu0 %v764
    %2627 = vmatpush1.msra.mxu0 %v763
    %2628 = vmatprep.subr.mxu0 %v768
    %2629 = vmatpush1.msra.mxu0 %v767
    %2630 = vmatprep.subr.mxu0 %v772
    %2631 = vmatpush1.msra.mxu0 %v771
    %2632 = vmatprep.subr.mxu0 %v776
    %2633 = vmatpush1.msra.mxu0 %v775
    %2634 = vmatprep.subr.mxu0 %v780
    %2635 = vmatpush1.msra.mxu0 %v779
    %2636 = vmatprep.subr.mxu0 %v784
    %2637 = vmatpush1.msra.mxu0 %v783
    %2638 = vmatprep.subr.mxu0 %v788
    %2639 = vmatpush1.msra.mxu0 %v787
    %2640 = vmatprep.subr.mxu0 %v792
    %2641 = vmatpush1.msra.mxu0 %v791
    %2642 = vmatprep.subr.mxu0 %v796
    %2643 = vmatpush1.msra.mxu0 %v795
    %2644 = vmatprep.subr.mxu0 %v800
    %2645 = vmatpush1.msra.mxu0 %v799
    %2646 = vmatprep.subr.mxu0 %v804
    %2647 = vmatpush1.msra.mxu0 %v803
    %2648 = vmatprep.subr.mxu0 %v808
    %2649 = vmatpush1.msra.mxu0 %v807
    %2650 = vmatprep.subr.mxu0 %v812
    %2651 = vmatpush1.msra.mxu0 %v811
    %2652 = vmatprep.subr.mxu0 %v816
    %2653 = vmatpush1.msra.mxu0 %v815
    %2654 = vmatprep.subr.mxu0 %v820
    %2655 = vmatpush1.msra.mxu0 %v819
    %2656 = vmatprep.mubr.f32.mxu0 %v2346
    %2657 = vmatmul.mubr.f32.gmra.mrb[0].mxu0 %v2520
    %v2658 = vpop.f32.mrb[0].mxu0
    %v2659 = vadd.f32 %v440, %v2658
    %v2660 = vpop.f32.mrb[0].mxu0
    %v2661 = vadd.f32 %v444, %v2660
    %2662 = vdwg.mxu0
    %v2663 = vxor.u32 %v2588, 2147483648
    %v2664 = vxor.u32 %v2590, 2147483648
    %v2665 = vxor.u32 %v2659, 2147483648
    %v2666 = vmul.f32 %v2663, 1.442695
    %v2667 = vpow.pop %v2666
    %v2668 = vmul.f32 %v2664, 1.442695
    %v2669 = vpow.pop %v2668
    %v2670 = vmul.f32 %v2665, 1.442695
    %v2671 = vpow.pop %v2670
    %v2672 = vadd.f32 %v2667, 1.0
    %v2673 = vadd.f32 %v2669, 1.0
    %v2674 = vadd.f32 %v2671, 1.0
    %v2675 = vrcp.pop %v2672
    %v2676 = vmul.f32 1.0, %v2675
    %v2677 = vrcp.pop %v2673
    %v2678 = vmul.f32 1.0, %v2677
    %v2679 = vrcp.pop %v2674
    %v2680 = vmul.f32 1.0, %v2679
    %v2681 = vtanh.pop %v2661
    %v2682 = vmul.f32 %v2678, %v2344
    %v2683 = vmul.f32 %v2676, %v2681
    %v2684 = vadd.f32 %v2682, %v2683
    %v2685 = vtanh.pop %v2684
    %v2686 = vmul.f32 %v2680, %v2685
    %v2687 = vld [vmem:[#allocation2 + $0xc0] sm:$0xff]
    %v2688 = vld [vmem:[#allocation2 + $0xc8] sm:$0xff]
    %v2689 = vld [vmem:[#allocation2 + $0xd0] sm:$0xff]
    %v2690 = vld [vmem:[#allocation2 + $0xd8] sm:$0xff]
    %2691 = vmatprep.subr.mxu0 %v460
    %2692 = vmatpush1.msra.mxu0 %v459
    %2693 = vmatprep.subr.mxu0 %v464
    %2694 = vmatpush1.msra.mxu0 %v463
    %2695 = vmatprep.subr.mxu0 %v468
    %2696 = vmatpush1.msra.mxu0 %v467
    %2697 = vmatprep.subr.mxu0 %v472
    %2698 = vmatpush1.msra.mxu0 %v471
    %2699 = vmatprep.subr.mxu0 %v476
    %2700 = vmatpush1.msra.mxu0 %v475
    %2701 = vmatprep.subr.mxu0 %v480
    %2702 = vmatpush1.msra.mxu0 %v479
    %2703 = vmatprep.subr.mxu0 %v484
    %2704 = vmatpush1.msra.mxu0 %v483
    %2705 = vmatprep.subr.mxu0 %v488
    %2706 = vmatpush1.msra.mxu0 %v487
    %2707 = vmatprep.subr.mxu0 %v492
    %2708 = vmatpush1.msra.mxu0 %v491
    %2709 = vmatprep.subr.mxu0 %v496
    %2710 = vmatpush1.msra.mxu0 %v495
    %2711 = vmatprep.subr.mxu0 %v500
    %2712 = vmatpush1.msra.mxu0 %v499
    %2713 = vmatprep.subr.mxu0 %v504
    %2714 = vmatpush1.msra.mxu0 %v503
    %2715 = vmatprep.subr.mxu0 %v508
    %2716 = vmatpush1.msra.mxu0 %v507
    %2717 = vmatprep.subr.mxu0 %v512
    %2718 = vmatpush1.msra.mxu0 %v511
    %2719 = vmatprep.subr.mxu0 %v516
    %2720 = vmatpush1.msra.mxu0 %v515
    %2721 = vmatprep.subr.mxu0 %v520
    %2722 = vmatpush1.msra.mxu0 %v519
    %2723 = vmatprep.subr.mxu0 0.0
    %2724 = vmatpush1.msra.mxu0 0.0
    %2725 = vmatprep.subr.mxu0 0.0
    %2726 = vmatpush1.msra.mxu0 0.0
    %2727 = vmatprep.subr.mxu0 0.0
    %2728 = vmatpush1.msra.mxu0 0.0
    %2729 = vmatprep.subr.mxu0 0.0
    %2730 = vmatpush1.msra.mxu0 0.0
    %2731 = vmatprep.subr.mxu0 0.0
    %2732 = vmatpush1.msra.mxu0 0.0
    %2733 = vmatprep.subr.mxu0 0.0
    %2734 = vmatpush1.msra.mxu0 0.0
    %2735 = vmatprep.subr.mxu0 0.0
    %2736 = vmatpush1.msra.mxu0 0.0
    %2737 = vmatprep.subr.mxu0 0.0
    %2738 = vmatpush1.msra.mxu0 0.0
    %2739 = vmatprep.subr.mxu0 0.0
    %2740 = vmatpush1.msra.mxu0 0.0
    %2741 = vmatprep.subr.mxu0 0.0
    %2742 = vmatpush1.msra.mxu0 0.0
    %2743 = vmatprep.subr.mxu0 0.0
    %2744 = vmatpush1.msra.mxu0 0.0
    %2745 = vmatprep.subr.mxu0 0.0
    %2746 = vmatpush1.msra.mxu0 0.0
    %2747 = vmatprep.subr.mxu0 0.0
    %2748 = vmatpush1.msra.mxu0 0.0
    %2749 = vmatprep.subr.mxu0 0.0
    %2750 = vmatpush1.msra.mxu0 0.0
    %2751 = vmatprep.subr.mxu0 0.0
    %2752 = vmatpush1.msra.mxu0 0.0
    %2753 = vmatprep.subr.mxu0 0.0
    %2754 = vmatpush1.msra.mxu0 0.0
    %2755 = vmatprep.mubr.f32.mxu0 0.0
    %2756 = vmatmul.mubr.f32.gmra.mrb[0].mxu0 %v2520
    %v2757 = vpop.f32.mrb[0].mxu0
    %v2758 = vadd.f32 0.0, %v2757
    %v2759 = vpop.f32.mrb[0].mxu0
    %v2760 = vadd.f32 0.0, %v2759
    %2761 = vdwg.mxu0
    %2762 = vmatprep.subr.mxu0 %v462
    %2763 = vmatpush1.msra.mxu0 %v461
    %2764 = vmatprep.subr.mxu0 %v466
    %2765 = vmatpush1.msra.mxu0 %v465
    %2766 = vmatprep.subr.mxu0 %v470
    %2767 = vmatpush1.msra.mxu0 %v469
    %2768 = vmatprep.subr.mxu0 %v474
    %2769 = vmatpush1.msra.mxu0 %v473
    %2770 = vmatprep.subr.mxu0 %v478
    %2771 = vmatpush1.msra.mxu0 %v477
    %2772 = vmatprep.subr.mxu0 %v482
    %2773 = vmatpush1.msra.mxu0 %v481
    %2774 = vmatprep.subr.mxu0 %v486
    %2775 = vmatpush1.msra.mxu0 %v485
    %2776 = vmatprep.subr.mxu0 %v490
    %2777 = vmatpush1.msra.mxu0 %v489
    %2778 = vmatprep.subr.mxu0 %v494
    %2779 = vmatpush1.msra.mxu0 %v493
    %2780 = vmatprep.subr.mxu0 %v498
    %2781 = vmatpush1.msra.mxu0 %v497
    %2782 = vmatprep.subr.mxu0 %v502
    %2783 = vmatpush1.msra.mxu0 %v501
    %2784 = vmatprep.subr.mxu0 %v506
    %2785 = vmatpush1.msra.mxu0 %v505
    %2786 = vmatprep.subr.mxu0 %v510
    %2787 = vmatpush1.msra.mxu0 %v509
    %2788 = vmatprep.subr.mxu0 %v514
    %2789 = vmatpush1.msra.mxu0 %v513
    %2790 = vmatprep.subr.mxu0 %v518
    %2791 = vmatpush1.msra.mxu0 %v517
    %2792 = vmatprep.subr.mxu0 %v522
    %2793 = vmatpush1.msra.mxu0 %v521
    %2794 = vmatprep.subr.mxu0 0.0
    %2795 = vmatpush1.msra.mxu0 0.0
    %2796 = vmatprep.subr.mxu0 0.0
    %2797 = vmatpush1.msra.mxu0 0.0
    %2798 = vmatprep.subr.mxu0 0.0
    %2799 = vmatpush1.msra.mxu0 0.0
    %2800 = vmatprep.subr.mxu0 0.0
    %2801 = vmatpush1.msra.mxu0 0.0
    %2802 = vmatprep.subr.mxu0 0.0
    %2803 = vmatpush1.msra.mxu0 0.0
    %2804 = vmatprep.subr.mxu0 0.0
    %2805 = vmatpush1.msra.mxu0 0.0
    %2806 = vmatprep.subr.mxu0 0.0
    %2807 = vmatpush1.msra.mxu0 0.0
    %2808 = vmatprep.subr.mxu0 0.0
    %2809 = vmatpush1.msra.mxu0 0.0
    %2810 = vmatprep.subr.mxu0 0.0
    %2811 = vmatpush1.msra.mxu0 0.0
    %2812 = vmatprep.subr.mxu0 0.0
    %2813 = vmatpush1.msra.mxu0 0.0
    %2814 = vmatprep.subr.mxu0 0.0
    %2815 = vmatpush1.msra.mxu0 0.0
    %2816 = vmatprep.subr.mxu0 0.0
    %2817 = vmatpush1.msra.mxu0 0.0
    %2818 = vmatprep.subr.mxu0 0.0
    %2819 = vmatpush1.msra.mxu0 0.0
    %2820 = vmatprep.subr.mxu0 0.0
    %2821 = vmatpush1.msra.mxu0 0.0
    %2822 = vmatprep.subr.mxu0 0.0
    %2823 = vmatpush1.msra.mxu0 0.0
    %2824 = vmatprep.subr.mxu0 0.0
    %2825 = vmatpush1.msra.mxu0 0.0
    %2826 = vmatprep.mubr.f32.mxu0 0.0
    %2827 = vmatmul.mubr.f32.gmra.mrb[0].mxu0 %v2520
    %v2828 = vpop.f32.mrb[0].mxu0
    %v2829 = vadd.f32 0.0, %v2828
    %v2830 = vpop.f32.mrb[0].mxu0
    %v2831 = vadd.f32 0.0, %v2830
    %2832 = vdwg.mxu0
    %v2833 = vadd.f32 %v2687, %v2758
    %v2834 = vadd.f32 %v2688, %v2760
    %v2835 = vadd.f32 %v2689, %v2829
    %v2836 = vadd.f32 %v2690, %v2831
    %v2837 = vxor.u32 %v2833, 2147483648
    %v2838 = vxor.u32 %v2834, 2147483648
    %v2839 = vxor.u32 %v2835, 2147483648
    %v2840 = vmul.f32 %v2837, 1.442695
    %v2841 = vpow.pop %v2840
    %v2842 = vmul.f32 %v2838, 1.442695
    %v2843 = vpow.pop %v2842
    %v2844 = vmul.f32 %v2839, 1.442695
    %v2845 = vpow.pop %v2844
    %v2846 = vadd.f32 %v2841, 1.0
    %v2847 = vadd.f32 %v2843, 1.0
    %v2848 = vadd.f32 %v2845, 1.0
    %v2849 = vrcp.pop %v2846
    %v2850 = vmul.f32 1.0, %v2849
    %v2851 = vrcp.pop %v2847
    %v2852 = vmul.f32 1.0, %v2851
    %v2853 = vrcp.pop %v2848
    %v2854 = vmul.f32 1.0, %v2853
    %v2855 = vtanh.pop %v2836
    %v2856 = vmul.f32 %v2852, %v2518
    %v2857 = vmul.f32 %v2850, %v2855
    %v2858 = vadd.f32 %v2856, %v2857
    %v2859 = vtanh.pop %v2858
    %v2860 = vmul.f32 %v2854, %v2859
    %2861 = vmatprep.subr.mxu0 %v694
    %2862 = vmatpush1.msra.mxu0 %v693
    %2863 = vmatprep.subr.mxu0 %v698
    %2864 = vmatpush1.msra.mxu0 %v697
    %2865 = vmatprep.subr.mxu0 %v702
    %2866 = vmatpush1.msra.mxu0 %v701
    %2867 = vmatprep.subr.mxu0 %v706
    %2868 = vmatpush1.msra.mxu0 %v705
    %2869 = vmatprep.subr.mxu0 %v710
    %2870 = vmatpush1.msra.mxu0 %v709
    %2871 = vmatprep.subr.mxu0 %v714
    %2872 = vmatpush1.msra.mxu0 %v713
    %2873 = vmatprep.subr.mxu0 %v718
    %2874 = vmatpush1.msra.mxu0 %v717
    %2875 = vmatprep.subr.mxu0 %v722
    %2876 = vmatpush1.msra.mxu0 %v721
    %2877 = vmatprep.subr.mxu0 %v726
    %2878 = vmatpush1.msra.mxu0 %v725
    %2879 = vmatprep.subr.mxu0 %v730
    %2880 = vmatpush1.msra.mxu0 %v729
    %2881 = vmatprep.subr.mxu0 %v734
    %2882 = vmatpush1.msra.mxu0 %v733
    %2883 = vmatprep.subr.mxu0 %v738
    %2884 = vmatpush1.msra.mxu0 %v737
    %2885 = vmatprep.subr.mxu0 %v742
    %2886 = vmatpush1.msra.mxu0 %v741
    %2887 = vmatprep.subr.mxu0 %v746
    %2888 = vmatpush1.msra.mxu0 %v745
    %2889 = vmatprep.subr.mxu0 %v750
    %2890 = vmatpush1.msra.mxu0 %v749
    %2891 = vmatprep.subr.mxu0 %v754
    %2892 = vmatpush1.msra.mxu0 %v753
    %2893 = vmatprep.subr.mxu0 %v758
    %2894 = vmatpush1.msra.mxu0 %v757
    %2895 = vmatprep.subr.mxu0 %v762
    %2896 = vmatpush1.msra.mxu0 %v761
    %2897 = vmatprep.subr.mxu0 %v766
    %2898 = vmatpush1.msra.mxu0 %v765
    %2899 = vmatprep.subr.mxu0 %v770
    %2900 = vmatpush1.msra.mxu0 %v769
    %2901 = vmatprep.subr.mxu0 %v774
    %2902 = vmatpush1.msra.mxu0 %v773
    %2903 = vmatprep.subr.mxu0 %v778
    %2904 = vmatpush1.msra.mxu0 %v777
    %2905 = vmatprep.subr.mxu0 %v782
    %2906 = vmatpush1.msra.mxu0 %v781
    %2907 = vmatprep.subr.mxu0 %v786
    %2908 = vmatpush1.msra.mxu0 %v785
    %2909 = vmatprep.subr.mxu0 %v790
    %2910 = vmatpush1.msra.mxu0 %v789
    %2911 = vmatprep.subr.mxu0 %v794
    %2912 = vmatpush1.msra.mxu0 %v793
    %2913 = vmatprep.subr.mxu0 %v798
    %2914 = vmatpush1.msra.mxu0 %v797
    %2915 = vmatprep.subr.mxu0 %v802
    %2916 = vmatpush1.msra.mxu0 %v801
    %2917 = vmatprep.subr.mxu0 %v806
    %2918 = vmatpush1.msra.mxu0 %v805
    %2919 = vmatprep.subr.mxu0 %v810
    %2920 = vmatpush1.msra.mxu0 %v809
    %2921 = vmatprep.subr.mxu0 %v814
    %2922 = vmatpush1.msra.mxu0 %v813
    %2923 = vmatprep.subr.mxu0 %v818
    %2924 = vmatpush1.msra.mxu0 %v817
    %2925 = vmatprep.mubr.f32.mxu0 %v2686
    %2926 = vmatmul.mubr.f32.gmra.mrb[0].mxu0 %v2860
    %v2927 = vpop.f32.mrb[0].mxu0
    %v2928 = vadd.f32 %v432, %v2927
    %v2929 = vpop.f32.mrb[0].mxu0
    %v2930 = vadd.f32 %v436, %v2929
    %2931 = vdwg.mxu0
    %2932 = vmatprep.subr.mxu0 %v696
    %2933 = vmatpush1.msra.mxu0 %v695
    %2934 = vmatprep.subr.mxu0 %v700
    %2935 = vmatpush1.msra.mxu0 %v699
    %2936 = vmatprep.subr.mxu0 %v704
    %2937 = vmatpush1.msra.mxu0 %v703
    %2938 = vmatprep.subr.mxu0 %v708
    %2939 = vmatpush1.msra.mxu0 %v707
    %2940 = vmatprep.subr.mxu0 %v712
    %2941 = vmatpush1.msra.mxu0 %v711
    %2942 = vmatprep.subr.mxu0 %v716
    %2943 = vmatpush1.msra.mxu0 %v715
    %2944 = vmatprep.subr.mxu0 %v720
    %2945 = vmatpush1.msra.mxu0 %v719
    %2946 = vmatprep.subr.mxu0 %v724
    %2947 = vmatpush1.msra.mxu0 %v723
    %2948 = vmatprep.subr.mxu0 %v728
    %2949 = vmatpush1.msra.mxu0 %v727
    %2950 = vmatprep.subr.mxu0 %v732
    %2951 = vmatpush1.msra.mxu0 %v731
    %2952 = vmatprep.subr.mxu0 %v736
    %2953 = vmatpush1.msra.mxu0 %v735
    %2954 = vmatprep.subr.mxu0 %v740
    %2955 = vmatpush1.msra.mxu0 %v739
    %2956 = vmatprep.subr.mxu0 %v744
    %2957 = vmatpush1.msra.mxu0 %v743
    %2958 = vmatprep.subr.mxu0 %v748
    %2959 = vmatpush1.msra.mxu0 %v747
    %2960 = vmatprep.subr.mxu0 %v752
    %2961 = vmatpush1.msra.mxu0 %v751
    %2962 = vmatprep.subr.mxu0 %v756
    %2963 = vmatpush1.msra.mxu0 %v755
    %2964 = vmatprep.subr.mxu0 %v760
    %2965 = vmatpush1.msra.mxu0 %v759
    %2966 = vmatprep.subr.mxu0 %v764
    %2967 = vmatpush1.msra.mxu0 %v763
    %2968 = vmatprep.subr.mxu0 %v768
    %2969 = vmatpush1.msra.mxu0 %v767
    %2970 = vmatprep.subr.mxu0 %v772
    %2971 = vmatpush1.msra.mxu0 %v771
    %2972 = vmatprep.subr.mxu0 %v776
    %2973 = vmatpush1.msra.mxu0 %v775
    %2974 = vmatprep.subr.mxu0 %v780
    %2975 = vmatpush1.msra.mxu0 %v779
    %2976 = vmatprep.subr.mxu0 %v784
    %2977 = vmatpush1.msra.mxu0 %v783
    %2978 = vmatprep.subr.mxu0 %v788
    %2979 = vmatpush1.msra.mxu0 %v787
    %2980 = vmatprep.subr.mxu0 %v792
    %2981 = vmatpush1.msra.mxu0 %v791
    %2982 = vmatprep.subr.mxu0 %v796
    %2983 = vmatpush1.msra.mxu0 %v795
    %2984 = vmatprep.subr.mxu0 %v800
    %2985 = vmatpush1.msra.mxu0 %v799
    %2986 = vmatprep.subr.mxu0 %v804
    %2987 = vmatpush1.msra.mxu0 %v803
    %2988 = vmatprep.subr.mxu0 %v808
    %2989 = vmatpush1.msra.mxu0 %v807
    %2990 = vmatprep.subr.mxu0 %v812
    %2991 = vmatpush1.msra.mxu0 %v811
    %2992 = vmatprep.subr.mxu0 %v816
    %2993 = vmatpush1.msra.mxu0 %v815
    %2994 = vmatprep.subr.mxu0 %v820
    %2995 = vmatpush1.msra.mxu0 %v819
    %2996 = vmatprep.mubr.f32.mxu0 %v2686
    %2997 = vmatmul.mubr.f32.gmra.mrb[0].mxu0 %v2860
    %v2998 = vpop.f32.mrb[0].mxu0
    %v2999 = vadd.f32 %v440, %v2998
    %v3000 = vpop.f32.mrb[0].mxu0
    %v3001 = vadd.f32 %v444, %v3000
    %3002 = vdwg.mxu0
    %v3003 = vxor.u32 %v2928, 2147483648
    %v3004 = vxor.u32 %v2930, 2147483648
    %v3005 = vxor.u32 %v2999, 2147483648
    %v3006 = vmul.f32 %v3003, 1.442695
    %v3007 = vpow.pop %v3006
    %v3008 = vmul.f32 %v3004, 1.442695
    %v3009 = vpow.pop %v3008
    %v3010 = vmul.f32 %v3005, 1.442695
    %v3011 = vpow.pop %v3010
    %v3012 = vadd.f32 %v3007, 1.0
    %v3013 = vadd.f32 %v3009, 1.0
    %v3014 = vadd.f32 %v3011, 1.0
    %v3015 = vrcp.pop %v3012
    %v3016 = vmul.f32 1.0, %v3015
    %v3017 = vrcp.pop %v3013
    %v3018 = vmul.f32 1.0, %v3017
    %v3019 = vrcp.pop %v3014
    %v3020 = vmul.f32 1.0, %v3019
    %v3021 = vtanh.pop %v3001
    %v3022 = vmul.f32 %v3018, %v2684
    %v3023 = vmul.f32 %v3016, %v3021
    %v3024 = vadd.f32 %v3022, %v3023
    %v3025 = vtanh.pop %v3024
    %v3026 = vmul.f32 %v3020, %v3025
    %v3027 = vld [vmem:[#allocation2 + $0xe0] sm:$0xff]
    %v3028 = vld [vmem:[#allocation2 + $0xe8] sm:$0xff]
    %v3029 = vld [vmem:[#allocation2 + $0xf0] sm:$0xff]
    %v3030 = vld [vmem:[#allocation2 + $0xf8] sm:$0xff]
    %3031 = vmatprep.subr.mxu0 %v460
    %3032 = vmatpush1.msra.mxu0 %v459
    %3033 = vmatprep.subr.mxu0 %v464
    %3034 = vmatpush1.msra.mxu0 %v463
    %3035 = vmatprep.subr.mxu0 %v468
    %3036 = vmatpush1.msra.mxu0 %v467
    %3037 = vmatprep.subr.mxu0 %v472
    %3038 = vmatpush1.msra.mxu0 %v471
    %3039 = vmatprep.subr.mxu0 %v476
    %3040 = vmatpush1.msra.mxu0 %v475
    %3041 = vmatprep.subr.mxu0 %v480
    %3042 = vmatpush1.msra.mxu0 %v479
    %3043 = vmatprep.subr.mxu0 %v484
    %3044 = vmatpush1.msra.mxu0 %v483
    %3045 = vmatprep.subr.mxu0 %v488
    %3046 = vmatpush1.msra.mxu0 %v487
    %3047 = vmatprep.subr.mxu0 %v492
    %3048 = vmatpush1.msra.mxu0 %v491
    %3049 = vmatprep.subr.mxu0 %v496
    %3050 = vmatpush1.msra.mxu0 %v495
    %3051 = vmatprep.subr.mxu0 %v500
    %3052 = vmatpush1.msra.mxu0 %v499
    %3053 = vmatprep.subr.mxu0 %v504
    %3054 = vmatpush1.msra.mxu0 %v503
    %3055 = vmatprep.subr.mxu0 %v508
    %3056 = vmatpush1.msra.mxu0 %v507
    %3057 = vmatprep.subr.mxu0 %v512
    %3058 = vmatpush1.msra.mxu0 %v511
    %3059 = vmatprep.subr.mxu0 %v516
    %3060 = vmatpush1.msra.mxu0 %v515
    %3061 = vmatprep.subr.mxu0 %v520
    %3062 = vmatpush1.msra.mxu0 %v519
    %3063 = vmatprep.subr.mxu0 0.0
    %3064 = vmatpush1.msra.mxu0 0.0
    %3065 = vmatprep.subr.mxu0 0.0
    %3066 = vmatpush1.msra.mxu0 0.0
    %3067 = vmatprep.subr.mxu0 0.0
    %3068 = vmatpush1.msra.mxu0 0.0
    %3069 = vmatprep.subr.mxu0 0.0
    %3070 = vmatpush1.msra.mxu0 0.0
    %3071 = vmatprep.subr.mxu0 0.0
    %3072 = vmatpush1.msra.mxu0 0.0
    %3073 = vmatprep.subr.mxu0 0.0
    %3074 = vmatpush1.msra.mxu0 0.0
    %3075 = vmatprep.subr.mxu0 0.0
    %3076 = vmatpush1.msra.mxu0 0.0
    %3077 = vmatprep.subr.mxu0 0.0
    %3078 = vmatpush1.msra.mxu0 0.0
    %3079 = vmatprep.subr.mxu0 0.0
    %3080 = vmatpush1.msra.mxu0 0.0
    %3081 = vmatprep.subr.mxu0 0.0
    %3082 = vmatpush1.msra.mxu0 0.0
    %3083 = vmatprep.subr.mxu0 0.0
    %3084 = vmatpush1.msra.mxu0 0.0
    %3085 = vmatprep.subr.mxu0 0.0
    %3086 = vmatpush1.msra.mxu0 0.0
    %3087 = vmatprep.subr.mxu0 0.0
    %3088 = vmatpush1.msra.mxu0 0.0
    %3089 = vmatprep.subr.mxu0 0.0
    %3090 = vmatpush1.msra.mxu0 0.0
    %3091 = vmatprep.subr.mxu0 0.0
    %3092 = vmatpush1.msra.mxu0 0.0
    %3093 = vmatprep.subr.mxu0 0.0
    %3094 = vmatpush1.msra.mxu0 0.0
    %3095 = vmatprep.mubr.f32.mxu0 0.0
    %3096 = vmatmul.mubr.f32.gmra.mrb[0].mxu0 %v2860
    %v3097 = vpop.f32.mrb[0].mxu0
    %v3098 = vadd.f32 0.0, %v3097
    %v3099 = vpop.f32.mrb[0].mxu0
    %v3100 = vadd.f32 0.0, %v3099
    %3101 = vdwg.mxu0
    %3102 = vmatprep.subr.mxu0 %v462
    %3103 = vmatpush1.msra.mxu0 %v461
    %3104 = vmatprep.subr.mxu0 %v466
    %3105 = vmatpush1.msra.mxu0 %v465
    %3106 = vmatprep.subr.mxu0 %v470
    %3107 = vmatpush1.msra.mxu0 %v469
    %3108 = vmatprep.subr.mxu0 %v474
    %3109 = vmatpush1.msra.mxu0 %v473
    %3110 = vmatprep.subr.mxu0 %v478
    %3111 = vmatpush1.msra.mxu0 %v477
    %3112 = vmatprep.subr.mxu0 %v482
    %3113 = vmatpush1.msra.mxu0 %v481
    %3114 = vmatprep.subr.mxu0 %v486
    %3115 = vmatpush1.msra.mxu0 %v485
    %3116 = vmatprep.subr.mxu0 %v490
    %3117 = vmatpush1.msra.mxu0 %v489
    %3118 = vmatprep.subr.mxu0 %v494
    %3119 = vmatpush1.msra.mxu0 %v493
    %3120 = vmatprep.subr.mxu0 %v498
    %3121 = vmatpush1.msra.mxu0 %v497
    %3122 = vmatprep.subr.mxu0 %v502
    %3123 = vmatpush1.msra.mxu0 %v501
    %3124 = vmatprep.subr.mxu0 %v506
    %3125 = vmatpush1.msra.mxu0 %v505
    %3126 = vmatprep.subr.mxu0 %v510
    %3127 = vmatpush1.msra.mxu0 %v509
    %3128 = vmatprep.subr.mxu0 %v514
    %3129 = vmatpush1.msra.mxu0 %v513
    %3130 = vmatprep.subr.mxu0 %v518
    %3131 = vmatpush1.msra.mxu0 %v517
    %3132 = vmatprep.subr.mxu0 %v522
    %3133 = vmatpush1.msra.mxu0 %v521
    %3134 = vmatprep.subr.mxu0 0.0
    %3135 = vmatpush1.msra.mxu0 0.0
    %3136 = vmatprep.subr.mxu0 0.0
    %3137 = vmatpush1.msra.mxu0 0.0
    %3138 = vmatprep.subr.mxu0 0.0
    %3139 = vmatpush1.msra.mxu0 0.0
    %3140 = vmatprep.subr.mxu0 0.0
    %3141 = vmatpush1.msra.mxu0 0.0
    %3142 = vmatprep.subr.mxu0 0.0
    %3143 = vmatpush1.msra.mxu0 0.0
    %3144 = vmatprep.subr.mxu0 0.0
    %3145 = vmatpush1.msra.mxu0 0.0
    %3146 = vmatprep.subr.mxu0 0.0
    %3147 = vmatpush1.msra.mxu0 0.0
    %3148 = vmatprep.subr.mxu0 0.0
    %3149 = vmatpush1.msra.mxu0 0.0
    %3150 = vmatprep.subr.mxu0 0.0
    %3151 = vmatpush1.msra.mxu0 0.0
    %3152 = vmatprep.subr.mxu0 0.0
    %3153 = vmatpush1.msra.mxu0 0.0
    %3154 = vmatprep.subr.mxu0 0.0
    %3155 = vmatpush1.msra.mxu0 0.0
    %3156 = vmatprep.subr.mxu0 0.0
    %3157 = vmatpush1.msra.mxu0 0.0
    %3158 = vmatprep.subr.mxu0 0.0
    %3159 = vmatpush1.msra.mxu0 0.0
    %3160 = vmatprep.subr.mxu0 0.0
    %3161 = vmatpush1.msra.mxu0 0.0
    %3162 = vmatprep.subr.mxu0 0.0
    %3163 = vmatpush1.msra.mxu0 0.0
    %3164 = vmatprep.subr.mxu0 0.0
    %3165 = vmatpush1.msra.mxu0 0.0
    %3166 = vmatprep.mubr.f32.mxu0 0.0
    %3167 = vmatmul.mubr.f32.gmra.mrb[0].mxu0 %v2860
    %v3168 = vpop.f32.mrb[0].mxu0
    %v3169 = vadd.f32 0.0, %v3168
    %v3170 = vpop.f32.mrb[0].mxu0
    %v3171 = vadd.f32 0.0, %v3170
    %3172 = vdwg.mxu0
    %v3173 = vadd.f32 %v3027, %v3098
    %v3174 = vadd.f32 %v3028, %v3100
    %v3175 = vadd.f32 %v3029, %v3169
    %v3176 = vadd.f32 %v3030, %v3171
    %v3177 = vxor.u32 %v3173, 2147483648
    %v3178 = vxor.u32 %v3174, 2147483648
    %v3179 = vxor.u32 %v3175, 2147483648
    %v3180 = vmul.f32 %v3177, 1.442695
    %v3181 = vpow.pop %v3180
    %v3182 = vmul.f32 %v3178, 1.442695
    %v3183 = vpow.pop %v3182
    %v3184 = vmul.f32 %v3179, 1.442695
    %v3185 = vpow.pop %v3184
    %v3186 = vadd.f32 %v3181, 1.0
    %v3187 = vadd.f32 %v3183, 1.0
    %v3188 = vadd.f32 %v3185, 1.0
    %v3189 = vrcp.pop %v3186
    %v3190 = vmul.f32 1.0, %v3189
    %v3191 = vrcp.pop %v3187
    %v3192 = vmul.f32 1.0, %v3191
    %v3193 = vrcp.pop %v3188
    %v3194 = vmul.f32 1.0, %v3193
    %v3195 = vtanh.pop %v3176
    %v3196 = vmul.f32 %v3192, %v2858
    %v3197 = vmul.f32 %v3190, %v3195
    %v3198 = vadd.f32 %v3196, %v3197
    %v3199 = vtanh.pop %v3198
    %v3200 = vmul.f32 %v3194, %v3199
    %3201 = vmatprep.subr.mxu0 %v694
    %3202 = vmatpush1.msra.mxu0 %v693
    %3203 = vmatprep.subr.mxu0 %v698
    %3204 = vmatpush1.msra.mxu0 %v697
    %3205 = vmatprep.subr.mxu0 %v702
    %3206 = vmatpush1.msra.mxu0 %v701
    %3207 = vmatprep.subr.mxu0 %v706
    %3208 = vmatpush1.msra.mxu0 %v705
    %3209 = vmatprep.subr.mxu0 %v710
    %3210 = vmatpush1.msra.mxu0 %v709
    %3211 = vmatprep.subr.mxu0 %v714
    %3212 = vmatpush1.msra.mxu0 %v713
    %3213 = vmatprep.subr.mxu0 %v718
    %3214 = vmatpush1.msra.mxu0 %v717
    %3215 = vmatprep.subr.mxu0 %v722
    %3216 = vmatpush1.msra.mxu0 %v721
    %3217 = vmatprep.subr.mxu0 %v726
    %3218 = vmatpush1.msra.mxu0 %v725
    %3219 = vmatprep.subr.mxu0 %v730
    %3220 = vmatpush1.msra.mxu0 %v729
    %3221 = vmatprep.subr.mxu0 %v734
    %3222 = vmatpush1.msra.mxu0 %v733
    %3223 = vmatprep.subr.mxu0 %v738
    %3224 = vmatpush1.msra.mxu0 %v737
    %3225 = vmatprep.subr.mxu0 %v742
    %3226 = vmatpush1.msra.mxu0 %v741
    %3227 = vmatprep.subr.mxu0 %v746
    %3228 = vmatpush1.msra.mxu0 %v745
    %3229 = vmatprep.subr.mxu0 %v750
    %3230 = vmatpush1.msra.mxu0 %v749
    %3231 = vmatprep.subr.mxu0 %v754
    %3232 = vmatpush1.msra.mxu0 %v753
    %3233 = vmatprep.subr.mxu0 %v758
    %3234 = vmatpush1.msra.mxu0 %v757
    %3235 = vmatprep.subr.mxu0 %v762
    %3236 = vmatpush1.msra.mxu0 %v761
    %3237 = vmatprep.subr.mxu0 %v766
    %3238 = vmatpush1.msra.mxu0 %v765
    %3239 = vmatprep.subr.mxu0 %v770
    %3240 = vmatpush1.msra.mxu0 %v769
    %3241 = vmatprep.subr.mxu0 %v774
    %3242 = vmatpush1.msra.mxu0 %v773
    %3243 = vmatprep.subr.mxu0 %v778
    %3244 = vmatpush1.msra.mxu0 %v777
    %3245 = vmatprep.subr.mxu0 %v782
    %3246 = vmatpush1.msra.mxu0 %v781
    %3247 = vmatprep.subr.mxu0 %v786
    %3248 = vmatpush1.msra.mxu0 %v785
    %3249 = vmatprep.subr.mxu0 %v790
    %3250 = vmatpush1.msra.mxu0 %v789
    %3251 = vmatprep.subr.mxu0 %v794
    %3252 = vmatpush1.msra.mxu0 %v793
    %3253 = vmatprep.subr.mxu0 %v798
    %3254 = vmatpush1.msra.mxu0 %v797
    %3255 = vmatprep.subr.mxu0 %v802
    %3256 = vmatpush1.msra.mxu0 %v801
    %3257 = vmatprep.subr.mxu0 %v806
    %3258 = vmatpush1.msra.mxu0 %v805
    %3259 = vmatprep.subr.mxu0 %v810
    %3260 = vmatpush1.msra.mxu0 %v809
    %3261 = vmatprep.subr.mxu0 %v814
    %3262 = vmatpush1.msra.mxu0 %v813
    %3263 = vmatprep.subr.mxu0 %v818
    %3264 = vmatpush1.msra.mxu0 %v817
    %3265 = vmatprep.mubr.f32.mxu0 %v3026
    %3266 = vmatmul.mubr.f32.gmra.mrb[0].mxu0 %v3200
    %v3267 = vpop.f32.mrb[0].mxu0
    %v3268 = vadd.f32 %v432, %v3267
    %v3269 = vpop.f32.mrb[0].mxu0
    %v3270 = vadd.f32 %v436, %v3269
    %3271 = vdwg.mxu0
    %3272 = vmatprep.subr.mxu0 %v696
    %3273 = vmatpush1.msra.mxu0 %v695
    %3274 = vmatprep.subr.mxu0 %v700
    %3275 = vmatpush1.msra.mxu0 %v699
    %3276 = vmatprep.subr.mxu0 %v704
    %3277 = vmatpush1.msra.mxu0 %v703
    %3278 = vmatprep.subr.mxu0 %v708
    %3279 = vmatpush1.msra.mxu0 %v707
    %3280 = vmatprep.subr.mxu0 %v712
    %3281 = vmatpush1.msra.mxu0 %v711
    %3282 = vmatprep.subr.mxu0 %v716
    %3283 = vmatpush1.msra.mxu0 %v715
    %3284 = vmatprep.subr.mxu0 %v720
    %3285 = vmatpush1.msra.mxu0 %v719
    %3286 = vmatprep.subr.mxu0 %v724
    %3287 = vmatpush1.msra.mxu0 %v723
    %3288 = vmatprep.subr.mxu0 %v728
    %3289 = vmatpush1.msra.mxu0 %v727
    %3290 = vmatprep.subr.mxu0 %v732
    %3291 = vmatpush1.msra.mxu0 %v731
    %3292 = vmatprep.subr.mxu0 %v736
    %3293 = vmatpush1.msra.mxu0 %v735
    %3294 = vmatprep.subr.mxu0 %v740
    %3295 = vmatpush1.msra.mxu0 %v739
    %3296 = vmatprep.subr.mxu0 %v744
    %3297 = vmatpush1.msra.mxu0 %v743
    %3298 = vmatprep.subr.mxu0 %v748
    %3299 = vmatpush1.msra.mxu0 %v747
    %3300 = vmatprep.subr.mxu0 %v752
    %3301 = vmatpush1.msra.mxu0 %v751
    %3302 = vmatprep.subr.mxu0 %v756
    %3303 = vmatpush1.msra.mxu0 %v755
    %3304 = vmatprep.subr.mxu0 %v760
    %3305 = vmatpush1.msra.mxu0 %v759
    %3306 = vmatprep.subr.mxu0 %v764
    %3307 = vmatpush1.msra.mxu0 %v763
    %3308 = vmatprep.subr.mxu0 %v768
    %3309 = vmatpush1.msra.mxu0 %v767
    %3310 = vmatprep.subr.mxu0 %v772
    %3311 = vmatpush1.msra.mxu0 %v771
    %3312 = vmatprep.subr.mxu0 %v776
    %3313 = vmatpush1.msra.mxu0 %v775
    %3314 = vmatprep.subr.mxu0 %v780
    %3315 = vmatpush1.msra.mxu0 %v779
    %3316 = vmatprep.subr.mxu0 %v784
    %3317 = vmatpush1.msra.mxu0 %v783
    %3318 = vmatprep.subr.mxu0 %v788
    %3319 = vmatpush1.msra.mxu0 %v787
    %3320 = vmatprep.subr.mxu0 %v792
    %3321 = vmatpush1.msra.mxu0 %v791
    %3322 = vmatprep.subr.mxu0 %v796
    %3323 = vmatpush1.msra.mxu0 %v795
    %3324 = vmatprep.subr.mxu0 %v800
    %3325 = vmatpush1.msra.mxu0 %v799
    %3326 = vmatprep.subr.mxu0 %v804
    %3327 = vmatpush1.msra.mxu0 %v803
    %3328 = vmatprep.subr.mxu0 %v808
    %3329 = vmatpush1.msra.mxu0 %v807
    %3330 = vmatprep.subr.mxu0 %v812
    %3331 = vmatpush1.msra.mxu0 %v811
    %3332 = vmatprep.subr.mxu0 %v816
    %3333 = vmatpush1.msra.mxu0 %v815
    %3334 = vmatprep.subr.mxu0 %v820
    %3335 = vmatpush1.msra.mxu0 %v819
    %3336 = vmatprep.mubr.f32.mxu0 %v3026
    %3337 = vmatmul.mubr.f32.gmra.mrb[0].mxu0 %v3200
    %v3338 = vpop.f32.mrb[0].mxu0
    %v3339 = vadd.f32 %v440, %v3338
    %v3340 = vpop.f32.mrb[0].mxu0
    %v3341 = vadd.f32 %v444, %v3340
    %3342 = vdwg.mxu0
    %v3343 = vxor.u32 %v3268, 2147483648
    %v3344 = vxor.u32 %v3270, 2147483648
    %v3345 = vxor.u32 %v3339, 2147483648
    %v3346 = vmul.f32 %v3343, 1.442695
    %v3347 = vpow.pop %v3346
    %v3348 = vmul.f32 %v3344, 1.442695
    %v3349 = vpow.pop %v3348
    %v3350 = vmul.f32 %v3345, 1.442695
    %v3351 = vpow.pop %v3350
    %v3352 = vadd.f32 %v3347, 1.0
    %v3353 = vadd.f32 %v3349, 1.0
    %v3354 = vadd.f32 %v3351, 1.0
    %v3355 = vrcp.pop %v3352
    %v3356 = vmul.f32 1.0, %v3355
    %v3357 = vrcp.pop %v3353
    %v3358 = vmul.f32 1.0, %v3357
    %v3359 = vrcp.pop %v3354
    %v3360 = vmul.f32 1.0, %v3359
    %v3361 = vtanh.pop %v3341
    %v3362 = vmul.f32 %v3358, %v3024
    %v3363 = vmul.f32 %v3356, %v3361
    %v3364 = vadd.f32 %v3362, %v3363
    %v3365 = vtanh.pop %v3364
    %v3366 = vmul.f32 %v3360, %v3365
    %3367 = vst [vmem:[#allocation3] sm:$0xff] %v3200
    %3368 = vst [vmem:[#allocation4] sm:$0xff] %v3198
    %3369 = vst [vmem:[%s450] sm:$0xff] %v3366
    %3370 = vst [vmem:[%s453] sm:$0xff] %v3364
    // Predicated region
    $region58: #{lstm_network_forward.1} parent=1 // pred_check
      %p3371 = pneg %p91
    $region59: #{lstm_network_forward.1} parent=1 // pred_check_branch
      %3373 = sbr.rel (%p3371) target = $region61
    $region60: #{lstm_network_forward.1} parent=1 // pred_region
      %v3374 = vld [vmem:[%s6] sm:$0xff]
      %v3375 = vld [vmem:[%s6 + $0x8] sm:$0xff]
      %v3376 = vld [vmem:[%s6 + $0x10] sm:$0xff]
      %v3377 = vld [vmem:[%s6 + $0x18] sm:$0xff]
      %v3378 = vld [vmem:[%s6 + $0x20] sm:$0xff]
      %v3379 = vld [vmem:[%s6 + $0x28] sm:$0xff]
      %v3380 = vld [vmem:[%s6 + $0x30] sm:$0xff]
      %v3381 = vld [vmem:[%s6 + $0x38] sm:$0xff]
      %v3382 = vld [vmem:[%s6 + $0x40] sm:$0xff]
      %v3383 = vld [vmem:[%s6 + $0x48] sm:$0xff]
      %v3384 = vld [vmem:[%s6 + $0x50] sm:$0xff]
      %v3385 = vld [vmem:[%s6 + $0x58] sm:$0xff]
      %v3386 = vld [vmem:[%s6 + $0x60] sm:$0xff]
      %v3387 = vld [vmem:[%s6 + $0x68] sm:$0xff]
      %v3388 = vld [vmem:[%s6 + $0x70] sm:$0xff]
      %v3389 = vld [vmem:[%s6 + $0x78] sm:$0xff]
      %v3390 = vld [vmem:[%s7] sm:$0x1]
      %v3392 = vlaneseq
      %v3393 = vshrl.u32 %v3392, 7
      %v3394 = vsub.s32 0, %v3393
      %v3395 = vrot.slane %v3390, %v3394
      %3397 = vmatprep.subr.mxu0 0.0
      %3398 = vmatpush1.msra.mxu0 %v3374
      %3399 = vmatprep.subr.mxu0 0.0
      %3400 = vmatpush1.msra.mxu0 %v3375
      %3401 = vmatprep.subr.mxu0 0.0
      %3402 = vmatpush1.msra.mxu0 %v3376
      %3403 = vmatprep.subr.mxu0 0.0
      %3404 = vmatpush1.msra.mxu0 %v3377
      %3405 = vmatprep.subr.mxu0 0.0
      %3406 = vmatpush1.msra.mxu0 %v3378
      %3407 = vmatprep.subr.mxu0 0.0
      %3408 = vmatpush1.msra.mxu0 %v3379
      %3409 = vmatprep.subr.mxu0 0.0
      %3410 = vmatpush1.msra.mxu0 %v3380
      %3411 = vmatprep.subr.mxu0 0.0
      %3412 = vmatpush1.msra.mxu0 %v3381
      %3413 = vmatprep.subr.mxu0 0.0
      %3414 = vmatpush1.msra.mxu0 %v3382
      %3415 = vmatprep.subr.mxu0 0.0
      %3416 = vmatpush1.msra.mxu0 %v3383
      %3417 = vmatprep.subr.mxu0 0.0
      %3418 = vmatpush1.msra.mxu0 %v3384
      %3419 = vmatprep.subr.mxu0 0.0
      %3420 = vmatpush1.msra.mxu0 %v3385
      %3421 = vmatprep.subr.mxu0 0.0
      %3422 = vmatpush1.msra.mxu0 %v3386
      %3423 = vmatprep.subr.mxu0 0.0
      %3424 = vmatpush1.msra.mxu0 %v3387
      %3425 = vmatprep.subr.mxu0 0.0
      %3426 = vmatpush1.msra.mxu0 %v3388
      %3427 = vmatprep.subr.mxu0 0.0
      %3428 = vmatpush1.msra.mxu0 %v3389
      %3429 = vmatprep.subr.mxu0 0.0
      %3430 = vmatpush1.msra.mxu0 0.0
      %3431 = vmatprep.subr.mxu0 0.0
      %3432 = vmatpush1.msra.mxu0 0.0
      %3433 = vmatprep.subr.mxu0 0.0
      %3434 = vmatpush1.msra.mxu0 0.0
      %3435 = vmatprep.subr.mxu0 0.0
      %3436 = vmatpush1.msra.mxu0 0.0
      %3437 = vmatprep.subr.mxu0 0.0
      %3438 = vmatpush1.msra.mxu0 0.0
      %3439 = vmatprep.subr.mxu0 0.0
      %3440 = vmatpush1.msra.mxu0 0.0
      %3441 = vmatprep.subr.mxu0 0.0
      %3442 = vmatpush1.msra.mxu0 0.0
      %3443 = vmatprep.subr.mxu0 0.0
      %3444 = vmatpush1.msra.mxu0 0.0
      %3445 = vmatprep.subr.mxu0 0.0
      %3446 = vmatpush1.msra.mxu0 0.0
      %3447 = vmatprep.subr.mxu0 0.0
      %3448 = vmatpush1.msra.mxu0 0.0
      %3449 = vmatprep.subr.mxu0 0.0
      %3450 = vmatpush1.msra.mxu0 0.0
      %3451 = vmatprep.subr.mxu0 0.0
      %3452 = vmatpush1.msra.mxu0 0.0
      %3453 = vmatprep.subr.mxu0 0.0
      %3454 = vmatpush1.msra.mxu0 0.0
      %3455 = vmatprep.subr.mxu0 0.0
      %3456 = vmatpush1.msra.mxu0 0.0
      %3457 = vmatprep.subr.mxu0 0.0
      %3458 = vmatpush1.msra.mxu0 0.0
      %3459 = vmatprep.subr.mxu0 0.0
      %3460 = vmatpush1.msra.mxu0 0.0
      %3461 = vmatprep.mubr.f32.mxu0 0.0
      %3462 = vmatmul.mubr.f32.gmra.mrb[0].mxu0 %v3366
      %v3463 = vpop.f32.mrb[0].mxu0
      %v3464 = vadd.f32 %v3395, %v3463
      %v3465 = vpop.f32.mrb[0].mxu0
      %3466 = vdwg.mxu0
      %3467 = vst [vmem:[%s8] sm:$0xff] %v3464
    $region61: #{lstm_network_forward.1} parent=1 // pred_fallthru
      _
    // Predicated region
    $region62: #{lstm_network_forward.1} parent=1 // pred_check
      _
    $region63: #{lstm_network_forward.1} parent=1 // pred_check_branch
      %3469 = sbr.rel (0) target = $region65
    $region64: #{lstm_network_forward.1} parent=1 // pred_region
      _
    $region65: #{lstm_network_forward.1} parent=1 // pred_fallthru
      _
    // Predicated region
    $region66: #{lstm_network_forward.1} parent=1 // pred_check
      _
    $region67: #{lstm_network_forward.1} parent=1 // pred_check_branch
      %3471 = sbr.rel (0) target = $region69
    $region68: #{lstm_network_forward.1} parent=1 // pred_region
      _
    $region69: #{lstm_network_forward.1} parent=1 // pred_fallthru
      _
    %3472 = vsyncpa [#allocation6], 1
    %3473 = vsyncpa [#allocation8], 1
    %3474 = vsyncpa [#allocation11], 1

// kernel: lstm_network_forward.1
$region0: #{lstm_network_forward.1}
  #allocation0 [shape = 'u32[]', space=smem, size = 0x4, offset = 0x4, fixed_abs, tag = 'smem constant byte address 0x4 - core index']
  #allocation1 [shape = 'u32[144,128]{1,0:T(1,128)}', space=vmem, size = 0x12000, scoped, tag = 'internal scratch']
  #allocation2 [shape = 'f32[64,512]{1,0:T(8,128)}', space=vmem, size = 0x20000, scoped, tag = 'scratch operand']
  #allocation3 [shape = 'f32[2,8,128]{2,1,0:T(8,128)}', space=vmem, size = 0x2000, scoped, tag = 'scratch operand']
  #allocation4 [shape = 'f32[2,8,128]{2,1,0:T(8,128)}', space=vmem, size = 0x2000, scoped, tag = 'scratch operand']
  %s0 = inlined_call_operand.vmem [shape: f32[64,4], index: 0, kind: input, shape index: {}]
  %s1 = inlined_call_operand.hbm [shape: f32[4,512], index: 1, kind: input, shape index: {}]
  %s2 = inlined_call_operand.hbm [shape: f32[1,512], index: 2, kind: input, shape index: {}]
  %s3 = inlined_call_operand.hbm [shape: f32[128,512], index: 3, kind: input, shape index: {}]
  %s4 = inlined_call_operand.hbm [shape: f32[256,512], index: 4, kind: input, shape index: {}]
  %s5 = inlined_call_operand.hbm [shape: f32[1,512], index: 5, kind: input, shape index: {}]
  %s6 = inlined_call_operand.vmem [shape: f32[128,128], index: 6, kind: input, shape index: {}]
  %s7 = inlined_call_operand.vmem [shape: f32[1,128], index: 7, kind: input, shape index: {}]
  %s8 = inlined_call_operand.vmem [shape: f32[8,128], index: 8, kind: output, shape index: {}]
  %s9 = sld [smem:[#allocation0]]
  $region70: #{lstm_network_forward.1} parent=0
    _
  %s11 = ssub.s32 1, %s9
  %s12 = scalar_select 0, %s11, %s9
  $region1: #{lstm_network_forward.1} parent=0
    #allocation5 [shape = 'u8[8192]{0}', space=vmem, size = 0x2000, scoped, tag = 'input window, operand 1, single buffered']
    #allocation6 [shape = 's32[1]{0}', space=sflag, size = 0x4, scoped, tag = 'scoped memory for lstm_network_forward.1']
    #allocation7 [shape = 'u8[2048]{0}', space=vmem, size = 0x800, scoped, tag = 'input window, operand 2, single buffered']
    #allocation8 [shape = 's32[1]{0}', space=sflag, size = 0x4, scoped, tag = 'scoped memory for lstm_network_forward.1']
    #allocation9 [shape = 'u8[262144]{0}', space=vmem, size = 0x40000, scoped, tag = 'input window, operand 3, single buffered']
    #allocation10 [shape = 'u8[524288]{0}', space=vmem, size = 0x80000, scoped, tag = 'input window, operand 4, single buffered']
    #allocation11 [shape = 's32[1]{0}', space=sflag, size = 0x4, scoped, tag = 'scoped memory for lstm_network_forward.1']
    #allocation12 [shape = 'u8[2048]{0}', space=vmem, size = 0x800, scoped, tag = 'input window, operand 5, single buffered']
    %13 = vsyncpa [#allocation6], 0
    %14 = vsyncpa [#allocation8], 0
    %15 = vsyncpa [#allocation11], 0
    // Predicated region
    $region2: #{lstm_network_forward.1} parent=1 // pred_check
      _
    $region3: #{lstm_network_forward.1} parent=1 // pred_check_branch
      %17 = sbr.rel (0) target = $region5
    $region4: #{lstm_network_forward.1} parent=1 // pred_region
      _
    $region5: #{lstm_network_forward.1} parent=1 // pred_fallthru
      _
    // Predicated region
    $region6: #{lstm_network_forward.1} parent=1 // pred_check
      _
    $region7: #{lstm_network_forward.1} parent=1 // pred_check_branch
      %19 = sbr.rel (0) target = $region9
    $region8: #{lstm_network_forward.1} parent=1 // pred_region
      %s21 = ssub.s32 256, 256
      %22 = vsyncadd [#allocation6], %s21
      %s24 = sshll.u32 [#allocation5], 4
      %s25 = int_to_ptr.vmem [resolvable:$true] %s24
      %27 = dma.hbm_to_vmem [thread:$0]  %s1, 256, %s25, [#allocation6]
    $region9: #{lstm_network_forward.1} parent=1 // pred_fallthru
      _
    // Predicated region
    $region10: #{lstm_network_forward.1} parent=1 // pred_check
      _
    $region11: #{lstm_network_forward.1} parent=1 // pred_check_branch
      %29 = sbr.rel (0) target = $region13
    $region12: #{lstm_network_forward.1} parent=1 // pred_region
      %s31 = ssub.s32 64, 64
      %32 = vsyncadd [#allocation8], %s31
      %s34 = sshll.u32 [#allocation7], 4
      %s35 = int_to_ptr.vmem [resolvable:$true] %s34
      %37 = dma.hbm_to_vmem [thread:$0]  %s2, 64, %s35, [#allocation8]
    $region13: #{lstm_network_forward.1} parent=1 // pred_fallthru
      _
    // Predicated region
    $region14: #{lstm_network_forward.1} parent=1 // pred_check
      _
    $region15: #{lstm_network_forward.1} parent=1 // pred_check_branch
      %39 = sbr.rel (0) target = $region17
    $region16: #{lstm_network_forward.1} parent=1 // pred_region
      %s41 = ssub.s32 8192, 8192
      %42 = vsyncadd [#allocation8], %s41
      %s43 = sshll.u32 [#allocation9], 4
      %s44 = int_to_ptr.vmem [resolvable:$true] %s43
      %49 = dma.hbm_to_vmem [thread:$0]  %s3, 8192, %s44, [#allocation8], 512, 512, 32
    $region17: #{lstm_network_forward.1} parent=1 // pred_fallthru
      _
    // Predicated region
    $region18: #{lstm_network_forward.1} parent=1 // pred_check
      _
    $region19: #{lstm_network_forward.1} parent=1 // pred_check_branch
      %51 = sbr.rel (0) target = $region21
    $region20: #{lstm_network_forward.1} parent=1 // pred_region
      %s53 = ssub.s32 16384, 16384
      %54 = vsyncadd [#allocation11], %s53
      %s55 = sshll.u32 [#allocation10], 4
      %s56 = int_to_ptr.vmem [resolvable:$true] %s55
      %61 = dma.hbm_to_vmem [thread:$0]  %s4, 16384, %s56, [#allocation11], 512, 512, 32
    $region21: #{lstm_network_forward.1} parent=1 // pred_fallthru
      _
    // Predicated region
    $region22: #{lstm_network_forward.1} parent=1 // pred_check
      _
    $region23: #{lstm_network_forward.1} parent=1 // pred_check_branch
      %63 = sbr.rel (0) target = $region25
    $region24: #{lstm_network_forward.1} parent=1 // pred_region
      %s65 = ssub.s32 64, 64
      %66 = vsyncadd [#allocation11], %s65
      %s68 = sshll.u32 [#allocation12], 4
      %s69 = int_to_ptr.vmem [resolvable:$true] %s68
      %71 = dma.hbm_to_vmem [thread:$0]  %s5, 64, %s69, [#allocation11]
    $region25: #{lstm_network_forward.1} parent=1 // pred_fallthru
      _
    // Predicated region
    $region26: #{lstm_network_forward.1} parent=1 // pred_check
      _
    $region27: #{lstm_network_forward.1} parent=1 // pred_check_branch
      %73 = sbr.rel (0) target = $region29
    $region28: #{lstm_network_forward.1} parent=1 // pred_region
      _
    $region29: #{lstm_network_forward.1} parent=1 // pred_fallthru
      _
    // Predicated region
    $region30: #{lstm_network_forward.1} parent=1 // pred_check
      _
    $region31: #{lstm_network_forward.1} parent=1 // pred_check_branch
      %75 = sbr.rel (0) target = $region33
    $region32: #{lstm_network_forward.1} parent=1 // pred_region
      _
    $region33: #{lstm_network_forward.1} parent=1 // pred_fallthru
      _
    // Predicated region
    $region34: #{lstm_network_forward.1} parent=1 // pred_check
      _
    $region35: #{lstm_network_forward.1} parent=1 // pred_check_branch
      %77 = sbr.rel (0) target = $region37
    $region36: #{lstm_network_forward.1} parent=1 // pred_region
      %78 = dma.done [#allocation6], 256
    $region37: #{lstm_network_forward.1} parent=1 // pred_fallthru
      _
    // Predicated region
    $region38: #{lstm_network_forward.1} parent=1 // pred_check
      _
    $region39: #{lstm_network_forward.1} parent=1 // pred_check_branch
      %80 = sbr.rel (0) target = $region41
    $region40: #{lstm_network_forward.1} parent=1 // pred_region
      %81 = dma.done [#allocation8], 64
    $region41: #{lstm_network_forward.1} parent=1 // pred_fallthru
      _
    // Predicated region
    $region42: #{lstm_network_forward.1} parent=1 // pred_check
      _
    $region43: #{lstm_network_forward.1} parent=1 // pred_check_branch
      %83 = sbr.rel (0) target = $region45
    $region44: #{lstm_network_forward.1} parent=1 // pred_region
      %84 = dma.done [#allocation8], 8192
    $region45: #{lstm_network_forward.1} parent=1 // pred_fallthru
      _
    // Predicated region
    $region46: #{lstm_network_forward.1} parent=1 // pred_check
      _
    $region47: #{lstm_network_forward.1} parent=1 // pred_check_branch
      %86 = sbr.rel (0) target = $region49
    $region48: #{lstm_network_forward.1} parent=1 // pred_region
      %87 = dma.done [#allocation11], 16384
    $region49: #{lstm_network_forward.1} parent=1 // pred_fallthru
      _
    // Predicated region
    $region50: #{lstm_network_forward.1} parent=1 // pred_check
      _
    $region51: #{lstm_network_forward.1} parent=1 // pred_check_branch
      %89 = sbr.rel (0) target = $region53
    $region52: #{lstm_network_forward.1} parent=1 // pred_region
      %90 = dma.done [#allocation11], 64
    $region53: #{lstm_network_forward.1} parent=1 // pred_fallthru
      _
    %p91 = scmp.eq.s32.totalorder 0, 0
    // Predicated region
    $region54: #{lstm_network_forward.1} parent=1 // pred_check
      %p92 = pneg %p91
    $region55: #{lstm_network_forward.1} parent=1 // pred_check_branch
      %94 = sbr.rel (%p92) target = $region57
    $region56: #{lstm_network_forward.1} parent=1 // pred_region
      %95 = vst [vmem:[#allocation3] sm:$0xff] 0.0
      %96 = vst [vmem:[#allocation3 + $0x8] sm:$0xff] 0.0
      %97 = vst [vmem:[#allocation4] sm:$0xff] 0.0
      %98 = vst [vmem:[#allocation4 + $0x8] sm:$0xff] 0.0
    $region57: #{lstm_network_forward.1} parent=1 // pred_fallthru
      _
    %v99 = vld [vmem:[%s0] sm:$0xff]
    %v100 = vld [vmem:[%s0 + $0x8] sm:$0xff]
    %v101 = vld [vmem:[%s0 + $0x10] sm:$0xff]
    %v102 = vld [vmem:[%s0 + $0x18] sm:$0xff]
    %v103 = vld [vmem:[%s0 + $0x20] sm:$0xff]
    %v104 = vld [vmem:[%s0 + $0x28] sm:$0xff]
    %v105 = vld [vmem:[%s0 + $0x30] sm:$0xff]
    %v106 = vld [vmem:[%s0 + $0x38] sm:$0xff]
    %v107 = vld [vmem:[#allocation5] sm:$0xff]
    %v108 = vld [vmem:[#allocation5 + $0x8] sm:$0xff]
    %v109 = vld [vmem:[#allocation7] sm:$0xf]
    %v111 = vlaneseq
    %v112 = vshrl.u32 %v111, 7
    %v113 = vsub.s32 0, %v112
    %v114 = vrot.slane %v109, %v113
    %v115 = vlaneseq
    %v116 = vshrl.u32 %v115, 7
    %v117 = vsub.s32 1, %v116
    %v118 = vrot.slane %v109, %v117
    %v119 = vlaneseq
    %v120 = vshrl.u32 %v119, 7
    %v121 = vsub.s32 2, %v120
    %v122 = vrot.slane %v109, %v121
    %v123 = vlaneseq
    %v124 = vshrl.u32 %v123, 7
    %v125 = vsub.s32 3, %v124
    %v126 = vrot.slane %v109, %v125
    %v133 = vcombine.high %v107, %v107
    %v134 = vcombine.high %v108, %v108
    %vm135 = vcmask 31744
    %v137 = vsel %vm135, %v99, 0
    %v140 = vsel %vm135, %v100, 0
    %v143 = vsel %vm135, %v101, 0
    %v146 = vsel %vm135, %v102, 0
    %v149 = vsel %vm135, %v103, 0
    %v152 = vsel %vm135, %v104, 0
    %v155 = vsel %vm135, %v105, 0
    %v158 = vsel %vm135, %v106, 0
    %vm160 = vcmask 1043456
    %v161 = vsel %vm160, %v107, 0
    %v163 = vsel %vm160, %v133, 0
    %v165 = vsel %vm160, %v108, 0
    %v167 = vsel %vm160, %v134, 0
    %169 = vmatprep.subr.mxu0 %v163
    %170 = vmatpush1.msra.mxu0 %v161
    %171 = vmatprep.subr.mxu0 0.0
    %172 = vmatpush1.msra.mxu0 0.0
    %173 = vmatprep.subr.mxu0 0.0
    %174 = vmatpush1.msra.mxu0 0.0
    %175 = vmatprep.subr.mxu0 0.0
    %176 = vmatpush1.msra.mxu0 0.0
    %177 = vmatprep.subr.mxu0 0.0
    %178 = vmatpush1.msra.mxu0 0.0
    %179 = vmatprep.subr.mxu0 0.0
    %180 = vmatpush1.msra.mxu0 0.0
    %181 = vmatprep.subr.mxu0 0.0
    %182 = vmatpush1.msra.mxu0 0.0
    %183 = vmatprep.subr.mxu0 0.0
    %184 = vmatpush1.msra.mxu0 0.0
    %185 = vmatprep.subr.mxu0 0.0
    %186 = vmatpush1.msra.mxu0 0.0
    %187 = vmatprep.subr.mxu0 0.0
    %188 = vmatpush1.msra.mxu0 0.0
    %189 = vmatprep.subr.mxu0 0.0
    %190 = vmatpush1.msra.mxu0 0.0
    %191 = vmatprep.subr.mxu0 0.0
    %192 = vmatpush1.msra.mxu0 0.0
    %193 = vmatprep.subr.mxu0 0.0
    %194 = vmatpush1.msra.mxu0 0.0
    %195 = vmatprep.subr.mxu0 0.0
    %196 = vmatpush1.msra.mxu0 0.0
    %197 = vmatprep.subr.mxu0 0.0
    %198 = vmatpush1.msra.mxu0 0.0
    %199 = vmatprep.subr.mxu0 0.0
    %200 = vmatpush1.msra.mxu0 0.0
    %201 = vmatprep.subr.mxu0 0.0
    %202 = vmatpush1.msra.mxu0 0.0
    %203 = vmatprep.subr.mxu0 0.0
    %204 = vmatpush1.msra.mxu0 0.0
    %205 = vmatprep.subr.mxu0 0.0
    %206 = vmatpush1.msra.mxu0 0.0
    %207 = vmatprep.subr.mxu0 0.0
    %208 = vmatpush1.msra.mxu0 0.0
    %209 = vmatprep.subr.mxu0 0.0
    %210 = vmatpush1.msra.mxu0 0.0
    %211 = vmatprep.subr.mxu0 0.0
    %212 = vmatpush1.msra.mxu0 0.0
    %213 = vmatprep.subr.mxu0 0.0
    %214 = vmatpush1.msra.mxu0 0.0
    %215 = vmatprep.subr.mxu0 0.0
    %216 = vmatpush1.msra.mxu0 0.0
    %217 = vmatprep.subr.mxu0 0.0
    %218 = vmatpush1.msra.mxu0 0.0
    %219 = vmatprep.subr.mxu0 0.0
    %220 = vmatpush1.msra.mxu0 0.0
    %221 = vmatprep.subr.mxu0 0.0
    %222 = vmatpush1.msra.mxu0 0.0
    %223 = vmatprep.subr.mxu0 0.0
    %224 = vmatpush1.msra.mxu0 0.0
    %225 = vmatprep.subr.mxu0 0.0
    %226 = vmatpush1.msra.mxu0 0.0
    %227 = vmatprep.subr.mxu0 0.0
    %228 = vmatpush1.msra.mxu0 0.0
    %229 = vmatprep.subr.mxu0 0.0
    %230 = vmatpush1.msra.mxu0 0.0
    %231 = vmatprep.subr.mxu0 0.0
    %232 = vmatpush1.msra.mxu0 0.0
    %233 = vmatprep.mubr.f32.mxu0 0.0
    %234 = vmatmul.mubr.f32.gmra.mrb[0].mxu0 %v137
    %v235 = vpop.f32.mrb[0].mxu0
    %v236 = vadd.f32 %v114, %v235
    %v237 = vpop.f32.mrb[0].mxu0
    %v238 = vadd.f32 %v118, %v237
    %239 = vmatprep.mubr.f32.mxu0 0.0
    %240 = vmatmul.mubr.f32.gmra.mrb[0].mxu0 %v140
    %v241 = vpop.f32.mrb[0].mxu0
    %v242 = vadd.f32 %v114, %v241
    %v243 = vpop.f32.mrb[0].mxu0
    %v244 = vadd.f32 %v118, %v243
    %245 = vmatprep.mubr.f32.mxu0 0.0
    %246 = vmatmul.mubr.f32.gmra.mrb[0].mxu0 %v143
    %v247 = vpop.f32.mrb[0].mxu0
    %v248 = vadd.f32 %v114, %v247
    %v249 = vpop.f32.mrb[0].mxu0
    %v250 = vadd.f32 %v118, %v249
    %251 = vmatprep.mubr.f32.mxu0 0.0
    %252 = vmatmul.mubr.f32.gmra.mrb[0].mxu0 %v146
    %v253 = vpop.f32.mrb[0].mxu0
    %v254 = vadd.f32 %v114, %v253
    %v255 = vpop.f32.mrb[0].mxu0
    %v256 = vadd.f32 %v118, %v255
    %257 = vmatprep.mubr.f32.mxu0 0.0
    %258 = vmatmul.mubr.f32.gmra.mrb[0].mxu0 %v149
    %v259 = vpop.f32.mrb[0].mxu0
    %v260 = vadd.f32 %v114, %v259
    %v261 = vpop.f32.mrb[0].mxu0
    %v262 = vadd.f32 %v118, %v261
    %263 = vmatprep.mubr.f32.mxu0 0.0
    %264 = vmatmul.mubr.f32.gmra.mrb[0].mxu0 %v152
    %v265 = vpop.f32.mrb[0].mxu0
    %v266 = vadd.f32 %v114, %v265
    %v267 = vpop.f32.mrb[0].mxu0
    %v268 = vadd.f32 %v118, %v267
    %269 = vmatprep.mubr.f32.mxu0 0.0
    %270 = vmatmul.mubr.f32.gmra.mrb[0].mxu0 %v155
    %v271 = vpop.f32.mrb[0].mxu0
    %v272 = vadd.f32 %v114, %v271
    %v273 = vpop.f32.mrb[0].mxu0
    %v274 = vadd.f32 %v118, %v273
    %275 = vmatprep.mubr.f32.mxu0 0.0
    %276 = vmatmul.mubr.f32.gmra.mrb[0].mxu0 %v158
    %v277 = vpop.f32.mrb[0].mxu0
    %v278 = vadd.f32 %v114, %v277
    %v279 = vpop.f32.mrb[0].mxu0
    %v280 = vadd.f32 %v118, %v279
    %281 = vdwg.mxu0
    %282 = vmatprep.subr.mxu0 %v167
    %283 = vmatpush1.msra.mxu0 %v165
    %284 = vmatprep.subr.mxu0 0.0
    %285 = vmatpush1.msra.mxu0 0.0
    %286 = vmatprep.subr.mxu0 0.0
    %287 = vmatpush1.msra.mxu0 0.0
    %288 = vmatprep.subr.mxu0 0.0
    %289 = vmatpush1.msra.mxu0 0.0
    %290 = vmatprep.subr.mxu0 0.0
    %291 = vmatpush1.msra.mxu0 0.0
    %292 = vmatprep.subr.mxu0 0.0
    %293 = vmatpush1.msra.mxu0 0.0
    %294 = vmatprep.subr.mxu0 0.0
    %295 = vmatpush1.msra.mxu0 0.0
    %296 = vmatprep.subr.mxu0 0.0
    %297 = vmatpush1.msra.mxu0 0.0
    %298 = vmatprep.subr.mxu0 0.0
    %299 = vmatpush1.msra.mxu0 0.0
    %300 = vmatprep.subr.mxu0 0.0
    %301 = vmatpush1.msra.mxu0 0.0
    %302 = vmatprep.subr.mxu0 0.0
    %303 = vmatpush1.msra.mxu0 0.0
    %304 = vmatprep.subr.mxu0 0.0
    %305 = vmatpush1.msra.mxu0 0.0
    %306 = vmatprep.subr.mxu0 0.0
    %307 = vmatpush1.msra.mxu0 0.0
    %308 = vmatprep.subr.mxu0 0.0
    %309 = vmatpush1.msra.mxu0 0.0
    %310 = vmatprep.subr.mxu0 0.0
    %311 = vmatpush1.msra.mxu0 0.0
    %312 = vmatprep.subr.mxu0 0.0
    %313 = vmatpush1.msra.mxu0 0.0
    %314 = vmatprep.subr.mxu0 0.0
    %315 = vmatpush1.msra.mxu0 0.0
    %316 = vmatprep.subr.mxu0 0.0
    %317 = vmatpush1.msra.mxu0 0.0
    %318 = vmatprep.subr.mxu0 0.0
    %319 = vmatpush1.msra.mxu0 0.0
    %320 = vmatprep.subr.mxu0 0.0
    %321 = vmatpush1.msra.mxu0 0.0
    %322 = vmatprep.subr.mxu0 0.0
    %323 = vmatpush1.msra.mxu0 0.0
    %324 = vmatprep.subr.mxu0 0.0
    %325 = vmatpush1.msra.mxu0 0.0
    %326 = vmatprep.subr.mxu0 0.0
    %327 = vmatpush1.msra.mxu0 0.0
    %328 = vmatprep.subr.mxu0 0.0
    %329 = vmatpush1.msra.mxu0 0.0
    %330 = vmatprep.subr.mxu0 0.0
    %331 = vmatpush1.msra.mxu0 0.0
    %332 = vmatprep.subr.mxu0 0.0
    %333 = vmatpush1.msra.mxu0 0.0
    %334 = vmatprep.subr.mxu0 0.0
    %335 = vmatpush1.msra.mxu0 0.0
    %336 = vmatprep.subr.mxu0 0.0
    %337 = vmatpush1.msra.mxu0 0.0
    %338 = vmatprep.subr.mxu0 0.0
    %339 = vmatpush1.msra.mxu0 0.0
    %340 = vmatprep.subr.mxu0 0.0
    %341 = vmatpush1.msra.mxu0 0.0
    %342 = vmatprep.subr.mxu0 0.0
    %343 = vmatpush1.msra.mxu0 0.0
    %344 = vmatprep.subr.mxu0 0.0
    %345 = vmatpush1.msra.mxu0 0.0
    %346 = vmatprep.mubr.f32.mxu0 0.0
    %347 = vmatmul.mubr.f32.gmra.mrb[0].mxu0 %v137
    %v348 = vpop.f32.mrb[0].mxu0
    %v349 = vadd.f32 %v122, %v348
    %v350 = vpop.f32.mrb[0].mxu0
    %v351 = vadd.f32 %v126, %v350
    %352 = vmatprep.mubr.f32.mxu0 0.0
    %353 = vmatmul.mubr.f32.gmra.mrb[0].mxu0 %v140
    %v354 = vpop.f32.mrb[0].mxu0
    %v355 = vadd.f32 %v122, %v354
    %v356 = vpop.f32.mrb[0].mxu0
    %v357 = vadd.f32 %v126, %v356
    %358 = vmatprep.mubr.f32.mxu0 0.0
    %359 = vmatmul.mubr.f32.gmra.mrb[0].mxu0 %v143
    %v360 = vpop.f32.mrb[0].mxu0
    %v361 = vadd.f32 %v122, %v360
    %v362 = vpop.f32.mrb[0].mxu0
    %v363 = vadd.f32 %v126, %v362
    %364 = vmatprep.mubr.f32.mxu0 0.0
    %365 = vmatmul.mubr.f32.gmra.mrb[0].mxu0 %v146
    %v366 = vpop.f32.mrb[0].mxu0
    %v367 = vadd.f32 %v122, %v366
    %v368 = vpop.f32.mrb[0].mxu0
    %v369 = vadd.f32 %v126, %v368
    %370 = vmatprep.mubr.f32.mxu0 0.0
    %371 = vmatmul.mubr.f32.gmra.mrb[0].mxu0 %v149
    %v372 = vpop.f32.mrb[0].mxu0
    %v373 = vadd.f32 %v122, %v372
    %v374 = vpop.f32.mrb[0].mxu0
    %v375 = vadd.f32 %v126, %v374
    %376 = vmatprep.mubr.f32.mxu0 0.0
    %377 = vmatmul.mubr.f32.gmra.mrb[0].mxu0 %v152
    %v378 = vpop.f32.mrb[0].mxu0
    %v379 = vadd.f32 %v122, %v378
    %v380 = vpop.f32.mrb[0].mxu0
    %v381 = vadd.f32 %v126, %v380
    %382 = vmatprep.mubr.f32.mxu0 0.0
    %383 = vmatmul.mubr.f32.gmra.mrb[0].mxu0 %v155
    %v384 = vpop.f32.mrb[0].mxu0
    %v385 = vadd.f32 %v122, %v384
    %v386 = vpop.f32.mrb[0].mxu0
    %v387 = vadd.f32 %v126, %v386
    %388 = vmatprep.mubr.f32.mxu0 0.0
    %389 = vmatmul.mubr.f32.gmra.mrb[0].mxu0 %v158
    %v390 = vpop.f32.mrb[0].mxu0
    %v391 = vadd.f32 %v122, %v390
    %v392 = vpop.f32.mrb[0].mxu0
    %v393 = vadd.f32 %v126, %v392
    %394 = vdwg.mxu0
    %395 = vst [vmem:[#allocation2] sm:$0xff] %v236
    %396 = vst [vmem:[#allocation2 + $0x8] sm:$0xff] %v238
    %397 = vst [vmem:[#allocation2 + $0x10] sm:$0xff] %v349
    %398 = vst [vmem:[#allocation2 + $0x18] sm:$0xff] %v351
    %399 = vst [vmem:[#allocation2 + $0x20] sm:$0xff] %v242
    %400 = vst [vmem:[#allocation2 + $0x28] sm:$0xff] %v244
    %401 = vst [vmem:[#allocation2 + $0x30] sm:$0xff] %v355
    %402 = vst [vmem:[#allocation2 + $0x38] sm:$0xff] %v357
    %403 = vst [vmem:[#allocation2 + $0x40] sm:$0xff] %v248
    %404 = vst [vmem:[#allocation2 + $0x48] sm:$0xff] %v250
    %405 = vst [vmem:[#allocation2 + $0x50] sm:$0xff] %v361
    %406 = vst [vmem:[#allocation2 + $0x58] sm:$0xff] %v363
    %407 = vst [vmem:[#allocation2 + $0x60] sm:$0xff] %v254
    %408 = vst [vmem:[#allocation2 + $0x68] sm:$0xff] %v256
    %409 = vst [vmem:[#allocation2 + $0x70] sm:$0xff] %v367
    %410 = vst [vmem:[#allocation2 + $0x78] sm:$0xff] %v369
    %411 = vst [vmem:[#allocation2 + $0x80] sm:$0xff] %v260
    %412 = vst [vmem:[#allocation2 + $0x88] sm:$0xff] %v262
    %413 = vst [vmem:[#allocation2 + $0x90] sm:$0xff] %v373
    %414 = vst [vmem:[#allocation2 + $0x98] sm:$0xff] %v375
    %415 = vst [vmem:[#allocation2 + $0xa0] sm:$0xff] %v266
    %416 = vst [vmem:[#allocation2 + $0xa8] sm:$0xff] %v268
    %417 = vst [vmem:[#allocation2 + $0xb0] sm:$0xff] %v379
    %418 = vst [vmem:[#allocation2 + $0xb8] sm:$0xff] %v381
    %419 = vst [vmem:[#allocation2 + $0xc0] sm:$0xff] %v272
    %420 = vst [vmem:[#allocation2 + $0xc8] sm:$0xff] %v274
    %421 = vst [vmem:[#allocation2 + $0xd0] sm:$0xff] %v385
    %422 = vst [vmem:[#allocation2 + $0xd8] sm:$0xff] %v387
    %423 = vst [vmem:[#allocation2 + $0xe0] sm:$0xff] %v278
    %424 = vst [vmem:[#allocation2 + $0xe8] sm:$0xff] %v280
    %425 = vst [vmem:[#allocation2 + $0xf0] sm:$0xff] %v391
    %426 = vst [vmem:[#allocation2 + $0xf8] sm:$0xff] %v393
    %v427 = vld [vmem:[#allocation12] sm:$0xf]
    %v429 = vlaneseq
    %v430 = vshrl.u32 %v429, 7
    %v431 = vsub.s32 0, %v430
    %v432 = vrot.slane %v427, %v431
    %v433 = vlaneseq
    %v434 = vshrl.u32 %v433, 7
    %v435 = vsub.s32 1, %v434
    %v436 = vrot.slane %v427, %v435
    %v437 = vlaneseq
    %v438 = vshrl.u32 %v437, 7
    %v439 = vsub.s32 2, %v438
    %v440 = vrot.slane %v427, %v439
    %v441 = vlaneseq
    %v442 = vshrl.u32 %v441, 7
    %v443 = vsub.s32 3, %v442
    %v444 = vrot.slane %v427, %v443
    %v449 = vld [vmem:[#allocation3] sm:$0xff]
    %s450 = scalar_lea.vmem [#allocation3], 8
    %v451 = vld [vmem:[%s450] sm:$0xff]
    %v452 = vld [vmem:[#allocation4] sm:$0xff]
    %s453 = scalar_lea.vmem [#allocation4], 8
    %v454 = vld [vmem:[%s453] sm:$0xff]
    %v455 = vld [vmem:[#allocation2] sm:$0xff]
    %v456 = vld [vmem:[#allocation2 + $0x8] sm:$0xff]
    %v457 = vld [vmem:[#allocation2 + $0x10] sm:$0xff]
    %v458 = vld [vmem:[#allocation2 + $0x18] sm:$0xff]
    %v459 = vld [vmem:[#allocation9] sm:$0xff]
    %v460 = vld [vmem:[#allocation9 + $0x8] sm:$0xff]
    %v461 = vld [vmem:[#allocation9 + $0x10] sm:$0xff]
    %v462 = vld [vmem:[#allocation9 + $0x18] sm:$0xff]
    %v463 = vld [vmem:[#allocation9 + $0x20] sm:$0xff]
    %v464 = vld [vmem:[#allocation9 + $0x28] sm:$0xff]
    %v465 = vld [vmem:[#allocation9 + $0x30] sm:$0xff]
    %v466 = vld [vmem:[#allocation9 + $0x38] sm:$0xff]
    %v467 = vld [vmem:[#allocation9 + $0x40] sm:$0xff]
    %v468 = vld [vmem:[#allocation9 + $0x48] sm:$0xff]
    %v469 = vld [vmem:[#allocation9 + $0x50] sm:$0xff]
    %v470 = vld [vmem:[#allocation9 + $0x58] sm:$0xff]
    %v471 = vld [vmem:[#allocation9 + $0x60] sm:$0xff]
    %v472 = vld [vmem:[#allocation9 + $0x68] sm:$0xff]
    %v473 = vld [vmem:[#allocation9 + $0x70] sm:$0xff]
    %v474 = vld [vmem:[#allocation9 + $0x78] sm:$0xff]
    %v475 = vld [vmem:[#allocation9 + $0x80] sm:$0xff]
    %v476 = vld [vmem:[#allocation9 + $0x88] sm:$0xff]
    %v477 = vld [vmem:[#allocation9 + $0x90] sm:$0xff]
    %v478 = vld [vmem:[#allocation9 + $0x98] sm:$0xff]
    %v479 = vld [vmem:[#allocation9 + $0xa0] sm:$0xff]
    %v480 = vld [vmem:[#allocation9 + $0xa8] sm:$0xff]
    %v481 = vld [vmem:[#allocation9 + $0xb0] sm:$0xff]
    %v482 = vld [vmem:[#allocation9 + $0xb8] sm:$0xff]
    %v483 = vld [vmem:[#allocation9 + $0xc0] sm:$0xff]
    %v484 = vld [vmem:[#allocation9 + $0xc8] sm:$0xff]
    %v485 = vld [vmem:[#allocation9 + $0xd0] sm:$0xff]
    %v486 = vld [vmem:[#allocation9 + $0xd8] sm:$0xff]
    %v487 = vld [vmem:[#allocation9 + $0xe0] sm:$0xff]
    %v488 = vld [vmem:[#allocation9 + $0xe8] sm:$0xff]
    %v489 = vld [vmem:[#allocation9 + $0xf0] sm:$0xff]
    %v490 = vld [vmem:[#allocation9 + $0xf8] sm:$0xff]
    %v491 = vld [vmem:[#allocation9 + $0x100] sm:$0xff]
    %v492 = vld [vmem:[#allocation9 + $0x108] sm:$0xff]
    %v493 = vld [vmem:[#allocation9 + $0x110] sm:$0xff]
    %v494 = vld [vmem:[#allocation9 + $0x118] sm:$0xff]
    %v495 = vld [vmem:[#allocation9 + $0x120] sm:$0xff]
    %v496 = vld [vmem:[#allocation9 + $0x128] sm:$0xff]
    %v497 = vld [vmem:[#allocation9 + $0x130] sm:$0xff]
    %v498 = vld [vmem:[#allocation9 + $0x138] sm:$0xff]
    %v499 = vld [vmem:[#allocation9 + $0x140] sm:$0xff]
    %v500 = vld [vmem:[#allocation9 + $0x148] sm:$0xff]
    %v501 = vld [vmem:[#allocation9 + $0x150] sm:$0xff]
    %v502 = vld [vmem:[#allocation9 + $0x158] sm:$0xff]
    %v503 = vld [vmem:[#allocation9 + $0x160] sm:$0xff]
    %v504 = vld [vmem:[#allocation9 + $0x168] sm:$0xff]
    %v505 = vld [vmem:[#allocation9 + $0x170] sm:$0xff]
    %v506 = vld [vmem:[#allocation9 + $0x178] sm:$0xff]
    %v507 = vld [vmem:[#allocation9 + $0x180] sm:$0xff]
    %v508 = vld [vmem:[#allocation9 + $0x188] sm:$0xff]
    %v509 = vld [vmem:[#allocation9 + $0x190] sm:$0xff]
    %v510 = vld [vmem:[#allocation9 + $0x198] sm:$0xff]
    %v511 = vld [vmem:[#allocation9 + $0x1a0] sm:$0xff]
    %v512 = vld [vmem:[#allocation9 + $0x1a8] sm:$0xff]
    %v513 = vld [vmem:[#allocation9 + $0x1b0] sm:$0xff]
    %v514 = vld [vmem:[#allocation9 + $0x1b8] sm:$0xff]
    %v515 = vld [vmem:[#allocation9 + $0x1c0] sm:$0xff]
    %v516 = vld [vmem:[#allocation9 + $0x1c8] sm:$0xff]
    %v517 = vld [vmem:[#allocation9 + $0x1d0] sm:$0xff]
    %v518 = vld [vmem:[#allocation9 + $0x1d8] sm:$0xff]
    %v519 = vld [vmem:[#allocation9 + $0x1e0] sm:$0xff]
    %v520 = vld [vmem:[#allocation9 + $0x1e8] sm:$0xff]
    %v521 = vld [vmem:[#allocation9 + $0x1f0] sm:$0xff]
    %v522 = vld [vmem:[#allocation9 + $0x1f8] sm:$0xff]
    %523 = vmatprep.subr.mxu0 %v460
    %524 = vmatpush1.msra.mxu0 %v459
    %525 = vmatprep.subr.mxu0 %v464
    %526 = vmatpush1.msra.mxu0 %v463
    %527 = vmatprep.subr.mxu0 %v468
    %528 = vmatpush1.msra.mxu0 %v467
    %529 = vmatprep.subr.mxu0 %v472
    %530 = vmatpush1.msra.mxu0 %v471
    %531 = vmatprep.subr.mxu0 %v476
    %532 = vmatpush1.msra.mxu0 %v475
    %533 = vmatprep.subr.mxu0 %v480
    %534 = vmatpush1.msra.mxu0 %v479
    %535 = vmatprep.subr.mxu0 %v484
    %536 = vmatpush1.msra.mxu0 %v483
    %537 = vmatprep.subr.mxu0 %v488
    %538 = vmatpush1.msra.mxu0 %v487
    %539 = vmatprep.subr.mxu0 %v492
    %540 = vmatpush1.msra.mxu0 %v491
    %541 = vmatprep.subr.mxu0 %v496
    %542 = vmatpush1.msra.mxu0 %v495
    %543 = vmatprep.subr.mxu0 %v500
    %544 = vmatpush1.msra.mxu0 %v499
    %545 = vmatprep.subr.mxu0 %v504
    %546 = vmatpush1.msra.mxu0 %v503
    %547 = vmatprep.subr.mxu0 %v508
    %548 = vmatpush1.msra.mxu0 %v507
    %549 = vmatprep.subr.mxu0 %v512
    %550 = vmatpush1.msra.mxu0 %v511
    %551 = vmatprep.subr.mxu0 %v516
    %552 = vmatpush1.msra.mxu0 %v515
    %553 = vmatprep.subr.mxu0 %v520
    %554 = vmatpush1.msra.mxu0 %v519
    %555 = vmatprep.subr.mxu0 0.0
    %556 = vmatpush1.msra.mxu0 0.0
    %557 = vmatprep.subr.mxu0 0.0
    %558 = vmatpush1.msra.mxu0 0.0
    %559 = vmatprep.subr.mxu0 0.0
    %560 = vmatpush1.msra.mxu0 0.0
    %561 = vmatprep.subr.mxu0 0.0
    %562 = vmatpush1.msra.mxu0 0.0
    %563 = vmatprep.subr.mxu0 0.0
    %564 = vmatpush1.msra.mxu0 0.0
    %565 = vmatprep.subr.mxu0 0.0
    %566 = vmatpush1.msra.mxu0 0.0
    %567 = vmatprep.subr.mxu0 0.0
    %568 = vmatpush1.msra.mxu0 0.0
    %569 = vmatprep.subr.mxu0 0.0
    %570 = vmatpush1.msra.mxu0 0.0
    %571 = vmatprep.subr.mxu0 0.0
    %572 = vmatpush1.msra.mxu0 0.0
    %573 = vmatprep.subr.mxu0 0.0
    %574 = vmatpush1.msra.mxu0 0.0
    %575 = vmatprep.subr.mxu0 0.0
    %576 = vmatpush1.msra.mxu0 0.0
    %577 = vmatprep.subr.mxu0 0.0
    %578 = vmatpush1.msra.mxu0 0.0
    %579 = vmatprep.subr.mxu0 0.0
    %580 = vmatpush1.msra.mxu0 0.0
    %581 = vmatprep.subr.mxu0 0.0
    %582 = vmatpush1.msra.mxu0 0.0
    %583 = vmatprep.subr.mxu0 0.0
    %584 = vmatpush1.msra.mxu0 0.0
    %585 = vmatprep.subr.mxu0 0.0
    %586 = vmatpush1.msra.mxu0 0.0
    %587 = vmatprep.mubr.f32.mxu0 0.0
    %588 = vmatmul.mubr.f32.gmra.mrb[0].mxu0 %v449
    %v589 = vpop.f32.mrb[0].mxu0
    %v590 = vadd.f32 0.0, %v589
    %v591 = vpop.f32.mrb[0].mxu0
    %v592 = vadd.f32 0.0, %v591
    %593 = vdwg.mxu0
    %594 = vmatprep.subr.mxu0 %v462
    %595 = vmatpush1.msra.mxu0 %v461
    %596 = vmatprep.subr.mxu0 %v466
    %597 = vmatpush1.msra.mxu0 %v465
    %598 = vmatprep.subr.mxu0 %v470
    %599 = vmatpush1.msra.mxu0 %v469
    %600 = vmatprep.subr.mxu0 %v474
    %601 = vmatpush1.msra.mxu0 %v473
    %602 = vmatprep.subr.mxu0 %v478
    %603 = vmatpush1.msra.mxu0 %v477
    %604 = vmatprep.subr.mxu0 %v482
    %605 = vmatpush1.msra.mxu0 %v481
    %606 = vmatprep.subr.mxu0 %v486
    %607 = vmatpush1.msra.mxu0 %v485
    %608 = vmatprep.subr.mxu0 %v490
    %609 = vmatpush1.msra.mxu0 %v489
    %610 = vmatprep.subr.mxu0 %v494
    %611 = vmatpush1.msra.mxu0 %v493
    %612 = vmatprep.subr.mxu0 %v498
    %613 = vmatpush1.msra.mxu0 %v497
    %614 = vmatprep.subr.mxu0 %v502
    %615 = vmatpush1.msra.mxu0 %v501
    %616 = vmatprep.subr.mxu0 %v506
    %617 = vmatpush1.msra.mxu0 %v505
    %618 = vmatprep.subr.mxu0 %v510
    %619 = vmatpush1.msra.mxu0 %v509
    %620 = vmatprep.subr.mxu0 %v514
    %621 = vmatpush1.msra.mxu0 %v513
    %622 = vmatprep.subr.mxu0 %v518
    %623 = vmatpush1.msra.mxu0 %v517
    %624 = vmatprep.subr.mxu0 %v522
    %625 = vmatpush1.msra.mxu0 %v521
    %626 = vmatprep.subr.mxu0 0.0
    %627 = vmatpush1.msra.mxu0 0.0
    %628 = vmatprep.subr.mxu0 0.0
    %629 = vmatpush1.msra.mxu0 0.0
    %630 = vmatprep.subr.mxu0 0.0
    %631 = vmatpush1.msra.mxu0 0.0
    %632 = vmatprep.subr.mxu0 0.0
    %633 = vmatpush1.msra.mxu0 0.0
    %634 = vmatprep.subr.mxu0 0.0
    %635 = vmatpush1.msra.mxu0 0.0
    %636 = vmatprep.subr.mxu0 0.0
    %637 = vmatpush1.msra.mxu0 0.0
    %638 = vmatprep.subr.mxu0 0.0
    %639 = vmatpush1.msra.mxu0 0.0
    %640 = vmatprep.subr.mxu0 0.0
    %641 = vmatpush1.msra.mxu0 0.0
    %642 = vmatprep.subr.mxu0 0.0
    %643 = vmatpush1.msra.mxu0 0.0
    %644 = vmatprep.subr.mxu0 0.0
    %645 = vmatpush1.msra.mxu0 0.0
    %646 = vmatprep.subr.mxu0 0.0
    %647 = vmatpush1.msra.mxu0 0.0
    %648 = vmatprep.subr.mxu0 0.0
    %649 = vmatpush1.msra.mxu0 0.0
    %650 = vmatprep.subr.mxu0 0.0
    %651 = vmatpush1.msra.mxu0 0.0
    %652 = vmatprep.subr.mxu0 0.0
    %653 = vmatpush1.msra.mxu0 0.0
    %654 = vmatprep.subr.mxu0 0.0
    %655 = vmatpush1.msra.mxu0 0.0
    %656 = vmatprep.subr.mxu0 0.0
    %657 = vmatpush1.msra.mxu0 0.0
    %658 = vmatprep.mubr.f32.mxu0 0.0
    %659 = vmatmul.mubr.f32.gmra.mrb[0].mxu0 %v449
    %v660 = vpop.f32.mrb[0].mxu0
    %v661 = vadd.f32 0.0, %v660
    %v662 = vpop.f32.mrb[0].mxu0
    %v663 = vadd.f32 0.0, %v662
    %664 = vdwg.mxu0
    %v665 = vadd.f32 %v455, %v590
    %v666 = vadd.f32 %v456, %v592
    %v667 = vadd.f32 %v457, %v661
    %v668 = vadd.f32 %v458, %v663
    %v669 = vxor.u32 %v665, 2147483648
    %v670 = vxor.u32 %v666, 2147483648
    %v671 = vxor.u32 %v667, 2147483648
    %v672 = vmul.f32 %v669, 1.442695
    %v673 = vpow.pop %v672
    %v674 = vmul.f32 %v670, 1.442695
    %v675 = vpow.pop %v674
    %v676 = vmul.f32 %v671, 1.442695
    %v677 = vpow.pop %v676
    %v678 = vadd.f32 %v673, 1.0
    %v679 = vadd.f32 %v675, 1.0
    %v680 = vadd.f32 %v677, 1.0
    %v681 = vrcp.pop %v678
    %v682 = vmul.f32 1.0, %v681
    %v683 = vrcp.pop %v679
    %v684 = vmul.f32 1.0, %v683
    %v685 = vrcp.pop %v680
    %v686 = vmul.f32 1.0, %v685
    %v687 = vtanh.pop %v668
    %v688 = vmul.f32 %v684, %v452
    %v689 = vmul.f32 %v682, %v687
    %v690 = vadd.f32 %v688, %v689
    %v691 = vtanh.pop %v690
    %v692 = vmul.f32 %v686, %v691
    %v693 = vld [vmem:[#allocation10] sm:$0xff]
    %v694 = vld [vmem:[#allocation10 + $0x8] sm:$0xff]
    %v695 = vld [vmem:[#allocation10 + $0x10] sm:$0xff]
    %v696 = vld [vmem:[#allocation10 + $0x18] sm:$0xff]
    %v697 = vld [vmem:[#allocation10 + $0x20] sm:$0xff]
    %v698 = vld [vmem:[#allocation10 + $0x28] sm:$0xff]
    %v699 = vld [vmem:[#allocation10 + $0x30] sm:$0xff]
    %v700 = vld [vmem:[#allocation10 + $0x38] sm:$0xff]
    %v701 = vld [vmem:[#allocation10 + $0x40] sm:$0xff]
    %v702 = vld [vmem:[#allocation10 + $0x48] sm:$0xff]
    %v703 = vld [vmem:[#allocation10 + $0x50] sm:$0xff]
    %v704 = vld [vmem:[#allocation10 + $0x58] sm:$0xff]
    %v705 = vld [vmem:[#allocation10 + $0x60] sm:$0xff]
    %v706 = vld [vmem:[#allocation10 + $0x68] sm:$0xff]
    %v707 = vld [vmem:[#allocation10 + $0x70] sm:$0xff]
    %v708 = vld [vmem:[#allocation10 + $0x78] sm:$0xff]
    %v709 = vld [vmem:[#allocation10 + $0x80] sm:$0xff]
    %v710 = vld [vmem:[#allocation10 + $0x88] sm:$0xff]
    %v711 = vld [vmem:[#allocation10 + $0x90] sm:$0xff]
    %v712 = vld [vmem:[#allocation10 + $0x98] sm:$0xff]
    %v713 = vld [vmem:[#allocation10 + $0xa0] sm:$0xff]
    %v714 = vld [vmem:[#allocation10 + $0xa8] sm:$0xff]
    %v715 = vld [vmem:[#allocation10 + $0xb0] sm:$0xff]
    %v716 = vld [vmem:[#allocation10 + $0xb8] sm:$0xff]
    %v717 = vld [vmem:[#allocation10 + $0xc0] sm:$0xff]
    %v718 = vld [vmem:[#allocation10 + $0xc8] sm:$0xff]
    %v719 = vld [vmem:[#allocation10 + $0xd0] sm:$0xff]
    %v720 = vld [vmem:[#allocation10 + $0xd8] sm:$0xff]
    %v721 = vld [vmem:[#allocation10 + $0xe0] sm:$0xff]
    %v722 = vld [vmem:[#allocation10 + $0xe8] sm:$0xff]
    %v723 = vld [vmem:[#allocation10 + $0xf0] sm:$0xff]
    %v724 = vld [vmem:[#allocation10 + $0xf8] sm:$0xff]
    %v725 = vld [vmem:[#allocation10 + $0x100] sm:$0xff]
    %v726 = vld [vmem:[#allocation10 + $0x108] sm:$0xff]
    %v727 = vld [vmem:[#allocation10 + $0x110] sm:$0xff]
    %v728 = vld [vmem:[#allocation10 + $0x118] sm:$0xff]
    %v729 = vld [vmem:[#allocation10 + $0x120] sm:$0xff]
    %v730 = vld [vmem:[#allocation10 + $0x128] sm:$0xff]
    %v731 = vld [vmem:[#allocation10 + $0x130] sm:$0xff]
    %v732 = vld [vmem:[#allocation10 + $0x138] sm:$0xff]
    %v733 = vld [vmem:[#allocation10 + $0x140] sm:$0xff]
    %v734 = vld [vmem:[#allocation10 + $0x148] sm:$0xff]
    %v735 = vld [vmem:[#allocation10 + $0x150] sm:$0xff]
    %v736 = vld [vmem:[#allocation10 + $0x158] sm:$0xff]
    %v737 = vld [vmem:[#allocation10 + $0x160] sm:$0xff]
    %v738 = vld [vmem:[#allocation10 + $0x168] sm:$0xff]
    %v739 = vld [vmem:[#allocation10 + $0x170] sm:$0xff]
    %v740 = vld [vmem:[#allocation10 + $0x178] sm:$0xff]
    %v741 = vld [vmem:[#allocation10 + $0x180] sm:$0xff]
    %v742 = vld [vmem:[#allocation10 + $0x188] sm:$0xff]
    %v743 = vld [vmem:[#allocation10 + $0x190] sm:$0xff]
    %v744 = vld [vmem:[#allocation10 + $0x198] sm:$0xff]
    %v745 = vld [vmem:[#allocation10 + $0x1a0] sm:$0xff]
    %v746 = vld [vmem:[#allocation10 + $0x1a8] sm:$0xff]
    %v747 = vld [vmem:[#allocation10 + $0x1b0] sm:$0xff]
    %v748 = vld [vmem:[#allocation10 + $0x1b8] sm:$0xff]
    %v749 = vld [vmem:[#allocation10 + $0x1c0] sm:$0xff]
    %v750 = vld [vmem:[#allocation10 + $0x1c8] sm:$0xff]
    %v751 = vld [vmem:[#allocation10 + $0x1d0] sm:$0xff]
    %v752 = vld [vmem:[#allocation10 + $0x1d8] sm:$0xff]
    %v753 = vld [vmem:[#allocation10 + $0x1e0] sm:$0xff]
    %v754 = vld [vmem:[#allocation10 + $0x1e8] sm:$0xff]
    %v755 = vld [vmem:[#allocation10 + $0x1f0] sm:$0xff]
    %v756 = vld [vmem:[#allocation10 + $0x1f8] sm:$0xff]
    %v757 = vld [vmem:[#allocation10 + $0x200] sm:$0xff]
    %v758 = vld [vmem:[#allocation10 + $0x208] sm:$0xff]
    %v759 = vld [vmem:[#allocation10 + $0x210] sm:$0xff]
    %v760 = vld [vmem:[#allocation10 + $0x218] sm:$0xff]
    %v761 = vld [vmem:[#allocation10 + $0x220] sm:$0xff]
    %v762 = vld [vmem:[#allocation10 + $0x228] sm:$0xff]
    %v763 = vld [vmem:[#allocation10 + $0x230] sm:$0xff]
    %v764 = vld [vmem:[#allocation10 + $0x238] sm:$0xff]
    %v765 = vld [vmem:[#allocation10 + $0x240] sm:$0xff]
    %v766 = vld [vmem:[#allocation10 + $0x248] sm:$0xff]
    %v767 = vld [vmem:[#allocation10 + $0x250] sm:$0xff]
    %v768 = vld [vmem:[#allocation10 + $0x258] sm:$0xff]
    %v769 = vld [vmem:[#allocation10 + $0x260] sm:$0xff]
    %v770 = vld [vmem:[#allocation10 + $0x268] sm:$0xff]
    %v771 = vld [vmem:[#allocation10 + $0x270] sm:$0xff]
    %v772 = vld [vmem:[#allocation10 + $0x278] sm:$0xff]
    %v773 = vld [vmem:[#allocation10 + $0x280] sm:$0xff]
    %v774 = vld [vmem:[#allocation10 + $0x288] sm:$0xff]
    %v775 = vld [vmem:[#allocation10 + $0x290] sm:$0xff]
    %v776 = vld [vmem:[#allocation10 + $0x298] sm:$0xff]
    %v777 = vld [vmem:[#allocation10 + $0x2a0] sm:$0xff]
    %v778 = vld [vmem:[#allocation10 + $0x2a8] sm:$0xff]
    %v779 = vld [vmem:[#allocation10 + $0x2b0] sm:$0xff]
    %v780 = vld [vmem:[#allocation10 + $0x2b8] sm:$0xff]
    %v781 = vld [vmem:[#allocation10 + $0x2c0] sm:$0xff]
    %v782 = vld [vmem:[#allocation10 + $0x2c8] sm:$0xff]
    %v783 = vld [vmem:[#allocation10 + $0x2d0] sm:$0xff]
    %v784 = vld [vmem:[#allocation10 + $0x2d8] sm:$0xff]
    %v785 = vld [vmem:[#allocation10 + $0x2e0] sm:$0xff]
    %v786 = vld [vmem:[#allocation10 + $0x2e8] sm:$0xff]
    %v787 = vld [vmem:[#allocation10 + $0x2f0] sm:$0xff]
    %v788 = vld [vmem:[#allocation10 + $0x2f8] sm:$0xff]
    %v789 = vld [vmem:[#allocation10 + $0x300] sm:$0xff]
    %v790 = vld [vmem:[#allocation10 + $0x308] sm:$0xff]
    %v791 = vld [vmem:[#allocation10 + $0x310] sm:$0xff]
    %v792 = vld [vmem:[#allocation10 + $0x318] sm:$0xff]
    %v793 = vld [vmem:[#allocation10 + $0x320] sm:$0xff]
    %v794 = vld [vmem:[#allocation10 + $0x328] sm:$0xff]
    %v795 = vld [vmem:[#allocation10 + $0x330] sm:$0xff]
    %v796 = vld [vmem:[#allocation10 + $0x338] sm:$0xff]
    %v797 = vld [vmem:[#allocation10 + $0x340] sm:$0xff]
    %v798 = vld [vmem:[#allocation10 + $0x348] sm:$0xff]
    %v799 = vld [vmem:[#allocation10 + $0x350] sm:$0xff]
    %v800 = vld [vmem:[#allocation10 + $0x358] sm:$0xff]
    %v801 = vld [vmem:[#allocation10 + $0x360] sm:$0xff]
    %v802 = vld [vmem:[#allocation10 + $0x368] sm:$0xff]
    %v803 = vld [vmem:[#allocation10 + $0x370] sm:$0xff]
    %v804 = vld [vmem:[#allocation10 + $0x378] sm:$0xff]
    %v805 = vld [vmem:[#allocation10 + $0x380] sm:$0xff]
    %v806 = vld [vmem:[#allocation10 + $0x388] sm:$0xff]
    %v807 = vld [vmem:[#allocation10 + $0x390] sm:$0xff]
    %v808 = vld [vmem:[#allocation10 + $0x398] sm:$0xff]
    %v809 = vld [vmem:[#allocation10 + $0x3a0] sm:$0xff]
    %v810 = vld [vmem:[#allocation10 + $0x3a8] sm:$0xff]
    %v811 = vld [vmem:[#allocation10 + $0x3b0] sm:$0xff]
    %v812 = vld [vmem:[#allocation10 + $0x3b8] sm:$0xff]
    %v813 = vld [vmem:[#allocation10 + $0x3c0] sm:$0xff]
    %v814 = vld [vmem:[#allocation10 + $0x3c8] sm:$0xff]
    %v815 = vld [vmem:[#allocation10 + $0x3d0] sm:$0xff]
    %v816 = vld [vmem:[#allocation10 + $0x3d8] sm:$0xff]
    %v817 = vld [vmem:[#allocation10 + $0x3e0] sm:$0xff]
    %v818 = vld [vmem:[#allocation10 + $0x3e8] sm:$0xff]
    %v819 = vld [vmem:[#allocation10 + $0x3f0] sm:$0xff]
    %v820 = vld [vmem:[#allocation10 + $0x3f8] sm:$0xff]
    %821 = vmatprep.subr.mxu0 %v694
    %822 = vmatpush1.msra.mxu0 %v693
    %823 = vmatprep.subr.mxu0 %v698
    %824 = vmatpush1.msra.mxu0 %v697
    %825 = vmatprep.subr.mxu0 %v702
    %826 = vmatpush1.msra.mxu0 %v701
    %827 = vmatprep.subr.mxu0 %v706
    %828 = vmatpush1.msra.mxu0 %v705
    %829 = vmatprep.subr.mxu0 %v710
    %830 = vmatpush1.msra.mxu0 %v709
    %831 = vmatprep.subr.mxu0 %v714
    %832 = vmatpush1.msra.mxu0 %v713
    %833 = vmatprep.subr.mxu0 %v718
    %834 = vmatpush1.msra.mxu0 %v717
    %835 = vmatprep.subr.mxu0 %v722
    %836 = vmatpush1.msra.mxu0 %v721
    %837 = vmatprep.subr.mxu0 %v726
    %838 = vmatpush1.msra.mxu0 %v725
    %839 = vmatprep.subr.mxu0 %v730
    %840 = vmatpush1.msra.mxu0 %v729
    %841 = vmatprep.subr.mxu0 %v734
    %842 = vmatpush1.msra.mxu0 %v733
    %843 = vmatprep.subr.mxu0 %v738
    %844 = vmatpush1.msra.mxu0 %v737
    %845 = vmatprep.subr.mxu0 %v742
    %846 = vmatpush1.msra.mxu0 %v741
    %847 = vmatprep.subr.mxu0 %v746
    %848 = vmatpush1.msra.mxu0 %v745
    %849 = vmatprep.subr.mxu0 %v750
    %850 = vmatpush1.msra.mxu0 %v749
    %851 = vmatprep.subr.mxu0 %v754
    %852 = vmatpush1.msra.mxu0 %v753
    %853 = vmatprep.subr.mxu0 %v758
    %854 = vmatpush1.msra.mxu0 %v757
    %855 = vmatprep.subr.mxu0 %v762
    %856 = vmatpush1.msra.mxu0 %v761
    %857 = vmatprep.subr.mxu0 %v766
    %858 = vmatpush1.msra.mxu0 %v765
    %859 = vmatprep.subr.mxu0 %v770
    %860 = vmatpush1.msra.mxu0 %v769
    %861 = vmatprep.subr.mxu0 %v774
    %862 = vmatpush1.msra.mxu0 %v773
    %863 = vmatprep.subr.mxu0 %v778
    %864 = vmatpush1.msra.mxu0 %v777
    %865 = vmatprep.subr.mxu0 %v782
    %866 = vmatpush1.msra.mxu0 %v781
    %867 = vmatprep.subr.mxu0 %v786
    %868 = vmatpush1.msra.mxu0 %v785
    %869 = vmatprep.subr.mxu0 %v790
    %870 = vmatpush1.msra.mxu0 %v789
    %871 = vmatprep.subr.mxu0 %v794
    %872 = vmatpush1.msra.mxu0 %v793
    %873 = vmatprep.subr.mxu0 %v798
    %874 = vmatpush1.msra.mxu0 %v797
    %875 = vmatprep.subr.mxu0 %v802
    %876 = vmatpush1.msra.mxu0 %v801
    %877 = vmatprep.subr.mxu0 %v806
    %878 = vmatpush1.msra.mxu0 %v805
    %879 = vmatprep.subr.mxu0 %v810
    %880 = vmatpush1.msra.mxu0 %v809
    %881 = vmatprep.subr.mxu0 %v814
    %882 = vmatpush1.msra.mxu0 %v813
    %883 = vmatprep.subr.mxu0 %v818
    %884 = vmatpush1.msra.mxu0 %v817
    %885 = vmatprep.mubr.f32.mxu0 %v451
    %886 = vmatmul.mubr.f32.gmra.mrb[0].mxu0 %v692
    %v887 = vpop.f32.mrb[0].mxu0
    %v888 = vadd.f32 %v432, %v887
    %v889 = vpop.f32.mrb[0].mxu0
    %v890 = vadd.f32 %v436, %v889
    %891 = vdwg.mxu0
    %892 = vmatprep.subr.mxu0 %v696
    %893 = vmatpush1.msra.mxu0 %v695
    %894 = vmatprep.subr.mxu0 %v700
    %895 = vmatpush1.msra.mxu0 %v699
    %896 = vmatprep.subr.mxu0 %v704
    %897 = vmatpush1.msra.mxu0 %v703
    %898 = vmatprep.subr.mxu0 %v708
    %899 = vmatpush1.msra.mxu0 %v707
    %900 = vmatprep.subr.mxu0 %v712
    %901 = vmatpush1.msra.mxu0 %v711
    %902 = vmatprep.subr.mxu0 %v716
    %903 = vmatpush1.msra.mxu0 %v715
    %904 = vmatprep.subr.mxu0 %v720
    %905 = vmatpush1.msra.mxu0 %v719
    %906 = vmatprep.subr.mxu0 %v724
    %907 = vmatpush1.msra.mxu0 %v723
    %908 = vmatprep.subr.mxu0 %v728
    %909 = vmatpush1.msra.mxu0 %v727
    %910 = vmatprep.subr.mxu0 %v732
    %911 = vmatpush1.msra.mxu0 %v731
    %912 = vmatprep.subr.mxu0 %v736
    %913 = vmatpush1.msra.mxu0 %v735
    %914 = vmatprep.subr.mxu0 %v740
    %915 = vmatpush1.msra.mxu0 %v739
    %916 = vmatprep.subr.mxu0 %v744
    %917 = vmatpush1.msra.mxu0 %v743
    %918 = vmatprep.subr.mxu0 %v748
    %919 = vmatpush1.msra.mxu0 %v747
    %920 = vmatprep.subr.mxu0 %v752
    %921 = vmatpush1.msra.mxu0 %v751
    %922 = vmatprep.subr.mxu0 %v756
    %923 = vmatpush1.msra.mxu0 %v755
    %924 = vmatprep.subr.mxu0 %v760
    %925 = vmatpush1.msra.mxu0 %v759
    %926 = vmatprep.subr.mxu0 %v764
    %927 = vmatpush1.msra.mxu0 %v763
    %928 = vmatprep.subr.mxu0 %v768
    %929 = vmatpush1.msra.mxu0 %v767
    %930 = vmatprep.subr.mxu0 %v772
    %931 = vmatpush1.msra.mxu0 %v771
    %932 = vmatprep.subr.mxu0 %v776
    %933 = vmatpush1.msra.mxu0 %v775
    %934 = vmatprep.subr.mxu0 %v780
    %935 = vmatpush1.msra.mxu0 %v779
    %936 = vmatprep.subr.mxu0 %v784
    %937 = vmatpush1.msra.mxu0 %v783
    %938 = vmatprep.subr.mxu0 %v788
    %939 = vmatpush1.msra.mxu0 %v787
    %940 = vmatprep.subr.mxu0 %v792
    %941 = vmatpush1.msra.mxu0 %v791
    %942 = vmatprep.subr.mxu0 %v796
    %943 = vmatpush1.msra.mxu0 %v795
    %944 = vmatprep.subr.mxu0 %v800
    %945 = vmatpush1.msra.mxu0 %v799
    %946 = vmatprep.subr.mxu0 %v804
    %947 = vmatpush1.msra.mxu0 %v803
    %948 = vmatprep.subr.mxu0 %v808
    %949 = vmatpush1.msra.mxu0 %v807
    %950 = vmatprep.subr.mxu0 %v812
    %951 = vmatpush1.msra.mxu0 %v811
    %952 = vmatprep.subr.mxu0 %v816
    %953 = vmatpush1.msra.mxu0 %v815
    %954 = vmatprep.subr.mxu0 %v820
    %955 = vmatpush1.msra.mxu0 %v819
    %956 = vmatprep.mubr.f32.mxu0 %v451
    %957 = vmatmul.mubr.f32.gmra.mrb[0].mxu0 %v692
    %v958 = vpop.f32.mrb[0].mxu0
    %v959 = vadd.f32 %v440, %v958
    %v960 = vpop.f32.mrb[0].mxu0
    %v961 = vadd.f32 %v444, %v960
    %962 = vdwg.mxu0
    %v963 = vxor.u32 %v888, 2147483648
    %v964 = vxor.u32 %v890, 2147483648
    %v965 = vxor.u32 %v959, 2147483648
    %v966 = vmul.f32 %v963, 1.442695
    %v967 = vpow.pop %v966
    %v968 = vmul.f32 %v964, 1.442695
    %v969 = vpow.pop %v968
    %v970 = vmul.f32 %v965, 1.442695
    %v971 = vpow.pop %v970
    %v972 = vadd.f32 %v967, 1.0
    %v973 = vadd.f32 %v969, 1.0
    %v974 = vadd.f32 %v971, 1.0
    %v975 = vrcp.pop %v972
    %v976 = vmul.f32 1.0, %v975
    %v977 = vrcp.pop %v973
    %v978 = vmul.f32 1.0, %v977
    %v979 = vrcp.pop %v974
    %v980 = vmul.f32 1.0, %v979
    %v981 = vtanh.pop %v961
    %v982 = vmul.f32 %v978, %v454
    %v983 = vmul.f32 %v976, %v981
    %v984 = vadd.f32 %v982, %v983
    %v985 = vtanh.pop %v984
    %v986 = vmul.f32 %v980, %v985
    %v987 = vld [vmem:[#allocation2 + $0x20] sm:$0xff]
    %v988 = vld [vmem:[#allocation2 + $0x28] sm:$0xff]
    %v989 = vld [vmem:[#allocation2 + $0x30] sm:$0xff]
    %v990 = vld [vmem:[#allocation2 + $0x38] sm:$0xff]
    %991 = vmatprep.subr.mxu0 %v460
    %992 = vmatpush1.msra.mxu0 %v459
    %993 = vmatprep.subr.mxu0 %v464
    %994 = vmatpush1.msra.mxu0 %v463
    %995 = vmatprep.subr.mxu0 %v468
    %996 = vmatpush1.msra.mxu0 %v467
    %997 = vmatprep.subr.mxu0 %v472
    %998 = vmatpush1.msra.mxu0 %v471
    %999 = vmatprep.subr.mxu0 %v476
    %1000 = vmatpush1.msra.mxu0 %v475
    %1001 = vmatprep.subr.mxu0 %v480
    %1002 = vmatpush1.msra.mxu0 %v479
    %1003 = vmatprep.subr.mxu0 %v484
    %1004 = vmatpush1.msra.mxu0 %v483
    %1005 = vmatprep.subr.mxu0 %v488
    %1006 = vmatpush1.msra.mxu0 %v487
    %1007 = vmatprep.subr.mxu0 %v492
    %1008 = vmatpush1.msra.mxu0 %v491
    %1009 = vmatprep.subr.mxu0 %v496
    %1010 = vmatpush1.msra.mxu0 %v495
    %1011 = vmatprep.subr.mxu0 %v500
    %1012 = vmatpush1.msra.mxu0 %v499
    %1013 = vmatprep.subr.mxu0 %v504
    %1014 = vmatpush1.msra.mxu0 %v503
    %1015 = vmatprep.subr.mxu0 %v508
    %1016 = vmatpush1.msra.mxu0 %v507
    %1017 = vmatprep.subr.mxu0 %v512
    %1018 = vmatpush1.msra.mxu0 %v511
    %1019 = vmatprep.subr.mxu0 %v516
    %1020 = vmatpush1.msra.mxu0 %v515
    %1021 = vmatprep.subr.mxu0 %v520
    %1022 = vmatpush1.msra.mxu0 %v519
    %1023 = vmatprep.subr.mxu0 0.0
    %1024 = vmatpush1.msra.mxu0 0.0
    %1025 = vmatprep.subr.mxu0 0.0
    %1026 = vmatpush1.msra.mxu0 0.0
    %1027 = vmatprep.subr.mxu0 0.0
    %1028 = vmatpush1.msra.mxu0 0.0
    %1029 = vmatprep.subr.mxu0 0.0
    %1030 = vmatpush1.msra.mxu0 0.0
    %1031 = vmatprep.subr.mxu0 0.0
    %1032 = vmatpush1.msra.mxu0 0.0
    %1033 = vmatprep.subr.mxu0 0.0
    %1034 = vmatpush1.msra.mxu0 0.0
    %1035 = vmatprep.subr.mxu0 0.0
    %1036 = vmatpush1.msra.mxu0 0.0
    %1037 = vmatprep.subr.mxu0 0.0
    %1038 = vmatpush1.msra.mxu0 0.0
    %1039 = vmatprep.subr.mxu0 0.0
    %1040 = vmatpush1.msra.mxu0 0.0
    %1041 = vmatprep.subr.mxu0 0.0
    %1042 = vmatpush1.msra.mxu0 0.0
    %1043 = vmatprep.subr.mxu0 0.0
    %1044 = vmatpush1.msra.mxu0 0.0
    %1045 = vmatprep.subr.mxu0 0.0
    %1046 = vmatpush1.msra.mxu0 0.0
    %1047 = vmatprep.subr.mxu0 0.0
    %1048 = vmatpush1.msra.mxu0 0.0
    %1049 = vmatprep.subr.mxu0 0.0
    %1050 = vmatpush1.msra.mxu0 0.0
    %1051 = vmatprep.subr.mxu0 0.0
    %1052 = vmatpush1.msra.mxu0 0.0
    %1053 = vmatprep.subr.mxu0 0.0
    %1054 = vmatpush1.msra.mxu0 0.0
    %1055 = vmatprep.mubr.f32.mxu0 0.0
    %1056 = vmatmul.mubr.f32.gmra.mrb[0].mxu0 %v692
    %v1057 = vpop.f32.mrb[0].mxu0
    %v1058 = vadd.f32 0.0, %v1057
    %v1059 = vpop.f32.mrb[0].mxu0
    %v1060 = vadd.f32 0.0, %v1059
    %1061 = vdwg.mxu0
    %1062 = vmatprep.subr.mxu0 %v462
    %1063 = vmatpush1.msra.mxu0 %v461
    %1064 = vmatprep.subr.mxu0 %v466
    %1065 = vmatpush1.msra.mxu0 %v465
    %1066 = vmatprep.subr.mxu0 %v470
    %1067 = vmatpush1.msra.mxu0 %v469
    %1068 = vmatprep.subr.mxu0 %v474
    %1069 = vmatpush1.msra.mxu0 %v473
    %1070 = vmatprep.subr.mxu0 %v478
    %1071 = vmatpush1.msra.mxu0 %v477
    %1072 = vmatprep.subr.mxu0 %v482
    %1073 = vmatpush1.msra.mxu0 %v481
    %1074 = vmatprep.subr.mxu0 %v486
    %1075 = vmatpush1.msra.mxu0 %v485
    %1076 = vmatprep.subr.mxu0 %v490
    %1077 = vmatpush1.msra.mxu0 %v489
    %1078 = vmatprep.subr.mxu0 %v494
    %1079 = vmatpush1.msra.mxu0 %v493
    %1080 = vmatprep.subr.mxu0 %v498
    %1081 = vmatpush1.msra.mxu0 %v497
    %1082 = vmatprep.subr.mxu0 %v502
    %1083 = vmatpush1.msra.mxu0 %v501
    %1084 = vmatprep.subr.mxu0 %v506
    %1085 = vmatpush1.msra.mxu0 %v505
    %1086 = vmatprep.subr.mxu0 %v510
    %1087 = vmatpush1.msra.mxu0 %v509
    %1088 = vmatprep.subr.mxu0 %v514
    %1089 = vmatpush1.msra.mxu0 %v513
    %1090 = vmatprep.subr.mxu0 %v518
    %1091 = vmatpush1.msra.mxu0 %v517
    %1092 = vmatprep.subr.mxu0 %v522
    %1093 = vmatpush1.msra.mxu0 %v521
    %1094 = vmatprep.subr.mxu0 0.0
    %1095 = vmatpush1.msra.mxu0 0.0
    %1096 = vmatprep.subr.mxu0 0.0
    %1097 = vmatpush1.msra.mxu0 0.0
    %1098 = vmatprep.subr.mxu0 0.0
    %1099 = vmatpush1.msra.mxu0 0.0
    %1100 = vmatprep.subr.mxu0 0.0
    %1101 = vmatpush1.msra.mxu0 0.0
    %1102 = vmatprep.subr.mxu0 0.0
    %1103 = vmatpush1.msra.mxu0 0.0
    %1104 = vmatprep.subr.mxu0 0.0
    %1105 = vmatpush1.msra.mxu0 0.0
    %1106 = vmatprep.subr.mxu0 0.0
    %1107 = vmatpush1.msra.mxu0 0.0
    %1108 = vmatprep.subr.mxu0 0.0
    %1109 = vmatpush1.msra.mxu0 0.0
    %1110 = vmatprep.subr.mxu0 0.0
    %1111 = vmatpush1.msra.mxu0 0.0
    %1112 = vmatprep.subr.mxu0 0.0
    %1113 = vmatpush1.msra.mxu0 0.0
    %1114 = vmatprep.subr.mxu0 0.0
    %1115 = vmatpush1.msra.mxu0 0.0
    %1116 = vmatprep.subr.mxu0 0.0
    %1117 = vmatpush1.msra.mxu0 0.0
    %1118 = vmatprep.subr.mxu0 0.0
    %1119 = vmatpush1.msra.mxu0 0.0
    %1120 = vmatprep.subr.mxu0 0.0
    %1121 = vmatpush1.msra.mxu0 0.0
    %1122 = vmatprep.subr.mxu0 0.0
    %1123 = vmatpush1.msra.mxu0 0.0
    %1124 = vmatprep.subr.mxu0 0.0
    %1125 = vmatpush1.msra.mxu0 0.0
    %1126 = vmatprep.mubr.f32.mxu0 0.0
    %1127 = vmatmul.mubr.f32.gmra.mrb[0].mxu0 %v692
    %v1128 = vpop.f32.mrb[0].mxu0
    %v1129 = vadd.f32 0.0, %v1128
    %v1130 = vpop.f32.mrb[0].mxu0
    %v1131 = vadd.f32 0.0, %v1130
    %1132 = vdwg.mxu0
    %v1133 = vadd.f32 %v987, %v1058
    %v1134 = vadd.f32 %v988, %v1060
    %v1135 = vadd.f32 %v989, %v1129
    %v1136 = vadd.f32 %v990, %v1131
    %v1137 = vxor.u32 %v1133, 2147483648
    %v1138 = vxor.u32 %v1134, 2147483648
    %v1139 = vxor.u32 %v1135, 2147483648
    %v1140 = vmul.f32 %v1137, 1.442695
    %v1141 = vpow.pop %v1140
    %v1142 = vmul.f32 %v1138, 1.442695
    %v1143 = vpow.pop %v1142
    %v1144 = vmul.f32 %v1139, 1.442695
    %v1145 = vpow.pop %v1144
    %v1146 = vadd.f32 %v1141, 1.0
    %v1147 = vadd.f32 %v1143, 1.0
    %v1148 = vadd.f32 %v1145, 1.0
    %v1149 = vrcp.pop %v1146
    %v1150 = vmul.f32 1.0, %v1149
    %v1151 = vrcp.pop %v1147
    %v1152 = vmul.f32 1.0, %v1151
    %v1153 = vrcp.pop %v1148
    %v1154 = vmul.f32 1.0, %v1153
    %v1155 = vtanh.pop %v1136
    %v1156 = vmul.f32 %v1152, %v690
    %v1157 = vmul.f32 %v1150, %v1155
    %v1158 = vadd.f32 %v1156, %v1157
    %v1159 = vtanh.pop %v1158
    %v1160 = vmul.f32 %v1154, %v1159
    %1161 = vmatprep.subr.mxu0 %v694
    %1162 = vmatpush1.msra.mxu0 %v693
    %1163 = vmatprep.subr.mxu0 %v698
    %1164 = vmatpush1.msra.mxu0 %v697
    %1165 = vmatprep.subr.mxu0 %v702
    %1166 = vmatpush1.msra.mxu0 %v701
    %1167 = vmatprep.subr.mxu0 %v706
    %1168 = vmatpush1.msra.mxu0 %v705
    %1169 = vmatprep.subr.mxu0 %v710
    %1170 = vmatpush1.msra.mxu0 %v709
    %1171 = vmatprep.subr.mxu0 %v714
    %1172 = vmatpush1.msra.mxu0 %v713
    %1173 = vmatprep.subr.mxu0 %v718
    %1174 = vmatpush1.msra.mxu0 %v717
    %1175 = vmatprep.subr.mxu0 %v722
    %1176 = vmatpush1.msra.mxu0 %v721
    %1177 = vmatprep.subr.mxu0 %v726
    %1178 = vmatpush1.msra.mxu0 %v725
    %1179 = vmatprep.subr.mxu0 %v730
    %1180 = vmatpush1.msra.mxu0 %v729
    %1181 = vmatprep.subr.mxu0 %v734
    %1182 = vmatpush1.msra.mxu0 %v733
    %1183 = vmatprep.subr.mxu0 %v738
    %1184 = vmatpush1.msra.mxu0 %v737
    %1185 = vmatprep.subr.mxu0 %v742
    %1186 = vmatpush1.msra.mxu0 %v741
    %1187 = vmatprep.subr.mxu0 %v746
    %1188 = vmatpush1.msra.mxu0 %v745
    %1189 = vmatprep.subr.mxu0 %v750
    %1190 = vmatpush1.msra.mxu0 %v749
    %1191 = vmatprep.subr.mxu0 %v754
    %1192 = vmatpush1.msra.mxu0 %v753
    %1193 = vmatprep.subr.mxu0 %v758
    %1194 = vmatpush1.msra.mxu0 %v757
    %1195 = vmatprep.subr.mxu0 %v762
    %1196 = vmatpush1.msra.mxu0 %v761
    %1197 = vmatprep.subr.mxu0 %v766
    %1198 = vmatpush1.msra.mxu0 %v765
    %1199 = vmatprep.subr.mxu0 %v770
    %1200 = vmatpush1.msra.mxu0 %v769
    %1201 = vmatprep.subr.mxu0 %v774
    %1202 = vmatpush1.msra.mxu0 %v773
    %1203 = vmatprep.subr.mxu0 %v778
    %1204 = vmatpush1.msra.mxu0 %v777
    %1205 = vmatprep.subr.mxu0 %v782
    %1206 = vmatpush1.msra.mxu0 %v781
    %1207 = vmatprep.subr.mxu0 %v786
    %1208 = vmatpush1.msra.mxu0 %v785
    %1209 = vmatprep.subr.mxu0 %v790
    %1210 = vmatpush1.msra.mxu0 %v789
    %1211 = vmatprep.subr.mxu0 %v794
    %1212 = vmatpush1.msra.mxu0 %v793
    %1213 = vmatprep.subr.mxu0 %v798
    %1214 = vmatpush1.msra.mxu0 %v797
    %1215 = vmatprep.subr.mxu0 %v802
    %1216 = vmatpush1.msra.mxu0 %v801
    %1217 = vmatprep.subr.mxu0 %v806
    %1218 = vmatpush1.msra.mxu0 %v805
    %1219 = vmatprep.subr.mxu0 %v810
    %1220 = vmatpush1.msra.mxu0 %v809
    %1221 = vmatprep.subr.mxu0 %v814
    %1222 = vmatpush1.msra.mxu0 %v813
    %1223 = vmatprep.subr.mxu0 %v818
    %1224 = vmatpush1.msra.mxu0 %v817
    %1225 = vmatprep.mubr.f32.mxu0 %v986
    %1226 = vmatmul.mubr.f32.gmra.mrb[0].mxu0 %v1160
    %v1227 = vpop.f32.mrb[0].mxu0
    %v1228 = vadd.f32 %v432, %v1227
    %v1229 = vpop.f32.mrb[0].mxu0
    %v1230 = vadd.f32 %v436, %v1229
    %1231 = vdwg.mxu0
    %1232 = vmatprep.subr.mxu0 %v696
    %1233 = vmatpush1.msra.mxu0 %v695
    %1234 = vmatprep.subr.mxu0 %v700
    %1235 = vmatpush1.msra.mxu0 %v699
    %1236 = vmatprep.subr.mxu0 %v704
    %1237 = vmatpush1.msra.mxu0 %v703
    %1238 = vmatprep.subr.mxu0 %v708
    %1239 = vmatpush1.msra.mxu0 %v707
    %1240 = vmatprep.subr.mxu0 %v712
    %1241 = vmatpush1.msra.mxu0 %v711
    %1242 = vmatprep.subr.mxu0 %v716
    %1243 = vmatpush1.msra.mxu0 %v715
    %1244 = vmatprep.subr.mxu0 %v720
    %1245 = vmatpush1.msra.mxu0 %v719
    %1246 = vmatprep.subr.mxu0 %v724
    %1247 = vmatpush1.msra.mxu0 %v723
    %1248 = vmatprep.subr.mxu0 %v728
    %1249 = vmatpush1.msra.mxu0 %v727
    %1250 = vmatprep.subr.mxu0 %v732
    %1251 = vmatpush1.msra.mxu0 %v731
    %1252 = vmatprep.subr.mxu0 %v736
    %1253 = vmatpush1.msra.mxu0 %v735
    %1254 = vmatprep.subr.mxu0 %v740
    %1255 = vmatpush1.msra.mxu0 %v739
    %1256 = vmatprep.subr.mxu0 %v744
    %1257 = vmatpush1.msra.mxu0 %v743
    %1258 = vmatprep.subr.mxu0 %v748
    %1259 = vmatpush1.msra.mxu0 %v747
    %1260 = vmatprep.subr.mxu0 %v752
    %1261 = vmatpush1.msra.mxu0 %v751
    %1262 = vmatprep.subr.mxu0 %v756
    %1263 = vmatpush1.msra.mxu0 %v755
    %1264 = vmatprep.subr.mxu0 %v760
    %1265 = vmatpush1.msra.mxu0 %v759
    %1266 = vmatprep.subr.mxu0 %v764
    %1267 = vmatpush1.msra.mxu0 %v763
    %1268 = vmatprep.subr.mxu0 %v768
    %1269 = vmatpush1.msra.mxu0 %v767
    %1270 = vmatprep.subr.mxu0 %v772
    %1271 = vmatpush1.msra.mxu0 %v771
    %1272 = vmatprep.subr.mxu0 %v776
    %1273 = vmatpush1.msra.mxu0 %v775
    %1274 = vmatprep.subr.mxu0 %v780
    %1275 = vmatpush1.msra.mxu0 %v779
    %1276 = vmatprep.subr.mxu0 %v784
    %1277 = vmatpush1.msra.mxu0 %v783
    %1278 = vmatprep.subr.mxu0 %v788
    %1279 = vmatpush1.msra.mxu0 %v787
    %1280 = vmatprep.subr.mxu0 %v792
    %1281 = vmatpush1.msra.mxu0 %v791
    %1282 = vmatprep.subr.mxu0 %v796
    %1283 = vmatpush1.msra.mxu0 %v795
    %1284 = vmatprep.subr.mxu0 %v800
    %1285 = vmatpush1.msra.mxu0 %v799
    %1286 = vmatprep.subr.mxu0 %v804
    %1287 = vmatpush1.msra.mxu0 %v803
    %1288 = vmatprep.subr.mxu0 %v808
    %1289 = vmatpush1.msra.mxu0 %v807
    %1290 = vmatprep.subr.mxu0 %v812
    %1291 = vmatpush1.msra.mxu0 %v811
    %1292 = vmatprep.subr.mxu0 %v816
    %1293 = vmatpush1.msra.mxu0 %v815
    %1294 = vmatprep.subr.mxu0 %v820
    %1295 = vmatpush1.msra.mxu0 %v819
    %1296 = vmatprep.mubr.f32.mxu0 %v986
    %1297 = vmatmul.mubr.f32.gmra.mrb[0].mxu0 %v1160
    %v1298 = vpop.f32.mrb[0].mxu0
    %v1299 = vadd.f32 %v440, %v1298
    %v1300 = vpop.f32.mrb[0].mxu0
    %v1301 = vadd.f32 %v444, %v1300
    %1302 = vdwg.mxu0
    %v1303 = vxor.u32 %v1228, 2147483648
    %v1304 = vxor.u32 %v1230, 2147483648
    %v1305 = vxor.u32 %v1299, 2147483648
    %v1306 = vmul.f32 %v1303, 1.442695
    %v1307 = vpow.pop %v1306
    %v1308 = vmul.f32 %v1304, 1.442695
    %v1309 = vpow.pop %v1308
    %v1310 = vmul.f32 %v1305, 1.442695
    %v1311 = vpow.pop %v1310
    %v1312 = vadd.f32 %v1307, 1.0
    %v1313 = vadd.f32 %v1309, 1.0
    %v1314 = vadd.f32 %v1311, 1.0
    %v1315 = vrcp.pop %v1312
    %v1316 = vmul.f32 1.0, %v1315
    %v1317 = vrcp.pop %v1313
    %v1318 = vmul.f32 1.0, %v1317
    %v1319 = vrcp.pop %v1314
    %v1320 = vmul.f32 1.0, %v1319
    %v1321 = vtanh.pop %v1301
    %v1322 = vmul.f32 %v1318, %v984
    %v1323 = vmul.f32 %v1316, %v1321
    %v1324 = vadd.f32 %v1322, %v1323
    %v1325 = vtanh.pop %v1324
    %v1326 = vmul.f32 %v1320, %v1325
    %v1327 = vld [vmem:[#allocation2 + $0x40] sm:$0xff]
    %v1328 = vld [vmem:[#allocation2 + $0x48] sm:$0xff]
    %v1329 = vld [vmem:[#allocation2 + $0x50] sm:$0xff]
    %v1330 = vld [vmem:[#allocation2 + $0x58] sm:$0xff]
    %1331 = vmatprep.subr.mxu0 %v460
    %1332 = vmatpush1.msra.mxu0 %v459
    %1333 = vmatprep.subr.mxu0 %v464
    %1334 = vmatpush1.msra.mxu0 %v463
    %1335 = vmatprep.subr.mxu0 %v468
    %1336 = vmatpush1.msra.mxu0 %v467
    %1337 = vmatprep.subr.mxu0 %v472
    %1338 = vmatpush1.msra.mxu0 %v471
    %1339 = vmatprep.subr.mxu0 %v476
    %1340 = vmatpush1.msra.mxu0 %v475
    %1341 = vmatprep.subr.mxu0 %v480
    %1342 = vmatpush1.msra.mxu0 %v479
    %1343 = vmatprep.subr.mxu0 %v484
    %1344 = vmatpush1.msra.mxu0 %v483
    %1345 = vmatprep.subr.mxu0 %v488
    %1346 = vmatpush1.msra.mxu0 %v487
    %1347 = vmatprep.subr.mxu0 %v492
    %1348 = vmatpush1.msra.mxu0 %v491
    %1349 = vmatprep.subr.mxu0 %v496
    %1350 = vmatpush1.msra.mxu0 %v495
    %1351 = vmatprep.subr.mxu0 %v500
    %1352 = vmatpush1.msra.mxu0 %v499
    %1353 = vmatprep.subr.mxu0 %v504
    %1354 = vmatpush1.msra.mxu0 %v503
    %1355 = vmatprep.subr.mxu0 %v508
    %1356 = vmatpush1.msra.mxu0 %v507
    %1357 = vmatprep.subr.mxu0 %v512
    %1358 = vmatpush1.msra.mxu0 %v511
    %1359 = vmatprep.subr.mxu0 %v516
    %1360 = vmatpush1.msra.mxu0 %v515
    %1361 = vmatprep.subr.mxu0 %v520
    %1362 = vmatpush1.msra.mxu0 %v519
    %1363 = vmatprep.subr.mxu0 0.0
    %1364 = vmatpush1.msra.mxu0 0.0
    %1365 = vmatprep.subr.mxu0 0.0
    %1366 = vmatpush1.msra.mxu0 0.0
    %1367 = vmatprep.subr.mxu0 0.0
    %1368 = vmatpush1.msra.mxu0 0.0
    %1369 = vmatprep.subr.mxu0 0.0
    %1370 = vmatpush1.msra.mxu0 0.0
    %1371 = vmatprep.subr.mxu0 0.0
    %1372 = vmatpush1.msra.mxu0 0.0
    %1373 = vmatprep.subr.mxu0 0.0
    %1374 = vmatpush1.msra.mxu0 0.0
    %1375 = vmatprep.subr.mxu0 0.0
    %1376 = vmatpush1.msra.mxu0 0.0
    %1377 = vmatprep.subr.mxu0 0.0
    %1378 = vmatpush1.msra.mxu0 0.0
    %1379 = vmatprep.subr.mxu0 0.0
    %1380 = vmatpush1.msra.mxu0 0.0
    %1381 = vmatprep.subr.mxu0 0.0
    %1382 = vmatpush1.msra.mxu0 0.0
    %1383 = vmatprep.subr.mxu0 0.0
    %1384 = vmatpush1.msra.mxu0 0.0
    %1385 = vmatprep.subr.mxu0 0.0
    %1386 = vmatpush1.msra.mxu0 0.0
    %1387 = vmatprep.subr.mxu0 0.0
    %1388 = vmatpush1.msra.mxu0 0.0
    %1389 = vmatprep.subr.mxu0 0.0
    %1390 = vmatpush1.msra.mxu0 0.0
    %1391 = vmatprep.subr.mxu0 0.0
    %1392 = vmatpush1.msra.mxu0 0.0
    %1393 = vmatprep.subr.mxu0 0.0
    %1394 = vmatpush1.msra.mxu0 0.0
    %1395 = vmatprep.mubr.f32.mxu0 0.0
    %1396 = vmatmul.mubr.f32.gmra.mrb[0].mxu0 %v1160
    %v1397 = vpop.f32.mrb[0].mxu0
    %v1398 = vadd.f32 0.0, %v1397
    %v1399 = vpop.f32.mrb[0].mxu0
    %v1400 = vadd.f32 0.0, %v1399
    %1401 = vdwg.mxu0
    %1402 = vmatprep.subr.mxu0 %v462
    %1403 = vmatpush1.msra.mxu0 %v461
    %1404 = vmatprep.subr.mxu0 %v466
    %1405 = vmatpush1.msra.mxu0 %v465
    %1406 = vmatprep.subr.mxu0 %v470
    %1407 = vmatpush1.msra.mxu0 %v469
    %1408 = vmatprep.subr.mxu0 %v474
    %1409 = vmatpush1.msra.mxu0 %v473
    %1410 = vmatprep.subr.mxu0 %v478
    %1411 = vmatpush1.msra.mxu0 %v477
    %1412 = vmatprep.subr.mxu0 %v482
    %1413 = vmatpush1.msra.mxu0 %v481
    %1414 = vmatprep.subr.mxu0 %v486
    %1415 = vmatpush1.msra.mxu0 %v485
    %1416 = vmatprep.subr.mxu0 %v490
    %1417 = vmatpush1.msra.mxu0 %v489
    %1418 = vmatprep.subr.mxu0 %v494
    %1419 = vmatpush1.msra.mxu0 %v493
    %1420 = vmatprep.subr.mxu0 %v498
    %1421 = vmatpush1.msra.mxu0 %v497
    %1422 = vmatprep.subr.mxu0 %v502
    %1423 = vmatpush1.msra.mxu0 %v501
    %1424 = vmatprep.subr.mxu0 %v506
    %1425 = vmatpush1.msra.mxu0 %v505
    %1426 = vmatprep.subr.mxu0 %v510
    %1427 = vmatpush1.msra.mxu0 %v509
    %1428 = vmatprep.subr.mxu0 %v514
    %1429 = vmatpush1.msra.mxu0 %v513
    %1430 = vmatprep.subr.mxu0 %v518
    %1431 = vmatpush1.msra.mxu0 %v517
    %1432 = vmatprep.subr.mxu0 %v522
    %1433 = vmatpush1.msra.mxu0 %v521
    %1434 = vmatprep.subr.mxu0 0.0
    %1435 = vmatpush1.msra.mxu0 0.0
    %1436 = vmatprep.subr.mxu0 0.0
    %1437 = vmatpush1.msra.mxu0 0.0
    %1438 = vmatprep.subr.mxu0 0.0
    %1439 = vmatpush1.msra.mxu0 0.0
    %1440 = vmatprep.subr.mxu0 0.0
    %1441 = vmatpush1.msra.mxu0 0.0
    %1442 = vmatprep.subr.mxu0 0.0
    %1443 = vmatpush1.msra.mxu0 0.0
    %1444 = vmatprep.subr.mxu0 0.0
    %1445 = vmatpush1.msra.mxu0 0.0
    %1446 = vmatprep.subr.mxu0 0.0
    %1447 = vmatpush1.msra.mxu0 0.0
    %1448 = vmatprep.subr.mxu0 0.0
    %1449 = vmatpush1.msra.mxu0 0.0
    %1450 = vmatprep.subr.mxu0 0.0
    %1451 = vmatpush1.msra.mxu0 0.0
    %1452 = vmatprep.subr.mxu0 0.0
    %1453 = vmatpush1.msra.mxu0 0.0
    %1454 = vmatprep.subr.mxu0 0.0
    %1455 = vmatpush1.msra.mxu0 0.0
    %1456 = vmatprep.subr.mxu0 0.0
    %1457 = vmatpush1.msra.mxu0 0.0
    %1458 = vmatprep.subr.mxu0 0.0
    %1459 = vmatpush1.msra.mxu0 0.0
    %1460 = vmatprep.subr.mxu0 0.0
    %1461 = vmatpush1.msra.mxu0 0.0
    %1462 = vmatprep.subr.mxu0 0.0
    %1463 = vmatpush1.msra.mxu0 0.0
    %1464 = vmatprep.subr.mxu0 0.0
    %1465 = vmatpush1.msra.mxu0 0.0
    %1466 = vmatprep.mubr.f32.mxu0 0.0
    %1467 = vmatmul.mubr.f32.gmra.mrb[0].mxu0 %v1160
    %v1468 = vpop.f32.mrb[0].mxu0
    %v1469 = vadd.f32 0.0, %v1468
    %v1470 = vpop.f32.mrb[0].mxu0
    %v1471 = vadd.f32 0.0, %v1470
    %1472 = vdwg.mxu0
    %v1473 = vadd.f32 %v1327, %v1398
    %v1474 = vadd.f32 %v1328, %v1400
    %v1475 = vadd.f32 %v1329, %v1469
    %v1476 = vadd.f32 %v1330, %v1471
    %v1477 = vxor.u32 %v1473, 2147483648
    %v1478 = vxor.u32 %v1474, 2147483648
    %v1479 = vxor.u32 %v1475, 2147483648
    %v1480 = vmul.f32 %v1477, 1.442695
    %v1481 = vpow.pop %v1480
    %v1482 = vmul.f32 %v1478, 1.442695
    %v1483 = vpow.pop %v1482
    %v1484 = vmul.f32 %v1479, 1.442695
    %v1485 = vpow.pop %v1484
    %v1486 = vadd.f32 %v1481, 1.0
    %v1487 = vadd.f32 %v1483, 1.0
    %v1488 = vadd.f32 %v1485, 1.0
    %v1489 = vrcp.pop %v1486
    %v1490 = vmul.f32 1.0, %v1489
    %v1491 = vrcp.pop %v1487
    %v1492 = vmul.f32 1.0, %v1491
    %v1493 = vrcp.pop %v1488
    %v1494 = vmul.f32 1.0, %v1493
    %v1495 = vtanh.pop %v1476
    %v1496 = vmul.f32 %v1492, %v1158
    %v1497 = vmul.f32 %v1490, %v1495
    %v1498 = vadd.f32 %v1496, %v1497
    %v1499 = vtanh.pop %v1498
    %v1500 = vmul.f32 %v1494, %v1499
    %1501 = vmatprep.subr.mxu0 %v694
    %1502 = vmatpush1.msra.mxu0 %v693
    %1503 = vmatprep.subr.mxu0 %v698
    %1504 = vmatpush1.msra.mxu0 %v697
    %1505 = vmatprep.subr.mxu0 %v702
    %1506 = vmatpush1.msra.mxu0 %v701
    %1507 = vmatprep.subr.mxu0 %v706
    %1508 = vmatpush1.msra.mxu0 %v705
    %1509 = vmatprep.subr.mxu0 %v710
    %1510 = vmatpush1.msra.mxu0 %v709
    %1511 = vmatprep.subr.mxu0 %v714
    %1512 = vmatpush1.msra.mxu0 %v713
    %1513 = vmatprep.subr.mxu0 %v718
    %1514 = vmatpush1.msra.mxu0 %v717
    %1515 = vmatprep.subr.mxu0 %v722
    %1516 = vmatpush1.msra.mxu0 %v721
    %1517 = vmatprep.subr.mxu0 %v726
    %1518 = vmatpush1.msra.mxu0 %v725
    %1519 = vmatprep.subr.mxu0 %v730
    %1520 = vmatpush1.msra.mxu0 %v729
    %1521 = vmatprep.subr.mxu0 %v734
    %1522 = vmatpush1.msra.mxu0 %v733
    %1523 = vmatprep.subr.mxu0 %v738
    %1524 = vmatpush1.msra.mxu0 %v737
    %1525 = vmatprep.subr.mxu0 %v742
    %1526 = vmatpush1.msra.mxu0 %v741
    %1527 = vmatprep.subr.mxu0 %v746
    %1528 = vmatpush1.msra.mxu0 %v745
    %1529 = vmatprep.subr.mxu0 %v750
    %1530 = vmatpush1.msra.mxu0 %v749
    %1531 = vmatprep.subr.mxu0 %v754
    %1532 = vmatpush1.msra.mxu0 %v753
    %1533 = vmatprep.subr.mxu0 %v758
    %1534 = vmatpush1.msra.mxu0 %v757
    %1535 = vmatprep.subr.mxu0 %v762
    %1536 = vmatpush1.msra.mxu0 %v761
    %1537 = vmatprep.subr.mxu0 %v766
    %1538 = vmatpush1.msra.mxu0 %v765
    %1539 = vmatprep.subr.mxu0 %v770
    %1540 = vmatpush1.msra.mxu0 %v769
    %1541 = vmatprep.subr.mxu0 %v774
    %1542 = vmatpush1.msra.mxu0 %v773
    %1543 = vmatprep.subr.mxu0 %v778
    %1544 = vmatpush1.msra.mxu0 %v777
    %1545 = vmatprep.subr.mxu0 %v782
    %1546 = vmatpush1.msra.mxu0 %v781
    %1547 = vmatprep.subr.mxu0 %v786
    %1548 = vmatpush1.msra.mxu0 %v785
    %1549 = vmatprep.subr.mxu0 %v790
    %1550 = vmatpush1.msra.mxu0 %v789
    %1551 = vmatprep.subr.mxu0 %v794
    %1552 = vmatpush1.msra.mxu0 %v793
    %1553 = vmatprep.subr.mxu0 %v798
    %1554 = vmatpush1.msra.mxu0 %v797
    %1555 = vmatprep.subr.mxu0 %v802
    %1556 = vmatpush1.msra.mxu0 %v801
    %1557 = vmatprep.subr.mxu0 %v806
    %1558 = vmatpush1.msra.mxu0 %v805
    %1559 = vmatprep.subr.mxu0 %v810
    %1560 = vmatpush1.msra.mxu0 %v809
    %1561 = vmatprep.subr.mxu0 %v814
    %1562 = vmatpush1.msra.mxu0 %v813
    %1563 = vmatprep.subr.mxu0 %v818
    %1564 = vmatpush1.msra.mxu0 %v817
    %1565 = vmatprep.mubr.f32.mxu0 %v1326
    %1566 = vmatmul.mubr.f32.gmra.mrb[0].mxu0 %v1500
    %v1567 = vpop.f32.mrb[0].mxu0
    %v1568 = vadd.f32 %v432, %v1567
    %v1569 = vpop.f32.mrb[0].mxu0
    %v1570 = vadd.f32 %v436, %v1569
    %1571 = vdwg.mxu0
    %1572 = vmatprep.subr.mxu0 %v696
    %1573 = vmatpush1.msra.mxu0 %v695
    %1574 = vmatprep.subr.mxu0 %v700
    %1575 = vmatpush1.msra.mxu0 %v699
    %1576 = vmatprep.subr.mxu0 %v704
    %1577 = vmatpush1.msra.mxu0 %v703
    %1578 = vmatprep.subr.mxu0 %v708
    %1579 = vmatpush1.msra.mxu0 %v707
    %1580 = vmatprep.subr.mxu0 %v712
    %1581 = vmatpush1.msra.mxu0 %v711
    %1582 = vmatprep.subr.mxu0 %v716
    %1583 = vmatpush1.msra.mxu0 %v715
    %1584 = vmatprep.subr.mxu0 %v720
    %1585 = vmatpush1.msra.mxu0 %v719
    %1586 = vmatprep.subr.mxu0 %v724
    %1587 = vmatpush1.msra.mxu0 %v723
    %1588 = vmatprep.subr.mxu0 %v728
    %1589 = vmatpush1.msra.mxu0 %v727
    %1590 = vmatprep.subr.mxu0 %v732
    %1591 = vmatpush1.msra.mxu0 %v731
    %1592 = vmatprep.subr.mxu0 %v736
    %1593 = vmatpush1.msra.mxu0 %v735
    %1594 = vmatprep.subr.mxu0 %v740
    %1595 = vmatpush1.msra.mxu0 %v739
    %1596 = vmatprep.subr.mxu0 %v744
    %1597 = vmatpush1.msra.mxu0 %v743
    %1598 = vmatprep.subr.mxu0 %v748
    %1599 = vmatpush1.msra.mxu0 %v747
    %1600 = vmatprep.subr.mxu0 %v752
    %1601 = vmatpush1.msra.mxu0 %v751
    %1602 = vmatprep.subr.mxu0 %v756
    %1603 = vmatpush1.msra.mxu0 %v755
    %1604 = vmatprep.subr.mxu0 %v760
    %1605 = vmatpush1.msra.mxu0 %v759
    %1606 = vmatprep.subr.mxu0 %v764
    %1607 = vmatpush1.msra.mxu0 %v763
    %1608 = vmatprep.subr.mxu0 %v768
    %1609 = vmatpush1.msra.mxu0 %v767
    %1610 = vmatprep.subr.mxu0 %v772
    %1611 = vmatpush1.msra.mxu0 %v771
    %1612 = vmatprep.subr.mxu0 %v776
    %1613 = vmatpush1.msra.mxu0 %v775
    %1614 = vmatprep.subr.mxu0 %v780
    %1615 = vmatpush1.msra.mxu0 %v779
    %1616 = vmatprep.subr.mxu0 %v784
    %1617 = vmatpush1.msra.mxu0 %v783
    %1618 = vmatprep.subr.mxu0 %v788
    %1619 = vmatpush1.msra.mxu0 %v787
    %1620 = vmatprep.subr.mxu0 %v792
    %1621 = vmatpush1.msra.mxu0 %v791
    %1622 = vmatprep.subr.mxu0 %v796
    %1623 = vmatpush1.msra.mxu0 %v795
    %1624 = vmatprep.subr.mxu0 %v800
    %1625 = vmatpush1.msra.mxu0 %v799
    %1626 = vmatprep.subr.mxu0 %v804
    %1627 = vmatpush1.msra.mxu0 %v803
    %1628 = vmatprep.subr.mxu0 %v808
    %1629 = vmatpush1.msra.mxu0 %v807
    %1630 = vmatprep.subr.mxu0 %v812
    %1631 = vmatpush1.msra.mxu0 %v811
    %1632 = vmatprep.subr.mxu0 %v816
    %1633 = vmatpush1.msra.mxu0 %v815
    %1634 = vmatprep.subr.mxu0 %v820
    %1635 = vmatpush1.msra.mxu0 %v819
    %1636 = vmatprep.mubr.f32.mxu0 %v1326
    %1637 = vmatmul.mubr.f32.gmra.mrb[0].mxu0 %v1500
    %v1638 = vpop.f32.mrb[0].mxu0
    %v1639 = vadd.f32 %v440, %v1638
    %v1640 = vpop.f32.mrb[0].mxu0
    %v1641 = vadd.f32 %v444, %v1640
    %1642 = vdwg.mxu0
    %v1643 = vxor.u32 %v1568, 2147483648
    %v1644 = vxor.u32 %v1570, 2147483648
    %v1645 = vxor.u32 %v1639, 2147483648
    %v1646 = vmul.f32 %v1643, 1.442695
    %v1647 = vpow.pop %v1646
    %v1648 = vmul.f32 %v1644, 1.442695
    %v1649 = vpow.pop %v1648
    %v1650 = vmul.f32 %v1645, 1.442695
    %v1651 = vpow.pop %v1650
    %v1652 = vadd.f32 %v1647, 1.0
    %v1653 = vadd.f32 %v1649, 1.0
    %v1654 = vadd.f32 %v1651, 1.0
    %v1655 = vrcp.pop %v1652
    %v1656 = vmul.f32 1.0, %v1655
    %v1657 = vrcp.pop %v1653
    %v1658 = vmul.f32 1.0, %v1657
    %v1659 = vrcp.pop %v1654
    %v1660 = vmul.f32 1.0, %v1659
    %v1661 = vtanh.pop %v1641
    %v1662 = vmul.f32 %v1658, %v1324
    %v1663 = vmul.f32 %v1656, %v1661
    %v1664 = vadd.f32 %v1662, %v1663
    %v1665 = vtanh.pop %v1664
    %v1666 = vmul.f32 %v1660, %v1665
    %v1667 = vld [vmem:[#allocation2 + $0x60] sm:$0xff]
    %v1668 = vld [vmem:[#allocation2 + $0x68] sm:$0xff]
    %v1669 = vld [vmem:[#allocation2 + $0x70] sm:$0xff]
    %v1670 = vld [vmem:[#allocation2 + $0x78] sm:$0xff]
    %1671 = vmatprep.subr.mxu0 %v460
    %1672 = vmatpush1.msra.mxu0 %v459
    %1673 = vmatprep.subr.mxu0 %v464
    %1674 = vmatpush1.msra.mxu0 %v463
    %1675 = vmatprep.subr.mxu0 %v468
    %1676 = vmatpush1.msra.mxu0 %v467
    %1677 = vmatprep.subr.mxu0 %v472
    %1678 = vmatpush1.msra.mxu0 %v471
    %1679 = vmatprep.subr.mxu0 %v476
    %1680 = vmatpush1.msra.mxu0 %v475
    %1681 = vmatprep.subr.mxu0 %v480
    %1682 = vmatpush1.msra.mxu0 %v479
    %1683 = vmatprep.subr.mxu0 %v484
    %1684 = vmatpush1.msra.mxu0 %v483
    %1685 = vmatprep.subr.mxu0 %v488
    %1686 = vmatpush1.msra.mxu0 %v487
    %1687 = vmatprep.subr.mxu0 %v492
    %1688 = vmatpush1.msra.mxu0 %v491
    %1689 = vmatprep.subr.mxu0 %v496
    %1690 = vmatpush1.msra.mxu0 %v495
    %1691 = vmatprep.subr.mxu0 %v500
    %1692 = vmatpush1.msra.mxu0 %v499
    %1693 = vmatprep.subr.mxu0 %v504
    %1694 = vmatpush1.msra.mxu0 %v503
    %1695 = vmatprep.subr.mxu0 %v508
    %1696 = vmatpush1.msra.mxu0 %v507
    %1697 = vmatprep.subr.mxu0 %v512
    %1698 = vmatpush1.msra.mxu0 %v511
    %1699 = vmatprep.subr.mxu0 %v516
    %1700 = vmatpush1.msra.mxu0 %v515
    %1701 = vmatprep.subr.mxu0 %v520
    %1702 = vmatpush1.msra.mxu0 %v519
    %1703 = vmatprep.subr.mxu0 0.0
    %1704 = vmatpush1.msra.mxu0 0.0
    %1705 = vmatprep.subr.mxu0 0.0
    %1706 = vmatpush1.msra.mxu0 0.0
    %1707 = vmatprep.subr.mxu0 0.0
    %1708 = vmatpush1.msra.mxu0 0.0
    %1709 = vmatprep.subr.mxu0 0.0
    %1710 = vmatpush1.msra.mxu0 0.0
    %1711 = vmatprep.subr.mxu0 0.0
    %1712 = vmatpush1.msra.mxu0 0.0
    %1713 = vmatprep.subr.mxu0 0.0
    %1714 = vmatpush1.msra.mxu0 0.0
    %1715 = vmatprep.subr.mxu0 0.0
    %1716 = vmatpush1.msra.mxu0 0.0
    %1717 = vmatprep.subr.mxu0 0.0
    %1718 = vmatpush1.msra.mxu0 0.0
    %1719 = vmatprep.subr.mxu0 0.0
    %1720 = vmatpush1.msra.mxu0 0.0
    %1721 = vmatprep.subr.mxu0 0.0
    %1722 = vmatpush1.msra.mxu0 0.0
    %1723 = vmatprep.subr.mxu0 0.0
    %1724 = vmatpush1.msra.mxu0 0.0
    %1725 = vmatprep.subr.mxu0 0.0
    %1726 = vmatpush1.msra.mxu0 0.0
    %1727 = vmatprep.subr.mxu0 0.0
    %1728 = vmatpush1.msra.mxu0 0.0
    %1729 = vmatprep.subr.mxu0 0.0
    %1730 = vmatpush1.msra.mxu0 0.0
    %1731 = vmatprep.subr.mxu0 0.0
    %1732 = vmatpush1.msra.mxu0 0.0
    %1733 = vmatprep.subr.mxu0 0.0
    %1734 = vmatpush1.msra.mxu0 0.0
    %1735 = vmatprep.mubr.f32.mxu0 0.0
    %1736 = vmatmul.mubr.f32.gmra.mrb[0].mxu0 %v1500
    %v1737 = vpop.f32.mrb[0].mxu0
    %v1738 = vadd.f32 0.0, %v1737
    %v1739 = vpop.f32.mrb[0].mxu0
    %v1740 = vadd.f32 0.0, %v1739
    %1741 = vdwg.mxu0
    %1742 = vmatprep.subr.mxu0 %v462
    %1743 = vmatpush1.msra.mxu0 %v461
    %1744 = vmatprep.subr.mxu0 %v466
    %1745 = vmatpush1.msra.mxu0 %v465
    %1746 = vmatprep.subr.mxu0 %v470
    %1747 = vmatpush1.msra.mxu0 %v469
    %1748 = vmatprep.subr.mxu0 %v474
    %1749 = vmatpush1.msra.mxu0 %v473
    %1750 = vmatprep.subr.mxu0 %v478
    %1751 = vmatpush1.msra.mxu0 %v477
    %1752 = vmatprep.subr.mxu0 %v482
    %1753 = vmatpush1.msra.mxu0 %v481
    %1754 = vmatprep.subr.mxu0 %v486
    %1755 = vmatpush1.msra.mxu0 %v485
    %1756 = vmatprep.subr.mxu0 %v490
    %1757 = vmatpush1.msra.mxu0 %v489
    %1758 = vmatprep.subr.mxu0 %v494
    %1759 = vmatpush1.msra.mxu0 %v493
    %1760 = vmatprep.subr.mxu0 %v498
    %1761 = vmatpush1.msra.mxu0 %v497
    %1762 = vmatprep.subr.mxu0 %v502
    %1763 = vmatpush1.msra.mxu0 %v501
    %1764 = vmatprep.subr.mxu0 %v506
    %1765 = vmatpush1.msra.mxu0 %v505
    %1766 = vmatprep.subr.mxu0 %v510
    %1767 = vmatpush1.msra.mxu0 %v509
    %1768 = vmatprep.subr.mxu0 %v514
    %1769 = vmatpush1.msra.mxu0 %v513
    %1770 = vmatprep.subr.mxu0 %v518
    %1771 = vmatpush1.msra.mxu0 %v517
    %1772 = vmatprep.subr.mxu0 %v522
    %1773 = vmatpush1.msra.mxu0 %v521
    %1774 = vmatprep.subr.mxu0 0.0
    %1775 = vmatpush1.msra.mxu0 0.0
    %1776 = vmatprep.subr.mxu0 0.0
    %1777 = vmatpush1.msra.mxu0 0.0
    %1778 = vmatprep.subr.mxu0 0.0
    %1779 = vmatpush1.msra.mxu0 0.0
    %1780 = vmatprep.subr.mxu0 0.0
    %1781 = vmatpush1.msra.mxu0 0.0
    %1782 = vmatprep.subr.mxu0 0.0
    %1783 = vmatpush1.msra.mxu0 0.0
    %1784 = vmatprep.subr.mxu0 0.0
    %1785 = vmatpush1.msra.mxu0 0.0
    %1786 = vmatprep.subr.mxu0 0.0
    %1787 = vmatpush1.msra.mxu0 0.0
    %1788 = vmatprep.subr.mxu0 0.0
    %1789 = vmatpush1.msra.mxu0 0.0
    %1790 = vmatprep.subr.mxu0 0.0
    %1791 = vmatpush1.msra.mxu0 0.0
    %1792 = vmatprep.subr.mxu0 0.0
    %1793 = vmatpush1.msra.mxu0 0.0
    %1794 = vmatprep.subr.mxu0 0.0
    %1795 = vmatpush1.msra.mxu0 0.0
    %1796 = vmatprep.subr.mxu0 0.0
    %1797 = vmatpush1.msra.mxu0 0.0
    %1798 = vmatprep.subr.mxu0 0.0
    %1799 = vmatpush1.msra.mxu0 0.0
    %1800 = vmatprep.subr.mxu0 0.0
    %1801 = vmatpush1.msra.mxu0 0.0
    %1802 = vmatprep.subr.mxu0 0.0
    %1803 = vmatpush1.msra.mxu0 0.0
    %1804 = vmatprep.subr.mxu0 0.0
    %1805 = vmatpush1.msra.mxu0 0.0
    %1806 = vmatprep.mubr.f32.mxu0 0.0
    %1807 = vmatmul.mubr.f32.gmra.mrb[0].mxu0 %v1500
    %v1808 = vpop.f32.mrb[0].mxu0
    %v1809 = vadd.f32 0.0, %v1808
    %v1810 = vpop.f32.mrb[0].mxu0
    %v1811 = vadd.f32 0.0, %v1810
    %1812 = vdwg.mxu0
    %v1813 = vadd.f32 %v1667, %v1738
    %v1814 = vadd.f32 %v1668, %v1740
    %v1815 = vadd.f32 %v1669, %v1809
    %v1816 = vadd.f32 %v1670, %v1811
    %v1817 = vxor.u32 %v1813, 2147483648
    %v1818 = vxor.u32 %v1814, 2147483648
    %v1819 = vxor.u32 %v1815, 2147483648
    %v1820 = vmul.f32 %v1817, 1.442695
    %v1821 = vpow.pop %v1820
    %v1822 = vmul.f32 %v1818, 1.442695
    %v1823 = vpow.pop %v1822
    %v1824 = vmul.f32 %v1819, 1.442695
    %v1825 = vpow.pop %v1824
    %v1826 = vadd.f32 %v1821, 1.0
    %v1827 = vadd.f32 %v1823, 1.0
    %v1828 = vadd.f32 %v1825, 1.0
    %v1829 = vrcp.pop %v1826
    %v1830 = vmul.f32 1.0, %v1829
    %v1831 = vrcp.pop %v1827
    %v1832 = vmul.f32 1.0, %v1831
    %v1833 = vrcp.pop %v1828
    %v1834 = vmul.f32 1.0, %v1833
    %v1835 = vtanh.pop %v1816
    %v1836 = vmul.f32 %v1832, %v1498
    %v1837 = vmul.f32 %v1830, %v1835
    %v1838 = vadd.f32 %v1836, %v1837
    %v1839 = vtanh.pop %v1838
    %v1840 = vmul.f32 %v1834, %v1839
    %1841 = vmatprep.subr.mxu0 %v694
    %1842 = vmatpush1.msra.mxu0 %v693
    %1843 = vmatprep.subr.mxu0 %v698
    %1844 = vmatpush1.msra.mxu0 %v697
    %1845 = vmatprep.subr.mxu0 %v702
    %1846 = vmatpush1.msra.mxu0 %v701
    %1847 = vmatprep.subr.mxu0 %v706
    %1848 = vmatpush1.msra.mxu0 %v705
    %1849 = vmatprep.subr.mxu0 %v710
    %1850 = vmatpush1.msra.mxu0 %v709
    %1851 = vmatprep.subr.mxu0 %v714
    %1852 = vmatpush1.msra.mxu0 %v713
    %1853 = vmatprep.subr.mxu0 %v718
    %1854 = vmatpush1.msra.mxu0 %v717
    %1855 = vmatprep.subr.mxu0 %v722
    %1856 = vmatpush1.msra.mxu0 %v721
    %1857 = vmatprep.subr.mxu0 %v726
    %1858 = vmatpush1.msra.mxu0 %v725
    %1859 = vmatprep.subr.mxu0 %v730
    %1860 = vmatpush1.msra.mxu0 %v729
    %1861 = vmatprep.subr.mxu0 %v734
    %1862 = vmatpush1.msra.mxu0 %v733
    %1863 = vmatprep.subr.mxu0 %v738
    %1864 = vmatpush1.msra.mxu0 %v737
    %1865 = vmatprep.subr.mxu0 %v742
    %1866 = vmatpush1.msra.mxu0 %v741
    %1867 = vmatprep.subr.mxu0 %v746
    %1868 = vmatpush1.msra.mxu0 %v745
    %1869 = vmatprep.subr.mxu0 %v750
    %1870 = vmatpush1.msra.mxu0 %v749
    %1871 = vmatprep.subr.mxu0 %v754
    %1872 = vmatpush1.msra.mxu0 %v753
    %1873 = vmatprep.subr.mxu0 %v758
    %1874 = vmatpush1.msra.mxu0 %v757
    %1875 = vmatprep.subr.mxu0 %v762
    %1876 = vmatpush1.msra.mxu0 %v761
    %1877 = vmatprep.subr.mxu0 %v766
    %1878 = vmatpush1.msra.mxu0 %v765
    %1879 = vmatprep.subr.mxu0 %v770
    %1880 = vmatpush1.msra.mxu0 %v769
    %1881 = vmatprep.subr.mxu0 %v774
    %1882 = vmatpush1.msra.mxu0 %v773
    %1883 = vmatprep.subr.mxu0 %v778
    %1884 = vmatpush1.msra.mxu0 %v777
    %1885 = vmatprep.subr.mxu0 %v782
    %1886 = vmatpush1.msra.mxu0 %v781
    %1887 = vmatprep.subr.mxu0 %v786
    %1888 = vmatpush1.msra.mxu0 %v785
    %1889 = vmatprep.subr.mxu0 %v790
    %1890 = vmatpush1.msra.mxu0 %v789
    %1891 = vmatprep.subr.mxu0 %v794
    %1892 = vmatpush1.msra.mxu0 %v793
    %1893 = vmatprep.subr.mxu0 %v798
    %1894 = vmatpush1.msra.mxu0 %v797
    %1895 = vmatprep.subr.mxu0 %v802
    %1896 = vmatpush1.msra.mxu0 %v801
    %1897 = vmatprep.subr.mxu0 %v806
    %1898 = vmatpush1.msra.mxu0 %v805
    %1899 = vmatprep.subr.mxu0 %v810
    %1900 = vmatpush1.msra.mxu0 %v809
    %1901 = vmatprep.subr.mxu0 %v814
    %1902 = vmatpush1.msra.mxu0 %v813
    %1903 = vmatprep.subr.mxu0 %v818
    %1904 = vmatpush1.msra.mxu0 %v817
    %1905 = vmatprep.mubr.f32.mxu0 %v1666
    %1906 = vmatmul.mubr.f32.gmra.mrb[0].mxu0 %v1840
    %v1907 = vpop.f32.mrb[0].mxu0
    %v1908 = vadd.f32 %v432, %v1907
    %v1909 = vpop.f32.mrb[0].mxu0
    %v1910 = vadd.f32 %v436, %v1909
    %1911 = vdwg.mxu0
    %1912 = vmatprep.subr.mxu0 %v696
    %1913 = vmatpush1.msra.mxu0 %v695
    %1914 = vmatprep.subr.mxu0 %v700
    %1915 = vmatpush1.msra.mxu0 %v699
    %1916 = vmatprep.subr.mxu0 %v704
    %1917 = vmatpush1.msra.mxu0 %v703
    %1918 = vmatprep.subr.mxu0 %v708
    %1919 = vmatpush1.msra.mxu0 %v707
    %1920 = vmatprep.subr.mxu0 %v712
    %1921 = vmatpush1.msra.mxu0 %v711
    %1922 = vmatprep.subr.mxu0 %v716
    %1923 = vmatpush1.msra.mxu0 %v715
    %1924 = vmatprep.subr.mxu0 %v720
    %1925 = vmatpush1.msra.mxu0 %v719
    %1926 = vmatprep.subr.mxu0 %v724
    %1927 = vmatpush1.msra.mxu0 %v723
    %1928 = vmatprep.subr.mxu0 %v728
    %1929 = vmatpush1.msra.mxu0 %v727
    %1930 = vmatprep.subr.mxu0 %v732
    %1931 = vmatpush1.msra.mxu0 %v731
    %1932 = vmatprep.subr.mxu0 %v736
    %1933 = vmatpush1.msra.mxu0 %v735
    %1934 = vmatprep.subr.mxu0 %v740
    %1935 = vmatpush1.msra.mxu0 %v739
    %1936 = vmatprep.subr.mxu0 %v744
    %1937 = vmatpush1.msra.mxu0 %v743
    %1938 = vmatprep.subr.mxu0 %v748
    %1939 = vmatpush1.msra.mxu0 %v747
    %1940 = vmatprep.subr.mxu0 %v752
    %1941 = vmatpush1.msra.mxu0 %v751
    %1942 = vmatprep.subr.mxu0 %v756
    %1943 = vmatpush1.msra.mxu0 %v755
    %1944 = vmatprep.subr.mxu0 %v760
    %1945 = vmatpush1.msra.mxu0 %v759
    %1946 = vmatprep.subr.mxu0 %v764
    %1947 = vmatpush1.msra.mxu0 %v763
    %1948 = vmatprep.subr.mxu0 %v768
    %1949 = vmatpush1.msra.mxu0 %v767
    %1950 = vmatprep.subr.mxu0 %v772
    %1951 = vmatpush1.msra.mxu0 %v771
    %1952 = vmatprep.subr.mxu0 %v776
    %1953 = vmatpush1.msra.mxu0 %v775
    %1954 = vmatprep.subr.mxu0 %v780
    %1955 = vmatpush1.msra.mxu0 %v779
    %1956 = vmatprep.subr.mxu0 %v784
    %1957 = vmatpush1.msra.mxu0 %v783
    %1958 = vmatprep.subr.mxu0 %v788
    %1959 = vmatpush1.msra.mxu0 %v787
    %1960 = vmatprep.subr.mxu0 %v792
    %1961 = vmatpush1.msra.mxu0 %v791
    %1962 = vmatprep.subr.mxu0 %v796
    %1963 = vmatpush1.msra.mxu0 %v795
    %1964 = vmatprep.subr.mxu0 %v800
    %1965 = vmatpush1.msra.mxu0 %v799
    %1966 = vmatprep.subr.mxu0 %v804
    %1967 = vmatpush1.msra.mxu0 %v803
    %1968 = vmatprep.subr.mxu0 %v808
    %1969 = vmatpush1.msra.mxu0 %v807
    %1970 = vmatprep.subr.mxu0 %v812
    %1971 = vmatpush1.msra.mxu0 %v811
    %1972 = vmatprep.subr.mxu0 %v816
    %1973 = vmatpush1.msra.mxu0 %v815
    %1974 = vmatprep.subr.mxu0 %v820
    %1975 = vmatpush1.msra.mxu0 %v819
    %1976 = vmatprep.mubr.f32.mxu0 %v1666
    %1977 = vmatmul.mubr.f32.gmra.mrb[0].mxu0 %v1840
    %v1978 = vpop.f32.mrb[0].mxu0
    %v1979 = vadd.f32 %v440, %v1978
    %v1980 = vpop.f32.mrb[0].mxu0
    %v1981 = vadd.f32 %v444, %v1980
    %1982 = vdwg.mxu0
    %v1983 = vxor.u32 %v1908, 2147483648
    %v1984 = vxor.u32 %v1910, 2147483648
    %v1985 = vxor.u32 %v1979, 2147483648
    %v1986 = vmul.f32 %v1983, 1.442695
    %v1987 = vpow.pop %v1986
    %v1988 = vmul.f32 %v1984, 1.442695
    %v1989 = vpow.pop %v1988
    %v1990 = vmul.f32 %v1985, 1.442695
    %v1991 = vpow.pop %v1990
    %v1992 = vadd.f32 %v1987, 1.0
    %v1993 = vadd.f32 %v1989, 1.0
    %v1994 = vadd.f32 %v1991, 1.0
    %v1995 = vrcp.pop %v1992
    %v1996 = vmul.f32 1.0, %v1995
    %v1997 = vrcp.pop %v1993
    %v1998 = vmul.f32 1.0, %v1997
    %v1999 = vrcp.pop %v1994
    %v2000 = vmul.f32 1.0, %v1999
    %v2001 = vtanh.pop %v1981
    %v2002 = vmul.f32 %v1998, %v1664
    %v2003 = vmul.f32 %v1996, %v2001
    %v2004 = vadd.f32 %v2002, %v2003
    %v2005 = vtanh.pop %v2004
    %v2006 = vmul.f32 %v2000, %v2005
    %v2007 = vld [vmem:[#allocation2 + $0x80] sm:$0xff]
    %v2008 = vld [vmem:[#allocation2 + $0x88] sm:$0xff]
    %v2009 = vld [vmem:[#allocation2 + $0x90] sm:$0xff]
    %v2010 = vld [vmem:[#allocation2 + $0x98] sm:$0xff]
    %2011 = vmatprep.subr.mxu0 %v460
    %2012 = vmatpush1.msra.mxu0 %v459
    %2013 = vmatprep.subr.mxu0 %v464
    %2014 = vmatpush1.msra.mxu0 %v463
    %2015 = vmatprep.subr.mxu0 %v468
    %2016 = vmatpush1.msra.mxu0 %v467
    %2017 = vmatprep.subr.mxu0 %v472
    %2018 = vmatpush1.msra.mxu0 %v471
    %2019 = vmatprep.subr.mxu0 %v476
    %2020 = vmatpush1.msra.mxu0 %v475
    %2021 = vmatprep.subr.mxu0 %v480
    %2022 = vmatpush1.msra.mxu0 %v479
    %2023 = vmatprep.subr.mxu0 %v484
    %2024 = vmatpush1.msra.mxu0 %v483
    %2025 = vmatprep.subr.mxu0 %v488
    %2026 = vmatpush1.msra.mxu0 %v487
    %2027 = vmatprep.subr.mxu0 %v492
    %2028 = vmatpush1.msra.mxu0 %v491
    %2029 = vmatprep.subr.mxu0 %v496
    %2030 = vmatpush1.msra.mxu0 %v495
    %2031 = vmatprep.subr.mxu0 %v500
    %2032 = vmatpush1.msra.mxu0 %v499
    %2033 = vmatprep.subr.mxu0 %v504
    %2034 = vmatpush1.msra.mxu0 %v503
    %2035 = vmatprep.subr.mxu0 %v508
    %2036 = vmatpush1.msra.mxu0 %v507
    %2037 = vmatprep.subr.mxu0 %v512
    %2038 = vmatpush1.msra.mxu0 %v511
    %2039 = vmatprep.subr.mxu0 %v516
    %2040 = vmatpush1.msra.mxu0 %v515
    %2041 = vmatprep.subr.mxu0 %v520
    %2042 = vmatpush1.msra.mxu0 %v519
    %2043 = vmatprep.subr.mxu0 0.0
    %2044 = vmatpush1.msra.mxu0 0.0
    %2045 = vmatprep.subr.mxu0 0.0
    %2046 = vmatpush1.msra.mxu0 0.0
    %2047 = vmatprep.subr.mxu0 0.0
    %2048 = vmatpush1.msra.mxu0 0.0
    %2049 = vmatprep.subr.mxu0 0.0
    %2050 = vmatpush1.msra.mxu0 0.0
    %2051 = vmatprep.subr.mxu0 0.0
    %2052 = vmatpush1.msra.mxu0 0.0
    %2053 = vmatprep.subr.mxu0 0.0
    %2054 = vmatpush1.msra.mxu0 0.0
    %2055 = vmatprep.subr.mxu0 0.0
    %2056 = vmatpush1.msra.mxu0 0.0
    %2057 = vmatprep.subr.mxu0 0.0
    %2058 = vmatpush1.msra.mxu0 0.0
    %2059 = vmatprep.subr.mxu0 0.0
    %2060 = vmatpush1.msra.mxu0 0.0
    %2061 = vmatprep.subr.mxu0 0.0
    %2062 = vmatpush1.msra.mxu0 0.0
    %2063 = vmatprep.subr.mxu0 0.0
    %2064 = vmatpush1.msra.mxu0 0.0
    %2065 = vmatprep.subr.mxu0 0.0
    %2066 = vmatpush1.msra.mxu0 0.0
    %2067 = vmatprep.subr.mxu0 0.0
    %2068 = vmatpush1.msra.mxu0 0.0
    %2069 = vmatprep.subr.mxu0 0.0
    %2070 = vmatpush1.msra.mxu0 0.0
    %2071 = vmatprep.subr.mxu0 0.0
    %2072 = vmatpush1.msra.mxu0 0.0
    %2073 = vmatprep.subr.mxu0 0.0
    %2074 = vmatpush1.msra.mxu0 0.0
    %2075 = vmatprep.mubr.f32.mxu0 0.0
    %2076 = vmatmul.mubr.f32.gmra.mrb[0].mxu0 %v1840
    %v2077 = vpop.f32.mrb[0].mxu0
    %v2078 = vadd.f32 0.0, %v2077
    %v2079 = vpop.f32.mrb[0].mxu0
    %v2080 = vadd.f32 0.0, %v2079
    %2081 = vdwg.mxu0
    %2082 = vmatprep.subr.mxu0 %v462
    %2083 = vmatpush1.msra.mxu0 %v461
    %2084 = vmatprep.subr.mxu0 %v466
    %2085 = vmatpush1.msra.mxu0 %v465
    %2086 = vmatprep.subr.mxu0 %v470
    %2087 = vmatpush1.msra.mxu0 %v469
    %2088 = vmatprep.subr.mxu0 %v474
    %2089 = vmatpush1.msra.mxu0 %v473
    %2090 = vmatprep.subr.mxu0 %v478
    %2091 = vmatpush1.msra.mxu0 %v477
    %2092 = vmatprep.subr.mxu0 %v482
    %2093 = vmatpush1.msra.mxu0 %v481
    %2094 = vmatprep.subr.mxu0 %v486
    %2095 = vmatpush1.msra.mxu0 %v485
    %2096 = vmatprep.subr.mxu0 %v490
    %2097 = vmatpush1.msra.mxu0 %v489
    %2098 = vmatprep.subr.mxu0 %v494
    %2099 = vmatpush1.msra.mxu0 %v493
    %2100 = vmatprep.subr.mxu0 %v498
    %2101 = vmatpush1.msra.mxu0 %v497
    %2102 = vmatprep.subr.mxu0 %v502
    %2103 = vmatpush1.msra.mxu0 %v501
    %2104 = vmatprep.subr.mxu0 %v506
    %2105 = vmatpush1.msra.mxu0 %v505
    %2106 = vmatprep.subr.mxu0 %v510
    %2107 = vmatpush1.msra.mxu0 %v509
    %2108 = vmatprep.subr.mxu0 %v514
    %2109 = vmatpush1.msra.mxu0 %v513
    %2110 = vmatprep.subr.mxu0 %v518
    %2111 = vmatpush1.msra.mxu0 %v517
    %2112 = vmatprep.subr.mxu0 %v522
    %2113 = vmatpush1.msra.mxu0 %v521
    %2114 = vmatprep.subr.mxu0 0.0
    %2115 = vmatpush1.msra.mxu0 0.0
    %2116 = vmatprep.subr.mxu0 0.0
    %2117 = vmatpush1.msra.mxu0 0.0
    %2118 = vmatprep.subr.mxu0 0.0
    %2119 = vmatpush1.msra.mxu0 0.0
    %2120 = vmatprep.subr.mxu0 0.0
    %2121 = vmatpush1.msra.mxu0 0.0
    %2122 = vmatprep.subr.mxu0 0.0
    %2123 = vmatpush1.msra.mxu0 0.0
    %2124 = vmatprep.subr.mxu0 0.0
    %2125 = vmatpush1.msra.mxu0 0.0
    %2126 = vmatprep.subr.mxu0 0.0
    %2127 = vmatpush1.msra.mxu0 0.0
    %2128 = vmatprep.subr.mxu0 0.0
    %2129 = vmatpush1.msra.mxu0 0.0
    %2130 = vmatprep.subr.mxu0 0.0
    %2131 = vmatpush1.msra.mxu0 0.0
    %2132 = vmatprep.subr.mxu0 0.0
    %2133 = vmatpush1.msra.mxu0 0.0
    %2134 = vmatprep.subr.mxu0 0.0
    %2135 = vmatpush1.msra.mxu0 0.0
    %2136 = vmatprep.subr.mxu0 0.0
    %2137 = vmatpush1.msra.mxu0 0.0
    %2138 = vmatprep.subr.mxu0 0.0
    %2139 = vmatpush1.msra.mxu0 0.0
    %2140 = vmatprep.subr.mxu0 0.0
    %2141 = vmatpush1.msra.mxu0 0.0
    %2142 = vmatprep.subr.mxu0 0.0
    %2143 = vmatpush1.msra.mxu0 0.0
    %2144 = vmatprep.subr.mxu0 0.0
    %2145 = vmatpush1.msra.mxu0 0.0
    %2146 = vmatprep.mubr.f32.mxu0 0.0
    %2147 = vmatmul.mubr.f32.gmra.mrb[0].mxu0 %v1840
    %v2148 = vpop.f32.mrb[0].mxu0
    %v2149 = vadd.f32 0.0, %v2148
    %v2150 = vpop.f32.mrb[0].mxu0
    %v2151 = vadd.f32 0.0, %v2150
    %2152 = vdwg.mxu0
    %v2153 = vadd.f32 %v2007, %v2078
    %v2154 = vadd.f32 %v2008, %v2080
    %v2155 = vadd.f32 %v2009, %v2149
    %v2156 = vadd.f32 %v2010, %v2151
    %v2157 = vxor.u32 %v2153, 2147483648
    %v2158 = vxor.u32 %v2154, 2147483648
    %v2159 = vxor.u32 %v2155, 2147483648
    %v2160 = vmul.f32 %v2157, 1.442695
    %v2161 = vpow.pop %v2160
    %v2162 = vmul.f32 %v2158, 1.442695
    %v2163 = vpow.pop %v2162
    %v2164 = vmul.f32 %v2159, 1.442695
    %v2165 = vpow.pop %v2164
    %v2166 = vadd.f32 %v2161, 1.0
    %v2167 = vadd.f32 %v2163, 1.0
    %v2168 = vadd.f32 %v2165, 1.0
    %v2169 = vrcp.pop %v2166
    %v2170 = vmul.f32 1.0, %v2169
    %v2171 = vrcp.pop %v2167
    %v2172 = vmul.f32 1.0, %v2171
    %v2173 = vrcp.pop %v2168
    %v2174 = vmul.f32 1.0, %v2173
    %v2175 = vtanh.pop %v2156
    %v2176 = vmul.f32 %v2172, %v1838
    %v2177 = vmul.f32 %v2170, %v2175
    %v2178 = vadd.f32 %v2176, %v2177
    %v2179 = vtanh.pop %v2178
    %v2180 = vmul.f32 %v2174, %v2179
    %2181 = vmatprep.subr.mxu0 %v694
    %2182 = vmatpush1.msra.mxu0 %v693
    %2183 = vmatprep.subr.mxu0 %v698
    %2184 = vmatpush1.msra.mxu0 %v697
    %2185 = vmatprep.subr.mxu0 %v702
    %2186 = vmatpush1.msra.mxu0 %v701
    %2187 = vmatprep.subr.mxu0 %v706
    %2188 = vmatpush1.msra.mxu0 %v705
    %2189 = vmatprep.subr.mxu0 %v710
    %2190 = vmatpush1.msra.mxu0 %v709
    %2191 = vmatprep.subr.mxu0 %v714
    %2192 = vmatpush1.msra.mxu0 %v713
    %2193 = vmatprep.subr.mxu0 %v718
    %2194 = vmatpush1.msra.mxu0 %v717
    %2195 = vmatprep.subr.mxu0 %v722
    %2196 = vmatpush1.msra.mxu0 %v721
    %2197 = vmatprep.subr.mxu0 %v726
    %2198 = vmatpush1.msra.mxu0 %v725
    %2199 = vmatprep.subr.mxu0 %v730
    %2200 = vmatpush1.msra.mxu0 %v729
    %2201 = vmatprep.subr.mxu0 %v734
    %2202 = vmatpush1.msra.mxu0 %v733
    %2203 = vmatprep.subr.mxu0 %v738
    %2204 = vmatpush1.msra.mxu0 %v737
    %2205 = vmatprep.subr.mxu0 %v742
    %2206 = vmatpush1.msra.mxu0 %v741
    %2207 = vmatprep.subr.mxu0 %v746
    %2208 = vmatpush1.msra.mxu0 %v745
    %2209 = vmatprep.subr.mxu0 %v750
    %2210 = vmatpush1.msra.mxu0 %v749
    %2211 = vmatprep.subr.mxu0 %v754
    %2212 = vmatpush1.msra.mxu0 %v753
    %2213 = vmatprep.subr.mxu0 %v758
    %2214 = vmatpush1.msra.mxu0 %v757
    %2215 = vmatprep.subr.mxu0 %v762
    %2216 = vmatpush1.msra.mxu0 %v761
    %2217 = vmatprep.subr.mxu0 %v766
    %2218 = vmatpush1.msra.mxu0 %v765
    %2219 = vmatprep.subr.mxu0 %v770
    %2220 = vmatpush1.msra.mxu0 %v769
    %2221 = vmatprep.subr.mxu0 %v774
    %2222 = vmatpush1.msra.mxu0 %v773
    %2223 = vmatprep.subr.mxu0 %v778
    %2224 = vmatpush1.msra.mxu0 %v777
    %2225 = vmatprep.subr.mxu0 %v782
    %2226 = vmatpush1.msra.mxu0 %v781
    %2227 = vmatprep.subr.mxu0 %v786
    %2228 = vmatpush1.msra.mxu0 %v785
    %2229 = vmatprep.subr.mxu0 %v790
    %2230 = vmatpush1.msra.mxu0 %v789
    %2231 = vmatprep.subr.mxu0 %v794
    %2232 = vmatpush1.msra.mxu0 %v793
    %2233 = vmatprep.subr.mxu0 %v798
    %2234 = vmatpush1.msra.mxu0 %v797
    %2235 = vmatprep.subr.mxu0 %v802
    %2236 = vmatpush1.msra.mxu0 %v801
    %2237 = vmatprep.subr.mxu0 %v806
    %2238 = vmatpush1.msra.mxu0 %v805
    %2239 = vmatprep.subr.mxu0 %v810
    %2240 = vmatpush1.msra.mxu0 %v809
    %2241 = vmatprep.subr.mxu0 %v814
    %2242 = vmatpush1.msra.mxu0 %v813
    %2243 = vmatprep.subr.mxu0 %v818
    %2244 = vmatpush1.msra.mxu0 %v817
    %2245 = vmatprep.mubr.f32.mxu0 %v2006
    %2246 = vmatmul.mubr.f32.gmra.mrb[0].mxu0 %v2180
    %v2247 = vpop.f32.mrb[0].mxu0
    %v2248 = vadd.f32 %v432, %v2247
    %v2249 = vpop.f32.mrb[0].mxu0
    %v2250 = vadd.f32 %v436, %v2249
    %2251 = vdwg.mxu0
    %2252 = vmatprep.subr.mxu0 %v696
    %2253 = vmatpush1.msra.mxu0 %v695
    %2254 = vmatprep.subr.mxu0 %v700
    %2255 = vmatpush1.msra.mxu0 %v699
    %2256 = vmatprep.subr.mxu0 %v704
    %2257 = vmatpush1.msra.mxu0 %v703
    %2258 = vmatprep.subr.mxu0 %v708
    %2259 = vmatpush1.msra.mxu0 %v707
    %2260 = vmatprep.subr.mxu0 %v712
    %2261 = vmatpush1.msra.mxu0 %v711
    %2262 = vmatprep.subr.mxu0 %v716
    %2263 = vmatpush1.msra.mxu0 %v715
    %2264 = vmatprep.subr.mxu0 %v720
    %2265 = vmatpush1.msra.mxu0 %v719
    %2266 = vmatprep.subr.mxu0 %v724
    %2267 = vmatpush1.msra.mxu0 %v723
    %2268 = vmatprep.subr.mxu0 %v728
    %2269 = vmatpush1.msra.mxu0 %v727
    %2270 = vmatprep.subr.mxu0 %v732
    %2271 = vmatpush1.msra.mxu0 %v731
    %2272 = vmatprep.subr.mxu0 %v736
    %2273 = vmatpush1.msra.mxu0 %v735
    %2274 = vmatprep.subr.mxu0 %v740
    %2275 = vmatpush1.msra.mxu0 %v739
    %2276 = vmatprep.subr.mxu0 %v744
    %2277 = vmatpush1.msra.mxu0 %v743
    %2278 = vmatprep.subr.mxu0 %v748
    %2279 = vmatpush1.msra.mxu0 %v747
    %2280 = vmatprep.subr.mxu0 %v752
    %2281 = vmatpush1.msra.mxu0 %v751
    %2282 = vmatprep.subr.mxu0 %v756
    %2283 = vmatpush1.msra.mxu0 %v755
    %2284 = vmatprep.subr.mxu0 %v760
    %2285 = vmatpush1.msra.mxu0 %v759
    %2286 = vmatprep.subr.mxu0 %v764
    %2287 = vmatpush1.msra.mxu0 %v763
    %2288 = vmatprep.subr.mxu0 %v768
    %2289 = vmatpush1.msra.mxu0 %v767
    %2290 = vmatprep.subr.mxu0 %v772
    %2291 = vmatpush1.msra.mxu0 %v771
    %2292 = vmatprep.subr.mxu0 %v776
    %2293 = vmatpush1.msra.mxu0 %v775
    %2294 = vmatprep.subr.mxu0 %v780
    %2295 = vmatpush1.msra.mxu0 %v779
    %2296 = vmatprep.subr.mxu0 %v784
    %2297 = vmatpush1.msra.mxu0 %v783
    %2298 = vmatprep.subr.mxu0 %v788
    %2299 = vmatpush1.msra.mxu0 %v787
    %2300 = vmatprep.subr.mxu0 %v792
    %2301 = vmatpush1.msra.mxu0 %v791
    %2302 = vmatprep.subr.mxu0 %v796
    %2303 = vmatpush1.msra.mxu0 %v795
    %2304 = vmatprep.subr.mxu0 %v800
    %2305 = vmatpush1.msra.mxu0 %v799
    %2306 = vmatprep.subr.mxu0 %v804
    %2307 = vmatpush1.msra.mxu0 %v803
    %2308 = vmatprep.subr.mxu0 %v808
    %2309 = vmatpush1.msra.mxu0 %v807
    %2310 = vmatprep.subr.mxu0 %v812
    %2311 = vmatpush1.msra.mxu0 %v811
    %2312 = vmatprep.subr.mxu0 %v816
    %2313 = vmatpush1.msra.mxu0 %v815
    %2314 = vmatprep.subr.mxu0 %v820
    %2315 = vmatpush1.msra.mxu0 %v819
    %2316 = vmatprep.mubr.f32.mxu0 %v2006
    %2317 = vmatmul.mubr.f32.gmra.mrb[0].mxu0 %v2180
    %v2318 = vpop.f32.mrb[0].mxu0
    %v2319 = vadd.f32 %v440, %v2318
    %v2320 = vpop.f32.mrb[0].mxu0
    %v2321 = vadd.f32 %v444, %v2320
    %2322 = vdwg.mxu0
    %v2323 = vxor.u32 %v2248, 2147483648
    %v2324 = vxor.u32 %v2250, 2147483648
    %v2325 = vxor.u32 %v2319, 2147483648
    %v2326 = vmul.f32 %v2323, 1.442695
    %v2327 = vpow.pop %v2326
    %v2328 = vmul.f32 %v2324, 1.442695
    %v2329 = vpow.pop %v2328
    %v2330 = vmul.f32 %v2325, 1.442695
    %v2331 = vpow.pop %v2330
    %v2332 = vadd.f32 %v2327, 1.0
    %v2333 = vadd.f32 %v2329, 1.0
    %v2334 = vadd.f32 %v2331, 1.0
    %v2335 = vrcp.pop %v2332
    %v2336 = vmul.f32 1.0, %v2335
    %v2337 = vrcp.pop %v2333
    %v2338 = vmul.f32 1.0, %v2337
    %v2339 = vrcp.pop %v2334
    %v2340 = vmul.f32 1.0, %v2339
    %v2341 = vtanh.pop %v2321
    %v2342 = vmul.f32 %v2338, %v2004
    %v2343 = vmul.f32 %v2336, %v2341
    %v2344 = vadd.f32 %v2342, %v2343
    %v2345 = vtanh.pop %v2344
    %v2346 = vmul.f32 %v2340, %v2345
    %v2347 = vld [vmem:[#allocation2 + $0xa0] sm:$0xff]
    %v2348 = vld [vmem:[#allocation2 + $0xa8] sm:$0xff]
    %v2349 = vld [vmem:[#allocation2 + $0xb0] sm:$0xff]
    %v2350 = vld [vmem:[#allocation2 + $0xb8] sm:$0xff]
    %2351 = vmatprep.subr.mxu0 %v460
    %2352 = vmatpush1.msra.mxu0 %v459
    %2353 = vmatprep.subr.mxu0 %v464
    %2354 = vmatpush1.msra.mxu0 %v463
    %2355 = vmatprep.subr.mxu0 %v468
    %2356 = vmatpush1.msra.mxu0 %v467
    %2357 = vmatprep.subr.mxu0 %v472
    %2358 = vmatpush1.msra.mxu0 %v471
    %2359 = vmatprep.subr.mxu0 %v476
    %2360 = vmatpush1.msra.mxu0 %v475
    %2361 = vmatprep.subr.mxu0 %v480
    %2362 = vmatpush1.msra.mxu0 %v479
    %2363 = vmatprep.subr.mxu0 %v484
    %2364 = vmatpush1.msra.mxu0 %v483
    %2365 = vmatprep.subr.mxu0 %v488
    %2366 = vmatpush1.msra.mxu0 %v487
    %2367 = vmatprep.subr.mxu0 %v492
    %2368 = vmatpush1.msra.mxu0 %v491
    %2369 = vmatprep.subr.mxu0 %v496
    %2370 = vmatpush1.msra.mxu0 %v495
    %2371 = vmatprep.subr.mxu0 %v500
    %2372 = vmatpush1.msra.mxu0 %v499
    %2373 = vmatprep.subr.mxu0 %v504
    %2374 = vmatpush1.msra.mxu0 %v503
    %2375 = vmatprep.subr.mxu0 %v508
    %2376 = vmatpush1.msra.mxu0 %v507
    %2377 = vmatprep.subr.mxu0 %v512
    %2378 = vmatpush1.msra.mxu0 %v511
    %2379 = vmatprep.subr.mxu0 %v516
    %2380 = vmatpush1.msra.mxu0 %v515
    %2381 = vmatprep.subr.mxu0 %v520
    %2382 = vmatpush1.msra.mxu0 %v519
    %2383 = vmatprep.subr.mxu0 0.0
    %2384 = vmatpush1.msra.mxu0 0.0
    %2385 = vmatprep.subr.mxu0 0.0
    %2386 = vmatpush1.msra.mxu0 0.0
    %2387 = vmatprep.subr.mxu0 0.0
    %2388 = vmatpush1.msra.mxu0 0.0
    %2389 = vmatprep.subr.mxu0 0.0
    %2390 = vmatpush1.msra.mxu0 0.0
    %2391 = vmatprep.subr.mxu0 0.0
    %2392 = vmatpush1.msra.mxu0 0.0
    %2393 = vmatprep.subr.mxu0 0.0
    %2394 = vmatpush1.msra.mxu0 0.0
    %2395 = vmatprep.subr.mxu0 0.0
    %2396 = vmatpush1.msra.mxu0 0.0
    %2397 = vmatprep.subr.mxu0 0.0
    %2398 = vmatpush1.msra.mxu0 0.0
    %2399 = vmatprep.subr.mxu0 0.0
    %2400 = vmatpush1.msra.mxu0 0.0
    %2401 = vmatprep.subr.mxu0 0.0
    %2402 = vmatpush1.msra.mxu0 0.0
    %2403 = vmatprep.subr.mxu0 0.0
    %2404 = vmatpush1.msra.mxu0 0.0
    %2405 = vmatprep.subr.mxu0 0.0
    %2406 = vmatpush1.msra.mxu0 0.0
    %2407 = vmatprep.subr.mxu0 0.0
    %2408 = vmatpush1.msra.mxu0 0.0
    %2409 = vmatprep.subr.mxu0 0.0
    %2410 = vmatpush1.msra.mxu0 0.0
    %2411 = vmatprep.subr.mxu0 0.0
    %2412 = vmatpush1.msra.mxu0 0.0
    %2413 = vmatprep.subr.mxu0 0.0
    %2414 = vmatpush1.msra.mxu0 0.0
    %2415 = vmatprep.mubr.f32.mxu0 0.0
    %2416 = vmatmul.mubr.f32.gmra.mrb[0].mxu0 %v2180
    %v2417 = vpop.f32.mrb[0].mxu0
    %v2418 = vadd.f32 0.0, %v2417
    %v2419 = vpop.f32.mrb[0].mxu0
    %v2420 = vadd.f32 0.0, %v2419
    %2421 = vdwg.mxu0
    %2422 = vmatprep.subr.mxu0 %v462
    %2423 = vmatpush1.msra.mxu0 %v461
    %2424 = vmatprep.subr.mxu0 %v466
    %2425 = vmatpush1.msra.mxu0 %v465
    %2426 = vmatprep.subr.mxu0 %v470
    %2427 = vmatpush1.msra.mxu0 %v469
    %2428 = vmatprep.subr.mxu0 %v474
    %2429 = vmatpush1.msra.mxu0 %v473
    %2430 = vmatprep.subr.mxu0 %v478
    %2431 = vmatpush1.msra.mxu0 %v477
    %2432 = vmatprep.subr.mxu0 %v482
    %2433 = vmatpush1.msra.mxu0 %v481
    %2434 = vmatprep.subr.mxu0 %v486
    %2435 = vmatpush1.msra.mxu0 %v485
    %2436 = vmatprep.subr.mxu0 %v490
    %2437 = vmatpush1.msra.mxu0 %v489
    %2438 = vmatprep.subr.mxu0 %v494
    %2439 = vmatpush1.msra.mxu0 %v493
    %2440 = vmatprep.subr.mxu0 %v498
    %2441 = vmatpush1.msra.mxu0 %v497
    %2442 = vmatprep.subr.mxu0 %v502
    %2443 = vmatpush1.msra.mxu0 %v501
    %2444 = vmatprep.subr.mxu0 %v506
    %2445 = vmatpush1.msra.mxu0 %v505
    %2446 = vmatprep.subr.mxu0 %v510
    %2447 = vmatpush1.msra.mxu0 %v509
    %2448 = vmatprep.subr.mxu0 %v514
    %2449 = vmatpush1.msra.mxu0 %v513
    %2450 = vmatprep.subr.mxu0 %v518
    %2451 = vmatpush1.msra.mxu0 %v517
    %2452 = vmatprep.subr.mxu0 %v522
    %2453 = vmatpush1.msra.mxu0 %v521
    %2454 = vmatprep.subr.mxu0 0.0
    %2455 = vmatpush1.msra.mxu0 0.0
    %2456 = vmatprep.subr.mxu0 0.0
    %2457 = vmatpush1.msra.mxu0 0.0
    %2458 = vmatprep.subr.mxu0 0.0
    %2459 = vmatpush1.msra.mxu0 0.0
    %2460 = vmatprep.subr.mxu0 0.0
    %2461 = vmatpush1.msra.mxu0 0.0
    %2462 = vmatprep.subr.mxu0 0.0
    %2463 = vmatpush1.msra.mxu0 0.0
    %2464 = vmatprep.subr.mxu0 0.0
    %2465 = vmatpush1.msra.mxu0 0.0
    %2466 = vmatprep.subr.mxu0 0.0
    %2467 = vmatpush1.msra.mxu0 0.0
    %2468 = vmatprep.subr.mxu0 0.0
    %2469 = vmatpush1.msra.mxu0 0.0
    %2470 = vmatprep.subr.mxu0 0.0
    %2471 = vmatpush1.msra.mxu0 0.0
    %2472 = vmatprep.subr.mxu0 0.0
    %2473 = vmatpush1.msra.mxu0 0.0
    %2474 = vmatprep.subr.mxu0 0.0
    %2475 = vmatpush1.msra.mxu0 0.0
    %2476 = vmatprep.subr.mxu0 0.0
    %2477 = vmatpush1.msra.mxu0 0.0
    %2478 = vmatprep.subr.mxu0 0.0
    %2479 = vmatpush1.msra.mxu0 0.0
    %2480 = vmatprep.subr.mxu0 0.0
    %2481 = vmatpush1.msra.mxu0 0.0
    %2482 = vmatprep.subr.mxu0 0.0
    %2483 = vmatpush1.msra.mxu0 0.0
    %2484 = vmatprep.subr.mxu0 0.0
    %2485 = vmatpush1.msra.mxu0 0.0
    %2486 = vmatprep.mubr.f32.mxu0 0.0
    %2487 = vmatmul.mubr.f32.gmra.mrb[0].mxu0 %v2180
    %v2488 = vpop.f32.mrb[0].mxu0
    %v2489 = vadd.f32 0.0, %v2488
    %v2490 = vpop.f32.mrb[0].mxu0
    %v2491 = vadd.f32 0.0, %v2490
    %2492 = vdwg.mxu0
    %v2493 = vadd.f32 %v2347, %v2418
    %v2494 = vadd.f32 %v2348, %v2420
    %v2495 = vadd.f32 %v2349, %v2489
    %v2496 = vadd.f32 %v2350, %v2491
    %v2497 = vxor.u32 %v2493, 2147483648
    %v2498 = vxor.u32 %v2494, 2147483648
    %v2499 = vxor.u32 %v2495, 2147483648
    %v2500 = vmul.f32 %v2497, 1.442695
    %v2501 = vpow.pop %v2500
    %v2502 = vmul.f32 %v2498, 1.442695
    %v2503 = vpow.pop %v2502
    %v2504 = vmul.f32 %v2499, 1.442695
    %v2505 = vpow.pop %v2504
    %v2506 = vadd.f32 %v2501, 1.0
    %v2507 = vadd.f32 %v2503, 1.0
    %v2508 = vadd.f32 %v2505, 1.0
    %v2509 = vrcp.pop %v2506
    %v2510 = vmul.f32 1.0, %v2509
    %v2511 = vrcp.pop %v2507
    %v2512 = vmul.f32 1.0, %v2511
    %v2513 = vrcp.pop %v2508
    %v2514 = vmul.f32 1.0, %v2513
    %v2515 = vtanh.pop %v2496
    %v2516 = vmul.f32 %v2512, %v2178
    %v2517 = vmul.f32 %v2510, %v2515
    %v2518 = vadd.f32 %v2516, %v2517
    %v2519 = vtanh.pop %v2518
    %v2520 = vmul.f32 %v2514, %v2519
    %2521 = vmatprep.subr.mxu0 %v694
    %2522 = vmatpush1.msra.mxu0 %v693
    %2523 = vmatprep.subr.mxu0 %v698
    %2524 = vmatpush1.msra.mxu0 %v697
    %2525 = vmatprep.subr.mxu0 %v702
    %2526 = vmatpush1.msra.mxu0 %v701
    %2527 = vmatprep.subr.mxu0 %v706
    %2528 = vmatpush1.msra.mxu0 %v705
    %2529 = vmatprep.subr.mxu0 %v710
    %2530 = vmatpush1.msra.mxu0 %v709
    %2531 = vmatprep.subr.mxu0 %v714
    %2532 = vmatpush1.msra.mxu0 %v713
    %2533 = vmatprep.subr.mxu0 %v718
    %2534 = vmatpush1.msra.mxu0 %v717
    %2535 = vmatprep.subr.mxu0 %v722
    %2536 = vmatpush1.msra.mxu0 %v721
    %2537 = vmatprep.subr.mxu0 %v726
    %2538 = vmatpush1.msra.mxu0 %v725
    %2539 = vmatprep.subr.mxu0 %v730
    %2540 = vmatpush1.msra.mxu0 %v729
    %2541 = vmatprep.subr.mxu0 %v734
    %2542 = vmatpush1.msra.mxu0 %v733
    %2543 = vmatprep.subr.mxu0 %v738
    %2544 = vmatpush1.msra.mxu0 %v737
    %2545 = vmatprep.subr.mxu0 %v742
    %2546 = vmatpush1.msra.mxu0 %v741
    %2547 = vmatprep.subr.mxu0 %v746
    %2548 = vmatpush1.msra.mxu0 %v745
    %2549 = vmatprep.subr.mxu0 %v750
    %2550 = vmatpush1.msra.mxu0 %v749
    %2551 = vmatprep.subr.mxu0 %v754
    %2552 = vmatpush1.msra.mxu0 %v753
    %2553 = vmatprep.subr.mxu0 %v758
    %2554 = vmatpush1.msra.mxu0 %v757
    %2555 = vmatprep.subr.mxu0 %v762
    %2556 = vmatpush1.msra.mxu0 %v761
    %2557 = vmatprep.subr.mxu0 %v766
    %2558 = vmatpush1.msra.mxu0 %v765
    %2559 = vmatprep.subr.mxu0 %v770
    %2560 = vmatpush1.msra.mxu0 %v769
    %2561 = vmatprep.subr.mxu0 %v774
    %2562 = vmatpush1.msra.mxu0 %v773
    %2563 = vmatprep.subr.mxu0 %v778
    %2564 = vmatpush1.msra.mxu0 %v777
    %2565 = vmatprep.subr.mxu0 %v782
    %2566 = vmatpush1.msra.mxu0 %v781
    %2567 = vmatprep.subr.mxu0 %v786
    %2568 = vmatpush1.msra.mxu0 %v785
    %2569 = vmatprep.subr.mxu0 %v790
    %2570 = vmatpush1.msra.mxu0 %v789
    %2571 = vmatprep.subr.mxu0 %v794
    %2572 = vmatpush1.msra.mxu0 %v793
    %2573 = vmatprep.subr.mxu0 %v798
    %2574 = vmatpush1.msra.mxu0 %v797
    %2575 = vmatprep.subr.mxu0 %v802
    %2576 = vmatpush1.msra.mxu0 %v801
    %2577 = vmatprep.subr.mxu0 %v806
    %2578 = vmatpush1.msra.mxu0 %v805
    %2579 = vmatprep.subr.mxu0 %v810
    %2580 = vmatpush1.msra.mxu0 %v809
    %2581 = vmatprep.subr.mxu0 %v814
    %2582 = vmatpush1.msra.mxu0 %v813
    %2583 = vmatprep.subr.mxu0 %v818
    %2584 = vmatpush1.msra.mxu0 %v817
    %2585 = vmatprep.mubr.f32.mxu0 %v2346
    %2586 = vmatmul.mubr.f32.gmra.mrb[0].mxu0 %v2520
    %v2587 = vpop.f32.mrb[0].mxu0
    %v2588 = vadd.f32 %v432, %v2587
    %v2589 = vpop.f32.mrb[0].mxu0
    %v2590 = vadd.f32 %v436, %v2589
    %2591 = vdwg.mxu0
    %2592 = vmatprep.subr.mxu0 %v696
    %2593 = vmatpush1.msra.mxu0 %v695
    %2594 = vmatprep.subr.mxu0 %v700
    %2595 = vmatpush1.msra.mxu0 %v699
    %2596 = vmatprep.subr.mxu0 %v704
    %2597 = vmatpush1.msra.mxu0 %v703
    %2598 = vmatprep.subr.mxu0 %v708
    %2599 = vmatpush1.msra.mxu0 %v707
    %2600 = vmatprep.subr.mxu0 %v712
    %2601 = vmatpush1.msra.mxu0 %v711
    %2602 = vmatprep.subr.mxu0 %v716
    %2603 = vmatpush1.msra.mxu0 %v715
    %2604 = vmatprep.subr.mxu0 %v720
    %2605 = vmatpush1.msra.mxu0 %v719
    %2606 = vmatprep.subr.mxu0 %v724
    %2607 = vmatpush1.msra.mxu0 %v723
    %2608 = vmatprep.subr.mxu0 %v728
    %2609 = vmatpush1.msra.mxu0 %v727
    %2610 = vmatprep.subr.mxu0 %v732
    %2611 = vmatpush1.msra.mxu0 %v731
    %2612 = vmatprep.subr.mxu0 %v736
    %2613 = vmatpush1.msra.mxu0 %v735
    %2614 = vmatprep.subr.mxu0 %v740
    %2615 = vmatpush1.msra.mxu0 %v739
    %2616 = vmatprep.subr.mxu0 %v744
    %2617 = vmatpush1.msra.mxu0 %v743
    %2618 = vmatprep.subr.mxu0 %v748
    %2619 = vmatpush1.msra.mxu0 %v747
    %2620 = vmatprep.subr.mxu0 %v752
    %2621 = vmatpush1.msra.mxu0 %v751
    %2622 = vmatprep.subr.mxu0 %v756
    %2623 = vmatpush1.msra.mxu0 %v755
    %2624 = vmatprep.subr.mxu0 %v760
    %2625 = vmatpush1.msra.mxu0 %v759
    %2626 = vmatprep.subr.mxu0 %v764
    %2627 = vmatpush1.msra.mxu0 %v763
    %2628 = vmatprep.subr.mxu0 %v768
    %2629 = vmatpush1.msra.mxu0 %v767
    %2630 = vmatprep.subr.mxu0 %v772
    %2631 = vmatpush1.msra.mxu0 %v771
    %2632 = vmatprep.subr.mxu0 %v776
    %2633 = vmatpush1.msra.mxu0 %v775
    %2634 = vmatprep.subr.mxu0 %v780
    %2635 = vmatpush1.msra.mxu0 %v779
    %2636 = vmatprep.subr.mxu0 %v784
    %2637 = vmatpush1.msra.mxu0 %v783
    %2638 = vmatprep.subr.mxu0 %v788
    %2639 = vmatpush1.msra.mxu0 %v787
    %2640 = vmatprep.subr.mxu0 %v792
    %2641 = vmatpush1.msra.mxu0 %v791
    %2642 = vmatprep.subr.mxu0 %v796
    %2643 = vmatpush1.msra.mxu0 %v795
    %2644 = vmatprep.subr.mxu0 %v800
    %2645 = vmatpush1.msra.mxu0 %v799
    %2646 = vmatprep.subr.mxu0 %v804
    %2647 = vmatpush1.msra.mxu0 %v803
    %2648 = vmatprep.subr.mxu0 %v808
    %2649 = vmatpush1.msra.mxu0 %v807
    %2650 = vmatprep.subr.mxu0 %v812
    %2651 = vmatpush1.msra.mxu0 %v811
    %2652 = vmatprep.subr.mxu0 %v816
    %2653 = vmatpush1.msra.mxu0 %v815
    %2654 = vmatprep.subr.mxu0 %v820
    %2655 = vmatpush1.msra.mxu0 %v819
    %2656 = vmatprep.mubr.f32.mxu0 %v2346
    %2657 = vmatmul.mubr.f32.gmra.mrb[0].mxu0 %v2520
    %v2658 = vpop.f32.mrb[0].mxu0
    %v2659 = vadd.f32 %v440, %v2658
    %v2660 = vpop.f32.mrb[0].mxu0
    %v2661 = vadd.f32 %v444, %v2660
    %2662 = vdwg.mxu0
    %v2663 = vxor.u32 %v2588, 2147483648
    %v2664 = vxor.u32 %v2590, 2147483648
    %v2665 = vxor.u32 %v2659, 2147483648
    %v2666 = vmul.f32 %v2663, 1.442695
    %v2667 = vpow.pop %v2666
    %v2668 = vmul.f32 %v2664, 1.442695
    %v2669 = vpow.pop %v2668
    %v2670 = vmul.f32 %v2665, 1.442695
    %v2671 = vpow.pop %v2670
    %v2672 = vadd.f32 %v2667, 1.0
    %v2673 = vadd.f32 %v2669, 1.0
    %v2674 = vadd.f32 %v2671, 1.0
    %v2675 = vrcp.pop %v2672
    %v2676 = vmul.f32 1.0, %v2675
    %v2677 = vrcp.pop %v2673
    %v2678 = vmul.f32 1.0, %v2677
    %v2679 = vrcp.pop %v2674
    %v2680 = vmul.f32 1.0, %v2679
    %v2681 = vtanh.pop %v2661
    %v2682 = vmul.f32 %v2678, %v2344
    %v2683 = vmul.f32 %v2676, %v2681
    %v2684 = vadd.f32 %v2682, %v2683
    %v2685 = vtanh.pop %v2684
    %v2686 = vmul.f32 %v2680, %v2685
    %v2687 = vld [vmem:[#allocation2 + $0xc0] sm:$0xff]
    %v2688 = vld [vmem:[#allocation2 + $0xc8] sm:$0xff]
    %v2689 = vld [vmem:[#allocation2 + $0xd0] sm:$0xff]
    %v2690 = vld [vmem:[#allocation2 + $0xd8] sm:$0xff]
    %2691 = vmatprep.subr.mxu0 %v460
    %2692 = vmatpush1.msra.mxu0 %v459
    %2693 = vmatprep.subr.mxu0 %v464
    %2694 = vmatpush1.msra.mxu0 %v463
    %2695 = vmatprep.subr.mxu0 %v468
    %2696 = vmatpush1.msra.mxu0 %v467
    %2697 = vmatprep.subr.mxu0 %v472
    %2698 = vmatpush1.msra.mxu0 %v471
    %2699 = vmatprep.subr.mxu0 %v476
    %2700 = vmatpush1.msra.mxu0 %v475
    %2701 = vmatprep.subr.mxu0 %v480
    %2702 = vmatpush1.msra.mxu0 %v479
    %2703 = vmatprep.subr.mxu0 %v484
    %2704 = vmatpush1.msra.mxu0 %v483
    %2705 = vmatprep.subr.mxu0 %v488
    %2706 = vmatpush1.msra.mxu0 %v487
    %2707 = vmatprep.subr.mxu0 %v492
    %2708 = vmatpush1.msra.mxu0 %v491
    %2709 = vmatprep.subr.mxu0 %v496
    %2710 = vmatpush1.msra.mxu0 %v495
    %2711 = vmatprep.subr.mxu0 %v500
    %2712 = vmatpush1.msra.mxu0 %v499
    %2713 = vmatprep.subr.mxu0 %v504
    %2714 = vmatpush1.msra.mxu0 %v503
    %2715 = vmatprep.subr.mxu0 %v508
    %2716 = vmatpush1.msra.mxu0 %v507
    %2717 = vmatprep.subr.mxu0 %v512
    %2718 = vmatpush1.msra.mxu0 %v511
    %2719 = vmatprep.subr.mxu0 %v516
    %2720 = vmatpush1.msra.mxu0 %v515
    %2721 = vmatprep.subr.mxu0 %v520
    %2722 = vmatpush1.msra.mxu0 %v519
    %2723 = vmatprep.subr.mxu0 0.0
    %2724 = vmatpush1.msra.mxu0 0.0
    %2725 = vmatprep.subr.mxu0 0.0
    %2726 = vmatpush1.msra.mxu0 0.0
    %2727 = vmatprep.subr.mxu0 0.0
    %2728 = vmatpush1.msra.mxu0 0.0
    %2729 = vmatprep.subr.mxu0 0.0
    %2730 = vmatpush1.msra.mxu0 0.0
    %2731 = vmatprep.subr.mxu0 0.0
    %2732 = vmatpush1.msra.mxu0 0.0
    %2733 = vmatprep.subr.mxu0 0.0
    %2734 = vmatpush1.msra.mxu0 0.0
    %2735 = vmatprep.subr.mxu0 0.0
    %2736 = vmatpush1.msra.mxu0 0.0
    %2737 = vmatprep.subr.mxu0 0.0
    %2738 = vmatpush1.msra.mxu0 0.0
    %2739 = vmatprep.subr.mxu0 0.0
    %2740 = vmatpush1.msra.mxu0 0.0
    %2741 = vmatprep.subr.mxu0 0.0
    %2742 = vmatpush1.msra.mxu0 0.0
    %2743 = vmatprep.subr.mxu0 0.0
    %2744 = vmatpush1.msra.mxu0 0.0
    %2745 = vmatprep.subr.mxu0 0.0
    %2746 = vmatpush1.msra.mxu0 0.0
    %2747 = vmatprep.subr.mxu0 0.0
    %2748 = vmatpush1.msra.mxu0 0.0
    %2749 = vmatprep.subr.mxu0 0.0
    %2750 = vmatpush1.msra.mxu0 0.0
    %2751 = vmatprep.subr.mxu0 0.0
    %2752 = vmatpush1.msra.mxu0 0.0
    %2753 = vmatprep.subr.mxu0 0.0
    %2754 = vmatpush1.msra.mxu0 0.0
    %2755 = vmatprep.mubr.f32.mxu0 0.0
    %2756 = vmatmul.mubr.f32.gmra.mrb[0].mxu0 %v2520
    %v2757 = vpop.f32.mrb[0].mxu0
    %v2758 = vadd.f32 0.0, %v2757
    %v2759 = vpop.f32.mrb[0].mxu0
    %v2760 = vadd.f32 0.0, %v2759
    %2761 = vdwg.mxu0
    %2762 = vmatprep.subr.mxu0 %v462
    %2763 = vmatpush1.msra.mxu0 %v461
    %2764 = vmatprep.subr.mxu0 %v466
    %2765 = vmatpush1.msra.mxu0 %v465
    %2766 = vmatprep.subr.mxu0 %v470
    %2767 = vmatpush1.msra.mxu0 %v469
    %2768 = vmatprep.subr.mxu0 %v474
    %2769 = vmatpush1.msra.mxu0 %v473
    %2770 = vmatprep.subr.mxu0 %v478
    %2771 = vmatpush1.msra.mxu0 %v477
    %2772 = vmatprep.subr.mxu0 %v482
    %2773 = vmatpush1.msra.mxu0 %v481
    %2774 = vmatprep.subr.mxu0 %v486
    %2775 = vmatpush1.msra.mxu0 %v485
    %2776 = vmatprep.subr.mxu0 %v490
    %2777 = vmatpush1.msra.mxu0 %v489
    %2778 = vmatprep.subr.mxu0 %v494
    %2779 = vmatpush1.msra.mxu0 %v493
    %2780 = vmatprep.subr.mxu0 %v498
    %2781 = vmatpush1.msra.mxu0 %v497
    %2782 = vmatprep.subr.mxu0 %v502
    %2783 = vmatpush1.msra.mxu0 %v501
    %2784 = vmatprep.subr.mxu0 %v506
    %2785 = vmatpush1.msra.mxu0 %v505
    %2786 = vmatprep.subr.mxu0 %v510
    %2787 = vmatpush1.msra.mxu0 %v509
    %2788 = vmatprep.subr.mxu0 %v514
    %2789 = vmatpush1.msra.mxu0 %v513
    %2790 = vmatprep.subr.mxu0 %v518
    %2791 = vmatpush1.msra.mxu0 %v517
    %2792 = vmatprep.subr.mxu0 %v522
    %2793 = vmatpush1.msra.mxu0 %v521
    %2794 = vmatprep.subr.mxu0 0.0
    %2795 = vmatpush1.msra.mxu0 0.0
    %2796 = vmatprep.subr.mxu0 0.0
    %2797 = vmatpush1.msra.mxu0 0.0
    %2798 = vmatprep.subr.mxu0 0.0
    %2799 = vmatpush1.msra.mxu0 0.0
    %2800 = vmatprep.subr.mxu0 0.0
    %2801 = vmatpush1.msra.mxu0 0.0
    %2802 = vmatprep.subr.mxu0 0.0
    %2803 = vmatpush1.msra.mxu0 0.0
    %2804 = vmatprep.subr.mxu0 0.0
    %2805 = vmatpush1.msra.mxu0 0.0
    %2806 = vmatprep.subr.mxu0 0.0
    %2807 = vmatpush1.msra.mxu0 0.0
    %2808 = vmatprep.subr.mxu0 0.0
    %2809 = vmatpush1.msra.mxu0 0.0
    %2810 = vmatprep.subr.mxu0 0.0
    %2811 = vmatpush1.msra.mxu0 0.0
    %2812 = vmatprep.subr.mxu0 0.0
    %2813 = vmatpush1.msra.mxu0 0.0
    %2814 = vmatprep.subr.mxu0 0.0
    %2815 = vmatpush1.msra.mxu0 0.0
    %2816 = vmatprep.subr.mxu0 0.0
    %2817 = vmatpush1.msra.mxu0 0.0
    %2818 = vmatprep.subr.mxu0 0.0
    %2819 = vmatpush1.msra.mxu0 0.0
    %2820 = vmatprep.subr.mxu0 0.0
    %2821 = vmatpush1.msra.mxu0 0.0
    %2822 = vmatprep.subr.mxu0 0.0
    %2823 = vmatpush1.msra.mxu0 0.0
    %2824 = vmatprep.subr.mxu0 0.0
    %2825 = vmatpush1.msra.mxu0 0.0
    %2826 = vmatprep.mubr.f32.mxu0 0.0
    %2827 = vmatmul.mubr.f32.gmra.mrb[0].mxu0 %v2520
    %v2828 = vpop.f32.mrb[0].mxu0
    %v2829 = vadd.f32 0.0, %v2828
    %v2830 = vpop.f32.mrb[0].mxu0
    %v2831 = vadd.f32 0.0, %v2830
    %2832 = vdwg.mxu0
    %v2833 = vadd.f32 %v2687, %v2758
    %v2834 = vadd.f32 %v2688, %v2760
    %v2835 = vadd.f32 %v2689, %v2829
    %v2836 = vadd.f32 %v2690, %v2831
    %v2837 = vxor.u32 %v2833, 2147483648
    %v2838 = vxor.u32 %v2834, 2147483648
    %v2839 = vxor.u32 %v2835, 2147483648
    %v2840 = vmul.f32 %v2837, 1.442695
    %v2841 = vpow.pop %v2840
    %v2842 = vmul.f32 %v2838, 1.442695
    %v2843 = vpow.pop %v2842
    %v2844 = vmul.f32 %v2839, 1.442695
    %v2845 = vpow.pop %v2844
    %v2846 = vadd.f32 %v2841, 1.0
    %v2847 = vadd.f32 %v2843, 1.0
    %v2848 = vadd.f32 %v2845, 1.0
    %v2849 = vrcp.pop %v2846
    %v2850 = vmul.f32 1.0, %v2849
    %v2851 = vrcp.pop %v2847
    %v2852 = vmul.f32 1.0, %v2851
    %v2853 = vrcp.pop %v2848
    %v2854 = vmul.f32 1.0, %v2853
    %v2855 = vtanh.pop %v2836
    %v2856 = vmul.f32 %v2852, %v2518
    %v2857 = vmul.f32 %v2850, %v2855
    %v2858 = vadd.f32 %v2856, %v2857
    %v2859 = vtanh.pop %v2858
    %v2860 = vmul.f32 %v2854, %v2859
    %2861 = vmatprep.subr.mxu0 %v694
    %2862 = vmatpush1.msra.mxu0 %v693
    %2863 = vmatprep.subr.mxu0 %v698
    %2864 = vmatpush1.msra.mxu0 %v697
    %2865 = vmatprep.subr.mxu0 %v702
    %2866 = vmatpush1.msra.mxu0 %v701
    %2867 = vmatprep.subr.mxu0 %v706
    %2868 = vmatpush1.msra.mxu0 %v705
    %2869 = vmatprep.subr.mxu0 %v710
    %2870 = vmatpush1.msra.mxu0 %v709
    %2871 = vmatprep.subr.mxu0 %v714
    %2872 = vmatpush1.msra.mxu0 %v713
    %2873 = vmatprep.subr.mxu0 %v718
    %2874 = vmatpush1.msra.mxu0 %v717
    %2875 = vmatprep.subr.mxu0 %v722
    %2876 = vmatpush1.msra.mxu0 %v721
    %2877 = vmatprep.subr.mxu0 %v726
    %2878 = vmatpush1.msra.mxu0 %v725
    %2879 = vmatprep.subr.mxu0 %v730
    %2880 = vmatpush1.msra.mxu0 %v729
    %2881 = vmatprep.subr.mxu0 %v734
    %2882 = vmatpush1.msra.mxu0 %v733
    %2883 = vmatprep.subr.mxu0 %v738
    %2884 = vmatpush1.msra.mxu0 %v737
    %2885 = vmatprep.subr.mxu0 %v742
    %2886 = vmatpush1.msra.mxu0 %v741
    %2887 = vmatprep.subr.mxu0 %v746
    %2888 = vmatpush1.msra.mxu0 %v745
    %2889 = vmatprep.subr.mxu0 %v750
    %2890 = vmatpush1.msra.mxu0 %v749
    %2891 = vmatprep.subr.mxu0 %v754
    %2892 = vmatpush1.msra.mxu0 %v753
    %2893 = vmatprep.subr.mxu0 %v758
    %2894 = vmatpush1.msra.mxu0 %v757
    %2895 = vmatprep.subr.mxu0 %v762
    %2896 = vmatpush1.msra.mxu0 %v761
    %2897 = vmatprep.subr.mxu0 %v766
    %2898 = vmatpush1.msra.mxu0 %v765
    %2899 = vmatprep.subr.mxu0 %v770
    %2900 = vmatpush1.msra.mxu0 %v769
    %2901 = vmatprep.subr.mxu0 %v774
    %2902 = vmatpush1.msra.mxu0 %v773
    %2903 = vmatprep.subr.mxu0 %v778
    %2904 = vmatpush1.msra.mxu0 %v777
    %2905 = vmatprep.subr.mxu0 %v782
    %2906 = vmatpush1.msra.mxu0 %v781
    %2907 = vmatprep.subr.mxu0 %v786
    %2908 = vmatpush1.msra.mxu0 %v785
    %2909 = vmatprep.subr.mxu0 %v790
    %2910 = vmatpush1.msra.mxu0 %v789
    %2911 = vmatprep.subr.mxu0 %v794
    %2912 = vmatpush1.msra.mxu0 %v793
    %2913 = vmatprep.subr.mxu0 %v798
    %2914 = vmatpush1.msra.mxu0 %v797
    %2915 = vmatprep.subr.mxu0 %v802
    %2916 = vmatpush1.msra.mxu0 %v801
    %2917 = vmatprep.subr.mxu0 %v806
    %2918 = vmatpush1.msra.mxu0 %v805
    %2919 = vmatprep.subr.mxu0 %v810
    %2920 = vmatpush1.msra.mxu0 %v809
    %2921 = vmatprep.subr.mxu0 %v814
    %2922 = vmatpush1.msra.mxu0 %v813
    %2923 = vmatprep.subr.mxu0 %v818
    %2924 = vmatpush1.msra.mxu0 %v817
    %2925 = vmatprep.mubr.f32.mxu0 %v2686
    %2926 = vmatmul.mubr.f32.gmra.mrb[0].mxu0 %v2860
    %v2927 = vpop.f32.mrb[0].mxu0
    %v2928 = vadd.f32 %v432, %v2927
    %v2929 = vpop.f32.mrb[0].mxu0
    %v2930 = vadd.f32 %v436, %v2929
    %2931 = vdwg.mxu0
    %2932 = vmatprep.subr.mxu0 %v696
    %2933 = vmatpush1.msra.mxu0 %v695
    %2934 = vmatprep.subr.mxu0 %v700
    %2935 = vmatpush1.msra.mxu0 %v699
    %2936 = vmatprep.subr.mxu0 %v704
    %2937 = vmatpush1.msra.mxu0 %v703
    %2938 = vmatprep.subr.mxu0 %v708
    %2939 = vmatpush1.msra.mxu0 %v707
    %2940 = vmatprep.subr.mxu0 %v712
    %2941 = vmatpush1.msra.mxu0 %v711
    %2942 = vmatprep.subr.mxu0 %v716
    %2943 = vmatpush1.msra.mxu0 %v715
    %2944 = vmatprep.subr.mxu0 %v720
    %2945 = vmatpush1.msra.mxu0 %v719
    %2946 = vmatprep.subr.mxu0 %v724
    %2947 = vmatpush1.msra.mxu0 %v723
    %2948 = vmatprep.subr.mxu0 %v728
    %2949 = vmatpush1.msra.mxu0 %v727
    %2950 = vmatprep.subr.mxu0 %v732
    %2951 = vmatpush1.msra.mxu0 %v731
    %2952 = vmatprep.subr.mxu0 %v736
    %2953 = vmatpush1.msra.mxu0 %v735
    %2954 = vmatprep.subr.mxu0 %v740
    %2955 = vmatpush1.msra.mxu0 %v739
    %2956 = vmatprep.subr.mxu0 %v744
    %2957 = vmatpush1.msra.mxu0 %v743
    %2958 = vmatprep.subr.mxu0 %v748
    %2959 = vmatpush1.msra.mxu0 %v747
    %2960 = vmatprep.subr.mxu0 %v752
    %2961 = vmatpush1.msra.mxu0 %v751
    %2962 = vmatprep.subr.mxu0 %v756
    %2963 = vmatpush1.msra.mxu0 %v755
    %2964 = vmatprep.subr.mxu0 %v760
    %2965 = vmatpush1.msra.mxu0 %v759
    %2966 = vmatprep.subr.mxu0 %v764
    %2967 = vmatpush1.msra.mxu0 %v763
    %2968 = vmatprep.subr.mxu0 %v768
    %2969 = vmatpush1.msra.mxu0 %v767
    %2970 = vmatprep.subr.mxu0 %v772
    %2971 = vmatpush1.msra.mxu0 %v771
    %2972 = vmatprep.subr.mxu0 %v776
    %2973 = vmatpush1.msra.mxu0 %v775
    %2974 = vmatprep.subr.mxu0 %v780
    %2975 = vmatpush1.msra.mxu0 %v779
    %2976 = vmatprep.subr.mxu0 %v784
    %2977 = vmatpush1.msra.mxu0 %v783
    %2978 = vmatprep.subr.mxu0 %v788
    %2979 = vmatpush1.msra.mxu0 %v787
    %2980 = vmatprep.subr.mxu0 %v792
    %2981 = vmatpush1.msra.mxu0 %v791
    %2982 = vmatprep.subr.mxu0 %v796
    %2983 = vmatpush1.msra.mxu0 %v795
    %2984 = vmatprep.subr.mxu0 %v800
    %2985 = vmatpush1.msra.mxu0 %v799
    %2986 = vmatprep.subr.mxu0 %v804
    %2987 = vmatpush1.msra.mxu0 %v803
    %2988 = vmatprep.subr.mxu0 %v808
    %2989 = vmatpush1.msra.mxu0 %v807
    %2990 = vmatprep.subr.mxu0 %v812
    %2991 = vmatpush1.msra.mxu0 %v811
    %2992 = vmatprep.subr.mxu0 %v816
    %2993 = vmatpush1.msra.mxu0 %v815
    %2994 = vmatprep.subr.mxu0 %v820
    %2995 = vmatpush1.msra.mxu0 %v819
    %2996 = vmatprep.mubr.f32.mxu0 %v2686
    %2997 = vmatmul.mubr.f32.gmra.mrb[0].mxu0 %v2860
    %v2998 = vpop.f32.mrb[0].mxu0
    %v2999 = vadd.f32 %v440, %v2998
    %v3000 = vpop.f32.mrb[0].mxu0
    %v3001 = vadd.f32 %v444, %v3000
    %3002 = vdwg.mxu0
    %v3003 = vxor.u32 %v2928, 2147483648
    %v3004 = vxor.u32 %v2930, 2147483648
    %v3005 = vxor.u32 %v2999, 2147483648
    %v3006 = vmul.f32 %v3003, 1.442695
    %v3007 = vpow.pop %v3006
    %v3008 = vmul.f32 %v3004, 1.442695
    %v3009 = vpow.pop %v3008
    %v3010 = vmul.f32 %v3005, 1.442695
    %v3011 = vpow.pop %v3010
    %v3012 = vadd.f32 %v3007, 1.0
    %v3013 = vadd.f32 %v3009, 1.0
    %v3014 = vadd.f32 %v3011, 1.0
    %v3015 = vrcp.pop %v3012
    %v3016 = vmul.f32 1.0, %v3015
    %v3017 = vrcp.pop %v3013
    %v3018 = vmul.f32 1.0, %v3017
    %v3019 = vrcp.pop %v3014
    %v3020 = vmul.f32 1.0, %v3019
    %v3021 = vtanh.pop %v3001
    %v3022 = vmul.f32 %v3018, %v2684
    %v3023 = vmul.f32 %v3016, %v3021
    %v3024 = vadd.f32 %v3022, %v3023
    %v3025 = vtanh.pop %v3024
    %v3026 = vmul.f32 %v3020, %v3025
    %v3027 = vld [vmem:[#allocation2 + $0xe0] sm:$0xff]
    %v3028 = vld [vmem:[#allocation2 + $0xe8] sm:$0xff]
    %v3029 = vld [vmem:[#allocation2 + $0xf0] sm:$0xff]
    %v3030 = vld [vmem:[#allocation2 + $0xf8] sm:$0xff]
    %3031 = vmatprep.subr.mxu0 %v460
    %3032 = vmatpush1.msra.mxu0 %v459
    %3033 = vmatprep.subr.mxu0 %v464
    %3034 = vmatpush1.msra.mxu0 %v463
    %3035 = vmatprep.subr.mxu0 %v468
    %3036 = vmatpush1.msra.mxu0 %v467
    %3037 = vmatprep.subr.mxu0 %v472
    %3038 = vmatpush1.msra.mxu0 %v471
    %3039 = vmatprep.subr.mxu0 %v476
    %3040 = vmatpush1.msra.mxu0 %v475
    %3041 = vmatprep.subr.mxu0 %v480
    %3042 = vmatpush1.msra.mxu0 %v479
    %3043 = vmatprep.subr.mxu0 %v484
    %3044 = vmatpush1.msra.mxu0 %v483
    %3045 = vmatprep.subr.mxu0 %v488
    %3046 = vmatpush1.msra.mxu0 %v487
    %3047 = vmatprep.subr.mxu0 %v492
    %3048 = vmatpush1.msra.mxu0 %v491
    %3049 = vmatprep.subr.mxu0 %v496
    %3050 = vmatpush1.msra.mxu0 %v495
    %3051 = vmatprep.subr.mxu0 %v500
    %3052 = vmatpush1.msra.mxu0 %v499
    %3053 = vmatprep.subr.mxu0 %v504
    %3054 = vmatpush1.msra.mxu0 %v503
    %3055 = vmatprep.subr.mxu0 %v508
    %3056 = vmatpush1.msra.mxu0 %v507
    %3057 = vmatprep.subr.mxu0 %v512
    %3058 = vmatpush1.msra.mxu0 %v511
    %3059 = vmatprep.subr.mxu0 %v516
    %3060 = vmatpush1.msra.mxu0 %v515
    %3061 = vmatprep.subr.mxu0 %v520
    %3062 = vmatpush1.msra.mxu0 %v519
    %3063 = vmatprep.subr.mxu0 0.0
    %3064 = vmatpush1.msra.mxu0 0.0
    %3065 = vmatprep.subr.mxu0 0.0
    %3066 = vmatpush1.msra.mxu0 0.0
    %3067 = vmatprep.subr.mxu0 0.0
    %3068 = vmatpush1.msra.mxu0 0.0
    %3069 = vmatprep.subr.mxu0 0.0
    %3070 = vmatpush1.msra.mxu0 0.0
    %3071 = vmatprep.subr.mxu0 0.0
    %3072 = vmatpush1.msra.mxu0 0.0
    %3073 = vmatprep.subr.mxu0 0.0
    %3074 = vmatpush1.msra.mxu0 0.0
    %3075 = vmatprep.subr.mxu0 0.0
    %3076 = vmatpush1.msra.mxu0 0.0
    %3077 = vmatprep.subr.mxu0 0.0
    %3078 = vmatpush1.msra.mxu0 0.0
    %3079 = vmatprep.subr.mxu0 0.0
    %3080 = vmatpush1.msra.mxu0 0.0
    %3081 = vmatprep.subr.mxu0 0.0
    %3082 = vmatpush1.msra.mxu0 0.0
    %3083 = vmatprep.subr.mxu0 0.0
    %3084 = vmatpush1.msra.mxu0 0.0
    %3085 = vmatprep.subr.mxu0 0.0
    %3086 = vmatpush1.msra.mxu0 0.0
    %3087 = vmatprep.subr.mxu0 0.0
    %3088 = vmatpush1.msra.mxu0 0.0
    %3089 = vmatprep.subr.mxu0 0.0
    %3090 = vmatpush1.msra.mxu0 0.0
    %3091 = vmatprep.subr.mxu0 0.0
    %3092 = vmatpush1.msra.mxu0 0.0
    %3093 = vmatprep.subr.mxu0 0.0
    %3094 = vmatpush1.msra.mxu0 0.0
    %3095 = vmatprep.mubr.f32.mxu0 0.0
    %3096 = vmatmul.mubr.f32.gmra.mrb[0].mxu0 %v2860
    %v3097 = vpop.f32.mrb[0].mxu0
    %v3098 = vadd.f32 0.0, %v3097
    %v3099 = vpop.f32.mrb[0].mxu0
    %v3100 = vadd.f32 0.0, %v3099
    %3101 = vdwg.mxu0
    %3102 = vmatprep.subr.mxu0 %v462
    %3103 = vmatpush1.msra.mxu0 %v461
    %3104 = vmatprep.subr.mxu0 %v466
    %3105 = vmatpush1.msra.mxu0 %v465
    %3106 = vmatprep.subr.mxu0 %v470
    %3107 = vmatpush1.msra.mxu0 %v469
    %3108 = vmatprep.subr.mxu0 %v474
    %3109 = vmatpush1.msra.mxu0 %v473
    %3110 = vmatprep.subr.mxu0 %v478
    %3111 = vmatpush1.msra.mxu0 %v477
    %3112 = vmatprep.subr.mxu0 %v482
    %3113 = vmatpush1.msra.mxu0 %v481
    %3114 = vmatprep.subr.mxu0 %v486
    %3115 = vmatpush1.msra.mxu0 %v485
    %3116 = vmatprep.subr.mxu0 %v490
    %3117 = vmatpush1.msra.mxu0 %v489
    %3118 = vmatprep.subr.mxu0 %v494
    %3119 = vmatpush1.msra.mxu0 %v493
    %3120 = vmatprep.subr.mxu0 %v498
    %3121 = vmatpush1.msra.mxu0 %v497
    %3122 = vmatprep.subr.mxu0 %v502
    %3123 = vmatpush1.msra.mxu0 %v501
    %3124 = vmatprep.subr.mxu0 %v506
    %3125 = vmatpush1.msra.mxu0 %v505
    %3126 = vmatprep.subr.mxu0 %v510
    %3127 = vmatpush1.msra.mxu0 %v509
    %3128 = vmatprep.subr.mxu0 %v514
    %3129 = vmatpush1.msra.mxu0 %v513
    %3130 = vmatprep.subr.mxu0 %v518
    %3131 = vmatpush1.msra.mxu0 %v517
    %3132 = vmatprep.subr.mxu0 %v522
    %3133 = vmatpush1.msra.mxu0 %v521
    %3134 = vmatprep.subr.mxu0 0.0
    %3135 = vmatpush1.msra.mxu0 0.0
    %3136 = vmatprep.subr.mxu0 0.0
    %3137 = vmatpush1.msra.mxu0 0.0
    %3138 = vmatprep.subr.mxu0 0.0
    %3139 = vmatpush1.msra.mxu0 0.0
    %3140 = vmatprep.subr.mxu0 0.0
    %3141 = vmatpush1.msra.mxu0 0.0
    %3142 = vmatprep.subr.mxu0 0.0
    %3143 = vmatpush1.msra.mxu0 0.0
    %3144 = vmatprep.subr.mxu0 0.0
    %3145 = vmatpush1.msra.mxu0 0.0
    %3146 = vmatprep.subr.mxu0 0.0
    %3147 = vmatpush1.msra.mxu0 0.0
    %3148 = vmatprep.subr.mxu0 0.0
    %3149 = vmatpush1.msra.mxu0 0.0
    %3150 = vmatprep.subr.mxu0 0.0
    %3151 = vmatpush1.msra.mxu0 0.0
    %3152 = vmatprep.subr.mxu0 0.0
    %3153 = vmatpush1.msra.mxu0 0.0
    %3154 = vmatprep.subr.mxu0 0.0
    %3155 = vmatpush1.msra.mxu0 0.0
    %3156 = vmatprep.subr.mxu0 0.0
    %3157 = vmatpush1.msra.mxu0 0.0
    %3158 = vmatprep.subr.mxu0 0.0
    %3159 = vmatpush1.msra.mxu0 0.0
    %3160 = vmatprep.subr.mxu0 0.0
    %3161 = vmatpush1.msra.mxu0 0.0
    %3162 = vmatprep.subr.mxu0 0.0
    %3163 = vmatpush1.msra.mxu0 0.0
    %3164 = vmatprep.subr.mxu0 0.0
    %3165 = vmatpush1.msra.mxu0 0.0
    %3166 = vmatprep.mubr.f32.mxu0 0.0
    %3167 = vmatmul.mubr.f32.gmra.mrb[0].mxu0 %v2860
    %v3168 = vpop.f32.mrb[0].mxu0
    %v3169 = vadd.f32 0.0, %v3168
    %v3170 = vpop.f32.mrb[0].mxu0
    %v3171 = vadd.f32 0.0, %v3170
    %3172 = vdwg.mxu0
    %v3173 = vadd.f32 %v3027, %v3098
    %v3174 = vadd.f32 %v3028, %v3100
    %v3175 = vadd.f32 %v3029, %v3169
    %v3176 = vadd.f32 %v3030, %v3171
    %v3177 = vxor.u32 %v3173, 2147483648
    %v3178 = vxor.u32 %v3174, 2147483648
    %v3179 = vxor.u32 %v3175, 2147483648
    %v3180 = vmul.f32 %v3177, 1.442695
    %v3181 = vpow.pop %v3180
    %v3182 = vmul.f32 %v3178, 1.442695
    %v3183 = vpow.pop %v3182
    %v3184 = vmul.f32 %v3179, 1.442695
    %v3185 = vpow.pop %v3184
    %v3186 = vadd.f32 %v3181, 1.0
    %v3187 = vadd.f32 %v3183, 1.0
    %v3188 = vadd.f32 %v3185, 1.0
    %v3189 = vrcp.pop %v3186
    %v3190 = vmul.f32 1.0, %v3189
    %v3191 = vrcp.pop %v3187
    %v3192 = vmul.f32 1.0, %v3191
    %v3193 = vrcp.pop %v3188
    %v3194 = vmul.f32 1.0, %v3193
    %v3195 = vtanh.pop %v3176
    %v3196 = vmul.f32 %v3192, %v2858
    %v3197 = vmul.f32 %v3190, %v3195
    %v3198 = vadd.f32 %v3196, %v3197
    %v3199 = vtanh.pop %v3198
    %v3200 = vmul.f32 %v3194, %v3199
    %3201 = vmatprep.subr.mxu0 %v694
    %3202 = vmatpush1.msra.mxu0 %v693
    %3203 = vmatprep.subr.mxu0 %v698
    %3204 = vmatpush1.msra.mxu0 %v697
    %3205 = vmatprep.subr.mxu0 %v702
    %3206 = vmatpush1.msra.mxu0 %v701
    %3207 = vmatprep.subr.mxu0 %v706
    %3208 = vmatpush1.msra.mxu0 %v705
    %3209 = vmatprep.subr.mxu0 %v710
    %3210 = vmatpush1.msra.mxu0 %v709
    %3211 = vmatprep.subr.mxu0 %v714
    %3212 = vmatpush1.msra.mxu0 %v713
    %3213 = vmatprep.subr.mxu0 %v718
    %3214 = vmatpush1.msra.mxu0 %v717
    %3215 = vmatprep.subr.mxu0 %v722
    %3216 = vmatpush1.msra.mxu0 %v721
    %3217 = vmatprep.subr.mxu0 %v726
    %3218 = vmatpush1.msra.mxu0 %v725
    %3219 = vmatprep.subr.mxu0 %v730
    %3220 = vmatpush1.msra.mxu0 %v729
    %3221 = vmatprep.subr.mxu0 %v734
    %3222 = vmatpush1.msra.mxu0 %v733
    %3223 = vmatprep.subr.mxu0 %v738
    %3224 = vmatpush1.msra.mxu0 %v737
    %3225 = vmatprep.subr.mxu0 %v742
    %3226 = vmatpush1.msra.mxu0 %v741
    %3227 = vmatprep.subr.mxu0 %v746
    %3228 = vmatpush1.msra.mxu0 %v745
    %3229 = vmatprep.subr.mxu0 %v750
    %3230 = vmatpush1.msra.mxu0 %v749
    %3231 = vmatprep.subr.mxu0 %v754
    %3232 = vmatpush1.msra.mxu0 %v753
    %3233 = vmatprep.subr.mxu0 %v758
    %3234 = vmatpush1.msra.mxu0 %v757
    %3235 = vmatprep.subr.mxu0 %v762
    %3236 = vmatpush1.msra.mxu0 %v761
    %3237 = vmatprep.subr.mxu0 %v766
    %3238 = vmatpush1.msra.mxu0 %v765
    %3239 = vmatprep.subr.mxu0 %v770
    %3240 = vmatpush1.msra.mxu0 %v769
    %3241 = vmatprep.subr.mxu0 %v774
    %3242 = vmatpush1.msra.mxu0 %v773
    %3243 = vmatprep.subr.mxu0 %v778
    %3244 = vmatpush1.msra.mxu0 %v777
    %3245 = vmatprep.subr.mxu0 %v782
    %3246 = vmatpush1.msra.mxu0 %v781
    %3247 = vmatprep.subr.mxu0 %v786
    %3248 = vmatpush1.msra.mxu0 %v785
    %3249 = vmatprep.subr.mxu0 %v790
    %3250 = vmatpush1.msra.mxu0 %v789
    %3251 = vmatprep.subr.mxu0 %v794
    %3252 = vmatpush1.msra.mxu0 %v793
    %3253 = vmatprep.subr.mxu0 %v798
    %3254 = vmatpush1.msra.mxu0 %v797
    %3255 = vmatprep.subr.mxu0 %v802
    %3256 = vmatpush1.msra.mxu0 %v801
    %3257 = vmatprep.subr.mxu0 %v806
    %3258 = vmatpush1.msra.mxu0 %v805
    %3259 = vmatprep.subr.mxu0 %v810
    %3260 = vmatpush1.msra.mxu0 %v809
    %3261 = vmatprep.subr.mxu0 %v814
    %3262 = vmatpush1.msra.mxu0 %v813
    %3263 = vmatprep.subr.mxu0 %v818
    %3264 = vmatpush1.msra.mxu0 %v817
    %3265 = vmatprep.mubr.f32.mxu0 %v3026
    %3266 = vmatmul.mubr.f32.gmra.mrb[0].mxu0 %v3200
    %v3267 = vpop.f32.mrb[0].mxu0
    %v3268 = vadd.f32 %v432, %v3267
    %v3269 = vpop.f32.mrb[0].mxu0
    %v3270 = vadd.f32 %v436, %v3269
    %3271 = vdwg.mxu0
    %3272 = vmatprep.subr.mxu0 %v696
    %3273 = vmatpush1.msra.mxu0 %v695
    %3274 = vmatprep.subr.mxu0 %v700
    %3275 = vmatpush1.msra.mxu0 %v699
    %3276 = vmatprep.subr.mxu0 %v704
    %3277 = vmatpush1.msra.mxu0 %v703
    %3278 = vmatprep.subr.mxu0 %v708
    %3279 = vmatpush1.msra.mxu0 %v707
    %3280 = vmatprep.subr.mxu0 %v712
    %3281 = vmatpush1.msra.mxu0 %v711
    %3282 = vmatprep.subr.mxu0 %v716
    %3283 = vmatpush1.msra.mxu0 %v715
    %3284 = vmatprep.subr.mxu0 %v720
    %3285 = vmatpush1.msra.mxu0 %v719
    %3286 = vmatprep.subr.mxu0 %v724
    %3287 = vmatpush1.msra.mxu0 %v723
    %3288 = vmatprep.subr.mxu0 %v728
    %3289 = vmatpush1.msra.mxu0 %v727
    %3290 = vmatprep.subr.mxu0 %v732
    %3291 = vmatpush1.msra.mxu0 %v731
    %3292 = vmatprep.subr.mxu0 %v736
    %3293 = vmatpush1.msra.mxu0 %v735
    %3294 = vmatprep.subr.mxu0 %v740
    %3295 = vmatpush1.msra.mxu0 %v739
    %3296 = vmatprep.subr.mxu0 %v744
    %3297 = vmatpush1.msra.mxu0 %v743
    %3298 = vmatprep.subr.mxu0 %v748
    %3299 = vmatpush1.msra.mxu0 %v747
    %3300 = vmatprep.subr.mxu0 %v752
    %3301 = vmatpush1.msra.mxu0 %v751
    %3302 = vmatprep.subr.mxu0 %v756
    %3303 = vmatpush1.msra.mxu0 %v755
    %3304 = vmatprep.subr.mxu0 %v760
    %3305 = vmatpush1.msra.mxu0 %v759
    %3306 = vmatprep.subr.mxu0 %v764
    %3307 = vmatpush1.msra.mxu0 %v763
    %3308 = vmatprep.subr.mxu0 %v768
    %3309 = vmatpush1.msra.mxu0 %v767
    %3310 = vmatprep.subr.mxu0 %v772
    %3311 = vmatpush1.msra.mxu0 %v771
    %3312 = vmatprep.subr.mxu0 %v776
    %3313 = vmatpush1.msra.mxu0 %v775
    %3314 = vmatprep.subr.mxu0 %v780
    %3315 = vmatpush1.msra.mxu0 %v779
    %3316 = vmatprep.subr.mxu0 %v784
    %3317 = vmatpush1.msra.mxu0 %v783
    %3318 = vmatprep.subr.mxu0 %v788
    %3319 = vmatpush1.msra.mxu0 %v787
    %3320 = vmatprep.subr.mxu0 %v792
    %3321 = vmatpush1.msra.mxu0 %v791
    %3322 = vmatprep.subr.mxu0 %v796
    %3323 = vmatpush1.msra.mxu0 %v795
    %3324 = vmatprep.subr.mxu0 %v800
    %3325 = vmatpush1.msra.mxu0 %v799
    %3326 = vmatprep.subr.mxu0 %v804
    %3327 = vmatpush1.msra.mxu0 %v803
    %3328 = vmatprep.subr.mxu0 %v808
    %3329 = vmatpush1.msra.mxu0 %v807
    %3330 = vmatprep.subr.mxu0 %v812
    %3331 = vmatpush1.msra.mxu0 %v811
    %3332 = vmatprep.subr.mxu0 %v816
    %3333 = vmatpush1.msra.mxu0 %v815
    %3334 = vmatprep.subr.mxu0 %v820
    %3335 = vmatpush1.msra.mxu0 %v819
    %3336 = vmatprep.mubr.f32.mxu0 %v3026
    %3337 = vmatmul.mubr.f32.gmra.mrb[0].mxu0 %v3200
    %v3338 = vpop.f32.mrb[0].mxu0
    %v3339 = vadd.f32 %v440, %v3338
    %v3340 = vpop.f32.mrb[0].mxu0
    %v3341 = vadd.f32 %v444, %v3340
    %3342 = vdwg.mxu0
    %v3343 = vxor.u32 %v3268, 2147483648
    %v3344 = vxor.u32 %v3270, 2147483648
    %v3345 = vxor.u32 %v3339, 2147483648
    %v3346 = vmul.f32 %v3343, 1.442695
    %v3347 = vpow.pop %v3346
    %v3348 = vmul.f32 %v3344, 1.442695
    %v3349 = vpow.pop %v3348
    %v3350 = vmul.f32 %v3345, 1.442695
    %v3351 = vpow.pop %v3350
    %v3352 = vadd.f32 %v3347, 1.0
    %v3353 = vadd.f32 %v3349, 1.0
    %v3354 = vadd.f32 %v3351, 1.0
    %v3355 = vrcp.pop %v3352
    %v3356 = vmul.f32 1.0, %v3355
    %v3357 = vrcp.pop %v3353
    %v3358 = vmul.f32 1.0, %v3357
    %v3359 = vrcp.pop %v3354
    %v3360 = vmul.f32 1.0, %v3359
    %v3361 = vtanh.pop %v3341
    %v3362 = vmul.f32 %v3358, %v3024
    %v3363 = vmul.f32 %v3356, %v3361
    %v3364 = vadd.f32 %v3362, %v3363
    %v3365 = vtanh.pop %v3364
    %v3366 = vmul.f32 %v3360, %v3365
    %3367 = vst [vmem:[#allocation3] sm:$0xff] %v3200
    %3368 = vst [vmem:[#allocation4] sm:$0xff] %v3198
    %3369 = vst [vmem:[%s450] sm:$0xff] %v3366
    %3370 = vst [vmem:[%s453] sm:$0xff] %v3364
    // Predicated region
    $region58: #{lstm_network_forward.1} parent=1 // pred_check
      %p3371 = pneg %p91
    $region59: #{lstm_network_forward.1} parent=1 // pred_check_branch
      %3373 = sbr.rel (%p3371) target = $region61
    $region60: #{lstm_network_forward.1} parent=1 // pred_region
      %v3374 = vld [vmem:[%s6] sm:$0xff]
      %v3375 = vld [vmem:[%s6 + $0x8] sm:$0xff]
      %v3376 = vld [vmem:[%s6 + $0x10] sm:$0xff]
      %v3377 = vld [vmem:[%s6 + $0x18] sm:$0xff]
      %v3378 = vld [vmem:[%s6 + $0x20] sm:$0xff]
      %v3379 = vld [vmem:[%s6 + $0x28] sm:$0xff]
      %v3380 = vld [vmem:[%s6 + $0x30] sm:$0xff]
      %v3381 = vld [vmem:[%s6 + $0x38] sm:$0xff]
      %v3382 = vld [vmem:[%s6 + $0x40] sm:$0xff]
      %v3383 = vld [vmem:[%s6 + $0x48] sm:$0xff]
      %v3384 = vld [vmem:[%s6 + $0x50] sm:$0xff]
      %v3385 = vld [vmem:[%s6 + $0x58] sm:$0xff]
      %v3386 = vld [vmem:[%s6 + $0x60] sm:$0xff]
      %v3387 = vld [vmem:[%s6 + $0x68] sm:$0xff]
      %v3388 = vld [vmem:[%s6 + $0x70] sm:$0xff]
      %v3389 = vld [vmem:[%s6 + $0x78] sm:$0xff]
      %v3390 = vld [vmem:[%s7] sm:$0x1]
      %v3392 = vlaneseq
      %v3393 = vshrl.u32 %v3392, 7
      %v3394 = vsub.s32 0, %v3393
      %v3395 = vrot.slane %v3390, %v3394
      %3397 = vmatprep.subr.mxu0 0.0
      %3398 = vmatpush1.msra.mxu0 %v3374
      %3399 = vmatprep.subr.mxu0 0.0
      %3400 = vmatpush1.msra.mxu0 %v3375
      %3401 = vmatprep.subr.mxu0 0.0
      %3402 = vmatpush1.msra.mxu0 %v3376
      %3403 = vmatprep.subr.mxu0 0.0
      %3404 = vmatpush1.msra.mxu0 %v3377
      %3405 = vmatprep.subr.mxu0 0.0
      %3406 = vmatpush1.msra.mxu0 %v3378
      %3407 = vmatprep.subr.mxu0 0.0
      %3408 = vmatpush1.msra.mxu0 %v3379
      %3409 = vmatprep.subr.mxu0 0.0
      %3410 = vmatpush1.msra.mxu0 %v3380
      %3411 = vmatprep.subr.mxu0 0.0
      %3412 = vmatpush1.msra.mxu0 %v3381
      %3413 = vmatprep.subr.mxu0 0.0
      %3414 = vmatpush1.msra.mxu0 %v3382
      %3415 = vmatprep.subr.mxu0 0.0
      %3416 = vmatpush1.msra.mxu0 %v3383
      %3417 = vmatprep.subr.mxu0 0.0
      %3418 = vmatpush1.msra.mxu0 %v3384
      %3419 = vmatprep.subr.mxu0 0.0
      %3420 = vmatpush1.msra.mxu0 %v3385
      %3421 = vmatprep.subr.mxu0 0.0
      %3422 = vmatpush1.msra.mxu0 %v3386
      %3423 = vmatprep.subr.mxu0 0.0
      %3424 = vmatpush1.msra.mxu0 %v3387
      %3425 = vmatprep.subr.mxu0 0.0
      %3426 = vmatpush1.msra.mxu0 %v3388
      %3427 = vmatprep.subr.mxu0 0.0
      %3428 = vmatpush1.msra.mxu0 %v3389
      %3429 = vmatprep.subr.mxu0 0.0
      %3430 = vmatpush1.msra.mxu0 0.0
      %3431 = vmatprep.subr.mxu0 0.0
      %3432 = vmatpush1.msra.mxu0 0.0
      %3433 = vmatprep.subr.mxu0 0.0
      %3434 = vmatpush1.msra.mxu0 0.0
      %3435 = vmatprep.subr.mxu0 0.0
      %3436 = vmatpush1.msra.mxu0 0.0
      %3437 = vmatprep.subr.mxu0 0.0
      %3438 = vmatpush1.msra.mxu0 0.0
      %3439 = vmatprep.subr.mxu0 0.0
      %3440 = vmatpush1.msra.mxu0 0.0
      %3441 = vmatprep.subr.mxu0 0.0
      %3442 = vmatpush1.msra.mxu0 0.0
      %3443 = vmatprep.subr.mxu0 0.0
      %3444 = vmatpush1.msra.mxu0 0.0
      %3445 = vmatprep.subr.mxu0 0.0
      %3446 = vmatpush1.msra.mxu0 0.0
      %3447 = vmatprep.subr.mxu0 0.0
      %3448 = vmatpush1.msra.mxu0 0.0
      %3449 = vmatprep.subr.mxu0 0.0
      %3450 = vmatpush1.msra.mxu0 0.0
      %3451 = vmatprep.subr.mxu0 0.0
      %3452 = vmatpush1.msra.mxu0 0.0
      %3453 = vmatprep.subr.mxu0 0.0
      %3454 = vmatpush1.msra.mxu0 0.0
      %3455 = vmatprep.subr.mxu0 0.0
      %3456 = vmatpush1.msra.mxu0 0.0
      %3457 = vmatprep.subr.mxu0 0.0
      %3458 = vmatpush1.msra.mxu0 0.0
      %3459 = vmatprep.subr.mxu0 0.0
      %3460 = vmatpush1.msra.mxu0 0.0
      %3461 = vmatprep.mubr.f32.mxu0 0.0
      %3462 = vmatmul.mubr.f32.gmra.mrb[0].mxu0 %v3366
      %v3463 = vpop.f32.mrb[0].mxu0
      %v3464 = vadd.f32 %v3395, %v3463
      %v3465 = vpop.f32.mrb[0].mxu0
      %3466 = vdwg.mxu0
      %3467 = vst [vmem:[%s8] sm:$0xff] %v3464
    $region61: #{lstm_network_forward.1} parent=1 // pred_fallthru
      _
    // Predicated region
    $region62: #{lstm_network_forward.1} parent=1 // pred_check
      _
    $region63: #{lstm_network_forward.1} parent=1 // pred_check_branch
      %3469 = sbr.rel (0) target = $region65
    $region64: #{lstm_network_forward.1} parent=1 // pred_region
      _
    $region65: #{lstm_network_forward.1} parent=1 // pred_fallthru
      _
    // Predicated region
    $region66: #{lstm_network_forward.1} parent=1 // pred_check
      _
    $region67: #{lstm_network_forward.1} parent=1 // pred_check_branch
      %3471 = sbr.rel (0) target = $region69
    $region68: #{lstm_network_forward.1} parent=1 // pred_region
      _
    $region69: #{lstm_network_forward.1} parent=1 // pred_fallthru
      _
    %3472 = vsyncpa [#allocation6], 1
    %3473 = vsyncpa [#allocation8], 1
    %3474 = vsyncpa [#allocation11], 1

</llo_original>
